<compile_context>
chip_gen: v7x
topology: tpu7x:2x2x1
jax: 0.10.0
libtpu: 0.0.40
codegen_flags: <defaults>
</compile_context>

<pallas_src>
import functools

import jax
import jax.numpy as jnp
from jax import lax
from jax.experimental import pallas as pl
from jax.experimental.pallas import tpu as pltpu


def _rup(x, m):
    return ((x + m - 1) // m) * m


def _conv1d_relu(x, xcol_ref, w_ref, b_ref, *, K):
    """Conv1d(stride=1, padding=K-1) + ReLU as a single im2col MXU matmul.

    x:        (TB, Lin, Cin) value (any float dtype)
    xcol_ref: (TB, Lpad, K*Cin) VMEM scratch, Lpad = round_up(Lin+K-1, 8),
              dtype = MXU compute dtype
    w_ref:    (K*Cin, Cout) VMEM-resident im2col weight, compute dtype
    b_ref:    (1, Cout) f32 bias
    returns   (TB, Lin+K-1, Cout) f32 post-ReLU
    """
    TB, Lin, Cin = x.shape
    Lout = Lin + K - 1                 # PyTorch Conv1d(padding=K-1) output len
    Lpad = xcol_ref.shape[1]           # sublane-aligned (multiple of 8)
    KC = xcol_ref.shape[2]             # == K * Cin
    Cout = w_ref.shape[1]
    x = x.astype(xcol_ref.dtype)

    # Zero ONLY the halo + alignment rows.  The K shifted body stores below
    # overwrite every remaining element, so the scratch never carries stale
    # data across grid iterations (and we never zero-fill the whole buffer).
    xcol_ref[:, 0:K - 1, :] = jnp.zeros((TB, K - 1, KC), xcol_ref.dtype)
    xcol_ref[:, Lin:Lpad, :] = jnp.zeros((TB, Lpad - Lin, KC), xcol_ref.dtype)

    # im2col: column block k holds xpad[l + k, :] == x shifted by (K-1-k) rows.
    for k in range(K):                 # static unroll (K = 3..5)
        xcol_ref[:, K - 1 - k:K - 1 - k + Lin, k * Cin:(k + 1) * Cin] = x

    # One large matmul: M = TB*Lpad, contraction = K*Cin, f32 accumulation.
    lhs = xcol_ref[...].reshape(TB * Lpad, KC)
    acc = jnp.dot(lhs, w_ref[...], preferred_element_type=jnp.float32)
    acc = acc.reshape(TB, Lpad, Cout)[:, :Lout, :]
    return jnp.maximum(acc + b_ref[...][None, :, :], 0.0)


def textcnn_kernel(x_ref, w1_ref, b1_ref, w2_ref, b2_ref, w3_ref, b3_ref,
                   wft_ref, bf_ref, out_ref,
                   xcol1_ref, xcol2_ref, xcol3_ref,
                   *, pool1, k1, k2, k3):
    x = x_ref[...]                                            # (TB, L, E)

    # conv1 + relu
    h1 = _conv1d_relu(x, xcol1_ref, w1_ref, b1_ref, K=k1)     # (TB, L+k1-1, C1)

    # max_pool1d(kernel=pool1, stride=pool1); PyTorch drops the remainder.
    TB, L1, C1 = h1.shape
    Lp = L1 // pool1
    hp = jnp.max(h1[:, :Lp * pool1, :].reshape(TB, Lp, pool1, C1), axis=2)

    # conv2 + relu, conv3 + relu (halo handling lives inside the helper).
    h2 = _conv1d_relu(hp, xcol2_ref, w2_ref, b2_ref, K=k2)    # (TB, Lp+k2-1, C2)
    h3 = _conv1d_relu(h2, xcol3_ref, w3_ref, b3_ref, K=k3)    # (TB, full_in, C3)

    # max over channels (== max_pool1d(kernel=C3) after the transpose).
    feat = jnp.max(h3, axis=2)                                # (TB, full_in) f32

    # Final Linear, output lane-padded to a multiple of 128 (wft/bf are padded
    # with zero columns in the wrapper) -> unmasked lane-dense store.
    out = jnp.dot(feat.astype(wft_ref.dtype), wft_ref[...],
                  preferred_element_type=jnp.float32)         # (TB, E_pad)
    out_ref[...] = out + bf_ref[...]


def textcnn_forward(token_ids, params, *, seq_len, pool1, k1, k2, k3,
                    batch_tile=8, compute_dtype=jnp.bfloat16,
                    vmem_limit_bytes=None):
    """TextCNN forward.  compute_dtype is the MXU operand dtype (accumulation
    is always f32).  batch_tile is the per-grid-step batch slab; shrink it
    (and/or use bf16) on v7x's 64 MiB VMEM, grow it on v5e/v6e."""
    emb = params["emb"]
    B, L = token_ids.shape
    assert L == seq_len
    E = emb.shape[1]
    C1 = params["w1"].shape[1]
    C2 = params["w2"].shape[1]
    C3 = params["w3"].shape[1]

    L1 = seq_len + k1 - 1           # conv1 output length
    Lp = L1 // pool1                # after max-pool (floor)
    L2 = Lp + k2 - 1                # conv2 output length
    L3 = L2 + k3 - 1                # conv3 output length == full_in
    assert params["wf"].shape == (E, L3)

    # Embedding gather stays in XLA (see TODO at top of file).
    x = jnp.take(emb, token_ids, axis=0).astype(compute_dtype)    # (B, L, E)

    # im2col weight matrices, computed once in the wrapper:
    #   wcol[k*Cin + c, o] = w[k, o, c]
    def wcol(w):
        K, Cout, Cin = w.shape
        return jnp.transpose(w, (0, 2, 1)).reshape(K * Cin, Cout).astype(
            compute_dtype)

    w1c, w2c, w3c = wcol(params["w1"]), wcol(params["w2"]), wcol(params["w3"])
    b1 = params["b1"].astype(jnp.float32)
    b2 = params["b2"].astype(jnp.float32)
    b3 = params["b3"].astype(jnp.float32)

    # Final Linear: wf is (E, full_in) -> pass (full_in, E_pad) with zero-padded
    # columns so the kernel's output store is lane-dense.
    E_pad = _rup(E, 128)
    wft = jnp.zeros((L3, E_pad), compute_dtype)
    wft = wft.at[:, :E].set(params["wf"].T.astype(compute_dtype))
    bfp = jnp.zeros((1, E_pad), jnp.float32)
    bfp = bfp.at[:, :E].set(params["bf"].astype(jnp.float32))

    TB = min(batch_tile, B)
    assert B % TB == 0, (B, TB)

    kernel = functools.partial(textcnn_kernel, pool1=pool1, k1=k1, k2=k2, k3=k3)
    resident = lambda: pl.BlockSpec(memory_space=pltpu.MemorySpace.VMEM)

    out = pl.pallas_call(
        kernel,
        out_shape=jax.ShapeDtypeStruct((B, E_pad), jnp.float32),
        grid_spec=pltpu.PrefetchScalarGridSpec(
            num_scalar_prefetch=0,
            grid=(B // TB,),
            in_specs=[
                # activation slab: double-buffered over the batch grid
                pl.BlockSpec((TB, seq_len, E), lambda i: (i, 0, 0)),
                # weights / biases: whole arrays resident in VMEM
                resident(), resident(),       # w1c, b1
                resident(), resident(),       # w2c, b2
                resident(), resident(),       # w3c, b3
                resident(), resident(),       # wft, bf
            ],
            out_specs=pl.BlockSpec((TB, E_pad), lambda i: (i, 0)),
            scratch_shapes=[
                # im2col staging buffers (compute dtype -> halved in bf16 mode)
                pltpu.VMEM((TB, _rup(L1, 8), k1 * E), compute_dtype),
                pltpu.VMEM((TB, _rup(L2, 8), k2 * C1), compute_dtype),
                pltpu.VMEM((TB, _rup(L3, 8), k3 * C2), compute_dtype),
            ],
        ),
        compiler_params=pltpu.CompilerParams(
            dimension_semantics=("parallel",),     # megacore split on v7x
            vmem_limit_bytes=vmem_limit_bytes),
    )(x, w1c, b1, w2c, b2, w3c, b3, wft, bfp)

    return out[:, :E]


def ref_forward(token_ids, params, *, pool1, k1, k2, k3):
    """Pure-JAX mirror of the PyTorch forward (NCW convs) for verification."""
    x = jnp.take(params["emb"], token_ids, axis=0)            # (B, L, E)
    x = jnp.transpose(x, (0, 2, 1))                           # (B, E, L)

    def conv(x, w_kof, b, pad):
        w = jnp.transpose(w_kof, (1, 2, 0))                   # (Cout, Cin, K)
        y = lax.conv_general_dilated(x, w, (1,), [(pad, pad)],
                                     dimension_numbers=("NCH", "OIH", "NCH"))
        return jnp.maximum(y + b.reshape(1, -1, 1), 0.0)

    x = conv(x, params["w1"], params["b1"], k1 - 1)
    B, C, L = x.shape
    Lp = L // pool1
    x = jnp.max(x[:, :, :Lp * pool1].reshape(B, C, Lp, pool1), axis=3)
    x = conv(x, params["w2"], params["b2"], k2 - 1)
    x = conv(x, params["w3"], params["b3"], k3 - 1)
    feat = jnp.max(x, axis=1)                                 # (B, full_in)
    return feat @ params["wf"].T + params["bf"].reshape(1, -1)


if __name__ == "__main__":
    # Small shapes, same structure as the module (which hard-codes
    # 600 / 400 / 200 / 100 widths).  Channel counts are kept lane-aligned
    # (multiples of 128) as any sane TPU config would be.
    B, E, V = 16, 128, 97
    SEQ, POOL1 = 30, 3
    C1, C2, C3 = 256, 128, 128
    K1, K2, K3 = 3, 4, 5
    FULL_IN = (SEQ + K1 - 1) // POOL1 + K2 + K3 - 2           # = 17

    key = jax.random.PRNGKey(0)
    ks = jax.random.split(key, 10)
    emb = jax.random.normal(ks[0], (V, E), jnp.float32) * 0.1
    emb = emb.at[0].set(0.0)                                  # padding_idx=0
    params = dict(
        emb=emb,
        w1=jax.random.normal(ks[1], (K1, C1, E), jnp.float32) * 0.05,
        b1=jax.random.normal(ks[2], (1, C1), jnp.float32) * 0.05,
        w2=jax.random.normal(ks[3], (K2, C2, C1), jnp.float32) * 0.05,
        b2=jax.random.normal(ks[4], (1, C2), jnp.float32) * 0.05,
        w3=jax.random.normal(ks[5], (K3, C3, C2), jnp.float32) * 0.05,
        b3=jax.random.normal(ks[6], (1, C3), jnp.float32) * 0.05,
        wf=jax.random.normal(ks[7], (E, FULL_IN), jnp.float32) * 0.1,
        bf=jax.random.normal(ks[8], (1, E), jnp.float32) * 0.1,
    )
    tokens = jax.random.randint(ks[9], (B, SEQ), 0, V)

    ref = ref_forward(tokens, params, pool1=POOL1, k1=K1, k2=K2, k3=K3)

    # f32 MXU path (bit-accurate check against the XLA reference).
    out_f32 = textcnn_forward(tokens, params, seq_len=SEQ, pool1=POOL1,
                              k1=K1, k2=K2, k3=K3, batch_tile=8,
                              compute_dtype=jnp.float32)
    out_f32 = jax.block_until_ready(out_f32)
    assert out_f32.shape == (B, E), out_f32.shape
    assert jnp.allclose(out_f32, ref, atol=2e-3, rtol=2e-3), \
        float(jnp.max(jnp.abs(out_f32 - ref)))

    # bf16 MXU path (production dtype on v6e/v7x), f32 accumulation.
    out_bf16 = textcnn_forward(tokens, params, seq_len=SEQ, pool1=POOL1,
                               k1=K1, k2=K2, k3=K3, batch_tile=8,
                               compute_dtype=jnp.bfloat16)
    out_bf16 = jax.block_until_ready(out_bf16)
    assert out_bf16.shape == (B, E), out_bf16.shape
    assert jnp.allclose(out_bf16, ref, atol=3e-2, rtol=3e-2), \
        float(jnp.max(jnp.abs(out_bf16 - ref)))

    print("KERNEL_OK")
</pallas_src>

<mosaic_0001>
module attributes {stable_mosaic.version = 11 : i64} {
  func.func @textcnn_kernel(%arg0: i32, %arg1: memref<8x30x128xf32, #tpu.memory_space<vmem>>, %arg2: memref<384x256xf32, #tpu.memory_space<vmem>>, %arg3: memref<1x256xf32, #tpu.memory_space<vmem>>, %arg4: memref<1024x128xf32, #tpu.memory_space<vmem>>, %arg5: memref<1x128xf32, #tpu.memory_space<vmem>>, %arg6: memref<640x128xf32, #tpu.memory_space<vmem>>, %arg7: memref<1x128xf32, #tpu.memory_space<vmem>>, %arg8: memref<17x128xf32, #tpu.memory_space<vmem>>, %arg9: memref<1x128xf32, #tpu.memory_space<vmem>>, %arg10: memref<8x128xf32, #tpu.memory_space<vmem>>, %arg11: memref<8x32x384xf32, #tpu.memory_space<vmem>>, %arg12: memref<8x16x1024xf32, #tpu.memory_space<vmem>>, %arg13: memref<8x24x640xf32, #tpu.memory_space<vmem>>) attributes {dimension_semantics = [#tpu.dimension_semantics<parallel>], iteration_bounds = array<i64: 2>, scalar_prefetch = 0 : i64, scratch_operands = 3 : i64, tpu.core_type = #tpu.core_type<tc>, window_params = [{transform_indices = @transform_0, window_bounds = array<i64: 8, 30, 128>}, {pipeline_mode = #tpu.pipeline_mode<synchronous>, transform_indices = @transform_1, window_bounds = array<i64: 384, 256>}, {pipeline_mode = #tpu.pipeline_mode<synchronous>, transform_indices = @transform_2, window_bounds = array<i64: 1, 256>}, {pipeline_mode = #tpu.pipeline_mode<synchronous>, transform_indices = @transform_3, window_bounds = array<i64: 1024, 128>}, {pipeline_mode = #tpu.pipeline_mode<synchronous>, transform_indices = @transform_4, window_bounds = array<i64: 1, 128>}, {pipeline_mode = #tpu.pipeline_mode<synchronous>, transform_indices = @transform_5, window_bounds = array<i64: 640, 128>}, {pipeline_mode = #tpu.pipeline_mode<synchronous>, transform_indices = @transform_6, window_bounds = array<i64: 1, 128>}, {pipeline_mode = #tpu.pipeline_mode<synchronous>, transform_indices = @transform_7, window_bounds = array<i64: 17, 128>}, {pipeline_mode = #tpu.pipeline_mode<synchronous>, transform_indices = @transform_8, window_bounds = array<i64: 1, 128>}, {transform_indices = @transform_9, window_bounds = array<i64: 8, 128>}]} {
    %c0 = arith.constant 0 : index
    %c0_0 = arith.constant 0 : index
    %c0_1 = arith.constant 0 : index
    %0 = vector.load %arg1[%c0, %c0_0, %c0_1] : memref<8x30x128xf32, #tpu.memory_space<vmem>>, vector<8x30x128xf32>
    %cst = arith.constant 0.000000e+00 : f32
    %1 = vector.broadcast %cst : f32 to vector<8x2x384xf32>
    %c0_2 = arith.constant 0 : index
    %c0_3 = arith.constant 0 : index
    %c0_4 = arith.constant 0 : index
    %2 = vector.load %arg11[%c0_2, %c0_3, %c0_4] : memref<8x32x384xf32, #tpu.memory_space<vmem>>, vector<8x2x384xf32>
    tpu.vector_store %arg11[%c0_2, %c0_3, %c0_4], %1 {strides = array<i32>} : memref<8x32x384xf32, #tpu.memory_space<vmem>>, vector<8x2x384xf32>,
    %cst_5 = arith.constant 0.000000e+00 : f32
    %3 = vector.broadcast %cst_5 : f32 to vector<8x2x384xf32>
    %c0_6 = arith.constant 0 : index
    %c30 = arith.constant 30 : index
    %c0_7 = arith.constant 0 : index
    %4 = vector.load %arg11[%c0_6, %c30, %c0_7] : memref<8x32x384xf32, #tpu.memory_space<vmem>>, vector<8x2x384xf32>
    tpu.vector_store %arg11[%c0_6, %c30, %c0_7], %3 {strides = array<i32>} : memref<8x32x384xf32, #tpu.memory_space<vmem>>, vector<8x2x384xf32>,
    %c0_8 = arith.constant 0 : index
    %c2 = arith.constant 2 : index
    %c0_9 = arith.constant 0 : index
    %5 = vector.load %arg11[%c0_8, %c2, %c0_9] : memref<8x32x384xf32, #tpu.memory_space<vmem>>, vector<8x30x128xf32>
    tpu.vector_store %arg11[%c0_8, %c2, %c0_9], %0 {strides = array<i32>} : memref<8x32x384xf32, #tpu.memory_space<vmem>>, vector<8x30x128xf32>,
    %c0_10 = arith.constant 0 : index
    %c1 = arith.constant 1 : index
    %c128 = arith.constant 128 : index
    %6 = vector.load %arg11[%c0_10, %c1, %c128] : memref<8x32x384xf32, #tpu.memory_space<vmem>>, vector<8x30x128xf32>
    tpu.vector_store %arg11[%c0_10, %c1, %c128], %0 {strides = array<i32>} : memref<8x32x384xf32, #tpu.memory_space<vmem>>, vector<8x30x128xf32>,
    %c0_11 = arith.constant 0 : index
    %c0_12 = arith.constant 0 : index
    %c256 = arith.constant 256 : index
    %7 = vector.load %arg11[%c0_11, %c0_12, %c256] : memref<8x32x384xf32, #tpu.memory_space<vmem>>, vector<8x30x128xf32>
    tpu.vector_store %arg11[%c0_11, %c0_12, %c256], %0 {strides = array<i32>} : memref<8x32x384xf32, #tpu.memory_space<vmem>>, vector<8x30x128xf32>,
    %c0_13 = arith.constant 0 : index
    %c0_14 = arith.constant 0 : index
    %c0_15 = arith.constant 0 : index
    %8 = vector.load %arg11[%c0_13, %c0_14, %c0_15] : memref<8x32x384xf32, #tpu.memory_space<vmem>>, vector<8x32x384xf32>
    %9 = vector.shape_cast %8 : vector<8x32x384xf32> to vector<256x384xf32>
    %c0_16 = arith.constant 0 : index
    %c0_17 = arith.constant 0 : index
    %10 = vector.load %arg2[%c0_16, %c0_17] : memref<384x256xf32, #tpu.memory_space<vmem>>, vector<384x256xf32>
    %cst_18 = arith.constant dense<0.000000e+00> : vector<256x256xf32>
    %11 = tpu.matmul %9, %10, %cst_18 {dimension_numbers = #tpu.dot_dimension_numbers<[1], [0], [0], [1], [0, 0, 1, 1], [], []>} : vector<256x384xf32>, vector<384x256xf32>, vector<256x256xf32> -> vector<256x256xf32>
    %12 = vector.shape_cast %11 : vector<256x256xf32> to vector<8x32x256xf32>
    %c0_19 = arith.constant 0 : index
    %c0_20 = arith.constant 0 : index
    %13 = vector.load %arg3[%c0_19, %c0_20] : memref<1x256xf32, #tpu.memory_space<vmem>>, vector<1x256xf32>
    %14 = vector.shape_cast %13 : vector<1x256xf32> to vector<1x1x256xf32>
    %15 = vector.broadcast %14 : vector<1x1x256xf32> to vector<8x32x256xf32>
    %16 = arith.addf %12, %15 : vector<8x32x256xf32>
    %cst_21 = arith.constant 0.000000e+00 : f32
    %17 = vector.broadcast %cst_21 : f32 to vector<8x32x256xf32>
    %18 = arith.maximumf %16, %17 : vector<8x32x256xf32>
    %19 = vector.extract_strided_slice %18 {offsets = [0, 0, 0], sizes = [8, 30, 256], strides = [1, 1, 1]} : vector<8x32x256xf32> to vector<8x30x256xf32>
    %20 = vector.shape_cast %19 : vector<8x30x256xf32> to vector<8x10x3x256xf32>
    %cst_22 = arith.constant dense<0xFF800000> : vector<8x10x256xf32>
    %21 = vector.multi_reduction <maximumf>, %20, %cst_22 [2] : vector<8x10x3x256xf32> to vector<8x10x256xf32>
    %cst_23 = arith.constant 0.000000e+00 : f32
    %22 = vector.broadcast %cst_23 : f32 to vector<8x3x1024xf32>
    %c0_24 = arith.constant 0 : index
    %c0_25 = arith.constant 0 : index
    %c0_26 = arith.constant 0 : index
    %23 = vector.load %arg12[%c0_24, %c0_25, %c0_26] : memref<8x16x1024xf32, #tpu.memory_space<vmem>>, vector<8x3x1024xf32>
    tpu.vector_store %arg12[%c0_24, %c0_25, %c0_26], %22 {strides = array<i32>} : memref<8x16x1024xf32, #tpu.memory_space<vmem>>, vector<8x3x1024xf32>,
    %cst_27 = arith.constant 0.000000e+00 : f32
    %24 = vector.broadcast %cst_27 : f32 to vector<8x6x1024xf32>
    %c0_28 = arith.constant 0 : index
    %c10 = arith.constant 10 : index
    %c0_29 = arith.constant 0 : index
    %25 = vector.load %arg12[%c0_28, %c10, %c0_29] : memref<8x16x1024xf32, #tpu.memory_space<vmem>>, vector<8x6x1024xf32>
    tpu.vector_store %arg12[%c0_28, %c10, %c0_29], %24 {strides = array<i32>} : memref<8x16x1024xf32, #tpu.memory_space<vmem>>, vector<8x6x1024xf32>,
    %c0_30 = arith.constant 0 : index
    %c3 = arith.constant 3 : index
    %c0_31 = arith.constant 0 : index
    %26 = vector.load %arg12[%c0_30, %c3, %c0_31] : memref<8x16x1024xf32, #tpu.memory_space<vmem>>, vector<8x10x256xf32>
    tpu.vector_store %arg12[%c0_30, %c3, %c0_31], %21 {strides = array<i32>} : memref<8x16x1024xf32, #tpu.memory_space<vmem>>, vector<8x10x256xf32>,
    %c0_32 = arith.constant 0 : index
    %c2_33 = arith.constant 2 : index
    %c256_34 = arith.constant 256 : index
    %27 = vector.load %arg12[%c0_32, %c2_33, %c256_34] : memref<8x16x1024xf32, #tpu.memory_space<vmem>>, vector<8x10x256xf32>
    tpu.vector_store %arg12[%c0_32, %c2_33, %c256_34], %21 {strides = array<i32>} : memref<8x16x1024xf32, #tpu.memory_space<vmem>>, vector<8x10x256xf32>,
    %c0_35 = arith.constant 0 : index
    %c1_36 = arith.constant 1 : index
    %c512 = arith.constant 512 : index
    %28 = vector.load %arg12[%c0_35, %c1_36, %c512] : memref<8x16x1024xf32, #tpu.memory_space<vmem>>, vector<8x10x256xf32>
    tpu.vector_store %arg12[%c0_35, %c1_36, %c512], %21 {strides = array<i32>} : memref<8x16x1024xf32, #tpu.memory_space<vmem>>, vector<8x10x256xf32>,
    %c0_37 = arith.constant 0 : index
    %c0_38 = arith.constant 0 : index
    %c768 = arith.constant 768 : index
    %29 = vector.load %arg12[%c0_37, %c0_38, %c768] : memref<8x16x1024xf32, #tpu.memory_space<vmem>>, vector<8x10x256xf32>
    tpu.vector_store %arg12[%c0_37, %c0_38, %c768], %21 {strides = array<i32>} : memref<8x16x1024xf32, #tpu.memory_space<vmem>>, vector<8x10x256xf32>,
    %c0_39 = arith.constant 0 : index
    %c0_40 = arith.constant 0 : index
    %c0_41 = arith.constant 0 : index
    %30 = vector.load %arg12[%c0_39, %c0_40, %c0_41] : memref<8x16x1024xf32, #tpu.memory_space<vmem>>, vector<8x16x1024xf32>
    %31 = vector.shape_cast %30 : vector<8x16x1024xf32> to vector<128x1024xf32>
    %c0_42 = arith.constant 0 : index
    %c0_43 = arith.constant 0 : index
    %32 = vector.load %arg4[%c0_42, %c0_43] : memref<1024x128xf32, #tpu.memory_space<vmem>>, vector<1024x128xf32>
    %cst_44 = arith.constant dense<0.000000e+00> : vector<128x128xf32>
    %33 = tpu.matmul %31, %32, %cst_44 {dimension_numbers = #tpu.dot_dimension_numbers<[1], [0], [0], [1], [0, 0, 1, 1], [], []>} : vector<128x1024xf32>, vector<1024x128xf32>, vector<128x128xf32> -> vector<128x128xf32>
    %34 = vector.shape_cast %33 : vector<128x128xf32> to vector<8x16x128xf32>
    %35 = vector.extract_strided_slice %34 {offsets = [0, 0, 0], sizes = [8, 13, 128], strides = [1, 1, 1]} : vector<8x16x128xf32> to vector<8x13x128xf32>
    %c0_45 = arith.constant 0 : index
    %c0_46 = arith.constant 0 : index
    %36 = vector.load %arg5[%c0_45, %c0_46] : memref<1x128xf32, #tpu.memory_space<vmem>>, vector<1x128xf32>
    %37 = vector.shape_cast %36 : vector<1x128xf32> to vector<1x1x128xf32>
    %38 = vector.broadcast %37 : vector<1x1x128xf32> to vector<8x13x128xf32>
    %39 = arith.addf %35, %38 : vector<8x13x128xf32>
    %cst_47 = arith.constant 0.000000e+00 : f32
    %40 = vector.broadcast %cst_47 : f32 to vector<8x13x128xf32>
    %41 = arith.maximumf %39, %40 : vector<8x13x128xf32>
    %cst_48 = arith.constant 0.000000e+00 : f32
    %42 = vector.broadcast %cst_48 : f32 to vector<8x4x640xf32>
    %c0_49 = arith.constant 0 : index
    %c0_50 = arith.constant 0 : index
    %c0_51 = arith.constant 0 : index
    %43 = vector.load %arg13[%c0_49, %c0_50, %c0_51] : memref<8x24x640xf32, #tpu.memory_space<vmem>>, vector<8x4x640xf32>
    tpu.vector_store %arg13[%c0_49, %c0_50, %c0_51], %42 {strides = array<i32>} : memref<8x24x640xf32, #tpu.memory_space<vmem>>, vector<8x4x640xf32>,
    %cst_52 = arith.constant 0.000000e+00 : f32
    %44 = vector.broadcast %cst_52 : f32 to vector<8x11x640xf32>
    %c0_53 = arith.constant 0 : index
    %c13 = arith.constant 13 : index
    %c0_54 = arith.constant 0 : index
    %45 = vector.load %arg13[%c0_53, %c13, %c0_54] : memref<8x24x640xf32, #tpu.memory_space<vmem>>, vector<8x11x640xf32>
    tpu.vector_store %arg13[%c0_53, %c13, %c0_54], %44 {strides = array<i32>} : memref<8x24x640xf32, #tpu.memory_space<vmem>>, vector<8x11x640xf32>,
    %c0_55 = arith.constant 0 : index
    %c4 = arith.constant 4 : index
    %c0_56 = arith.constant 0 : index
    %46 = vector.load %arg13[%c0_55, %c4, %c0_56] : memref<8x24x640xf32, #tpu.memory_space<vmem>>, vector<8x13x128xf32>
    tpu.vector_store %arg13[%c0_55, %c4, %c0_56], %41 {strides = array<i32>} : memref<8x24x640xf32, #tpu.memory_space<vmem>>, vector<8x13x128xf32>,
    %c0_57 = arith.constant 0 : index
    %c3_58 = arith.constant 3 : index
    %c128_59 = arith.constant 128 : index
    %47 = vector.load %arg13[%c0_57, %c3_58, %c128_59] : memref<8x24x640xf32, #tpu.memory_space<vmem>>, vector<8x13x128xf32>
    tpu.vector_store %arg13[%c0_57, %c3_58, %c128_59], %41 {strides = array<i32>} : memref<8x24x640xf32, #tpu.memory_space<vmem>>, vector<8x13x128xf32>,
    %c0_60 = arith.constant 0 : index
    %c2_61 = arith.constant 2 : index
    %c256_62 = arith.constant 256 : index
    %48 = vector.load %arg13[%c0_60, %c2_61, %c256_62] : memref<8x24x640xf32, #tpu.memory_space<vmem>>, vector<8x13x128xf32>
    tpu.vector_store %arg13[%c0_60, %c2_61, %c256_62], %41 {strides = array<i32>} : memref<8x24x640xf32, #tpu.memory_space<vmem>>, vector<8x13x128xf32>,
    %c0_63 = arith.constant 0 : index
    %c1_64 = arith.constant 1 : index
    %c384 = arith.constant 384 : index
    %49 = vector.load %arg13[%c0_63, %c1_64, %c384] : memref<8x24x640xf32, #tpu.memory_space<vmem>>, vector<8x13x128xf32>
    tpu.vector_store %arg13[%c0_63, %c1_64, %c384], %41 {strides = array<i32>} : memref<8x24x640xf32, #tpu.memory_space<vmem>>, vector<8x13x128xf32>,
    %c0_65 = arith.constant 0 : index
    %c0_66 = arith.constant 0 : index
    %c512_67 = arith.constant 512 : index
    %50 = vector.load %arg13[%c0_65, %c0_66, %c512_67] : memref<8x24x640xf32, #tpu.memory_space<vmem>>, vector<8x13x128xf32>
    tpu.vector_store %arg13[%c0_65, %c0_66, %c512_67], %41 {strides = array<i32>} : memref<8x24x640xf32, #tpu.memory_space<vmem>>, vector<8x13x128xf32>,
    %c0_68 = arith.constant 0 : index
    %c0_69 = arith.constant 0 : index
    %c0_70 = arith.constant 0 : index
    %51 = vector.load %arg13[%c0_68, %c0_69, %c0_70] : memref<8x24x640xf32, #tpu.memory_space<vmem>>, vector<8x24x640xf32>
    %52 = vector.shape_cast %51 : vector<8x24x640xf32> to vector<192x640xf32>
    %c0_71 = arith.constant 0 : index
    %c0_72 = arith.constant 0 : index
    %53 = vector.load %arg6[%c0_71, %c0_72] : memref<640x128xf32, #tpu.memory_space<vmem>>, vector<640x128xf32>
    %cst_73 = arith.constant dense<0.000000e+00> : vector<192x128xf32>
    %54 = tpu.matmul %52, %53, %cst_73 {dimension_numbers = #tpu.dot_dimension_numbers<[1], [0], [0], [1], [0, 0, 1, 1], [], []>} : vector<192x640xf32>, vector<640x128xf32>, vector<192x128xf32> -> vector<192x128xf32>
    %55 = vector.shape_cast %54 : vector<192x128xf32> to vector<8x24x128xf32>
    %56 = vector.extract_strided_slice %55 {offsets = [0, 0, 0], sizes = [8, 17, 128], strides = [1, 1, 1]} : vector<8x24x128xf32> to vector<8x17x128xf32>
    %c0_74 = arith.constant 0 : index
    %c0_75 = arith.constant 0 : index
    %57 = vector.load %arg7[%c0_74, %c0_75] : memref<1x128xf32, #tpu.memory_space<vmem>>, vector<1x128xf32>
    %58 = vector.shape_cast %57 : vector<1x128xf32> to vector<1x1x128xf32>
    %59 = vector.broadcast %58 : vector<1x1x128xf32> to vector<8x17x128xf32>
    %60 = arith.addf %56, %59 : vector<8x17x128xf32>
    %cst_76 = arith.constant 0.000000e+00 : f32
    %61 = vector.broadcast %cst_76 : f32 to vector<8x17x128xf32>
    %62 = arith.maximumf %60, %61 : vector<8x17x128xf32>
    %cst_77 = arith.constant dense<0xFF800000> : vector<8x17xf32>
    %63 = vector.multi_reduction <maximumf>, %62, %cst_77 [2] : vector<8x17x128xf32> to vector<8x17xf32>
    %c0_78 = arith.constant 0 : index
    %c0_79 = arith.constant 0 : index
    %64 = vector.load %arg8[%c0_78, %c0_79] : memref<17x128xf32, #tpu.memory_space<vmem>>, vector<17x128xf32>
    %cst_80 = arith.constant dense<0.000000e+00> : vector<8x128xf32>
    %65 = tpu.matmul %63, %64, %cst_80 {dimension_numbers = #tpu.dot_dimension_numbers<[1], [0], [0], [1], [0, 0, 1, 1], [], []>} : vector<8x17xf32>, vector<17x128xf32>, vector<8x128xf32> -> vector<8x128xf32>
    %c0_81 = arith.constant 0 : index
    %c0_82 = arith.constant 0 : index
    %66 = vector.load %arg9[%c0_81, %c0_82] : memref<1x128xf32, #tpu.memory_space<vmem>>, vector<1x128xf32>
    %67 = vector.broadcast %66 : vector<1x128xf32> to vector<8x128xf32>
    %68 = arith.addf %65, %67 : vector<8x128xf32>
    %c0_83 = arith.constant 0 : index
    %c0_84 = arith.constant 0 : index
    %69 = vector.load %arg10[%c0_83, %c0_84] : memref<8x128xf32, #tpu.memory_space<vmem>>, vector<8x128xf32>
    tpu.vector_store %arg10[%c0_83, %c0_84], %68 {strides = array<i32>} : memref<8x128xf32, #tpu.memory_space<vmem>>, vector<8x128xf32>,
    return
  }
  func.func @transform_0(%arg0: i32) -> (i32, i32, i32) {
    %c0_i32 = arith.constant 0 : i32
    %c0_i32_0 = arith.constant 0 : i32
    %c0_i32_1 = arith.constant 0 : i32
    return %arg0, %c0_i32, %c0_i32_0 : i32, i32, i32
  }
  func.func @transform_1(%arg0: i32) -> (i32, i32) {
    %c0_i32 = arith.constant 0 : i32
    %c0_i32_0 = arith.constant 0 : i32
    %c0_i32_1 = arith.constant 0 : i32
    return %c0_i32, %c0_i32_0 : i32, i32
  }
  func.func @transform_2(%arg0: i32) -> (i32, i32) {
    %c0_i32 = arith.constant 0 : i32
    %c0_i32_0 = arith.constant 0 : i32
    %c0_i32_1 = arith.constant 0 : i32
    return %c0_i32, %c0_i32_0 : i32, i32
  }
  func.func @transform_3(%arg0: i32) -> (i32, i32) {
    %c0_i32 = arith.constant 0 : i32
    %c0_i32_0 = arith.constant 0 : i32
    %c0_i32_1 = arith.constant 0 : i32
    return %c0_i32, %c0_i32_0 : i32, i32
  }
  func.func @transform_4(%arg0: i32) -> (i32, i32) {
    %c0_i32 = arith.constant 0 : i32
    %c0_i32_0 = arith.constant 0 : i32
    %c0_i32_1 = arith.constant 0 : i32
    return %c0_i32, %c0_i32_0 : i32, i32
  }
  func.func @transform_5(%arg0: i32) -> (i32, i32) {
    %c0_i32 = arith.constant 0 : i32
    %c0_i32_0 = arith.constant 0 : i32
    %c0_i32_1 = arith.constant 0 : i32
    return %c0_i32, %c0_i32_0 : i32, i32
  }
  func.func @transform_6(%arg0: i32) -> (i32, i32) {
    %c0_i32 = arith.constant 0 : i32
    %c0_i32_0 = arith.constant 0 : i32
    %c0_i32_1 = arith.constant 0 : i32
    return %c0_i32, %c0_i32_0 : i32, i32
  }
  func.func @transform_7(%arg0: i32) -> (i32, i32) {
    %c0_i32 = arith.constant 0 : i32
    %c0_i32_0 = arith.constant 0 : i32
    %c0_i32_1 = arith.constant 0 : i32
    return %c0_i32, %c0_i32_0 : i32, i32
  }
  func.func @transform_8(%arg0: i32) -> (i32, i32) {
    %c0_i32 = arith.constant 0 : i32
    %c0_i32_0 = arith.constant 0 : i32
    %c0_i32_1 = arith.constant 0 : i32
    return %c0_i32, %c0_i32_0 : i32, i32
  }
  func.func @transform_9(%arg0: i32) -> (i32, i32) {
    %c0_i32 = arith.constant 0 : i32
    %c0_i32_0 = arith.constant 0 : i32
    return %arg0, %c0_i32 : i32, i32
  }
}

</mosaic_0001>

<llo_original>
// kernel: tpu_custom_call.1
$region0: #{tpu_custom_call.1}
  #allocation0 [shape = 'u32[]', space=smem, size = 0x4, offset = 0x4, fixed_abs, tag = 'smem constant byte address 0x4 - core index']
  #allocation1 [shape = 'u32[144,128]{1,0:T(1,128)}', space=vmem, size = 0x12000, scoped, tag = 'internal scratch']
  #allocation2 [shape = 'f32[8,32,384]{2,1,0:T(8,128)}', space=vmem, size = 0x60000, scoped, tag = 'scratch operand']
  #allocation3 [shape = 'f32[8,16,1024]{2,1,0:T(8,128)}', space=vmem, size = 0x80000, scoped, tag = 'scratch operand']
  #allocation4 [shape = 'f32[8,24,640]{2,1,0:T(8,128)}', space=vmem, size = 0x78000, scoped, tag = 'scratch operand']
  %s0 = inlined_call_operand.vmem [shape: f32[16,30,128], index: 0, kind: input, shape index: {}]
  %s1 = inlined_call_operand.vmem [shape: f32[384,256], index: 1, kind: input, shape index: {}]
  %s2 = inlined_call_operand.vmem [shape: f32[1,256], index: 2, kind: input, shape index: {}]
  %s3 = inlined_call_operand.hbm [shape: f32[1024,128], index: 3, kind: input, shape index: {}]
  %s4 = inlined_call_operand.vmem [shape: f32[1,128], index: 4, kind: input, shape index: {}]
  %s5 = inlined_call_operand.hbm [shape: f32[640,128], index: 5, kind: input, shape index: {}]
  %s6 = inlined_call_operand.vmem [shape: f32[1,128], index: 6, kind: input, shape index: {}]
  %s7 = inlined_call_operand.vmem [shape: f32[17,128], index: 7, kind: input, shape index: {}]
  %s8 = inlined_call_operand.vmem [shape: f32[1,128], index: 8, kind: input, shape index: {}]
  %s9 = inlined_call_operand.hbm [shape: f32[16,128], index: 9, kind: output, shape index: {}]
  %s10 = sld [smem:[#allocation0]]
  $region77: #{tpu_custom_call.1} parent=0
    _
  %s12 = ssub.s32 1, %s10
  %s13 = scalar_select 0, %s12, %s10
  $region1: #{tpu_custom_call.1} parent=0
    #allocation5 [shape = 'u8[524288]{0}', space=vmem, size = 0x80000, scoped, tag = 'input window, operand 3, single buffered']
    #allocation6 [shape = 's32[2]{0}', space=sflag, size = 0x8, scoped, tag = 'scoped memory for tpu_custom_call.1']
    #allocation7 [shape = 's32[2]{0}', space=sflag, size = 0x8, scoped, tag = 'scoped memory for tpu_custom_call.1']
    #allocation8 [shape = 'u8[327680]{0}', space=vmem, size = 0x50000, scoped, tag = 'input window, operand 5, single buffered']
    #allocation9 [shape = 's32[1]{0}', space=sflag, size = 0x4, scoped, tag = 'scoped memory for tpu_custom_call.1']
    #allocation10 [shape = 'u8[8192]{0}', space=vmem, size = 0x2000, scoped, tag = 'output window, operand 0']
    %14 = vsyncpa [#allocation6], 0
    %15 = vsyncpa [#allocation9], 0
    %16 = vsyncpa [#allocation7], 0
    %s17 = scalar_lea.sflag [#allocation7], 1
    %18 = vsyncpa %s17, 0
    loop: start=0, step=1, limit=4
    $region2: #{tpu_custom_call.1} parent=1 // loop_pre_header
      _
    $region3: #{tpu_custom_call.1} parent=1 // loop_header
      %s20 = sphi 0, %s24
      %p21 = scmp.ge.s32.totalorder %s20, 4
      %s30 = sphi 0, %s32
      %s33 = sphi 0, %s30
      %s34 = sphi 0, %s33
      %s50 = sphi 0, %s34
      %s54 = sphi 0, %s54
      %s56 = sphi 0, %s54
      %s57 = sphi 0, %s56
      %s71 = sphi 0, %s57
      %s75 = sphi 0, %s75
      %s77 = sphi 0, %s75
      %s78 = sphi 0, %s77
      %s92 = sphi 0, %s78
      %s96 = sphi 0, %s96
      %s98 = sphi 0, %s96
      %s99 = sphi 0, %s98
      %s113 = sphi 0, %s99
      %s117 = sphi 0, %s117
      %s119 = sphi 0, %s117
      %s120 = sphi 0, %s119
      %s134 = sphi 0, %s120
      %s138 = sphi 0, %s138
      %s140 = sphi 0, %s138
      %s141 = sphi 0, %s140
      %s155 = sphi 0, %s141
      %s159 = sphi 0, %s159
      %s161 = sphi 0, %s159
      %s162 = sphi 0, %s161
      %s176 = sphi 0, %s162
      %s180 = sphi 0, %s180
      %s182 = sphi 0, %s180
      %s183 = sphi 0, %s182
      %s197 = sphi 0, %s183
      %s201 = sphi 0, %s201
      %s203 = sphi 0, %s201
      %s204 = sphi 0, %s203
      %s218 = sphi 0, %s204
      %s224 = sphi 0, %s226
      %s227 = sphi 0, %s224
      %s228 = sphi 0, %s227
      %s244 = sphi 0, %s228
    $region4: #{tpu_custom_call.1} parent=1 // loop_header_branch
      %23 = sbr.rel (%p21) target = $region8
    $region5: #{tpu_custom_call.1} parent=1 // loop_body
      %s25 = ssub.s32 %s20, 1
      %s26 = ssub.s32 %s20, 2
      %s27 = sadd.s32 %s20, 1
      %s28 = ssub.s32 %s20, %s27
      %p29 = scmp.eq.s32.totalorder %s28, 0
      %s31 = sadd.s32 %s30, 1
      %s32 = scalar_select %p29, %s30, %s31
      %p35 = pneg %p29
      %p36 = scmp.eq.s32.totalorder %s20, 1
      %p37 = por %p35, %p36
      %p38 = scmp.ne.s32.totalorder %s30, %s33
      %p39 = scmp.eq.s32.totalorder %s20, 0
      %p40 = por %p38, %p39
      %p41 = scmp.ne.s32.totalorder %s30, %s33
      %p42 = scmp.eq.s32.totalorder %s25, 1
      %p43 = por %p41, %p42
      %p44 = scmp.ne.s32.totalorder %s33, %s34
      %p45 = scmp.eq.s32.totalorder %s25, 0
      %p46 = por %p44, %p45
      %p47 = scmp.ne.s32.totalorder %s33, %s34
      %p48 = scmp.eq.s32.totalorder %s26, 1
      %p49 = por %p47, %p48
      %p51 = scmp.ne.s32.totalorder %s34, %s50
      %p52 = scmp.eq.s32.totalorder %s26, 0
      %p53 = por %p51, %p52
      %s55 = sadd.s32 %s54, 1
      %p58 = scmp.eq.s32.totalorder %s20, 1
      %p59 = scmp.ne.s32.totalorder %s54, %s56
      %p60 = scmp.eq.s32.totalorder %s20, 0
      %p61 = por %p59, %p60
      %p62 = scmp.ne.s32.totalorder %s54, %s56
      %p63 = scmp.eq.s32.totalorder %s25, 1
      %p64 = por %p62, %p63
      %p65 = scmp.ne.s32.totalorder %s56, %s57
      %p66 = scmp.eq.s32.totalorder %s25, 0
      %p67 = por %p65, %p66
      %p68 = scmp.ne.s32.totalorder %s56, %s57
      %p69 = scmp.eq.s32.totalorder %s26, 1
      %p70 = por %p68, %p69
      %p72 = scmp.ne.s32.totalorder %s57, %s71
      %p73 = scmp.eq.s32.totalorder %s26, 0
      %p74 = por %p72, %p73
      %s76 = sadd.s32 %s75, 1
      %p79 = scmp.eq.s32.totalorder %s20, 1
      %p80 = scmp.ne.s32.totalorder %s75, %s77
      %p81 = scmp.eq.s32.totalorder %s20, 0
      %p82 = por %p80, %p81
      %p83 = scmp.ne.s32.totalorder %s75, %s77
      %p84 = scmp.eq.s32.totalorder %s25, 1
      %p85 = por %p83, %p84
      %p86 = scmp.ne.s32.totalorder %s77, %s78
      %p87 = scmp.eq.s32.totalorder %s25, 0
      %p88 = por %p86, %p87
      %p89 = scmp.ne.s32.totalorder %s77, %s78
      %p90 = scmp.eq.s32.totalorder %s26, 1
      %p91 = por %p89, %p90
      %p93 = scmp.ne.s32.totalorder %s78, %s92
      %p94 = scmp.eq.s32.totalorder %s26, 0
      %p95 = por %p93, %p94
      %s97 = sadd.s32 %s96, 1
      %p100 = scmp.eq.s32.totalorder %s20, 1
      %p101 = scmp.ne.s32.totalorder %s96, %s98
      %p102 = scmp.eq.s32.totalorder %s20, 0
      %p103 = por %p101, %p102
      %p104 = scmp.ne.s32.totalorder %s96, %s98
      %p105 = scmp.eq.s32.totalorder %s25, 1
      %p106 = por %p104, %p105
      %p107 = scmp.ne.s32.totalorder %s98, %s99
      %p108 = scmp.eq.s32.totalorder %s25, 0
      %p109 = por %p107, %p108
      %p110 = scmp.ne.s32.totalorder %s98, %s99
      %p111 = scmp.eq.s32.totalorder %s26, 1
      %p112 = por %p110, %p111
      %p114 = scmp.ne.s32.totalorder %s99, %s113
      %p115 = scmp.eq.s32.totalorder %s26, 0
      %p116 = por %p114, %p115
      %s118 = sadd.s32 %s117, 1
      %p121 = scmp.eq.s32.totalorder %s20, 1
      %p122 = scmp.ne.s32.totalorder %s117, %s119
      %p123 = scmp.eq.s32.totalorder %s20, 0
      %p124 = por %p122, %p123
      %p125 = scmp.ne.s32.totalorder %s117, %s119
      %p126 = scmp.eq.s32.totalorder %s25, 1
      %p127 = por %p125, %p126
      %p128 = scmp.ne.s32.totalorder %s119, %s120
      %p129 = scmp.eq.s32.totalorder %s25, 0
      %p130 = por %p128, %p129
      %p131 = scmp.ne.s32.totalorder %s119, %s120
      %p132 = scmp.eq.s32.totalorder %s26, 1
      %p133 = por %p131, %p132
      %p135 = scmp.ne.s32.totalorder %s120, %s134
      %p136 = scmp.eq.s32.totalorder %s26, 0
      %p137 = por %p135, %p136
      %s139 = sadd.s32 %s138, 1
      %p142 = scmp.eq.s32.totalorder %s20, 1
      %p143 = scmp.ne.s32.totalorder %s138, %s140
      %p144 = scmp.eq.s32.totalorder %s20, 0
      %p145 = por %p143, %p144
      %p146 = scmp.ne.s32.totalorder %s138, %s140
      %p147 = scmp.eq.s32.totalorder %s25, 1
      %p148 = por %p146, %p147
      %p149 = scmp.ne.s32.totalorder %s140, %s141
      %p150 = scmp.eq.s32.totalorder %s25, 0
      %p151 = por %p149, %p150
      %p152 = scmp.ne.s32.totalorder %s140, %s141
      %p153 = scmp.eq.s32.totalorder %s26, 1
      %p154 = por %p152, %p153
      %p156 = scmp.ne.s32.totalorder %s141, %s155
      %p157 = scmp.eq.s32.totalorder %s26, 0
      %p158 = por %p156, %p157
      %s160 = sadd.s32 %s159, 1
      %p163 = scmp.eq.s32.totalorder %s20, 1
      %p164 = scmp.ne.s32.totalorder %s159, %s161
      %p165 = scmp.eq.s32.totalorder %s20, 0
      %p166 = por %p164, %p165
      %p167 = scmp.ne.s32.totalorder %s159, %s161
      %p168 = scmp.eq.s32.totalorder %s25, 1
      %p169 = por %p167, %p168
      %p170 = scmp.ne.s32.totalorder %s161, %s162
      %p171 = scmp.eq.s32.totalorder %s25, 0
      %p172 = por %p170, %p171
      %p173 = scmp.ne.s32.totalorder %s161, %s162
      %p174 = scmp.eq.s32.totalorder %s26, 1
      %p175 = por %p173, %p174
      %p177 = scmp.ne.s32.totalorder %s162, %s176
      %p178 = scmp.eq.s32.totalorder %s26, 0
      %p179 = por %p177, %p178
      %s181 = sadd.s32 %s180, 1
      %p184 = scmp.eq.s32.totalorder %s20, 1
      %p185 = scmp.ne.s32.totalorder %s180, %s182
      %p186 = scmp.eq.s32.totalorder %s20, 0
      %p187 = por %p185, %p186
      %p188 = scmp.ne.s32.totalorder %s180, %s182
      %p189 = scmp.eq.s32.totalorder %s25, 1
      %p190 = por %p188, %p189
      %p191 = scmp.ne.s32.totalorder %s182, %s183
      %p192 = scmp.eq.s32.totalorder %s25, 0
      %p193 = por %p191, %p192
      %p194 = scmp.ne.s32.totalorder %s182, %s183
      %p195 = scmp.eq.s32.totalorder %s26, 1
      %p196 = por %p194, %p195
      %p198 = scmp.ne.s32.totalorder %s183, %s197
      %p199 = scmp.eq.s32.totalorder %s26, 0
      %p200 = por %p198, %p199
      %s202 = sadd.s32 %s201, 1
      %p205 = scmp.eq.s32.totalorder %s20, 1
      %p206 = scmp.ne.s32.totalorder %s201, %s203
      %p207 = scmp.eq.s32.totalorder %s20, 0
      %p208 = por %p206, %p207
      %p209 = scmp.ne.s32.totalorder %s201, %s203
      %p210 = scmp.eq.s32.totalorder %s25, 1
      %p211 = por %p209, %p210
      %p212 = scmp.ne.s32.totalorder %s203, %s204
      %p213 = scmp.eq.s32.totalorder %s25, 0
      %p214 = por %p212, %p213
      %p215 = scmp.ne.s32.totalorder %s203, %s204
      %p216 = scmp.eq.s32.totalorder %s26, 1
      %p217 = por %p215, %p216
      %p219 = scmp.ne.s32.totalorder %s204, %s218
      %p220 = scmp.eq.s32.totalorder %s26, 0
      %p221 = por %p219, %p220
      %s222 = ssub.s32 %s20, %s27
      %p223 = scmp.eq.s32.totalorder %s222, 0
      %s225 = sadd.s32 %s224, 1
      %s226 = scalar_select %p223, %s224, %s225
      %p229 = pneg %p223
      %p230 = scmp.eq.s32.totalorder %s20, 1
      %p231 = por %p229, %p230
      %p232 = scmp.ne.s32.totalorder %s224, %s227
      %p233 = scmp.eq.s32.totalorder %s20, 0
      %p234 = por %p232, %p233
      %p235 = scmp.ne.s32.totalorder %s224, %s227
      %p236 = scmp.eq.s32.totalorder %s25, 1
      %p237 = por %p235, %p236
      %p238 = scmp.ne.s32.totalorder %s227, %s228
      %p239 = scmp.eq.s32.totalorder %s25, 0
      %p240 = por %p238, %p239
      %p241 = scmp.ne.s32.totalorder %s227, %s228
      %p242 = scmp.eq.s32.totalorder %s26, 1
      %p243 = por %p241, %p242
      %p245 = scmp.ne.s32.totalorder %s228, %s244
      %p246 = scmp.eq.s32.totalorder %s26, 0
      %p247 = por %p245, %p246
      %p248 = scmp.le.s32.totalorder 1, %s20
      %p249 = scmp.lt.s32.totalorder %s20, 3
      %p250 = pnand %p248, %p249
      %p251 = pneg %p250
      // Predicated region
      $region9: #{tpu_custom_call.1} parent=5 // pred_check
        _
      $region10: #{tpu_custom_call.1} parent=5 // pred_check_branch
        %253 = sbr.rel (%p250) target = $region12
      $region11: #{tpu_custom_call.1} parent=5 // pred_region
        %s254 = ssub.s32 %s20, 1
        // Predicated region
        $region13: #{tpu_custom_call.1} parent=11 // pred_check
          %p255 = pneg %p67
        $region14: #{tpu_custom_call.1} parent=11 // pred_check_branch
          %257 = sbr.rel (%p255) target = $region16
        $region15: #{tpu_custom_call.1} parent=11 // pred_region
          _
        $region16: #{tpu_custom_call.1} parent=11 // pred_fallthru
          _
        // Predicated region
        $region17: #{tpu_custom_call.1} parent=11 // pred_check
          %p258 = pneg %p88
        $region18: #{tpu_custom_call.1} parent=11 // pred_check_branch
          %260 = sbr.rel (%p258) target = $region20
        $region19: #{tpu_custom_call.1} parent=11 // pred_region
          _
        $region20: #{tpu_custom_call.1} parent=11 // pred_fallthru
          _
        // Predicated region
        $region21: #{tpu_custom_call.1} parent=11 // pred_check
          %p261 = pneg %p109
        $region22: #{tpu_custom_call.1} parent=11 // pred_check_branch
          %263 = sbr.rel (%p261) target = $region24
        $region23: #{tpu_custom_call.1} parent=11 // pred_region
          %s265 = ssub.s32 16384, 16384
          %266 = vsyncadd [#allocation6], %s265
          %s267 = sshll.u32 [#allocation5], 4
          %s268 = int_to_ptr.vmem [resolvable:$true] %s267
          %273 = dma.hbm_to_vmem [thread:$0]  %s3, 16384, %s268, [#allocation6], 128, 128, 8
        $region24: #{tpu_custom_call.1} parent=11 // pred_fallthru
          _
        // Predicated region
        $region25: #{tpu_custom_call.1} parent=11 // pred_check
          %p274 = pneg %p130
        $region26: #{tpu_custom_call.1} parent=11 // pred_check_branch
          %276 = sbr.rel (%p274) target = $region28
        $region27: #{tpu_custom_call.1} parent=11 // pred_region
          _
        $region28: #{tpu_custom_call.1} parent=11 // pred_fallthru
          _
        // Predicated region
        $region29: #{tpu_custom_call.1} parent=11 // pred_check
          %p277 = pneg %p151
        $region30: #{tpu_custom_call.1} parent=11 // pred_check_branch
          %279 = sbr.rel (%p277) target = $region32
        $region31: #{tpu_custom_call.1} parent=11 // pred_region
          %s281 = ssub.s32 10240, 10240
          %282 = vsyncadd [#allocation9], %s281
          %s283 = sshll.u32 [#allocation8], 4
          %s284 = int_to_ptr.vmem [resolvable:$true] %s283
          %289 = dma.hbm_to_vmem [thread:$0]  %s5, 10240, %s284, [#allocation9], 128, 128, 8
        $region32: #{tpu_custom_call.1} parent=11 // pred_fallthru
          _
        // Predicated region
        $region33: #{tpu_custom_call.1} parent=11 // pred_check
          %p290 = pneg %p172
        $region34: #{tpu_custom_call.1} parent=11 // pred_check_branch
          %292 = sbr.rel (%p290) target = $region36
        $region35: #{tpu_custom_call.1} parent=11 // pred_region
          _
        $region36: #{tpu_custom_call.1} parent=11 // pred_fallthru
          _
        // Predicated region
        $region37: #{tpu_custom_call.1} parent=11 // pred_check
          %p293 = pneg %p193
        $region38: #{tpu_custom_call.1} parent=11 // pred_check_branch
          %295 = sbr.rel (%p293) target = $region40
        $region39: #{tpu_custom_call.1} parent=11 // pred_region
          _
        $region40: #{tpu_custom_call.1} parent=11 // pred_fallthru
          _
        // Predicated region
        $region41: #{tpu_custom_call.1} parent=11 // pred_check
          %p296 = pneg %p214
        $region42: #{tpu_custom_call.1} parent=11 // pred_check_branch
          %298 = sbr.rel (%p296) target = $region44
        $region43: #{tpu_custom_call.1} parent=11 // pred_region
          _
        $region44: #{tpu_custom_call.1} parent=11 // pred_fallthru
          _
      $region12: #{tpu_custom_call.1} parent=5 // pred_fallthru
        _
      %p299 = scmp.lt.s32.totalorder %s20, 2
      // Predicated region
      $region45: #{tpu_custom_call.1} parent=5 // pred_check
        %p300 = pneg %p299
      $region46: #{tpu_custom_call.1} parent=5 // pred_check_branch
        %302 = sbr.rel (%p300) target = $region48
      $region47: #{tpu_custom_call.1} parent=5 // pred_region
        // Predicated region
        $region49: #{tpu_custom_call.1} parent=47 // pred_check
          %p303 = pneg %p40
        $region50: #{tpu_custom_call.1} parent=47 // pred_check_branch
          %305 = sbr.rel (%p303) target = $region52
        $region51: #{tpu_custom_call.1} parent=47 // pred_region
          %s306 = smul.u32 8, %s20
          %p307 = scmp.lt.s32.totalorder %s306, 15
          %s308 = scalar_select %p307, %s306, 15
          %s309 = smul.addr %s308, 4
          %s310 = smul.addr %s309, 8
          %s311 = scalar_lea.vmem %s0, %s310
          %s312 = smul.u32 8, %s20
        $region52: #{tpu_custom_call.1} parent=47 // pred_fallthru
          _
      $region48: #{tpu_custom_call.1} parent=5 // pred_fallthru
        _
      %p313 = scmp.le.s32.totalorder 1, %s20
      %p314 = scmp.lt.s32.totalorder %s20, 3
      %p315 = pnand %p313, %p314
      %p316 = pneg %p315
      // Predicated region
      $region53: #{tpu_custom_call.1} parent=5 // pred_check
        _
      $region54: #{tpu_custom_call.1} parent=5 // pred_check_branch
        %318 = sbr.rel (%p315) target = $region56
      $region55: #{tpu_custom_call.1} parent=5 // pred_region
        %s319 = ssub.s32 %s20, 1
        // Predicated region
        $region57: #{tpu_custom_call.1} parent=55 // pred_check
          %p320 = pneg %p109
        $region58: #{tpu_custom_call.1} parent=55 // pred_check_branch
          %322 = sbr.rel (%p320) target = $region60
        $region59: #{tpu_custom_call.1} parent=55 // pred_region
          %323 = dma.done [#allocation6], 16384
        $region60: #{tpu_custom_call.1} parent=55 // pred_fallthru
          _
        // Predicated region
        $region61: #{tpu_custom_call.1} parent=55 // pred_check
          %p324 = pneg %p151
        $region62: #{tpu_custom_call.1} parent=55 // pred_check_branch
          %326 = sbr.rel (%p324) target = $region64
        $region63: #{tpu_custom_call.1} parent=55 // pred_region
          %327 = dma.done [#allocation9], 10240
        $region64: #{tpu_custom_call.1} parent=55 // pred_fallthru
          _
        %s328 = smul.u32 8, %s25
        %p329 = scmp.lt.s32.totalorder %s328, 15
        %s330 = scalar_select %p329, %s328, 15
        %s331 = smul.addr %s330, 4
        %s332 = smul.addr %s331, 8
        %s333 = scalar_lea.vmem %s0, %s332
        %p334 = pneg %p46
        %p335 = pneg %p43
        %p336 = pneg %p67
        %p337 = pneg %p64
        %p338 = pneg %p88
        %p339 = pneg %p85
        %p340 = pneg %p109
        %p341 = pneg %p106
        %p342 = pneg %p130
        %p343 = pneg %p127
        %p344 = pneg %p151
        %p345 = pneg %p148
        %p346 = pneg %p172
        %p347 = pneg %p169
        %p348 = pneg %p193
        %p349 = pneg %p190
        %p350 = pneg %p214
        %p351 = pneg %p211
        %p352 = pneg %p240
        %p353 = pneg %p237
        %s354 = sand.u32 %s227, 1
        %s355 = scalar_lea.sflag [#allocation7], %s354
        %s356 = sand.u32 %s227, 1
        %s357 = smul.addr %s356, 8
        %s358 = scalar_lea.vmem [#allocation10], %s357
        %s359 = smul.u32 8, %s25
        %p360 = scmp.lt.s32.totalorder %s359, 15
        %s361 = scalar_select %p360, %s359, 15
        %s362 = smul.addr %s361, 4
        %s363 = smul.addr %s362, 8
        %s364 = scalar_lea.vmem %s0, %s363
        %s365 = smul.u32 8, %s25
        %v366 = vld [vmem:[%s364] sm:$0xff]
        %v367 = vld [vmem:[%s364 + $0x8] sm:$0xff]
        %v368 = vld [vmem:[%s364 + $0x10] sm:$0xff]
        %v369 = vld [vmem:[%s364 + $0x18] sm:$0x3f]
        %v370 = vld [vmem:[%s364 + $0x20] sm:$0xff]
        %v371 = vld [vmem:[%s364 + $0x28] sm:$0xff]
        %v372 = vld [vmem:[%s364 + $0x30] sm:$0xff]
        %v373 = vld [vmem:[%s364 + $0x38] sm:$0x3f]
        %v374 = vld [vmem:[%s364 + $0x40] sm:$0xff]
        %v375 = vld [vmem:[%s364 + $0x48] sm:$0xff]
        %v376 = vld [vmem:[%s364 + $0x50] sm:$0xff]
        %v377 = vld [vmem:[%s364 + $0x58] sm:$0x3f]
        %v378 = vld [vmem:[%s364 + $0x60] sm:$0xff]
        %v379 = vld [vmem:[%s364 + $0x68] sm:$0xff]
        %v380 = vld [vmem:[%s364 + $0x70] sm:$0xff]
        %v381 = vld [vmem:[%s364 + $0x78] sm:$0x3f]
        %v382 = vld [vmem:[%s364 + $0x80] sm:$0xff]
        %v383 = vld [vmem:[%s364 + $0x88] sm:$0xff]
        %v384 = vld [vmem:[%s364 + $0x90] sm:$0xff]
        %v385 = vld [vmem:[%s364 + $0x98] sm:$0x3f]
        %v386 = vld [vmem:[%s364 + $0xa0] sm:$0xff]
        %v387 = vld [vmem:[%s364 + $0xa8] sm:$0xff]
        %v388 = vld [vmem:[%s364 + $0xb0] sm:$0xff]
        %v389 = vld [vmem:[%s364 + $0xb8] sm:$0x3f]
        %v390 = vld [vmem:[%s364 + $0xc0] sm:$0xff]
        %v391 = vld [vmem:[%s364 + $0xc8] sm:$0xff]
        %v392 = vld [vmem:[%s364 + $0xd0] sm:$0xff]
        %v393 = vld [vmem:[%s364 + $0xd8] sm:$0x3f]
        %v394 = vld [vmem:[%s364 + $0xe0] sm:$0xff]
        %v395 = vld [vmem:[%s364 + $0xe8] sm:$0xff]
        %v396 = vld [vmem:[%s364 + $0xf0] sm:$0xff]
        %v397 = vld [vmem:[%s364 + $0xf8] sm:$0x3f]
        %398 = vst [vmem:[#allocation2] sm:$0x3] 0.0
        %399 = vst [vmem:[#allocation2 + $0x8] sm:$0x3] 0.0
        %400 = vst [vmem:[#allocation2 + $0x10] sm:$0x3] 0.0
        %401 = vst [vmem:[#allocation2 + $0x60] sm:$0x3] 0.0
        %402 = vst [vmem:[#allocation2 + $0x68] sm:$0x3] 0.0
        %403 = vst [vmem:[#allocation2 + $0x70] sm:$0x3] 0.0
        %404 = vst [vmem:[#allocation2 + $0xc0] sm:$0x3] 0.0
        %405 = vst [vmem:[#allocation2 + $0xc8] sm:$0x3] 0.0
        %406 = vst [vmem:[#allocation2 + $0xd0] sm:$0x3] 0.0
        %407 = vst [vmem:[#allocation2 + $0x120] sm:$0x3] 0.0
        %408 = vst [vmem:[#allocation2 + $0x128] sm:$0x3] 0.0
        %409 = vst [vmem:[#allocation2 + $0x130] sm:$0x3] 0.0
        %410 = vst [vmem:[#allocation2 + $0x180] sm:$0x3] 0.0
        %411 = vst [vmem:[#allocation2 + $0x188] sm:$0x3] 0.0
        %412 = vst [vmem:[#allocation2 + $0x190] sm:$0x3] 0.0
        %413 = vst [vmem:[#allocation2 + $0x1e0] sm:$0x3] 0.0
        %414 = vst [vmem:[#allocation2 + $0x1e8] sm:$0x3] 0.0
        %415 = vst [vmem:[#allocation2 + $0x1f0] sm:$0x3] 0.0
        %416 = vst [vmem:[#allocation2 + $0x240] sm:$0x3] 0.0
        %417 = vst [vmem:[#allocation2 + $0x248] sm:$0x3] 0.0
        %418 = vst [vmem:[#allocation2 + $0x250] sm:$0x3] 0.0
        %419 = vst [vmem:[#allocation2 + $0x2a0] sm:$0x3] 0.0
        %420 = vst [vmem:[#allocation2 + $0x2a8] sm:$0x3] 0.0
        %421 = vst [vmem:[#allocation2 + $0x2b0] sm:$0x3] 0.0
        %422 = vst [vmem:[#allocation2 + $0x48] sm:$0xc0] 0.0
        %423 = vst [vmem:[#allocation2 + $0x50] sm:$0xc0] 0.0
        %424 = vst [vmem:[#allocation2 + $0x58] sm:$0xc0] 0.0
        %425 = vst [vmem:[#allocation2 + $0xa8] sm:$0xc0] 0.0
        %426 = vst [vmem:[#allocation2 + $0xb0] sm:$0xc0] 0.0
        %427 = vst [vmem:[#allocation2 + $0xb8] sm:$0xc0] 0.0
        %428 = vst [vmem:[#allocation2 + $0x108] sm:$0xc0] 0.0
        %429 = vst [vmem:[#allocation2 + $0x110] sm:$0xc0] 0.0
        %430 = vst [vmem:[#allocation2 + $0x118] sm:$0xc0] 0.0
        %431 = vst [vmem:[#allocation2 + $0x168] sm:$0xc0] 0.0
        %432 = vst [vmem:[#allocation2 + $0x170] sm:$0xc0] 0.0
        %433 = vst [vmem:[#allocation2 + $0x178] sm:$0xc0] 0.0
        %434 = vst [vmem:[#allocation2 + $0x1c8] sm:$0xc0] 0.0
        %435 = vst [vmem:[#allocation2 + $0x1d0] sm:$0xc0] 0.0
        %436 = vst [vmem:[#allocation2 + $0x1d8] sm:$0xc0] 0.0
        %437 = vst [vmem:[#allocation2 + $0x228] sm:$0xc0] 0.0
        %438 = vst [vmem:[#allocation2 + $0x230] sm:$0xc0] 0.0
        %439 = vst [vmem:[#allocation2 + $0x238] sm:$0xc0] 0.0
        %440 = vst [vmem:[#allocation2 + $0x288] sm:$0xc0] 0.0
        %441 = vst [vmem:[#allocation2 + $0x290] sm:$0xc0] 0.0
        %442 = vst [vmem:[#allocation2 + $0x298] sm:$0xc0] 0.0
        %443 = vst [vmem:[#allocation2 + $0x2e8] sm:$0xc0] 0.0
        %444 = vst [vmem:[#allocation2 + $0x2f0] sm:$0xc0] 0.0
        %445 = vst [vmem:[#allocation2 + $0x2f8] sm:$0xc0] 0.0
        %vm478 = vcmask 1041408
        %v479 = vrot.slane %v366, 6
        %v480 = vrot.slane %v367, 6
        %v481 = vsel %vm478, %v479, %v480
        %v482 = vrot.slane %v368, 6
        %v483 = vsel %vm478, %v480, %v482
        %v484 = vrot.slane %v369, 6
        %v485 = vsel %vm478, %v482, %v484
        %v486 = vrot.slane %v370, 6
        %v487 = vrot.slane %v371, 6
        %v488 = vsel %vm478, %v486, %v487
        %v489 = vrot.slane %v372, 6
        %v490 = vsel %vm478, %v487, %v489
        %v491 = vrot.slane %v373, 6
        %v492 = vsel %vm478, %v489, %v491
        %v493 = vrot.slane %v374, 6
        %v494 = vrot.slane %v375, 6
        %v495 = vsel %vm478, %v493, %v494
        %v496 = vrot.slane %v376, 6
        %v497 = vsel %vm478, %v494, %v496
        %v498 = vrot.slane %v377, 6
        %v499 = vsel %vm478, %v496, %v498
        %v500 = vrot.slane %v378, 6
        %v501 = vrot.slane %v379, 6
        %v502 = vsel %vm478, %v500, %v501
        %v503 = vrot.slane %v380, 6
        %v504 = vsel %vm478, %v501, %v503
        %v505 = vrot.slane %v381, 6
        %v506 = vsel %vm478, %v503, %v505
        %v507 = vrot.slane %v382, 6
        %v508 = vrot.slane %v383, 6
        %v509 = vsel %vm478, %v507, %v508
        %v510 = vrot.slane %v384, 6
        %v511 = vsel %vm478, %v508, %v510
        %v512 = vrot.slane %v385, 6
        %v513 = vsel %vm478, %v510, %v512
        %v514 = vrot.slane %v386, 6
        %v515 = vrot.slane %v387, 6
        %v516 = vsel %vm478, %v514, %v515
        %v517 = vrot.slane %v388, 6
        %v518 = vsel %vm478, %v515, %v517
        %v519 = vrot.slane %v389, 6
        %v520 = vsel %vm478, %v517, %v519
        %v521 = vrot.slane %v390, 6
        %v522 = vrot.slane %v391, 6
        %v523 = vsel %vm478, %v521, %v522
        %v524 = vrot.slane %v392, 6
        %v525 = vsel %vm478, %v522, %v524
        %v526 = vrot.slane %v393, 6
        %v527 = vsel %vm478, %v524, %v526
        %v528 = vrot.slane %v394, 6
        %v529 = vrot.slane %v395, 6
        %v530 = vsel %vm478, %v528, %v529
        %v531 = vrot.slane %v396, 6
        %v532 = vsel %vm478, %v529, %v531
        %v533 = vrot.slane %v397, 6
        %v534 = vsel %vm478, %v531, %v533
        %567 = vst [vmem:[#allocation2] sm:$0xfc] %v479
        %568 = vst [vmem:[#allocation2 + $0x18] sm:$0xff] %v481
        %569 = vst [vmem:[#allocation2 + $0x30] sm:$0xff] %v483
        %570 = vst [vmem:[#allocation2 + $0x48] sm:$0xff] %v485
        %571 = vst [vmem:[#allocation2 + $0x60] sm:$0xfc] %v486
        %572 = vst [vmem:[#allocation2 + $0x78] sm:$0xff] %v488
        %573 = vst [vmem:[#allocation2 + $0x90] sm:$0xff] %v490
        %574 = vst [vmem:[#allocation2 + $0xa8] sm:$0xff] %v492
        %575 = vst [vmem:[#allocation2 + $0xc0] sm:$0xfc] %v493
        %576 = vst [vmem:[#allocation2 + $0xd8] sm:$0xff] %v495
        %577 = vst [vmem:[#allocation2 + $0xf0] sm:$0xff] %v497
        %578 = vst [vmem:[#allocation2 + $0x108] sm:$0xff] %v499
        %579 = vst [vmem:[#allocation2 + $0x120] sm:$0xfc] %v500
        %580 = vst [vmem:[#allocation2 + $0x138] sm:$0xff] %v502
        %581 = vst [vmem:[#allocation2 + $0x150] sm:$0xff] %v504
        %582 = vst [vmem:[#allocation2 + $0x168] sm:$0xff] %v506
        %583 = vst [vmem:[#allocation2 + $0x180] sm:$0xfc] %v507
        %584 = vst [vmem:[#allocation2 + $0x198] sm:$0xff] %v509
        %585 = vst [vmem:[#allocation2 + $0x1b0] sm:$0xff] %v511
        %586 = vst [vmem:[#allocation2 + $0x1c8] sm:$0xff] %v513
        %587 = vst [vmem:[#allocation2 + $0x1e0] sm:$0xfc] %v514
        %588 = vst [vmem:[#allocation2 + $0x1f8] sm:$0xff] %v516
        %589 = vst [vmem:[#allocation2 + $0x210] sm:$0xff] %v518
        %590 = vst [vmem:[#allocation2 + $0x228] sm:$0xff] %v520
        %591 = vst [vmem:[#allocation2 + $0x240] sm:$0xfc] %v521
        %592 = vst [vmem:[#allocation2 + $0x258] sm:$0xff] %v523
        %593 = vst [vmem:[#allocation2 + $0x270] sm:$0xff] %v525
        %594 = vst [vmem:[#allocation2 + $0x288] sm:$0xff] %v527
        %595 = vst [vmem:[#allocation2 + $0x2a0] sm:$0xfc] %v528
        %596 = vst [vmem:[#allocation2 + $0x2b8] sm:$0xff] %v530
        %597 = vst [vmem:[#allocation2 + $0x2d0] sm:$0xff] %v532
        %598 = vst [vmem:[#allocation2 + $0x2e8] sm:$0xff] %v534
        %vm599 = vcmask 1040384
        %v600 = vrot.slane %v366, 7
        %v601 = vrot.slane %v367, 7
        %v602 = vsel %vm599, %v600, %v601
        %v603 = vrot.slane %v368, 7
        %v604 = vsel %vm599, %v601, %v603
        %v605 = vrot.slane %v369, 7
        %v606 = vsel %vm599, %v603, %v605
        %v607 = vrot.slane %v370, 7
        %v608 = vrot.slane %v371, 7
        %v609 = vsel %vm599, %v607, %v608
        %v610 = vrot.slane %v372, 7
        %v611 = vsel %vm599, %v608, %v610
        %v612 = vrot.slane %v373, 7
        %v613 = vsel %vm599, %v610, %v612
        %v614 = vrot.slane %v374, 7
        %v615 = vrot.slane %v375, 7
        %v616 = vsel %vm599, %v614, %v615
        %v617 = vrot.slane %v376, 7
        %v618 = vsel %vm599, %v615, %v617
        %v619 = vrot.slane %v377, 7
        %v620 = vsel %vm599, %v617, %v619
        %v621 = vrot.slane %v378, 7
        %v622 = vrot.slane %v379, 7
        %v623 = vsel %vm599, %v621, %v622
        %v624 = vrot.slane %v380, 7
        %v625 = vsel %vm599, %v622, %v624
        %v626 = vrot.slane %v381, 7
        %v627 = vsel %vm599, %v624, %v626
        %v628 = vrot.slane %v382, 7
        %v629 = vrot.slane %v383, 7
        %v630 = vsel %vm599, %v628, %v629
        %v631 = vrot.slane %v384, 7
        %v632 = vsel %vm599, %v629, %v631
        %v633 = vrot.slane %v385, 7
        %v634 = vsel %vm599, %v631, %v633
        %v635 = vrot.slane %v386, 7
        %v636 = vrot.slane %v387, 7
        %v637 = vsel %vm599, %v635, %v636
        %v638 = vrot.slane %v388, 7
        %v639 = vsel %vm599, %v636, %v638
        %v640 = vrot.slane %v389, 7
        %v641 = vsel %vm599, %v638, %v640
        %v642 = vrot.slane %v390, 7
        %v643 = vrot.slane %v391, 7
        %v644 = vsel %vm599, %v642, %v643
        %v645 = vrot.slane %v392, 7
        %v646 = vsel %vm599, %v643, %v645
        %v647 = vrot.slane %v393, 7
        %v648 = vsel %vm599, %v645, %v647
        %v649 = vrot.slane %v394, 7
        %v650 = vrot.slane %v395, 7
        %v651 = vsel %vm599, %v649, %v650
        %v652 = vrot.slane %v396, 7
        %v653 = vsel %vm599, %v650, %v652
        %v654 = vrot.slane %v397, 7
        %v655 = vsel %vm599, %v652, %v654
        %688 = vst [vmem:[#allocation2 + $0x8] sm:$0xfe] %v600
        %689 = vst [vmem:[#allocation2 + $0x20] sm:$0xff] %v602
        %690 = vst [vmem:[#allocation2 + $0x38] sm:$0xff] %v604
        %691 = vst [vmem:[#allocation2 + $0x50] sm:$0x7f] %v606
        %692 = vst [vmem:[#allocation2 + $0x68] sm:$0xfe] %v607
        %693 = vst [vmem:[#allocation2 + $0x80] sm:$0xff] %v609
        %694 = vst [vmem:[#allocation2 + $0x98] sm:$0xff] %v611
        %695 = vst [vmem:[#allocation2 + $0xb0] sm:$0x7f] %v613
        %696 = vst [vmem:[#allocation2 + $0xc8] sm:$0xfe] %v614
        %697 = vst [vmem:[#allocation2 + $0xe0] sm:$0xff] %v616
        %698 = vst [vmem:[#allocation2 + $0xf8] sm:$0xff] %v618
        %699 = vst [vmem:[#allocation2 + $0x110] sm:$0x7f] %v620
        %700 = vst [vmem:[#allocation2 + $0x128] sm:$0xfe] %v621
        %701 = vst [vmem:[#allocation2 + $0x140] sm:$0xff] %v623
        %702 = vst [vmem:[#allocation2 + $0x158] sm:$0xff] %v625
        %703 = vst [vmem:[#allocation2 + $0x170] sm:$0x7f] %v627
        %704 = vst [vmem:[#allocation2 + $0x188] sm:$0xfe] %v628
        %705 = vst [vmem:[#allocation2 + $0x1a0] sm:$0xff] %v630
        %706 = vst [vmem:[#allocation2 + $0x1b8] sm:$0xff] %v632
        %707 = vst [vmem:[#allocation2 + $0x1d0] sm:$0x7f] %v634
        %708 = vst [vmem:[#allocation2 + $0x1e8] sm:$0xfe] %v635
        %709 = vst [vmem:[#allocation2 + $0x200] sm:$0xff] %v637
        %710 = vst [vmem:[#allocation2 + $0x218] sm:$0xff] %v639
        %711 = vst [vmem:[#allocation2 + $0x230] sm:$0x7f] %v641
        %712 = vst [vmem:[#allocation2 + $0x248] sm:$0xfe] %v642
        %713 = vst [vmem:[#allocation2 + $0x260] sm:$0xff] %v644
        %714 = vst [vmem:[#allocation2 + $0x278] sm:$0xff] %v646
        %715 = vst [vmem:[#allocation2 + $0x290] sm:$0x7f] %v648
        %716 = vst [vmem:[#allocation2 + $0x2a8] sm:$0xfe] %v649
        %717 = vst [vmem:[#allocation2 + $0x2c0] sm:$0xff] %v651
        %718 = vst [vmem:[#allocation2 + $0x2d8] sm:$0xff] %v653
        %719 = vst [vmem:[#allocation2 + $0x2f0] sm:$0x7f] %v655
        %720 = vst [vmem:[#allocation2 + $0x10] sm:$0xff] %v366
        %721 = vst [vmem:[#allocation2 + $0x28] sm:$0xff] %v367
        %722 = vst [vmem:[#allocation2 + $0x40] sm:$0xff] %v368
        %723 = vst [vmem:[#allocation2 + $0x58] sm:$0x3f] %v369
        %724 = vst [vmem:[#allocation2 + $0x70] sm:$0xff] %v370
        %725 = vst [vmem:[#allocation2 + $0x88] sm:$0xff] %v371
        %726 = vst [vmem:[#allocation2 + $0xa0] sm:$0xff] %v372
        %727 = vst [vmem:[#allocation2 + $0xb8] sm:$0x3f] %v373
        %728 = vst [vmem:[#allocation2 + $0xd0] sm:$0xff] %v374
        %729 = vst [vmem:[#allocation2 + $0xe8] sm:$0xff] %v375
        %730 = vst [vmem:[#allocation2 + $0x100] sm:$0xff] %v376
        %731 = vst [vmem:[#allocation2 + $0x118] sm:$0x3f] %v377
        %732 = vst [vmem:[#allocation2 + $0x130] sm:$0xff] %v378
        %733 = vst [vmem:[#allocation2 + $0x148] sm:$0xff] %v379
        %734 = vst [vmem:[#allocation2 + $0x160] sm:$0xff] %v380
        %735 = vst [vmem:[#allocation2 + $0x178] sm:$0x3f] %v381
        %736 = vst [vmem:[#allocation2 + $0x190] sm:$0xff] %v382
        %737 = vst [vmem:[#allocation2 + $0x1a8] sm:$0xff] %v383
        %738 = vst [vmem:[#allocation2 + $0x1c0] sm:$0xff] %v384
        %739 = vst [vmem:[#allocation2 + $0x1d8] sm:$0x3f] %v385
        %740 = vst [vmem:[#allocation2 + $0x1f0] sm:$0xff] %v386
        %741 = vst [vmem:[#allocation2 + $0x208] sm:$0xff] %v387
        %742 = vst [vmem:[#allocation2 + $0x220] sm:$0xff] %v388
        %743 = vst [vmem:[#allocation2 + $0x238] sm:$0x3f] %v389
        %744 = vst [vmem:[#allocation2 + $0x250] sm:$0xff] %v390
        %745 = vst [vmem:[#allocation2 + $0x268] sm:$0xff] %v391
        %746 = vst [vmem:[#allocation2 + $0x280] sm:$0xff] %v392
        %747 = vst [vmem:[#allocation2 + $0x298] sm:$0x3f] %v393
        %748 = vst [vmem:[#allocation2 + $0x2b0] sm:$0xff] %v394
        %749 = vst [vmem:[#allocation2 + $0x2c8] sm:$0xff] %v395
        %750 = vst [vmem:[#allocation2 + $0x2e0] sm:$0xff] %v396
        %751 = vst [vmem:[#allocation2 + $0x2f8] sm:$0x3f] %v397
        %v752 = vld [vmem:[#allocation2] sm:$0xff]
        %v753 = vld [vmem:[#allocation2 + $0x8] sm:$0xff]
        %v754 = vld [vmem:[#allocation2 + $0x10] sm:$0xff]
        %v755 = vld [vmem:[#allocation2 + $0x18] sm:$0xff]
        %v756 = vld [vmem:[#allocation2 + $0x20] sm:$0xff]
        %v757 = vld [vmem:[#allocation2 + $0x28] sm:$0xff]
        %v758 = vld [vmem:[#allocation2 + $0x30] sm:$0xff]
        %v759 = vld [vmem:[#allocation2 + $0x38] sm:$0xff]
        %v760 = vld [vmem:[#allocation2 + $0x40] sm:$0xff]
        %v761 = vld [vmem:[#allocation2 + $0x48] sm:$0xff]
        %v762 = vld [vmem:[#allocation2 + $0x50] sm:$0xff]
        %v763 = vld [vmem:[#allocation2 + $0x58] sm:$0xff]
        %v764 = vld [vmem:[#allocation2 + $0x60] sm:$0xff]
        %v765 = vld [vmem:[#allocation2 + $0x68] sm:$0xff]
        %v766 = vld [vmem:[#allocation2 + $0x70] sm:$0xff]
        %v767 = vld [vmem:[#allocation2 + $0x78] sm:$0xff]
        %v768 = vld [vmem:[#allocation2 + $0x80] sm:$0xff]
        %v769 = vld [vmem:[#allocation2 + $0x88] sm:$0xff]
        %v770 = vld [vmem:[#allocation2 + $0x90] sm:$0xff]
        %v771 = vld [vmem:[#allocation2 + $0x98] sm:$0xff]
        %v772 = vld [vmem:[#allocation2 + $0xa0] sm:$0xff]
        %v773 = vld [vmem:[#allocation2 + $0xa8] sm:$0xff]
        %v774 = vld [vmem:[#allocation2 + $0xb0] sm:$0xff]
        %v775 = vld [vmem:[#allocation2 + $0xb8] sm:$0xff]
        %v776 = vld [vmem:[#allocation2 + $0xc0] sm:$0xff]
        %v777 = vld [vmem:[#allocation2 + $0xc8] sm:$0xff]
        %v778 = vld [vmem:[#allocation2 + $0xd0] sm:$0xff]
        %v779 = vld [vmem:[#allocation2 + $0xd8] sm:$0xff]
        %v780 = vld [vmem:[#allocation2 + $0xe0] sm:$0xff]
        %v781 = vld [vmem:[#allocation2 + $0xe8] sm:$0xff]
        %v782 = vld [vmem:[#allocation2 + $0xf0] sm:$0xff]
        %v783 = vld [vmem:[#allocation2 + $0xf8] sm:$0xff]
        %v784 = vld [vmem:[#allocation2 + $0x100] sm:$0xff]
        %v785 = vld [vmem:[#allocation2 + $0x108] sm:$0xff]
        %v786 = vld [vmem:[#allocation2 + $0x110] sm:$0xff]
        %v787 = vld [vmem:[#allocation2 + $0x118] sm:$0xff]
        %v788 = vld [vmem:[#allocation2 + $0x120] sm:$0xff]
        %v789 = vld [vmem:[#allocation2 + $0x128] sm:$0xff]
        %v790 = vld [vmem:[#allocation2 + $0x130] sm:$0xff]
        %v791 = vld [vmem:[#allocation2 + $0x138] sm:$0xff]
        %v792 = vld [vmem:[#allocation2 + $0x140] sm:$0xff]
        %v793 = vld [vmem:[#allocation2 + $0x148] sm:$0xff]
        %v794 = vld [vmem:[#allocation2 + $0x150] sm:$0xff]
        %v795 = vld [vmem:[#allocation2 + $0x158] sm:$0xff]
        %v796 = vld [vmem:[#allocation2 + $0x160] sm:$0xff]
        %v797 = vld [vmem:[#allocation2 + $0x168] sm:$0xff]
        %v798 = vld [vmem:[#allocation2 + $0x170] sm:$0xff]
        %v799 = vld [vmem:[#allocation2 + $0x178] sm:$0xff]
        %v800 = vld [vmem:[#allocation2 + $0x180] sm:$0xff]
        %v801 = vld [vmem:[#allocation2 + $0x188] sm:$0xff]
        %v802 = vld [vmem:[#allocation2 + $0x190] sm:$0xff]
        %v803 = vld [vmem:[#allocation2 + $0x198] sm:$0xff]
        %v804 = vld [vmem:[#allocation2 + $0x1a0] sm:$0xff]
        %v805 = vld [vmem:[#allocation2 + $0x1a8] sm:$0xff]
        %v806 = vld [vmem:[#allocation2 + $0x1b0] sm:$0xff]
        %v807 = vld [vmem:[#allocation2 + $0x1b8] sm:$0xff]
        %v808 = vld [vmem:[#allocation2 + $0x1c0] sm:$0xff]
        %v809 = vld [vmem:[#allocation2 + $0x1c8] sm:$0xff]
        %v810 = vld [vmem:[#allocation2 + $0x1d0] sm:$0xff]
        %v811 = vld [vmem:[#allocation2 + $0x1d8] sm:$0xff]
        %v812 = vld [vmem:[#allocation2 + $0x1e0] sm:$0xff]
        %v813 = vld [vmem:[#allocation2 + $0x1e8] sm:$0xff]
        %v814 = vld [vmem:[#allocation2 + $0x1f0] sm:$0xff]
        %v815 = vld [vmem:[#allocation2 + $0x1f8] sm:$0xff]
        %v816 = vld [vmem:[#allocation2 + $0x200] sm:$0xff]
        %v817 = vld [vmem:[#allocation2 + $0x208] sm:$0xff]
        %v818 = vld [vmem:[#allocation2 + $0x210] sm:$0xff]
        %v819 = vld [vmem:[#allocation2 + $0x218] sm:$0xff]
        %v820 = vld [vmem:[#allocation2 + $0x220] sm:$0xff]
        %v821 = vld [vmem:[#allocation2 + $0x228] sm:$0xff]
        %v822 = vld [vmem:[#allocation2 + $0x230] sm:$0xff]
        %v823 = vld [vmem:[#allocation2 + $0x238] sm:$0xff]
        %v824 = vld [vmem:[#allocation2 + $0x240] sm:$0xff]
        %v825 = vld [vmem:[#allocation2 + $0x248] sm:$0xff]
        %v826 = vld [vmem:[#allocation2 + $0x250] sm:$0xff]
        %v827 = vld [vmem:[#allocation2 + $0x258] sm:$0xff]
        %v828 = vld [vmem:[#allocation2 + $0x260] sm:$0xff]
        %v829 = vld [vmem:[#allocation2 + $0x268] sm:$0xff]
        %v830 = vld [vmem:[#allocation2 + $0x270] sm:$0xff]
        %v831 = vld [vmem:[#allocation2 + $0x278] sm:$0xff]
        %v832 = vld [vmem:[#allocation2 + $0x280] sm:$0xff]
        %v833 = vld [vmem:[#allocation2 + $0x288] sm:$0xff]
        %v834 = vld [vmem:[#allocation2 + $0x290] sm:$0xff]
        %v835 = vld [vmem:[#allocation2 + $0x298] sm:$0xff]
        %v836 = vld [vmem:[#allocation2 + $0x2a0] sm:$0xff]
        %v837 = vld [vmem:[#allocation2 + $0x2a8] sm:$0xff]
        %v838 = vld [vmem:[#allocation2 + $0x2b0] sm:$0xff]
        %v839 = vld [vmem:[#allocation2 + $0x2b8] sm:$0xff]
        %v840 = vld [vmem:[#allocation2 + $0x2c0] sm:$0xff]
        %v841 = vld [vmem:[#allocation2 + $0x2c8] sm:$0xff]
        %v842 = vld [vmem:[#allocation2 + $0x2d0] sm:$0xff]
        %v843 = vld [vmem:[#allocation2 + $0x2d8] sm:$0xff]
        %v844 = vld [vmem:[#allocation2 + $0x2e0] sm:$0xff]
        %v845 = vld [vmem:[#allocation2 + $0x2e8] sm:$0xff]
        %v846 = vld [vmem:[#allocation2 + $0x2f0] sm:$0xff]
        %v847 = vld [vmem:[#allocation2 + $0x2f8] sm:$0xff]
        %v848 = vld [vmem:[%s1] sm:$0xff]
        %v849 = vld [vmem:[%s1 + $0x8] sm:$0xff]
        %v850 = vld [vmem:[%s1 + $0x10] sm:$0xff]
        %v851 = vld [vmem:[%s1 + $0x18] sm:$0xff]
        %v852 = vld [vmem:[%s1 + $0x20] sm:$0xff]
        %v853 = vld [vmem:[%s1 + $0x28] sm:$0xff]
        %v854 = vld [vmem:[%s1 + $0x30] sm:$0xff]
        %v855 = vld [vmem:[%s1 + $0x38] sm:$0xff]
        %v856 = vld [vmem:[%s1 + $0x40] sm:$0xff]
        %v857 = vld [vmem:[%s1 + $0x48] sm:$0xff]
        %v858 = vld [vmem:[%s1 + $0x50] sm:$0xff]
        %v859 = vld [vmem:[%s1 + $0x58] sm:$0xff]
        %v860 = vld [vmem:[%s1 + $0x60] sm:$0xff]
        %v861 = vld [vmem:[%s1 + $0x68] sm:$0xff]
        %v862 = vld [vmem:[%s1 + $0x70] sm:$0xff]
        %v863 = vld [vmem:[%s1 + $0x78] sm:$0xff]
        %v864 = vld [vmem:[%s1 + $0x80] sm:$0xff]
        %v865 = vld [vmem:[%s1 + $0x88] sm:$0xff]
        %v866 = vld [vmem:[%s1 + $0x90] sm:$0xff]
        %v867 = vld [vmem:[%s1 + $0x98] sm:$0xff]
        %v868 = vld [vmem:[%s1 + $0xa0] sm:$0xff]
        %v869 = vld [vmem:[%s1 + $0xa8] sm:$0xff]
        %v870 = vld [vmem:[%s1 + $0xb0] sm:$0xff]
        %v871 = vld [vmem:[%s1 + $0xb8] sm:$0xff]
        %v872 = vld [vmem:[%s1 + $0xc0] sm:$0xff]
        %v873 = vld [vmem:[%s1 + $0xc8] sm:$0xff]
        %v874 = vld [vmem:[%s1 + $0xd0] sm:$0xff]
        %v875 = vld [vmem:[%s1 + $0xd8] sm:$0xff]
        %v876 = vld [vmem:[%s1 + $0xe0] sm:$0xff]
        %v877 = vld [vmem:[%s1 + $0xe8] sm:$0xff]
        %v878 = vld [vmem:[%s1 + $0xf0] sm:$0xff]
        %v879 = vld [vmem:[%s1 + $0xf8] sm:$0xff]
        %v880 = vld [vmem:[%s1 + $0x100] sm:$0xff]
        %v881 = vld [vmem:[%s1 + $0x108] sm:$0xff]
        %v882 = vld [vmem:[%s1 + $0x110] sm:$0xff]
        %v883 = vld [vmem:[%s1 + $0x118] sm:$0xff]
        %v884 = vld [vmem:[%s1 + $0x120] sm:$0xff]
        %v885 = vld [vmem:[%s1 + $0x128] sm:$0xff]
        %v886 = vld [vmem:[%s1 + $0x130] sm:$0xff]
        %v887 = vld [vmem:[%s1 + $0x138] sm:$0xff]
        %v888 = vld [vmem:[%s1 + $0x140] sm:$0xff]
        %v889 = vld [vmem:[%s1 + $0x148] sm:$0xff]
        %v890 = vld [vmem:[%s1 + $0x150] sm:$0xff]
        %v891 = vld [vmem:[%s1 + $0x158] sm:$0xff]
        %v892 = vld [vmem:[%s1 + $0x160] sm:$0xff]
        %v893 = vld [vmem:[%s1 + $0x168] sm:$0xff]
        %v894 = vld [vmem:[%s1 + $0x170] sm:$0xff]
        %v895 = vld [vmem:[%s1 + $0x178] sm:$0xff]
        %v896 = vld [vmem:[%s1 + $0x180] sm:$0xff]
        %v897 = vld [vmem:[%s1 + $0x188] sm:$0xff]
        %v898 = vld [vmem:[%s1 + $0x190] sm:$0xff]
        %v899 = vld [vmem:[%s1 + $0x198] sm:$0xff]
        %v900 = vld [vmem:[%s1 + $0x1a0] sm:$0xff]
        %v901 = vld [vmem:[%s1 + $0x1a8] sm:$0xff]
        %v902 = vld [vmem:[%s1 + $0x1b0] sm:$0xff]
        %v903 = vld [vmem:[%s1 + $0x1b8] sm:$0xff]
        %v904 = vld [vmem:[%s1 + $0x1c0] sm:$0xff]
        %v905 = vld [vmem:[%s1 + $0x1c8] sm:$0xff]
        %v906 = vld [vmem:[%s1 + $0x1d0] sm:$0xff]
        %v907 = vld [vmem:[%s1 + $0x1d8] sm:$0xff]
        %v908 = vld [vmem:[%s1 + $0x1e0] sm:$0xff]
        %v909 = vld [vmem:[%s1 + $0x1e8] sm:$0xff]
        %v910 = vld [vmem:[%s1 + $0x1f0] sm:$0xff]
        %v911 = vld [vmem:[%s1 + $0x1f8] sm:$0xff]
        %v912 = vld [vmem:[%s1 + $0x200] sm:$0xff]
        %v913 = vld [vmem:[%s1 + $0x208] sm:$0xff]
        %v914 = vld [vmem:[%s1 + $0x210] sm:$0xff]
        %v915 = vld [vmem:[%s1 + $0x218] sm:$0xff]
        %v916 = vld [vmem:[%s1 + $0x220] sm:$0xff]
        %v917 = vld [vmem:[%s1 + $0x228] sm:$0xff]
        %v918 = vld [vmem:[%s1 + $0x230] sm:$0xff]
        %v919 = vld [vmem:[%s1 + $0x238] sm:$0xff]
        %v920 = vld [vmem:[%s1 + $0x240] sm:$0xff]
        %v921 = vld [vmem:[%s1 + $0x248] sm:$0xff]
        %v922 = vld [vmem:[%s1 + $0x250] sm:$0xff]
        %v923 = vld [vmem:[%s1 + $0x258] sm:$0xff]
        %v924 = vld [vmem:[%s1 + $0x260] sm:$0xff]
        %v925 = vld [vmem:[%s1 + $0x268] sm:$0xff]
        %v926 = vld [vmem:[%s1 + $0x270] sm:$0xff]
        %v927 = vld [vmem:[%s1 + $0x278] sm:$0xff]
        %v928 = vld [vmem:[%s1 + $0x280] sm:$0xff]
        %v929 = vld [vmem:[%s1 + $0x288] sm:$0xff]
        %v930 = vld [vmem:[%s1 + $0x290] sm:$0xff]
        %v931 = vld [vmem:[%s1 + $0x298] sm:$0xff]
        %v932 = vld [vmem:[%s1 + $0x2a0] sm:$0xff]
        %v933 = vld [vmem:[%s1 + $0x2a8] sm:$0xff]
        %v934 = vld [vmem:[%s1 + $0x2b0] sm:$0xff]
        %v935 = vld [vmem:[%s1 + $0x2b8] sm:$0xff]
        %v936 = vld [vmem:[%s1 + $0x2c0] sm:$0xff]
        %v937 = vld [vmem:[%s1 + $0x2c8] sm:$0xff]
        %v938 = vld [vmem:[%s1 + $0x2d0] sm:$0xff]
        %v939 = vld [vmem:[%s1 + $0x2d8] sm:$0xff]
        %v940 = vld [vmem:[%s1 + $0x2e0] sm:$0xff]
        %v941 = vld [vmem:[%s1 + $0x2e8] sm:$0xff]
        %v942 = vld [vmem:[%s1 + $0x2f0] sm:$0xff]
        %v943 = vld [vmem:[%s1 + $0x2f8] sm:$0xff]
        %944 = vmatprep.subr.mxu0 %v849
        %945 = vmatpush1.msra.mxu0 %v848
        %946 = vmatprep.subr.mxu0 %v851
        %947 = vmatpush1.msra.mxu0 %v850
        %948 = vmatprep.subr.mxu0 %v853
        %949 = vmatpush1.msra.mxu0 %v852
        %950 = vmatprep.subr.mxu0 %v855
        %951 = vmatpush1.msra.mxu0 %v854
        %952 = vmatprep.subr.mxu0 %v857
        %953 = vmatpush1.msra.mxu0 %v856
        %954 = vmatprep.subr.mxu0 %v859
        %955 = vmatpush1.msra.mxu0 %v858
        %956 = vmatprep.subr.mxu0 %v861
        %957 = vmatpush1.msra.mxu0 %v860
        %958 = vmatprep.subr.mxu0 %v863
        %959 = vmatpush1.msra.mxu0 %v862
        %960 = vmatprep.subr.mxu0 %v865
        %961 = vmatpush1.msra.mxu0 %v864
        %962 = vmatprep.subr.mxu0 %v867
        %963 = vmatpush1.msra.mxu0 %v866
        %964 = vmatprep.subr.mxu0 %v869
        %965 = vmatpush1.msra.mxu0 %v868
        %966 = vmatprep.subr.mxu0 %v871
        %967 = vmatpush1.msra.mxu0 %v870
        %968 = vmatprep.subr.mxu0 %v873
        %969 = vmatpush1.msra.mxu0 %v872
        %970 = vmatprep.subr.mxu0 %v875
        %971 = vmatpush1.msra.mxu0 %v874
        %972 = vmatprep.subr.mxu0 %v877
        %973 = vmatpush1.msra.mxu0 %v876
        %974 = vmatprep.subr.mxu0 %v879
        %975 = vmatpush1.msra.mxu0 %v878
        %976 = vmatprep.subr.mxu0 %v881
        %977 = vmatpush1.msra.mxu0 %v880
        %978 = vmatprep.subr.mxu0 %v883
        %979 = vmatpush1.msra.mxu0 %v882
        %980 = vmatprep.subr.mxu0 %v885
        %981 = vmatpush1.msra.mxu0 %v884
        %982 = vmatprep.subr.mxu0 %v887
        %983 = vmatpush1.msra.mxu0 %v886
        %984 = vmatprep.subr.mxu0 %v889
        %985 = vmatpush1.msra.mxu0 %v888
        %986 = vmatprep.subr.mxu0 %v891
        %987 = vmatpush1.msra.mxu0 %v890
        %988 = vmatprep.subr.mxu0 %v893
        %989 = vmatpush1.msra.mxu0 %v892
        %990 = vmatprep.subr.mxu0 %v895
        %991 = vmatpush1.msra.mxu0 %v894
        %992 = vmatprep.subr.mxu0 %v897
        %993 = vmatpush1.msra.mxu0 %v896
        %994 = vmatprep.subr.mxu0 %v899
        %995 = vmatpush1.msra.mxu0 %v898
        %996 = vmatprep.subr.mxu0 %v901
        %997 = vmatpush1.msra.mxu0 %v900
        %998 = vmatprep.subr.mxu0 %v903
        %999 = vmatpush1.msra.mxu0 %v902
        %1000 = vmatprep.subr.mxu0 %v905
        %1001 = vmatpush1.msra.mxu0 %v904
        %1002 = vmatprep.subr.mxu0 %v907
        %1003 = vmatpush1.msra.mxu0 %v906
        %1004 = vmatprep.subr.mxu0 %v909
        %1005 = vmatpush1.msra.mxu0 %v908
        %1006 = vmatprep.subr.mxu0 %v911
        %1007 = vmatpush1.msra.mxu0 %v910
        %1008 = vmatprep.mubr.f32.mxu0 %v753
        %1009 = vmatmul.mubr.f32.gmra.mrb[0].mxu0 %v752
        %v1010 = vpop.f32.mrb[0].mxu0
        %v1011 = vadd.f32 0.0, %v1010
        %v1012 = vpop.f32.mrb[0].mxu0
        %v1013 = vadd.f32 0.0, %v1012
        %1014 = vmatprep.mubr.f32.mxu0 %v756
        %1015 = vmatmul.mubr.f32.gmra.mrb[0].mxu0 %v755
        %v1016 = vpop.f32.mrb[0].mxu0
        %v1017 = vadd.f32 0.0, %v1016
        %v1018 = vpop.f32.mrb[0].mxu0
        %v1019 = vadd.f32 0.0, %v1018
        %1020 = vmatprep.mubr.f32.mxu0 %v759
        %1021 = vmatmul.mubr.f32.gmra.mrb[0].mxu0 %v758
        %v1022 = vpop.f32.mrb[0].mxu0
        %v1023 = vadd.f32 0.0, %v1022
        %v1024 = vpop.f32.mrb[0].mxu0
        %v1025 = vadd.f32 0.0, %v1024
        %1026 = vmatprep.mubr.f32.mxu0 %v762
        %1027 = vmatmul.mubr.f32.gmra.mrb[0].mxu0 %v761
        %v1028 = vpop.f32.mrb[0].mxu0
        %v1029 = vadd.f32 0.0, %v1028
        %v1030 = vpop.f32.mrb[0].mxu0
        %v1031 = vadd.f32 0.0, %v1030
        %1032 = vmatprep.mubr.f32.mxu0 %v765
        %1033 = vmatmul.mubr.f32.gmra.mrb[0].mxu0 %v764
        %v1034 = vpop.f32.mrb[0].mxu0
        %v1035 = vadd.f32 0.0, %v1034
        %v1036 = vpop.f32.mrb[0].mxu0
        %v1037 = vadd.f32 0.0, %v1036
        %1038 = vmatprep.mubr.f32.mxu0 %v768
        %1039 = vmatmul.mubr.f32.gmra.mrb[0].mxu0 %v767
        %v1040 = vpop.f32.mrb[0].mxu0
        %v1041 = vadd.f32 0.0, %v1040
        %v1042 = vpop.f32.mrb[0].mxu0
        %v1043 = vadd.f32 0.0, %v1042
        %1044 = vmatprep.mubr.f32.mxu0 %v771
        %1045 = vmatmul.mubr.f32.gmra.mrb[0].mxu0 %v770
        %v1046 = vpop.f32.mrb[0].mxu0
        %v1047 = vadd.f32 0.0, %v1046
        %v1048 = vpop.f32.mrb[0].mxu0
        %v1049 = vadd.f32 0.0, %v1048
        %1050 = vmatprep.mubr.f32.mxu0 %v774
        %1051 = vmatmul.mubr.f32.gmra.mrb[0].mxu0 %v773
        %v1052 = vpop.f32.mrb[0].mxu0
        %v1053 = vadd.f32 0.0, %v1052
        %v1054 = vpop.f32.mrb[0].mxu0
        %v1055 = vadd.f32 0.0, %v1054
        %1056 = vmatprep.mubr.f32.mxu0 %v777
        %1057 = vmatmul.mubr.f32.gmra.mrb[0].mxu0 %v776
        %v1058 = vpop.f32.mrb[0].mxu0
        %v1059 = vadd.f32 0.0, %v1058
        %v1060 = vpop.f32.mrb[0].mxu0
        %v1061 = vadd.f32 0.0, %v1060
        %1062 = vmatprep.mubr.f32.mxu0 %v780
        %1063 = vmatmul.mubr.f32.gmra.mrb[0].mxu0 %v779
        %v1064 = vpop.f32.mrb[0].mxu0
        %v1065 = vadd.f32 0.0, %v1064
        %v1066 = vpop.f32.mrb[0].mxu0
        %v1067 = vadd.f32 0.0, %v1066
        %1068 = vmatprep.mubr.f32.mxu0 %v783
        %1069 = vmatmul.mubr.f32.gmra.mrb[0].mxu0 %v782
        %v1070 = vpop.f32.mrb[0].mxu0
        %v1071 = vadd.f32 0.0, %v1070
        %v1072 = vpop.f32.mrb[0].mxu0
        %v1073 = vadd.f32 0.0, %v1072
        %1074 = vmatprep.mubr.f32.mxu0 %v786
        %1075 = vmatmul.mubr.f32.gmra.mrb[0].mxu0 %v785
        %v1076 = vpop.f32.mrb[0].mxu0
        %v1077 = vadd.f32 0.0, %v1076
        %v1078 = vpop.f32.mrb[0].mxu0
        %v1079 = vadd.f32 0.0, %v1078
        %1080 = vmatprep.mubr.f32.mxu0 %v789
        %1081 = vmatmul.mubr.f32.gmra.mrb[0].mxu0 %v788
        %v1082 = vpop.f32.mrb[0].mxu0
        %v1083 = vadd.f32 0.0, %v1082
        %v1084 = vpop.f32.mrb[0].mxu0
        %v1085 = vadd.f32 0.0, %v1084
        %1086 = vmatprep.mubr.f32.mxu0 %v792
        %1087 = vmatmul.mubr.f32.gmra.mrb[0].mxu0 %v791
        %v1088 = vpop.f32.mrb[0].mxu0
        %v1089 = vadd.f32 0.0, %v1088
        %v1090 = vpop.f32.mrb[0].mxu0
        %v1091 = vadd.f32 0.0, %v1090
        %1092 = vmatprep.mubr.f32.mxu0 %v795
        %1093 = vmatmul.mubr.f32.gmra.mrb[0].mxu0 %v794
        %v1094 = vpop.f32.mrb[0].mxu0
        %v1095 = vadd.f32 0.0, %v1094
        %v1096 = vpop.f32.mrb[0].mxu0
        %v1097 = vadd.f32 0.0, %v1096
        %1098 = vmatprep.mubr.f32.mxu0 %v798
        %1099 = vmatmul.mubr.f32.gmra.mrb[0].mxu0 %v797
        %v1100 = vpop.f32.mrb[0].mxu0
        %v1101 = vadd.f32 0.0, %v1100
        %v1102 = vpop.f32.mrb[0].mxu0
        %v1103 = vadd.f32 0.0, %v1102
        %1104 = vmatprep.mubr.f32.mxu0 %v801
        %1105 = vmatmul.mubr.f32.gmra.mrb[0].mxu0 %v800
        %v1106 = vpop.f32.mrb[0].mxu0
        %v1107 = vadd.f32 0.0, %v1106
        %v1108 = vpop.f32.mrb[0].mxu0
        %v1109 = vadd.f32 0.0, %v1108
        %1110 = vmatprep.mubr.f32.mxu0 %v804
        %1111 = vmatmul.mubr.f32.gmra.mrb[0].mxu0 %v803
        %v1112 = vpop.f32.mrb[0].mxu0
        %v1113 = vadd.f32 0.0, %v1112
        %v1114 = vpop.f32.mrb[0].mxu0
        %v1115 = vadd.f32 0.0, %v1114
        %1116 = vmatprep.mubr.f32.mxu0 %v807
        %1117 = vmatmul.mubr.f32.gmra.mrb[0].mxu0 %v806
        %v1118 = vpop.f32.mrb[0].mxu0
        %v1119 = vadd.f32 0.0, %v1118
        %v1120 = vpop.f32.mrb[0].mxu0
        %v1121 = vadd.f32 0.0, %v1120
        %1122 = vmatprep.mubr.f32.mxu0 %v810
        %1123 = vmatmul.mubr.f32.gmra.mrb[0].mxu0 %v809
        %v1124 = vpop.f32.mrb[0].mxu0
        %v1125 = vadd.f32 0.0, %v1124
        %v1126 = vpop.f32.mrb[0].mxu0
        %v1127 = vadd.f32 0.0, %v1126
        %1128 = vmatprep.mubr.f32.mxu0 %v813
        %1129 = vmatmul.mubr.f32.gmra.mrb[0].mxu0 %v812
        %v1130 = vpop.f32.mrb[0].mxu0
        %v1131 = vadd.f32 0.0, %v1130
        %v1132 = vpop.f32.mrb[0].mxu0
        %v1133 = vadd.f32 0.0, %v1132
        %1134 = vmatprep.mubr.f32.mxu0 %v816
        %1135 = vmatmul.mubr.f32.gmra.mrb[0].mxu0 %v815
        %v1136 = vpop.f32.mrb[0].mxu0
        %v1137 = vadd.f32 0.0, %v1136
        %v1138 = vpop.f32.mrb[0].mxu0
        %v1139 = vadd.f32 0.0, %v1138
        %1140 = vmatprep.mubr.f32.mxu0 %v819
        %1141 = vmatmul.mubr.f32.gmra.mrb[0].mxu0 %v818
        %v1142 = vpop.f32.mrb[0].mxu0
        %v1143 = vadd.f32 0.0, %v1142
        %v1144 = vpop.f32.mrb[0].mxu0
        %v1145 = vadd.f32 0.0, %v1144
        %1146 = vmatprep.mubr.f32.mxu0 %v822
        %1147 = vmatmul.mubr.f32.gmra.mrb[0].mxu0 %v821
        %v1148 = vpop.f32.mrb[0].mxu0
        %v1149 = vadd.f32 0.0, %v1148
        %v1150 = vpop.f32.mrb[0].mxu0
        %v1151 = vadd.f32 0.0, %v1150
        %1152 = vmatprep.mubr.f32.mxu0 %v825
        %1153 = vmatmul.mubr.f32.gmra.mrb[0].mxu0 %v824
        %v1154 = vpop.f32.mrb[0].mxu0
        %v1155 = vadd.f32 0.0, %v1154
        %v1156 = vpop.f32.mrb[0].mxu0
        %v1157 = vadd.f32 0.0, %v1156
        %1158 = vmatprep.mubr.f32.mxu0 %v828
        %1159 = vmatmul.mubr.f32.gmra.mrb[0].mxu0 %v827
        %v1160 = vpop.f32.mrb[0].mxu0
        %v1161 = vadd.f32 0.0, %v1160
        %v1162 = vpop.f32.mrb[0].mxu0
        %v1163 = vadd.f32 0.0, %v1162
        %1164 = vmatprep.mubr.f32.mxu0 %v831
        %1165 = vmatmul.mubr.f32.gmra.mrb[0].mxu0 %v830
        %v1166 = vpop.f32.mrb[0].mxu0
        %v1167 = vadd.f32 0.0, %v1166
        %v1168 = vpop.f32.mrb[0].mxu0
        %v1169 = vadd.f32 0.0, %v1168
        %1170 = vmatprep.mubr.f32.mxu0 %v834
        %1171 = vmatmul.mubr.f32.gmra.mrb[0].mxu0 %v833
        %v1172 = vpop.f32.mrb[0].mxu0
        %v1173 = vadd.f32 0.0, %v1172
        %v1174 = vpop.f32.mrb[0].mxu0
        %v1175 = vadd.f32 0.0, %v1174
        %1176 = vmatprep.mubr.f32.mxu0 %v837
        %1177 = vmatmul.mubr.f32.gmra.mrb[0].mxu0 %v836
        %v1178 = vpop.f32.mrb[0].mxu0
        %v1179 = vadd.f32 0.0, %v1178
        %v1180 = vpop.f32.mrb[0].mxu0
        %v1181 = vadd.f32 0.0, %v1180
        %1182 = vmatprep.mubr.f32.mxu0 %v840
        %1183 = vmatmul.mubr.f32.gmra.mrb[0].mxu0 %v839
        %v1184 = vpop.f32.mrb[0].mxu0
        %v1185 = vadd.f32 0.0, %v1184
        %v1186 = vpop.f32.mrb[0].mxu0
        %v1187 = vadd.f32 0.0, %v1186
        %1188 = vmatprep.mubr.f32.mxu0 %v843
        %1189 = vmatmul.mubr.f32.gmra.mrb[0].mxu0 %v842
        %v1190 = vpop.f32.mrb[0].mxu0
        %v1191 = vadd.f32 0.0, %v1190
        %v1192 = vpop.f32.mrb[0].mxu0
        %v1193 = vadd.f32 0.0, %v1192
        %1194 = vmatprep.mubr.f32.mxu0 %v846
        %1195 = vmatmul.mubr.f32.gmra.mrb[0].mxu0 %v845
        %v1196 = vpop.f32.mrb[0].mxu0
        %v1197 = vadd.f32 0.0, %v1196
        %v1198 = vpop.f32.mrb[0].mxu0
        %v1199 = vadd.f32 0.0, %v1198
        %1200 = vdwg.mxu0
        %1201 = vmatprep.subr.mxu0 %v913
        %1202 = vmatpush1.msra.mxu0 %v912
        %1203 = vmatprep.subr.mxu0 %v915
        %1204 = vmatpush1.msra.mxu0 %v914
        %1205 = vmatprep.subr.mxu0 %v917
        %1206 = vmatpush1.msra.mxu0 %v916
        %1207 = vmatprep.subr.mxu0 %v919
        %1208 = vmatpush1.msra.mxu0 %v918
        %1209 = vmatprep.subr.mxu0 %v921
        %1210 = vmatpush1.msra.mxu0 %v920
        %1211 = vmatprep.subr.mxu0 %v923
        %1212 = vmatpush1.msra.mxu0 %v922
        %1213 = vmatprep.subr.mxu0 %v925
        %1214 = vmatpush1.msra.mxu0 %v924
        %1215 = vmatprep.subr.mxu0 %v927
        %1216 = vmatpush1.msra.mxu0 %v926
        %1217 = vmatprep.subr.mxu0 %v929
        %1218 = vmatpush1.msra.mxu0 %v928
        %1219 = vmatprep.subr.mxu0 %v931
        %1220 = vmatpush1.msra.mxu0 %v930
        %1221 = vmatprep.subr.mxu0 %v933
        %1222 = vmatpush1.msra.mxu0 %v932
        %1223 = vmatprep.subr.mxu0 %v935
        %1224 = vmatpush1.msra.mxu0 %v934
        %1225 = vmatprep.subr.mxu0 %v937
        %1226 = vmatpush1.msra.mxu0 %v936
        %1227 = vmatprep.subr.mxu0 %v939
        %1228 = vmatpush1.msra.mxu0 %v938
        %1229 = vmatprep.subr.mxu0 %v941
        %1230 = vmatpush1.msra.mxu0 %v940
        %1231 = vmatprep.subr.mxu0 %v943
        %1232 = vmatpush1.msra.mxu0 %v942
        %1233 = vmatprep.subr.mxu0 0.0
        %1234 = vmatpush1.msra.mxu0 0.0
        %1235 = vmatprep.subr.mxu0 0.0
        %1236 = vmatpush1.msra.mxu0 0.0
        %1237 = vmatprep.subr.mxu0 0.0
        %1238 = vmatpush1.msra.mxu0 0.0
        %1239 = vmatprep.subr.mxu0 0.0
        %1240 = vmatpush1.msra.mxu0 0.0
        %1241 = vmatprep.subr.mxu0 0.0
        %1242 = vmatpush1.msra.mxu0 0.0
        %1243 = vmatprep.subr.mxu0 0.0
        %1244 = vmatpush1.msra.mxu0 0.0
        %1245 = vmatprep.subr.mxu0 0.0
        %1246 = vmatpush1.msra.mxu0 0.0
        %1247 = vmatprep.subr.mxu0 0.0
        %1248 = vmatpush1.msra.mxu0 0.0
        %1249 = vmatprep.subr.mxu0 0.0
        %1250 = vmatpush1.msra.mxu0 0.0
        %1251 = vmatprep.subr.mxu0 0.0
        %1252 = vmatpush1.msra.mxu0 0.0
        %1253 = vmatprep.subr.mxu0 0.0
        %1254 = vmatpush1.msra.mxu0 0.0
        %1255 = vmatprep.subr.mxu0 0.0
        %1256 = vmatpush1.msra.mxu0 0.0
        %1257 = vmatprep.subr.mxu0 0.0
        %1258 = vmatpush1.msra.mxu0 0.0
        %1259 = vmatprep.subr.mxu0 0.0
        %1260 = vmatpush1.msra.mxu0 0.0
        %1261 = vmatprep.subr.mxu0 0.0
        %1262 = vmatpush1.msra.mxu0 0.0
        %1263 = vmatprep.subr.mxu0 0.0
        %1264 = vmatpush1.msra.mxu0 0.0
        %1265 = vmatprep.mubr.f32.mxu0 0.0
        %1266 = vmatmul.mubr.f32.gmra.mrb[0].mxu0 %v754
        %v1267 = vpop.f32.mrb[0].mxu0
        %v1268 = vadd.f32 %v1011, %v1267
        %v1269 = vpop.f32.mrb[0].mxu0
        %v1270 = vadd.f32 %v1013, %v1269
        %1271 = vmatprep.mubr.f32.mxu0 0.0
        %1272 = vmatmul.mubr.f32.gmra.mrb[0].mxu0 %v757
        %v1273 = vpop.f32.mrb[0].mxu0
        %v1274 = vadd.f32 %v1017, %v1273
        %v1275 = vpop.f32.mrb[0].mxu0
        %v1276 = vadd.f32 %v1019, %v1275
        %1277 = vmatprep.mubr.f32.mxu0 0.0
        %1278 = vmatmul.mubr.f32.gmra.mrb[0].mxu0 %v760
        %v1279 = vpop.f32.mrb[0].mxu0
        %v1280 = vadd.f32 %v1023, %v1279
        %v1281 = vpop.f32.mrb[0].mxu0
        %v1282 = vadd.f32 %v1025, %v1281
        %1283 = vmatprep.mubr.f32.mxu0 0.0
        %1284 = vmatmul.mubr.f32.gmra.mrb[0].mxu0 %v763
        %v1285 = vpop.f32.mrb[0].mxu0
        %v1286 = vadd.f32 %v1029, %v1285
        %v1287 = vpop.f32.mrb[0].mxu0
        %v1288 = vadd.f32 %v1031, %v1287
        %1289 = vmatprep.mubr.f32.mxu0 0.0
        %1290 = vmatmul.mubr.f32.gmra.mrb[0].mxu0 %v766
        %v1291 = vpop.f32.mrb[0].mxu0
        %v1292 = vadd.f32 %v1035, %v1291
        %v1293 = vpop.f32.mrb[0].mxu0
        %v1294 = vadd.f32 %v1037, %v1293
        %1295 = vmatprep.mubr.f32.mxu0 0.0
        %1296 = vmatmul.mubr.f32.gmra.mrb[0].mxu0 %v769
        %v1297 = vpop.f32.mrb[0].mxu0
        %v1298 = vadd.f32 %v1041, %v1297
        %v1299 = vpop.f32.mrb[0].mxu0
        %v1300 = vadd.f32 %v1043, %v1299
        %1301 = vmatprep.mubr.f32.mxu0 0.0
        %1302 = vmatmul.mubr.f32.gmra.mrb[0].mxu0 %v772
        %v1303 = vpop.f32.mrb[0].mxu0
        %v1304 = vadd.f32 %v1047, %v1303
        %v1305 = vpop.f32.mrb[0].mxu0
        %v1306 = vadd.f32 %v1049, %v1305
        %1307 = vmatprep.mubr.f32.mxu0 0.0
        %1308 = vmatmul.mubr.f32.gmra.mrb[0].mxu0 %v775
        %v1309 = vpop.f32.mrb[0].mxu0
        %v1310 = vadd.f32 %v1053, %v1309
        %v1311 = vpop.f32.mrb[0].mxu0
        %v1312 = vadd.f32 %v1055, %v1311
        %1313 = vmatprep.mubr.f32.mxu0 0.0
        %1314 = vmatmul.mubr.f32.gmra.mrb[0].mxu0 %v778
        %v1315 = vpop.f32.mrb[0].mxu0
        %v1316 = vadd.f32 %v1059, %v1315
        %v1317 = vpop.f32.mrb[0].mxu0
        %v1318 = vadd.f32 %v1061, %v1317
        %1319 = vmatprep.mubr.f32.mxu0 0.0
        %1320 = vmatmul.mubr.f32.gmra.mrb[0].mxu0 %v781
        %v1321 = vpop.f32.mrb[0].mxu0
        %v1322 = vadd.f32 %v1065, %v1321
        %v1323 = vpop.f32.mrb[0].mxu0
        %v1324 = vadd.f32 %v1067, %v1323
        %1325 = vmatprep.mubr.f32.mxu0 0.0
        %1326 = vmatmul.mubr.f32.gmra.mrb[0].mxu0 %v784
        %v1327 = vpop.f32.mrb[0].mxu0
        %v1328 = vadd.f32 %v1071, %v1327
        %v1329 = vpop.f32.mrb[0].mxu0
        %v1330 = vadd.f32 %v1073, %v1329
        %1331 = vmatprep.mubr.f32.mxu0 0.0
        %1332 = vmatmul.mubr.f32.gmra.mrb[0].mxu0 %v787
        %v1333 = vpop.f32.mrb[0].mxu0
        %v1334 = vadd.f32 %v1077, %v1333
        %v1335 = vpop.f32.mrb[0].mxu0
        %v1336 = vadd.f32 %v1079, %v1335
        %1337 = vmatprep.mubr.f32.mxu0 0.0
        %1338 = vmatmul.mubr.f32.gmra.mrb[0].mxu0 %v790
        %v1339 = vpop.f32.mrb[0].mxu0
        %v1340 = vadd.f32 %v1083, %v1339
        %v1341 = vpop.f32.mrb[0].mxu0
        %v1342 = vadd.f32 %v1085, %v1341
        %1343 = vmatprep.mubr.f32.mxu0 0.0
        %1344 = vmatmul.mubr.f32.gmra.mrb[0].mxu0 %v793
        %v1345 = vpop.f32.mrb[0].mxu0
        %v1346 = vadd.f32 %v1089, %v1345
        %v1347 = vpop.f32.mrb[0].mxu0
        %v1348 = vadd.f32 %v1091, %v1347
        %1349 = vmatprep.mubr.f32.mxu0 0.0
        %1350 = vmatmul.mubr.f32.gmra.mrb[0].mxu0 %v796
        %v1351 = vpop.f32.mrb[0].mxu0
        %v1352 = vadd.f32 %v1095, %v1351
        %v1353 = vpop.f32.mrb[0].mxu0
        %v1354 = vadd.f32 %v1097, %v1353
        %1355 = vmatprep.mubr.f32.mxu0 0.0
        %1356 = vmatmul.mubr.f32.gmra.mrb[0].mxu0 %v799
        %v1357 = vpop.f32.mrb[0].mxu0
        %v1358 = vadd.f32 %v1101, %v1357
        %v1359 = vpop.f32.mrb[0].mxu0
        %v1360 = vadd.f32 %v1103, %v1359
        %1361 = vmatprep.mubr.f32.mxu0 0.0
        %1362 = vmatmul.mubr.f32.gmra.mrb[0].mxu0 %v802
        %v1363 = vpop.f32.mrb[0].mxu0
        %v1364 = vadd.f32 %v1107, %v1363
        %v1365 = vpop.f32.mrb[0].mxu0
        %v1366 = vadd.f32 %v1109, %v1365
        %1367 = vmatprep.mubr.f32.mxu0 0.0
        %1368 = vmatmul.mubr.f32.gmra.mrb[0].mxu0 %v805
        %v1369 = vpop.f32.mrb[0].mxu0
        %v1370 = vadd.f32 %v1113, %v1369
        %v1371 = vpop.f32.mrb[0].mxu0
        %v1372 = vadd.f32 %v1115, %v1371
        %1373 = vmatprep.mubr.f32.mxu0 0.0
        %1374 = vmatmul.mubr.f32.gmra.mrb[0].mxu0 %v808
        %v1375 = vpop.f32.mrb[0].mxu0
        %v1376 = vadd.f32 %v1119, %v1375
        %v1377 = vpop.f32.mrb[0].mxu0
        %v1378 = vadd.f32 %v1121, %v1377
        %1379 = vmatprep.mubr.f32.mxu0 0.0
        %1380 = vmatmul.mubr.f32.gmra.mrb[0].mxu0 %v811
        %v1381 = vpop.f32.mrb[0].mxu0
        %v1382 = vadd.f32 %v1125, %v1381
        %v1383 = vpop.f32.mrb[0].mxu0
        %v1384 = vadd.f32 %v1127, %v1383
        %1385 = vmatprep.mubr.f32.mxu0 0.0
        %1386 = vmatmul.mubr.f32.gmra.mrb[0].mxu0 %v814
        %v1387 = vpop.f32.mrb[0].mxu0
        %v1388 = vadd.f32 %v1131, %v1387
        %v1389 = vpop.f32.mrb[0].mxu0
        %v1390 = vadd.f32 %v1133, %v1389
        %1391 = vmatprep.mubr.f32.mxu0 0.0
        %1392 = vmatmul.mubr.f32.gmra.mrb[0].mxu0 %v817
        %v1393 = vpop.f32.mrb[0].mxu0
        %v1394 = vadd.f32 %v1137, %v1393
        %v1395 = vpop.f32.mrb[0].mxu0
        %v1396 = vadd.f32 %v1139, %v1395
        %1397 = vmatprep.mubr.f32.mxu0 0.0
        %1398 = vmatmul.mubr.f32.gmra.mrb[0].mxu0 %v820
        %v1399 = vpop.f32.mrb[0].mxu0
        %v1400 = vadd.f32 %v1143, %v1399
        %v1401 = vpop.f32.mrb[0].mxu0
        %v1402 = vadd.f32 %v1145, %v1401
        %1403 = vmatprep.mubr.f32.mxu0 0.0
        %1404 = vmatmul.mubr.f32.gmra.mrb[0].mxu0 %v823
        %v1405 = vpop.f32.mrb[0].mxu0
        %v1406 = vadd.f32 %v1149, %v1405
        %v1407 = vpop.f32.mrb[0].mxu0
        %v1408 = vadd.f32 %v1151, %v1407
        %1409 = vmatprep.mubr.f32.mxu0 0.0
        %1410 = vmatmul.mubr.f32.gmra.mrb[0].mxu0 %v826
        %v1411 = vpop.f32.mrb[0].mxu0
        %v1412 = vadd.f32 %v1155, %v1411
        %v1413 = vpop.f32.mrb[0].mxu0
        %v1414 = vadd.f32 %v1157, %v1413
        %1415 = vmatprep.mubr.f32.mxu0 0.0
        %1416 = vmatmul.mubr.f32.gmra.mrb[0].mxu0 %v829
        %v1417 = vpop.f32.mrb[0].mxu0
        %v1418 = vadd.f32 %v1161, %v1417
        %v1419 = vpop.f32.mrb[0].mxu0
        %v1420 = vadd.f32 %v1163, %v1419
        %1421 = vmatprep.mubr.f32.mxu0 0.0
        %1422 = vmatmul.mubr.f32.gmra.mrb[0].mxu0 %v832
        %v1423 = vpop.f32.mrb[0].mxu0
        %v1424 = vadd.f32 %v1167, %v1423
        %v1425 = vpop.f32.mrb[0].mxu0
        %v1426 = vadd.f32 %v1169, %v1425
        %1427 = vmatprep.mubr.f32.mxu0 0.0
        %1428 = vmatmul.mubr.f32.gmra.mrb[0].mxu0 %v835
        %v1429 = vpop.f32.mrb[0].mxu0
        %v1430 = vadd.f32 %v1173, %v1429
        %v1431 = vpop.f32.mrb[0].mxu0
        %v1432 = vadd.f32 %v1175, %v1431
        %1433 = vmatprep.mubr.f32.mxu0 0.0
        %1434 = vmatmul.mubr.f32.gmra.mrb[0].mxu0 %v838
        %v1435 = vpop.f32.mrb[0].mxu0
        %v1436 = vadd.f32 %v1179, %v1435
        %v1437 = vpop.f32.mrb[0].mxu0
        %v1438 = vadd.f32 %v1181, %v1437
        %1439 = vmatprep.mubr.f32.mxu0 0.0
        %1440 = vmatmul.mubr.f32.gmra.mrb[0].mxu0 %v841
        %v1441 = vpop.f32.mrb[0].mxu0
        %v1442 = vadd.f32 %v1185, %v1441
        %v1443 = vpop.f32.mrb[0].mxu0
        %v1444 = vadd.f32 %v1187, %v1443
        %1445 = vmatprep.mubr.f32.mxu0 0.0
        %1446 = vmatmul.mubr.f32.gmra.mrb[0].mxu0 %v844
        %v1447 = vpop.f32.mrb[0].mxu0
        %v1448 = vadd.f32 %v1191, %v1447
        %v1449 = vpop.f32.mrb[0].mxu0
        %v1450 = vadd.f32 %v1193, %v1449
        %1451 = vmatprep.mubr.f32.mxu0 0.0
        %1452 = vmatmul.mubr.f32.gmra.mrb[0].mxu0 %v847
        %v1453 = vpop.f32.mrb[0].mxu0
        %v1454 = vadd.f32 %v1197, %v1453
        %v1455 = vpop.f32.mrb[0].mxu0
        %v1456 = vadd.f32 %v1199, %v1455
        %1457 = vdwg.mxu0
        %v1458 = vld [vmem:[%s2] sm:$0x3]
        %v1460 = vlaneseq
        %v1461 = vshrl.u32 %v1460, 7
        %v1462 = vsub.s32 0, %v1461
        %v1463 = vrot.slane %v1458, %v1462
        %v1464 = vlaneseq
        %v1465 = vshrl.u32 %v1464, 7
        %v1466 = vsub.s32 1, %v1465
        %v1467 = vrot.slane %v1458, %v1466
        %v1470 = vadd.f32 %v1268, %v1463
        %v1471 = vadd.f32 %v1270, %v1467
        %v1472 = vadd.f32 %v1274, %v1463
        %v1473 = vadd.f32 %v1276, %v1467
        %v1474 = vadd.f32 %v1280, %v1463
        %v1475 = vadd.f32 %v1282, %v1467
        %v1476 = vadd.f32 %v1286, %v1463
        %v1477 = vadd.f32 %v1288, %v1467
        %v1478 = vadd.f32 %v1292, %v1463
        %v1479 = vadd.f32 %v1294, %v1467
        %v1480 = vadd.f32 %v1298, %v1463
        %v1481 = vadd.f32 %v1300, %v1467
        %v1482 = vadd.f32 %v1304, %v1463
        %v1483 = vadd.f32 %v1306, %v1467
        %v1484 = vadd.f32 %v1310, %v1463
        %v1485 = vadd.f32 %v1312, %v1467
        %v1486 = vadd.f32 %v1316, %v1463
        %v1487 = vadd.f32 %v1318, %v1467
        %v1488 = vadd.f32 %v1322, %v1463
        %v1489 = vadd.f32 %v1324, %v1467
        %v1490 = vadd.f32 %v1328, %v1463
        %v1491 = vadd.f32 %v1330, %v1467
        %v1492 = vadd.f32 %v1334, %v1463
        %v1493 = vadd.f32 %v1336, %v1467
        %v1494 = vadd.f32 %v1340, %v1463
        %v1495 = vadd.f32 %v1342, %v1467
        %v1496 = vadd.f32 %v1346, %v1463
        %v1497 = vadd.f32 %v1348, %v1467
        %v1498 = vadd.f32 %v1352, %v1463
        %v1499 = vadd.f32 %v1354, %v1467
        %v1500 = vadd.f32 %v1358, %v1463
        %v1501 = vadd.f32 %v1360, %v1467
        %v1502 = vadd.f32 %v1364, %v1463
        %v1503 = vadd.f32 %v1366, %v1467
        %v1504 = vadd.f32 %v1370, %v1463
        %v1505 = vadd.f32 %v1372, %v1467
        %v1506 = vadd.f32 %v1376, %v1463
        %v1507 = vadd.f32 %v1378, %v1467
        %v1508 = vadd.f32 %v1382, %v1463
        %v1509 = vadd.f32 %v1384, %v1467
        %v1510 = vadd.f32 %v1388, %v1463
        %v1511 = vadd.f32 %v1390, %v1467
        %v1512 = vadd.f32 %v1394, %v1463
        %v1513 = vadd.f32 %v1396, %v1467
        %v1514 = vadd.f32 %v1400, %v1463
        %v1515 = vadd.f32 %v1402, %v1467
        %v1516 = vadd.f32 %v1406, %v1463
        %v1517 = vadd.f32 %v1408, %v1467
        %v1518 = vadd.f32 %v1412, %v1463
        %v1519 = vadd.f32 %v1414, %v1467
        %v1520 = vadd.f32 %v1418, %v1463
        %v1521 = vadd.f32 %v1420, %v1467
        %v1522 = vadd.f32 %v1424, %v1463
        %v1523 = vadd.f32 %v1426, %v1467
        %v1524 = vadd.f32 %v1430, %v1463
        %v1525 = vadd.f32 %v1432, %v1467
        %v1526 = vadd.f32 %v1436, %v1463
        %v1527 = vadd.f32 %v1438, %v1467
        %v1528 = vadd.f32 %v1442, %v1463
        %v1529 = vadd.f32 %v1444, %v1467
        %v1530 = vadd.f32 %v1448, %v1463
        %v1531 = vadd.f32 %v1450, %v1467
        %v1532 = vadd.f32 %v1454, %v1463
        %v1533 = vadd.f32 %v1456, %v1467
        %v1534 = vmax.f32 %v1470, 0.0
        %v1535 = vmax.f32 %v1471, 0.0
        %v1536 = vmax.f32 %v1472, 0.0
        %v1537 = vmax.f32 %v1473, 0.0
        %v1538 = vmax.f32 %v1474, 0.0
        %v1539 = vmax.f32 %v1475, 0.0
        %v1540 = vmax.f32 %v1476, 0.0
        %v1541 = vmax.f32 %v1477, 0.0
        %v1542 = vmax.f32 %v1478, 0.0
        %v1543 = vmax.f32 %v1479, 0.0
        %v1544 = vmax.f32 %v1480, 0.0
        %v1545 = vmax.f32 %v1481, 0.0
        %v1546 = vmax.f32 %v1482, 0.0
        %v1547 = vmax.f32 %v1483, 0.0
        %v1548 = vmax.f32 %v1484, 0.0
        %v1549 = vmax.f32 %v1485, 0.0
        %v1550 = vmax.f32 %v1486, 0.0
        %v1551 = vmax.f32 %v1487, 0.0
        %v1552 = vmax.f32 %v1488, 0.0
        %v1553 = vmax.f32 %v1489, 0.0
        %v1554 = vmax.f32 %v1490, 0.0
        %v1555 = vmax.f32 %v1491, 0.0
        %v1556 = vmax.f32 %v1492, 0.0
        %v1557 = vmax.f32 %v1493, 0.0
        %v1558 = vmax.f32 %v1494, 0.0
        %v1559 = vmax.f32 %v1495, 0.0
        %v1560 = vmax.f32 %v1496, 0.0
        %v1561 = vmax.f32 %v1497, 0.0
        %v1562 = vmax.f32 %v1498, 0.0
        %v1563 = vmax.f32 %v1499, 0.0
        %v1564 = vmax.f32 %v1500, 0.0
        %v1565 = vmax.f32 %v1501, 0.0
        %v1566 = vmax.f32 %v1502, 0.0
        %v1567 = vmax.f32 %v1503, 0.0
        %v1568 = vmax.f32 %v1504, 0.0
        %v1569 = vmax.f32 %v1505, 0.0
        %v1570 = vmax.f32 %v1506, 0.0
        %v1571 = vmax.f32 %v1507, 0.0
        %v1572 = vmax.f32 %v1508, 0.0
        %v1573 = vmax.f32 %v1509, 0.0
        %v1574 = vmax.f32 %v1510, 0.0
        %v1575 = vmax.f32 %v1511, 0.0
        %v1576 = vmax.f32 %v1512, 0.0
        %v1577 = vmax.f32 %v1513, 0.0
        %v1578 = vmax.f32 %v1514, 0.0
        %v1579 = vmax.f32 %v1515, 0.0
        %v1580 = vmax.f32 %v1516, 0.0
        %v1581 = vmax.f32 %v1517, 0.0
        %v1582 = vmax.f32 %v1518, 0.0
        %v1583 = vmax.f32 %v1519, 0.0
        %v1584 = vmax.f32 %v1520, 0.0
        %v1585 = vmax.f32 %v1521, 0.0
        %v1586 = vmax.f32 %v1522, 0.0
        %v1587 = vmax.f32 %v1523, 0.0
        %v1588 = vmax.f32 %v1524, 0.0
        %v1589 = vmax.f32 %v1525, 0.0
        %v1590 = vmax.f32 %v1526, 0.0
        %v1591 = vmax.f32 %v1527, 0.0
        %v1592 = vmax.f32 %v1528, 0.0
        %v1593 = vmax.f32 %v1529, 0.0
        %v1594 = vmax.f32 %v1530, 0.0
        %v1595 = vmax.f32 %v1531, 0.0
        %v1596 = vmax.f32 %v1532, 0.0
        %v1597 = vmax.f32 %v1533, 0.0
        %v1662 = vcombine.low %v1534, %v1535
        %v1663 = vcombine.high %v1534, %v1535
        %v1665 = vunpack.c.l.s4 1966171168
        %v1666 = vunpack.c.0.s8 %v1665
        %v1667 = vlaneseq
        %v1668 = vshrl.u32 %v1667, 7
        %v1669 = vsub.s32 %v1666, %v1668
        %v1670 = vrot.slane %v1662, %v1669
        %v1672 = vunpack.c.l.s4 1966171168
        %v1673 = vunpack.c.0.s8 %v1672
        %v1674 = vlaneseq
        %v1675 = vshrl.u32 %v1674, 7
        %v1676 = vsub.s32 %v1673, %v1675
        %v1677 = vrot.slane %v1663, %v1676
        %v1678 = vcombine.high %v1670, %v1670
        %v1679 = vcombine.high %v1677, %v1677
        %v1681 = vunpack.c.l.s4 1966171168
        %v1682 = vunpack.c.0.s8 %v1681
        %v1683 = vlaneseq
        %v1684 = vshrl.u32 %v1683, 7
        %v1685 = vsub.s32 %v1682, %v1684
        %v1686 = vrot.slane %v1670, %v1685
        %v1688 = vunpack.c.l.s4 1966171168
        %v1689 = vunpack.c.0.s8 %v1688
        %v1690 = vlaneseq
        %v1691 = vshrl.u32 %v1690, 7
        %v1692 = vsub.s32 %v1689, %v1691
        %v1693 = vrot.slane %v1677, %v1692
        %v1695 = vunpack.c.l.s4 1966171168
        %v1696 = vunpack.c.0.s8 %v1695
        %v1697 = vlaneseq
        %v1698 = vshrl.u32 %v1697, 7
        %v1699 = vsub.s32 %v1696, %v1698
        %v1700 = vrot.slane %v1678, %v1699
        %v1702 = vunpack.c.l.s4 1966171168
        %v1703 = vunpack.c.0.s8 %v1702
        %v1704 = vlaneseq
        %v1705 = vshrl.u32 %v1704, 7
        %v1706 = vsub.s32 %v1703, %v1705
        %v1707 = vrot.slane %v1679, %v1706
        %v1708 = vcombine.high %v1686, %v1686
        %v1709 = vcombine.high %v1693, %v1693
        %v1710 = vcombine.high %v1700, %v1700
        %v1711 = vcombine.high %v1707, %v1707
        %v1712 = vcombine.low %v1536, %v1537
        %v1713 = vcombine.high %v1536, %v1537
        %v1715 = vunpack.c.l.s4 1966171168
        %v1716 = vunpack.c.0.s8 %v1715
        %v1717 = vlaneseq
        %v1718 = vshrl.u32 %v1717, 7
        %v1719 = vsub.s32 %v1716, %v1718
        %v1720 = vrot.slane %v1712, %v1719
        %v1722 = vunpack.c.l.s4 1966171168
        %v1723 = vunpack.c.0.s8 %v1722
        %v1724 = vlaneseq
        %v1725 = vshrl.u32 %v1724, 7
        %v1726 = vsub.s32 %v1723, %v1725
        %v1727 = vrot.slane %v1713, %v1726
        %v1728 = vcombine.high %v1720, %v1720
        %v1729 = vcombine.high %v1727, %v1727
        %v1731 = vunpack.c.l.s4 1966171168
        %v1732 = vunpack.c.0.s8 %v1731
        %v1733 = vlaneseq
        %v1734 = vshrl.u32 %v1733, 7
        %v1735 = vsub.s32 %v1732, %v1734
        %v1736 = vrot.slane %v1720, %v1735
        %v1738 = vunpack.c.l.s4 1966171168
        %v1739 = vunpack.c.0.s8 %v1738
        %v1740 = vlaneseq
        %v1741 = vshrl.u32 %v1740, 7
        %v1742 = vsub.s32 %v1739, %v1741
        %v1743 = vrot.slane %v1727, %v1742
        %v1745 = vunpack.c.l.s4 1966171168
        %v1746 = vunpack.c.0.s8 %v1745
        %v1747 = vlaneseq
        %v1748 = vshrl.u32 %v1747, 7
        %v1749 = vsub.s32 %v1746, %v1748
        %v1750 = vrot.slane %v1728, %v1749
        %v1752 = vunpack.c.l.s4 1966171168
        %v1753 = vunpack.c.0.s8 %v1752
        %v1754 = vlaneseq
        %v1755 = vshrl.u32 %v1754, 7
        %v1756 = vsub.s32 %v1753, %v1755
        %v1757 = vrot.slane %v1729, %v1756
        %v1758 = vcombine.high %v1736, %v1736
        %v1759 = vcombine.high %v1743, %v1743
        %v1760 = vcombine.high %v1750, %v1750
        %v1761 = vcombine.high %v1757, %v1757
        %v1762 = vcombine.low %v1538, %v1539
        %v1763 = vcombine.high %v1538, %v1539
        %v1765 = vunpack.c.l.s4 1966171168
        %v1766 = vunpack.c.0.s8 %v1765
        %v1767 = vlaneseq
        %v1768 = vshrl.u32 %v1767, 7
        %v1769 = vsub.s32 %v1766, %v1768
        %v1770 = vrot.slane %v1762, %v1769
        %v1772 = vunpack.c.l.s4 1966171168
        %v1773 = vunpack.c.0.s8 %v1772
        %v1774 = vlaneseq
        %v1775 = vshrl.u32 %v1774, 7
        %v1776 = vsub.s32 %v1773, %v1775
        %v1777 = vrot.slane %v1763, %v1776
        %v1778 = vcombine.high %v1770, %v1770
        %v1779 = vcombine.high %v1777, %v1777
        %v1781 = vunpack.c.l.s4 1966171168
        %v1782 = vunpack.c.0.s8 %v1781
        %v1783 = vlaneseq
        %v1784 = vshrl.u32 %v1783, 7
        %v1785 = vsub.s32 %v1782, %v1784
        %v1786 = vrot.slane %v1770, %v1785
        %v1788 = vunpack.c.l.s4 1966171168
        %v1789 = vunpack.c.0.s8 %v1788
        %v1790 = vlaneseq
        %v1791 = vshrl.u32 %v1790, 7
        %v1792 = vsub.s32 %v1789, %v1791
        %v1793 = vrot.slane %v1777, %v1792
        %v1795 = vunpack.c.l.s4 1966171168
        %v1796 = vunpack.c.0.s8 %v1795
        %v1797 = vlaneseq
        %v1798 = vshrl.u32 %v1797, 7
        %v1799 = vsub.s32 %v1796, %v1798
        %v1800 = vrot.slane %v1778, %v1799
        %v1802 = vunpack.c.l.s4 1966171168
        %v1803 = vunpack.c.0.s8 %v1802
        %v1804 = vlaneseq
        %v1805 = vshrl.u32 %v1804, 7
        %v1806 = vsub.s32 %v1803, %v1805
        %v1807 = vrot.slane %v1779, %v1806
        %v1808 = vcombine.high %v1786, %v1786
        %v1809 = vcombine.high %v1793, %v1793
        %v1810 = vcombine.high %v1800, %v1800
        %v1811 = vcombine.high %v1807, %v1807
        %v1812 = vcombine.low %v1540, %v1541
        %v1813 = vcombine.high %v1540, %v1541
        %v1815 = vunpack.c.l.s4 1966171168
        %v1816 = vunpack.c.0.s8 %v1815
        %v1817 = vlaneseq
        %v1818 = vshrl.u32 %v1817, 7
        %v1819 = vsub.s32 %v1816, %v1818
        %v1820 = vrot.slane %v1812, %v1819
        %v1822 = vunpack.c.l.s4 1966171168
        %v1823 = vunpack.c.0.s8 %v1822
        %v1824 = vlaneseq
        %v1825 = vshrl.u32 %v1824, 7
        %v1826 = vsub.s32 %v1823, %v1825
        %v1827 = vrot.slane %v1813, %v1826
        %v1828 = vcombine.high %v1820, %v1820
        %v1829 = vcombine.high %v1827, %v1827
        %v1831 = vunpack.c.l.s4 1966171168
        %v1832 = vunpack.c.0.s8 %v1831
        %v1833 = vlaneseq
        %v1834 = vshrl.u32 %v1833, 7
        %v1835 = vsub.s32 %v1832, %v1834
        %v1836 = vrot.slane %v1820, %v1835
        %v1838 = vunpack.c.l.s4 1966171168
        %v1839 = vunpack.c.0.s8 %v1838
        %v1840 = vlaneseq
        %v1841 = vshrl.u32 %v1840, 7
        %v1842 = vsub.s32 %v1839, %v1841
        %v1843 = vrot.slane %v1827, %v1842
        %v1845 = vunpack.c.l.s4 1966171168
        %v1846 = vunpack.c.0.s8 %v1845
        %v1847 = vlaneseq
        %v1848 = vshrl.u32 %v1847, 7
        %v1849 = vsub.s32 %v1846, %v1848
        %v1850 = vrot.slane %v1828, %v1849
        %v1852 = vunpack.c.l.s4 1966171168
        %v1853 = vunpack.c.0.s8 %v1852
        %v1854 = vlaneseq
        %v1855 = vshrl.u32 %v1854, 7
        %v1856 = vsub.s32 %v1853, %v1855
        %v1857 = vrot.slane %v1829, %v1856
        %v1858 = vcombine.high %v1836, %v1836
        %v1859 = vcombine.high %v1850, %v1850
        %v1860 = vcombine.low %v1542, %v1543
        %v1861 = vcombine.high %v1542, %v1543
        %v1863 = vunpack.c.l.s4 1966171168
        %v1864 = vunpack.c.0.s8 %v1863
        %v1865 = vlaneseq
        %v1866 = vshrl.u32 %v1865, 7
        %v1867 = vsub.s32 %v1864, %v1866
        %v1868 = vrot.slane %v1860, %v1867
        %v1870 = vunpack.c.l.s4 1966171168
        %v1871 = vunpack.c.0.s8 %v1870
        %v1872 = vlaneseq
        %v1873 = vshrl.u32 %v1872, 7
        %v1874 = vsub.s32 %v1871, %v1873
        %v1875 = vrot.slane %v1861, %v1874
        %v1876 = vcombine.high %v1868, %v1868
        %v1877 = vcombine.high %v1875, %v1875
        %v1879 = vunpack.c.l.s4 1966171168
        %v1880 = vunpack.c.0.s8 %v1879
        %v1881 = vlaneseq
        %v1882 = vshrl.u32 %v1881, 7
        %v1883 = vsub.s32 %v1880, %v1882
        %v1884 = vrot.slane %v1868, %v1883
        %v1886 = vunpack.c.l.s4 1966171168
        %v1887 = vunpack.c.0.s8 %v1886
        %v1888 = vlaneseq
        %v1889 = vshrl.u32 %v1888, 7
        %v1890 = vsub.s32 %v1887, %v1889
        %v1891 = vrot.slane %v1875, %v1890
        %v1893 = vunpack.c.l.s4 1966171168
        %v1894 = vunpack.c.0.s8 %v1893
        %v1895 = vlaneseq
        %v1896 = vshrl.u32 %v1895, 7
        %v1897 = vsub.s32 %v1894, %v1896
        %v1898 = vrot.slane %v1876, %v1897
        %v1900 = vunpack.c.l.s4 1966171168
        %v1901 = vunpack.c.0.s8 %v1900
        %v1902 = vlaneseq
        %v1903 = vshrl.u32 %v1902, 7
        %v1904 = vsub.s32 %v1901, %v1903
        %v1905 = vrot.slane %v1877, %v1904
        %v1906 = vcombine.high %v1884, %v1884
        %v1907 = vcombine.high %v1891, %v1891
        %v1908 = vcombine.high %v1898, %v1898
        %v1909 = vcombine.high %v1905, %v1905
        %v1910 = vcombine.low %v1544, %v1545
        %v1911 = vcombine.high %v1544, %v1545
        %v1913 = vunpack.c.l.s4 1966171168
        %v1914 = vunpack.c.0.s8 %v1913
        %v1915 = vlaneseq
        %v1916 = vshrl.u32 %v1915, 7
        %v1917 = vsub.s32 %v1914, %v1916
        %v1918 = vrot.slane %v1910, %v1917
        %v1920 = vunpack.c.l.s4 1966171168
        %v1921 = vunpack.c.0.s8 %v1920
        %v1922 = vlaneseq
        %v1923 = vshrl.u32 %v1922, 7
        %v1924 = vsub.s32 %v1921, %v1923
        %v1925 = vrot.slane %v1911, %v1924
        %v1926 = vcombine.high %v1918, %v1918
        %v1927 = vcombine.high %v1925, %v1925
        %v1929 = vunpack.c.l.s4 1966171168
        %v1930 = vunpack.c.0.s8 %v1929
        %v1931 = vlaneseq
        %v1932 = vshrl.u32 %v1931, 7
        %v1933 = vsub.s32 %v1930, %v1932
        %v1934 = vrot.slane %v1918, %v1933
        %v1936 = vunpack.c.l.s4 1966171168
        %v1937 = vunpack.c.0.s8 %v1936
        %v1938 = vlaneseq
        %v1939 = vshrl.u32 %v1938, 7
        %v1940 = vsub.s32 %v1937, %v1939
        %v1941 = vrot.slane %v1925, %v1940
        %v1943 = vunpack.c.l.s4 1966171168
        %v1944 = vunpack.c.0.s8 %v1943
        %v1945 = vlaneseq
        %v1946 = vshrl.u32 %v1945, 7
        %v1947 = vsub.s32 %v1944, %v1946
        %v1948 = vrot.slane %v1926, %v1947
        %v1950 = vunpack.c.l.s4 1966171168
        %v1951 = vunpack.c.0.s8 %v1950
        %v1952 = vlaneseq
        %v1953 = vshrl.u32 %v1952, 7
        %v1954 = vsub.s32 %v1951, %v1953
        %v1955 = vrot.slane %v1927, %v1954
        %v1956 = vcombine.high %v1934, %v1934
        %v1957 = vcombine.high %v1941, %v1941
        %v1958 = vcombine.high %v1948, %v1948
        %v1959 = vcombine.high %v1955, %v1955
        %v1960 = vcombine.low %v1546, %v1547
        %v1961 = vcombine.high %v1546, %v1547
        %v1963 = vunpack.c.l.s4 1966171168
        %v1964 = vunpack.c.0.s8 %v1963
        %v1965 = vlaneseq
        %v1966 = vshrl.u32 %v1965, 7
        %v1967 = vsub.s32 %v1964, %v1966
        %v1968 = vrot.slane %v1960, %v1967
        %v1970 = vunpack.c.l.s4 1966171168
        %v1971 = vunpack.c.0.s8 %v1970
        %v1972 = vlaneseq
        %v1973 = vshrl.u32 %v1972, 7
        %v1974 = vsub.s32 %v1971, %v1973
        %v1975 = vrot.slane %v1961, %v1974
        %v1976 = vcombine.high %v1968, %v1968
        %v1977 = vcombine.high %v1975, %v1975
        %v1979 = vunpack.c.l.s4 1966171168
        %v1980 = vunpack.c.0.s8 %v1979
        %v1981 = vlaneseq
        %v1982 = vshrl.u32 %v1981, 7
        %v1983 = vsub.s32 %v1980, %v1982
        %v1984 = vrot.slane %v1968, %v1983
        %v1986 = vunpack.c.l.s4 1966171168
        %v1987 = vunpack.c.0.s8 %v1986
        %v1988 = vlaneseq
        %v1989 = vshrl.u32 %v1988, 7
        %v1990 = vsub.s32 %v1987, %v1989
        %v1991 = vrot.slane %v1975, %v1990
        %v1993 = vunpack.c.l.s4 1966171168
        %v1994 = vunpack.c.0.s8 %v1993
        %v1995 = vlaneseq
        %v1996 = vshrl.u32 %v1995, 7
        %v1997 = vsub.s32 %v1994, %v1996
        %v1998 = vrot.slane %v1976, %v1997
        %v2000 = vunpack.c.l.s4 1966171168
        %v2001 = vunpack.c.0.s8 %v2000
        %v2002 = vlaneseq
        %v2003 = vshrl.u32 %v2002, 7
        %v2004 = vsub.s32 %v2001, %v2003
        %v2005 = vrot.slane %v1977, %v2004
        %v2006 = vcombine.high %v1984, %v1984
        %v2007 = vcombine.high %v1991, %v1991
        %v2008 = vcombine.high %v1998, %v1998
        %v2009 = vcombine.high %v2005, %v2005
        %v2010 = vcombine.low %v1548, %v1549
        %v2011 = vcombine.high %v1548, %v1549
        %v2013 = vunpack.c.l.s4 1966171168
        %v2014 = vunpack.c.0.s8 %v2013
        %v2015 = vlaneseq
        %v2016 = vshrl.u32 %v2015, 7
        %v2017 = vsub.s32 %v2014, %v2016
        %v2018 = vrot.slane %v2010, %v2017
        %v2020 = vunpack.c.l.s4 1966171168
        %v2021 = vunpack.c.0.s8 %v2020
        %v2022 = vlaneseq
        %v2023 = vshrl.u32 %v2022, 7
        %v2024 = vsub.s32 %v2021, %v2023
        %v2025 = vrot.slane %v2011, %v2024
        %v2026 = vcombine.high %v2018, %v2018
        %v2027 = vcombine.high %v2025, %v2025
        %v2029 = vunpack.c.l.s4 1966171168
        %v2030 = vunpack.c.0.s8 %v2029
        %v2031 = vlaneseq
        %v2032 = vshrl.u32 %v2031, 7
        %v2033 = vsub.s32 %v2030, %v2032
        %v2034 = vrot.slane %v2018, %v2033
        %v2036 = vunpack.c.l.s4 1966171168
        %v2037 = vunpack.c.0.s8 %v2036
        %v2038 = vlaneseq
        %v2039 = vshrl.u32 %v2038, 7
        %v2040 = vsub.s32 %v2037, %v2039
        %v2041 = vrot.slane %v2025, %v2040
        %v2043 = vunpack.c.l.s4 1966171168
        %v2044 = vunpack.c.0.s8 %v2043
        %v2045 = vlaneseq
        %v2046 = vshrl.u32 %v2045, 7
        %v2047 = vsub.s32 %v2044, %v2046
        %v2048 = vrot.slane %v2026, %v2047
        %v2050 = vunpack.c.l.s4 1966171168
        %v2051 = vunpack.c.0.s8 %v2050
        %v2052 = vlaneseq
        %v2053 = vshrl.u32 %v2052, 7
        %v2054 = vsub.s32 %v2051, %v2053
        %v2055 = vrot.slane %v2027, %v2054
        %v2056 = vcombine.high %v2034, %v2034
        %v2057 = vcombine.high %v2048, %v2048
        %v2058 = vcombine.low %v1550, %v1551
        %v2059 = vcombine.high %v1550, %v1551
        %v2061 = vunpack.c.l.s4 1966171168
        %v2062 = vunpack.c.0.s8 %v2061
        %v2063 = vlaneseq
        %v2064 = vshrl.u32 %v2063, 7
        %v2065 = vsub.s32 %v2062, %v2064
        %v2066 = vrot.slane %v2058, %v2065
        %v2068 = vunpack.c.l.s4 1966171168
        %v2069 = vunpack.c.0.s8 %v2068
        %v2070 = vlaneseq
        %v2071 = vshrl.u32 %v2070, 7
        %v2072 = vsub.s32 %v2069, %v2071
        %v2073 = vrot.slane %v2059, %v2072
        %v2074 = vcombine.high %v2066, %v2066
        %v2075 = vcombine.high %v2073, %v2073
        %v2077 = vunpack.c.l.s4 1966171168
        %v2078 = vunpack.c.0.s8 %v2077
        %v2079 = vlaneseq
        %v2080 = vshrl.u32 %v2079, 7
        %v2081 = vsub.s32 %v2078, %v2080
        %v2082 = vrot.slane %v2066, %v2081
        %v2084 = vunpack.c.l.s4 1966171168
        %v2085 = vunpack.c.0.s8 %v2084
        %v2086 = vlaneseq
        %v2087 = vshrl.u32 %v2086, 7
        %v2088 = vsub.s32 %v2085, %v2087
        %v2089 = vrot.slane %v2073, %v2088
        %v2091 = vunpack.c.l.s4 1966171168
        %v2092 = vunpack.c.0.s8 %v2091
        %v2093 = vlaneseq
        %v2094 = vshrl.u32 %v2093, 7
        %v2095 = vsub.s32 %v2092, %v2094
        %v2096 = vrot.slane %v2074, %v2095
        %v2098 = vunpack.c.l.s4 1966171168
        %v2099 = vunpack.c.0.s8 %v2098
        %v2100 = vlaneseq
        %v2101 = vshrl.u32 %v2100, 7
        %v2102 = vsub.s32 %v2099, %v2101
        %v2103 = vrot.slane %v2075, %v2102
        %v2104 = vcombine.high %v2082, %v2082
        %v2105 = vcombine.high %v2089, %v2089
        %v2106 = vcombine.high %v2096, %v2096
        %v2107 = vcombine.high %v2103, %v2103
        %v2108 = vcombine.low %v1552, %v1553
        %v2109 = vcombine.high %v1552, %v1553
        %v2111 = vunpack.c.l.s4 1966171168
        %v2112 = vunpack.c.0.s8 %v2111
        %v2113 = vlaneseq
        %v2114 = vshrl.u32 %v2113, 7
        %v2115 = vsub.s32 %v2112, %v2114
        %v2116 = vrot.slane %v2108, %v2115
        %v2118 = vunpack.c.l.s4 1966171168
        %v2119 = vunpack.c.0.s8 %v2118
        %v2120 = vlaneseq
        %v2121 = vshrl.u32 %v2120, 7
        %v2122 = vsub.s32 %v2119, %v2121
        %v2123 = vrot.slane %v2109, %v2122
        %v2124 = vcombine.high %v2116, %v2116
        %v2125 = vcombine.high %v2123, %v2123
        %v2127 = vunpack.c.l.s4 1966171168
        %v2128 = vunpack.c.0.s8 %v2127
        %v2129 = vlaneseq
        %v2130 = vshrl.u32 %v2129, 7
        %v2131 = vsub.s32 %v2128, %v2130
        %v2132 = vrot.slane %v2116, %v2131
        %v2134 = vunpack.c.l.s4 1966171168
        %v2135 = vunpack.c.0.s8 %v2134
        %v2136 = vlaneseq
        %v2137 = vshrl.u32 %v2136, 7
        %v2138 = vsub.s32 %v2135, %v2137
        %v2139 = vrot.slane %v2123, %v2138
        %v2141 = vunpack.c.l.s4 1966171168
        %v2142 = vunpack.c.0.s8 %v2141
        %v2143 = vlaneseq
        %v2144 = vshrl.u32 %v2143, 7
        %v2145 = vsub.s32 %v2142, %v2144
        %v2146 = vrot.slane %v2124, %v2145
        %v2148 = vunpack.c.l.s4 1966171168
        %v2149 = vunpack.c.0.s8 %v2148
        %v2150 = vlaneseq
        %v2151 = vshrl.u32 %v2150, 7
        %v2152 = vsub.s32 %v2149, %v2151
        %v2153 = vrot.slane %v2125, %v2152
        %v2154 = vcombine.high %v2132, %v2132
        %v2155 = vcombine.high %v2139, %v2139
        %v2156 = vcombine.high %v2146, %v2146
        %v2157 = vcombine.high %v2153, %v2153
        %v2158 = vcombine.low %v1554, %v1555
        %v2159 = vcombine.high %v1554, %v1555
        %v2161 = vunpack.c.l.s4 1966171168
        %v2162 = vunpack.c.0.s8 %v2161
        %v2163 = vlaneseq
        %v2164 = vshrl.u32 %v2163, 7
        %v2165 = vsub.s32 %v2162, %v2164
        %v2166 = vrot.slane %v2158, %v2165
        %v2168 = vunpack.c.l.s4 1966171168
        %v2169 = vunpack.c.0.s8 %v2168
        %v2170 = vlaneseq
        %v2171 = vshrl.u32 %v2170, 7
        %v2172 = vsub.s32 %v2169, %v2171
        %v2173 = vrot.slane %v2159, %v2172
        %v2174 = vcombine.high %v2166, %v2166
        %v2175 = vcombine.high %v2173, %v2173
        %v2177 = vunpack.c.l.s4 1966171168
        %v2178 = vunpack.c.0.s8 %v2177
        %v2179 = vlaneseq
        %v2180 = vshrl.u32 %v2179, 7
        %v2181 = vsub.s32 %v2178, %v2180
        %v2182 = vrot.slane %v2166, %v2181
        %v2184 = vunpack.c.l.s4 1966171168
        %v2185 = vunpack.c.0.s8 %v2184
        %v2186 = vlaneseq
        %v2187 = vshrl.u32 %v2186, 7
        %v2188 = vsub.s32 %v2185, %v2187
        %v2189 = vrot.slane %v2173, %v2188
        %v2191 = vunpack.c.l.s4 1966171168
        %v2192 = vunpack.c.0.s8 %v2191
        %v2193 = vlaneseq
        %v2194 = vshrl.u32 %v2193, 7
        %v2195 = vsub.s32 %v2192, %v2194
        %v2196 = vrot.slane %v2174, %v2195
        %v2198 = vunpack.c.l.s4 1966171168
        %v2199 = vunpack.c.0.s8 %v2198
        %v2200 = vlaneseq
        %v2201 = vshrl.u32 %v2200, 7
        %v2202 = vsub.s32 %v2199, %v2201
        %v2203 = vrot.slane %v2175, %v2202
        %v2204 = vcombine.high %v2182, %v2182
        %v2205 = vcombine.high %v2189, %v2189
        %v2206 = vcombine.high %v2196, %v2196
        %v2207 = vcombine.high %v2203, %v2203
        %v2208 = vcombine.low %v1556, %v1557
        %v2209 = vcombine.high %v1556, %v1557
        %v2211 = vunpack.c.l.s4 1966171168
        %v2212 = vunpack.c.0.s8 %v2211
        %v2213 = vlaneseq
        %v2214 = vshrl.u32 %v2213, 7
        %v2215 = vsub.s32 %v2212, %v2214
        %v2216 = vrot.slane %v2208, %v2215
        %v2218 = vunpack.c.l.s4 1966171168
        %v2219 = vunpack.c.0.s8 %v2218
        %v2220 = vlaneseq
        %v2221 = vshrl.u32 %v2220, 7
        %v2222 = vsub.s32 %v2219, %v2221
        %v2223 = vrot.slane %v2209, %v2222
        %v2224 = vcombine.high %v2216, %v2216
        %v2225 = vcombine.high %v2223, %v2223
        %v2227 = vunpack.c.l.s4 1966171168
        %v2228 = vunpack.c.0.s8 %v2227
        %v2229 = vlaneseq
        %v2230 = vshrl.u32 %v2229, 7
        %v2231 = vsub.s32 %v2228, %v2230
        %v2232 = vrot.slane %v2216, %v2231
        %v2234 = vunpack.c.l.s4 1966171168
        %v2235 = vunpack.c.0.s8 %v2234
        %v2236 = vlaneseq
        %v2237 = vshrl.u32 %v2236, 7
        %v2238 = vsub.s32 %v2235, %v2237
        %v2239 = vrot.slane %v2223, %v2238
        %v2241 = vunpack.c.l.s4 1966171168
        %v2242 = vunpack.c.0.s8 %v2241
        %v2243 = vlaneseq
        %v2244 = vshrl.u32 %v2243, 7
        %v2245 = vsub.s32 %v2242, %v2244
        %v2246 = vrot.slane %v2224, %v2245
        %v2248 = vunpack.c.l.s4 1966171168
        %v2249 = vunpack.c.0.s8 %v2248
        %v2250 = vlaneseq
        %v2251 = vshrl.u32 %v2250, 7
        %v2252 = vsub.s32 %v2249, %v2251
        %v2253 = vrot.slane %v2225, %v2252
        %v2254 = vcombine.high %v2232, %v2232
        %v2255 = vcombine.high %v2246, %v2246
        %v2256 = vcombine.low %v1558, %v1559
        %v2257 = vcombine.high %v1558, %v1559
        %v2259 = vunpack.c.l.s4 1966171168
        %v2260 = vunpack.c.0.s8 %v2259
        %v2261 = vlaneseq
        %v2262 = vshrl.u32 %v2261, 7
        %v2263 = vsub.s32 %v2260, %v2262
        %v2264 = vrot.slane %v2256, %v2263
        %v2266 = vunpack.c.l.s4 1966171168
        %v2267 = vunpack.c.0.s8 %v2266
        %v2268 = vlaneseq
        %v2269 = vshrl.u32 %v2268, 7
        %v2270 = vsub.s32 %v2267, %v2269
        %v2271 = vrot.slane %v2257, %v2270
        %v2272 = vcombine.high %v2264, %v2264
        %v2273 = vcombine.high %v2271, %v2271
        %v2275 = vunpack.c.l.s4 1966171168
        %v2276 = vunpack.c.0.s8 %v2275
        %v2277 = vlaneseq
        %v2278 = vshrl.u32 %v2277, 7
        %v2279 = vsub.s32 %v2276, %v2278
        %v2280 = vrot.slane %v2264, %v2279
        %v2282 = vunpack.c.l.s4 1966171168
        %v2283 = vunpack.c.0.s8 %v2282
        %v2284 = vlaneseq
        %v2285 = vshrl.u32 %v2284, 7
        %v2286 = vsub.s32 %v2283, %v2285
        %v2287 = vrot.slane %v2271, %v2286
        %v2289 = vunpack.c.l.s4 1966171168
        %v2290 = vunpack.c.0.s8 %v2289
        %v2291 = vlaneseq
        %v2292 = vshrl.u32 %v2291, 7
        %v2293 = vsub.s32 %v2290, %v2292
        %v2294 = vrot.slane %v2272, %v2293
        %v2296 = vunpack.c.l.s4 1966171168
        %v2297 = vunpack.c.0.s8 %v2296
        %v2298 = vlaneseq
        %v2299 = vshrl.u32 %v2298, 7
        %v2300 = vsub.s32 %v2297, %v2299
        %v2301 = vrot.slane %v2273, %v2300
        %v2302 = vcombine.high %v2280, %v2280
        %v2303 = vcombine.high %v2287, %v2287
        %v2304 = vcombine.high %v2294, %v2294
        %v2305 = vcombine.high %v2301, %v2301
        %v2306 = vcombine.low %v1560, %v1561
        %v2307 = vcombine.high %v1560, %v1561
        %v2309 = vunpack.c.l.s4 1966171168
        %v2310 = vunpack.c.0.s8 %v2309
        %v2311 = vlaneseq
        %v2312 = vshrl.u32 %v2311, 7
        %v2313 = vsub.s32 %v2310, %v2312
        %v2314 = vrot.slane %v2306, %v2313
        %v2316 = vunpack.c.l.s4 1966171168
        %v2317 = vunpack.c.0.s8 %v2316
        %v2318 = vlaneseq
        %v2319 = vshrl.u32 %v2318, 7
        %v2320 = vsub.s32 %v2317, %v2319
        %v2321 = vrot.slane %v2307, %v2320
        %v2322 = vcombine.high %v2314, %v2314
        %v2323 = vcombine.high %v2321, %v2321
        %v2325 = vunpack.c.l.s4 1966171168
        %v2326 = vunpack.c.0.s8 %v2325
        %v2327 = vlaneseq
        %v2328 = vshrl.u32 %v2327, 7
        %v2329 = vsub.s32 %v2326, %v2328
        %v2330 = vrot.slane %v2314, %v2329
        %v2332 = vunpack.c.l.s4 1966171168
        %v2333 = vunpack.c.0.s8 %v2332
        %v2334 = vlaneseq
        %v2335 = vshrl.u32 %v2334, 7
        %v2336 = vsub.s32 %v2333, %v2335
        %v2337 = vrot.slane %v2321, %v2336
        %v2339 = vunpack.c.l.s4 1966171168
        %v2340 = vunpack.c.0.s8 %v2339
        %v2341 = vlaneseq
        %v2342 = vshrl.u32 %v2341, 7
        %v2343 = vsub.s32 %v2340, %v2342
        %v2344 = vrot.slane %v2322, %v2343
        %v2346 = vunpack.c.l.s4 1966171168
        %v2347 = vunpack.c.0.s8 %v2346
        %v2348 = vlaneseq
        %v2349 = vshrl.u32 %v2348, 7
        %v2350 = vsub.s32 %v2347, %v2349
        %v2351 = vrot.slane %v2323, %v2350
        %v2352 = vcombine.high %v2330, %v2330
        %v2353 = vcombine.high %v2337, %v2337
        %v2354 = vcombine.high %v2344, %v2344
        %v2355 = vcombine.high %v2351, %v2351
        %v2356 = vcombine.low %v1562, %v1563
        %v2357 = vcombine.high %v1562, %v1563
        %v2359 = vunpack.c.l.s4 1966171168
        %v2360 = vunpack.c.0.s8 %v2359
        %v2361 = vlaneseq
        %v2362 = vshrl.u32 %v2361, 7
        %v2363 = vsub.s32 %v2360, %v2362
        %v2364 = vrot.slane %v2356, %v2363
        %v2366 = vunpack.c.l.s4 1966171168
        %v2367 = vunpack.c.0.s8 %v2366
        %v2368 = vlaneseq
        %v2369 = vshrl.u32 %v2368, 7
        %v2370 = vsub.s32 %v2367, %v2369
        %v2371 = vrot.slane %v2357, %v2370
        %v2372 = vcombine.high %v2364, %v2364
        %v2373 = vcombine.high %v2371, %v2371
        %v2375 = vunpack.c.l.s4 1966171168
        %v2376 = vunpack.c.0.s8 %v2375
        %v2377 = vlaneseq
        %v2378 = vshrl.u32 %v2377, 7
        %v2379 = vsub.s32 %v2376, %v2378
        %v2380 = vrot.slane %v2364, %v2379
        %v2382 = vunpack.c.l.s4 1966171168
        %v2383 = vunpack.c.0.s8 %v2382
        %v2384 = vlaneseq
        %v2385 = vshrl.u32 %v2384, 7
        %v2386 = vsub.s32 %v2383, %v2385
        %v2387 = vrot.slane %v2371, %v2386
        %v2389 = vunpack.c.l.s4 1966171168
        %v2390 = vunpack.c.0.s8 %v2389
        %v2391 = vlaneseq
        %v2392 = vshrl.u32 %v2391, 7
        %v2393 = vsub.s32 %v2390, %v2392
        %v2394 = vrot.slane %v2372, %v2393
        %v2396 = vunpack.c.l.s4 1966171168
        %v2397 = vunpack.c.0.s8 %v2396
        %v2398 = vlaneseq
        %v2399 = vshrl.u32 %v2398, 7
        %v2400 = vsub.s32 %v2397, %v2399
        %v2401 = vrot.slane %v2373, %v2400
        %v2402 = vcombine.high %v2380, %v2380
        %v2403 = vcombine.high %v2387, %v2387
        %v2404 = vcombine.high %v2394, %v2394
        %v2405 = vcombine.high %v2401, %v2401
        %v2406 = vcombine.low %v1564, %v1565
        %v2407 = vcombine.high %v1564, %v1565
        %v2409 = vunpack.c.l.s4 1966171168
        %v2410 = vunpack.c.0.s8 %v2409
        %v2411 = vlaneseq
        %v2412 = vshrl.u32 %v2411, 7
        %v2413 = vsub.s32 %v2410, %v2412
        %v2414 = vrot.slane %v2406, %v2413
        %v2416 = vunpack.c.l.s4 1966171168
        %v2417 = vunpack.c.0.s8 %v2416
        %v2418 = vlaneseq
        %v2419 = vshrl.u32 %v2418, 7
        %v2420 = vsub.s32 %v2417, %v2419
        %v2421 = vrot.slane %v2407, %v2420
        %v2422 = vcombine.high %v2414, %v2414
        %v2423 = vcombine.high %v2421, %v2421
        %v2425 = vunpack.c.l.s4 1966171168
        %v2426 = vunpack.c.0.s8 %v2425
        %v2427 = vlaneseq
        %v2428 = vshrl.u32 %v2427, 7
        %v2429 = vsub.s32 %v2426, %v2428
        %v2430 = vrot.slane %v2414, %v2429
        %v2432 = vunpack.c.l.s4 1966171168
        %v2433 = vunpack.c.0.s8 %v2432
        %v2434 = vlaneseq
        %v2435 = vshrl.u32 %v2434, 7
        %v2436 = vsub.s32 %v2433, %v2435
        %v2437 = vrot.slane %v2421, %v2436
        %v2439 = vunpack.c.l.s4 1966171168
        %v2440 = vunpack.c.0.s8 %v2439
        %v2441 = vlaneseq
        %v2442 = vshrl.u32 %v2441, 7
        %v2443 = vsub.s32 %v2440, %v2442
        %v2444 = vrot.slane %v2422, %v2443
        %v2446 = vunpack.c.l.s4 1966171168
        %v2447 = vunpack.c.0.s8 %v2446
        %v2448 = vlaneseq
        %v2449 = vshrl.u32 %v2448, 7
        %v2450 = vsub.s32 %v2447, %v2449
        %v2451 = vrot.slane %v2423, %v2450
        %v2452 = vcombine.high %v2430, %v2430
        %v2453 = vcombine.high %v2444, %v2444
        %v2454 = vcombine.low %v1566, %v1567
        %v2455 = vcombine.high %v1566, %v1567
        %v2457 = vunpack.c.l.s4 1966171168
        %v2458 = vunpack.c.0.s8 %v2457
        %v2459 = vlaneseq
        %v2460 = vshrl.u32 %v2459, 7
        %v2461 = vsub.s32 %v2458, %v2460
        %v2462 = vrot.slane %v2454, %v2461
        %v2464 = vunpack.c.l.s4 1966171168
        %v2465 = vunpack.c.0.s8 %v2464
        %v2466 = vlaneseq
        %v2467 = vshrl.u32 %v2466, 7
        %v2468 = vsub.s32 %v2465, %v2467
        %v2469 = vrot.slane %v2455, %v2468
        %v2470 = vcombine.high %v2462, %v2462
        %v2471 = vcombine.high %v2469, %v2469
        %v2473 = vunpack.c.l.s4 1966171168
        %v2474 = vunpack.c.0.s8 %v2473
        %v2475 = vlaneseq
        %v2476 = vshrl.u32 %v2475, 7
        %v2477 = vsub.s32 %v2474, %v2476
        %v2478 = vrot.slane %v2462, %v2477
        %v2480 = vunpack.c.l.s4 1966171168
        %v2481 = vunpack.c.0.s8 %v2480
        %v2482 = vlaneseq
        %v2483 = vshrl.u32 %v2482, 7
        %v2484 = vsub.s32 %v2481, %v2483
        %v2485 = vrot.slane %v2469, %v2484
        %v2487 = vunpack.c.l.s4 1966171168
        %v2488 = vunpack.c.0.s8 %v2487
        %v2489 = vlaneseq
        %v2490 = vshrl.u32 %v2489, 7
        %v2491 = vsub.s32 %v2488, %v2490
        %v2492 = vrot.slane %v2470, %v2491
        %v2494 = vunpack.c.l.s4 1966171168
        %v2495 = vunpack.c.0.s8 %v2494
        %v2496 = vlaneseq
        %v2497 = vshrl.u32 %v2496, 7
        %v2498 = vsub.s32 %v2495, %v2497
        %v2499 = vrot.slane %v2471, %v2498
        %v2500 = vcombine.high %v2478, %v2478
        %v2501 = vcombine.high %v2485, %v2485
        %v2502 = vcombine.high %v2492, %v2492
        %v2503 = vcombine.high %v2499, %v2499
        %v2504 = vcombine.low %v1568, %v1569
        %v2505 = vcombine.high %v1568, %v1569
        %v2507 = vunpack.c.l.s4 1966171168
        %v2508 = vunpack.c.0.s8 %v2507
        %v2509 = vlaneseq
        %v2510 = vshrl.u32 %v2509, 7
        %v2511 = vsub.s32 %v2508, %v2510
        %v2512 = vrot.slane %v2504, %v2511
        %v2514 = vunpack.c.l.s4 1966171168
        %v2515 = vunpack.c.0.s8 %v2514
        %v2516 = vlaneseq
        %v2517 = vshrl.u32 %v2516, 7
        %v2518 = vsub.s32 %v2515, %v2517
        %v2519 = vrot.slane %v2505, %v2518
        %v2520 = vcombine.high %v2512, %v2512
        %v2521 = vcombine.high %v2519, %v2519
        %v2523 = vunpack.c.l.s4 1966171168
        %v2524 = vunpack.c.0.s8 %v2523
        %v2525 = vlaneseq
        %v2526 = vshrl.u32 %v2525, 7
        %v2527 = vsub.s32 %v2524, %v2526
        %v2528 = vrot.slane %v2512, %v2527
        %v2530 = vunpack.c.l.s4 1966171168
        %v2531 = vunpack.c.0.s8 %v2530
        %v2532 = vlaneseq
        %v2533 = vshrl.u32 %v2532, 7
        %v2534 = vsub.s32 %v2531, %v2533
        %v2535 = vrot.slane %v2519, %v2534
        %v2537 = vunpack.c.l.s4 1966171168
        %v2538 = vunpack.c.0.s8 %v2537
        %v2539 = vlaneseq
        %v2540 = vshrl.u32 %v2539, 7
        %v2541 = vsub.s32 %v2538, %v2540
        %v2542 = vrot.slane %v2520, %v2541
        %v2544 = vunpack.c.l.s4 1966171168
        %v2545 = vunpack.c.0.s8 %v2544
        %v2546 = vlaneseq
        %v2547 = vshrl.u32 %v2546, 7
        %v2548 = vsub.s32 %v2545, %v2547
        %v2549 = vrot.slane %v2521, %v2548
        %v2550 = vcombine.high %v2528, %v2528
        %v2551 = vcombine.high %v2535, %v2535
        %v2552 = vcombine.high %v2542, %v2542
        %v2553 = vcombine.high %v2549, %v2549
        %v2554 = vcombine.low %v1570, %v1571
        %v2555 = vcombine.high %v1570, %v1571
        %v2557 = vunpack.c.l.s4 1966171168
        %v2558 = vunpack.c.0.s8 %v2557
        %v2559 = vlaneseq
        %v2560 = vshrl.u32 %v2559, 7
        %v2561 = vsub.s32 %v2558, %v2560
        %v2562 = vrot.slane %v2554, %v2561
        %v2564 = vunpack.c.l.s4 1966171168
        %v2565 = vunpack.c.0.s8 %v2564
        %v2566 = vlaneseq
        %v2567 = vshrl.u32 %v2566, 7
        %v2568 = vsub.s32 %v2565, %v2567
        %v2569 = vrot.slane %v2555, %v2568
        %v2570 = vcombine.high %v2562, %v2562
        %v2571 = vcombine.high %v2569, %v2569
        %v2573 = vunpack.c.l.s4 1966171168
        %v2574 = vunpack.c.0.s8 %v2573
        %v2575 = vlaneseq
        %v2576 = vshrl.u32 %v2575, 7
        %v2577 = vsub.s32 %v2574, %v2576
        %v2578 = vrot.slane %v2562, %v2577
        %v2580 = vunpack.c.l.s4 1966171168
        %v2581 = vunpack.c.0.s8 %v2580
        %v2582 = vlaneseq
        %v2583 = vshrl.u32 %v2582, 7
        %v2584 = vsub.s32 %v2581, %v2583
        %v2585 = vrot.slane %v2569, %v2584
        %v2587 = vunpack.c.l.s4 1966171168
        %v2588 = vunpack.c.0.s8 %v2587
        %v2589 = vlaneseq
        %v2590 = vshrl.u32 %v2589, 7
        %v2591 = vsub.s32 %v2588, %v2590
        %v2592 = vrot.slane %v2570, %v2591
        %v2594 = vunpack.c.l.s4 1966171168
        %v2595 = vunpack.c.0.s8 %v2594
        %v2596 = vlaneseq
        %v2597 = vshrl.u32 %v2596, 7
        %v2598 = vsub.s32 %v2595, %v2597
        %v2599 = vrot.slane %v2571, %v2598
        %v2600 = vcombine.high %v2578, %v2578
        %v2601 = vcombine.high %v2585, %v2585
        %v2602 = vcombine.high %v2592, %v2592
        %v2603 = vcombine.high %v2599, %v2599
        %v2604 = vcombine.low %v1572, %v1573
        %v2605 = vcombine.high %v1572, %v1573
        %v2607 = vunpack.c.l.s4 1966171168
        %v2608 = vunpack.c.0.s8 %v2607
        %v2609 = vlaneseq
        %v2610 = vshrl.u32 %v2609, 7
        %v2611 = vsub.s32 %v2608, %v2610
        %v2612 = vrot.slane %v2604, %v2611
        %v2614 = vunpack.c.l.s4 1966171168
        %v2615 = vunpack.c.0.s8 %v2614
        %v2616 = vlaneseq
        %v2617 = vshrl.u32 %v2616, 7
        %v2618 = vsub.s32 %v2615, %v2617
        %v2619 = vrot.slane %v2605, %v2618
        %v2620 = vcombine.high %v2612, %v2612
        %v2621 = vcombine.high %v2619, %v2619
        %v2623 = vunpack.c.l.s4 1966171168
        %v2624 = vunpack.c.0.s8 %v2623
        %v2625 = vlaneseq
        %v2626 = vshrl.u32 %v2625, 7
        %v2627 = vsub.s32 %v2624, %v2626
        %v2628 = vrot.slane %v2612, %v2627
        %v2630 = vunpack.c.l.s4 1966171168
        %v2631 = vunpack.c.0.s8 %v2630
        %v2632 = vlaneseq
        %v2633 = vshrl.u32 %v2632, 7
        %v2634 = vsub.s32 %v2631, %v2633
        %v2635 = vrot.slane %v2619, %v2634
        %v2637 = vunpack.c.l.s4 1966171168
        %v2638 = vunpack.c.0.s8 %v2637
        %v2639 = vlaneseq
        %v2640 = vshrl.u32 %v2639, 7
        %v2641 = vsub.s32 %v2638, %v2640
        %v2642 = vrot.slane %v2620, %v2641
        %v2644 = vunpack.c.l.s4 1966171168
        %v2645 = vunpack.c.0.s8 %v2644
        %v2646 = vlaneseq
        %v2647 = vshrl.u32 %v2646, 7
        %v2648 = vsub.s32 %v2645, %v2647
        %v2649 = vrot.slane %v2621, %v2648
        %v2650 = vcombine.high %v2628, %v2628
        %v2651 = vcombine.high %v2642, %v2642
        %v2652 = vcombine.low %v1574, %v1575
        %v2653 = vcombine.high %v1574, %v1575
        %v2655 = vunpack.c.l.s4 1966171168
        %v2656 = vunpack.c.0.s8 %v2655
        %v2657 = vlaneseq
        %v2658 = vshrl.u32 %v2657, 7
        %v2659 = vsub.s32 %v2656, %v2658
        %v2660 = vrot.slane %v2652, %v2659
        %v2662 = vunpack.c.l.s4 1966171168
        %v2663 = vunpack.c.0.s8 %v2662
        %v2664 = vlaneseq
        %v2665 = vshrl.u32 %v2664, 7
        %v2666 = vsub.s32 %v2663, %v2665
        %v2667 = vrot.slane %v2653, %v2666
        %v2668 = vcombine.high %v2660, %v2660
        %v2669 = vcombine.high %v2667, %v2667
        %v2671 = vunpack.c.l.s4 1966171168
        %v2672 = vunpack.c.0.s8 %v2671
        %v2673 = vlaneseq
        %v2674 = vshrl.u32 %v2673, 7
        %v2675 = vsub.s32 %v2672, %v2674
        %v2676 = vrot.slane %v2660, %v2675
        %v2678 = vunpack.c.l.s4 1966171168
        %v2679 = vunpack.c.0.s8 %v2678
        %v2680 = vlaneseq
        %v2681 = vshrl.u32 %v2680, 7
        %v2682 = vsub.s32 %v2679, %v2681
        %v2683 = vrot.slane %v2667, %v2682
        %v2685 = vunpack.c.l.s4 1966171168
        %v2686 = vunpack.c.0.s8 %v2685
        %v2687 = vlaneseq
        %v2688 = vshrl.u32 %v2687, 7
        %v2689 = vsub.s32 %v2686, %v2688
        %v2690 = vrot.slane %v2668, %v2689
        %v2692 = vunpack.c.l.s4 1966171168
        %v2693 = vunpack.c.0.s8 %v2692
        %v2694 = vlaneseq
        %v2695 = vshrl.u32 %v2694, 7
        %v2696 = vsub.s32 %v2693, %v2695
        %v2697 = vrot.slane %v2669, %v2696
        %v2698 = vcombine.high %v2676, %v2676
        %v2699 = vcombine.high %v2683, %v2683
        %v2700 = vcombine.high %v2690, %v2690
        %v2701 = vcombine.high %v2697, %v2697
        %v2702 = vcombine.low %v1576, %v1577
        %v2703 = vcombine.high %v1576, %v1577
        %v2705 = vunpack.c.l.s4 1966171168
        %v2706 = vunpack.c.0.s8 %v2705
        %v2707 = vlaneseq
        %v2708 = vshrl.u32 %v2707, 7
        %v2709 = vsub.s32 %v2706, %v2708
        %v2710 = vrot.slane %v2702, %v2709
        %v2712 = vunpack.c.l.s4 1966171168
        %v2713 = vunpack.c.0.s8 %v2712
        %v2714 = vlaneseq
        %v2715 = vshrl.u32 %v2714, 7
        %v2716 = vsub.s32 %v2713, %v2715
        %v2717 = vrot.slane %v2703, %v2716
        %v2718 = vcombine.high %v2710, %v2710
        %v2719 = vcombine.high %v2717, %v2717
        %v2721 = vunpack.c.l.s4 1966171168
        %v2722 = vunpack.c.0.s8 %v2721
        %v2723 = vlaneseq
        %v2724 = vshrl.u32 %v2723, 7
        %v2725 = vsub.s32 %v2722, %v2724
        %v2726 = vrot.slane %v2710, %v2725
        %v2728 = vunpack.c.l.s4 1966171168
        %v2729 = vunpack.c.0.s8 %v2728
        %v2730 = vlaneseq
        %v2731 = vshrl.u32 %v2730, 7
        %v2732 = vsub.s32 %v2729, %v2731
        %v2733 = vrot.slane %v2717, %v2732
        %v2735 = vunpack.c.l.s4 1966171168
        %v2736 = vunpack.c.0.s8 %v2735
        %v2737 = vlaneseq
        %v2738 = vshrl.u32 %v2737, 7
        %v2739 = vsub.s32 %v2736, %v2738
        %v2740 = vrot.slane %v2718, %v2739
        %v2742 = vunpack.c.l.s4 1966171168
        %v2743 = vunpack.c.0.s8 %v2742
        %v2744 = vlaneseq
        %v2745 = vshrl.u32 %v2744, 7
        %v2746 = vsub.s32 %v2743, %v2745
        %v2747 = vrot.slane %v2719, %v2746
        %v2748 = vcombine.high %v2726, %v2726
        %v2749 = vcombine.high %v2733, %v2733
        %v2750 = vcombine.high %v2740, %v2740
        %v2751 = vcombine.high %v2747, %v2747
        %v2752 = vcombine.low %v1578, %v1579
        %v2753 = vcombine.high %v1578, %v1579
        %v2755 = vunpack.c.l.s4 1966171168
        %v2756 = vunpack.c.0.s8 %v2755
        %v2757 = vlaneseq
        %v2758 = vshrl.u32 %v2757, 7
        %v2759 = vsub.s32 %v2756, %v2758
        %v2760 = vrot.slane %v2752, %v2759
        %v2762 = vunpack.c.l.s4 1966171168
        %v2763 = vunpack.c.0.s8 %v2762
        %v2764 = vlaneseq
        %v2765 = vshrl.u32 %v2764, 7
        %v2766 = vsub.s32 %v2763, %v2765
        %v2767 = vrot.slane %v2753, %v2766
        %v2768 = vcombine.high %v2760, %v2760
        %v2769 = vcombine.high %v2767, %v2767
        %v2771 = vunpack.c.l.s4 1966171168
        %v2772 = vunpack.c.0.s8 %v2771
        %v2773 = vlaneseq
        %v2774 = vshrl.u32 %v2773, 7
        %v2775 = vsub.s32 %v2772, %v2774
        %v2776 = vrot.slane %v2760, %v2775
        %v2778 = vunpack.c.l.s4 1966171168
        %v2779 = vunpack.c.0.s8 %v2778
        %v2780 = vlaneseq
        %v2781 = vshrl.u32 %v2780, 7
        %v2782 = vsub.s32 %v2779, %v2781
        %v2783 = vrot.slane %v2767, %v2782
        %v2785 = vunpack.c.l.s4 1966171168
        %v2786 = vunpack.c.0.s8 %v2785
        %v2787 = vlaneseq
        %v2788 = vshrl.u32 %v2787, 7
        %v2789 = vsub.s32 %v2786, %v2788
        %v2790 = vrot.slane %v2768, %v2789
        %v2792 = vunpack.c.l.s4 1966171168
        %v2793 = vunpack.c.0.s8 %v2792
        %v2794 = vlaneseq
        %v2795 = vshrl.u32 %v2794, 7
        %v2796 = vsub.s32 %v2793, %v2795
        %v2797 = vrot.slane %v2769, %v2796
        %v2798 = vcombine.high %v2776, %v2776
        %v2799 = vcombine.high %v2783, %v2783
        %v2800 = vcombine.high %v2790, %v2790
        %v2801 = vcombine.high %v2797, %v2797
        %v2802 = vcombine.low %v1580, %v1581
        %v2803 = vcombine.high %v1580, %v1581
        %v2805 = vunpack.c.l.s4 1966171168
        %v2806 = vunpack.c.0.s8 %v2805
        %v2807 = vlaneseq
        %v2808 = vshrl.u32 %v2807, 7
        %v2809 = vsub.s32 %v2806, %v2808
        %v2810 = vrot.slane %v2802, %v2809
        %v2812 = vunpack.c.l.s4 1966171168
        %v2813 = vunpack.c.0.s8 %v2812
        %v2814 = vlaneseq
        %v2815 = vshrl.u32 %v2814, 7
        %v2816 = vsub.s32 %v2813, %v2815
        %v2817 = vrot.slane %v2803, %v2816
        %v2818 = vcombine.high %v2810, %v2810
        %v2819 = vcombine.high %v2817, %v2817
        %v2821 = vunpack.c.l.s4 1966171168
        %v2822 = vunpack.c.0.s8 %v2821
        %v2823 = vlaneseq
        %v2824 = vshrl.u32 %v2823, 7
        %v2825 = vsub.s32 %v2822, %v2824
        %v2826 = vrot.slane %v2810, %v2825
        %v2828 = vunpack.c.l.s4 1966171168
        %v2829 = vunpack.c.0.s8 %v2828
        %v2830 = vlaneseq
        %v2831 = vshrl.u32 %v2830, 7
        %v2832 = vsub.s32 %v2829, %v2831
        %v2833 = vrot.slane %v2817, %v2832
        %v2835 = vunpack.c.l.s4 1966171168
        %v2836 = vunpack.c.0.s8 %v2835
        %v2837 = vlaneseq
        %v2838 = vshrl.u32 %v2837, 7
        %v2839 = vsub.s32 %v2836, %v2838
        %v2840 = vrot.slane %v2818, %v2839
        %v2842 = vunpack.c.l.s4 1966171168
        %v2843 = vunpack.c.0.s8 %v2842
        %v2844 = vlaneseq
        %v2845 = vshrl.u32 %v2844, 7
        %v2846 = vsub.s32 %v2843, %v2845
        %v2847 = vrot.slane %v2819, %v2846
        %v2848 = vcombine.high %v2826, %v2826
        %v2849 = vcombine.high %v2840, %v2840
        %v2850 = vcombine.low %v1582, %v1583
        %v2851 = vcombine.high %v1582, %v1583
        %v2853 = vunpack.c.l.s4 1966171168
        %v2854 = vunpack.c.0.s8 %v2853
        %v2855 = vlaneseq
        %v2856 = vshrl.u32 %v2855, 7
        %v2857 = vsub.s32 %v2854, %v2856
        %v2858 = vrot.slane %v2850, %v2857
        %v2860 = vunpack.c.l.s4 1966171168
        %v2861 = vunpack.c.0.s8 %v2860
        %v2862 = vlaneseq
        %v2863 = vshrl.u32 %v2862, 7
        %v2864 = vsub.s32 %v2861, %v2863
        %v2865 = vrot.slane %v2851, %v2864
        %v2866 = vcombine.high %v2858, %v2858
        %v2867 = vcombine.high %v2865, %v2865
        %v2869 = vunpack.c.l.s4 1966171168
        %v2870 = vunpack.c.0.s8 %v2869
        %v2871 = vlaneseq
        %v2872 = vshrl.u32 %v2871, 7
        %v2873 = vsub.s32 %v2870, %v2872
        %v2874 = vrot.slane %v2858, %v2873
        %v2876 = vunpack.c.l.s4 1966171168
        %v2877 = vunpack.c.0.s8 %v2876
        %v2878 = vlaneseq
        %v2879 = vshrl.u32 %v2878, 7
        %v2880 = vsub.s32 %v2877, %v2879
        %v2881 = vrot.slane %v2865, %v2880
        %v2883 = vunpack.c.l.s4 1966171168
        %v2884 = vunpack.c.0.s8 %v2883
        %v2885 = vlaneseq
        %v2886 = vshrl.u32 %v2885, 7
        %v2887 = vsub.s32 %v2884, %v2886
        %v2888 = vrot.slane %v2866, %v2887
        %v2890 = vunpack.c.l.s4 1966171168
        %v2891 = vunpack.c.0.s8 %v2890
        %v2892 = vlaneseq
        %v2893 = vshrl.u32 %v2892, 7
        %v2894 = vsub.s32 %v2891, %v2893
        %v2895 = vrot.slane %v2867, %v2894
        %v2896 = vcombine.high %v2874, %v2874
        %v2897 = vcombine.high %v2881, %v2881
        %v2898 = vcombine.high %v2888, %v2888
        %v2899 = vcombine.high %v2895, %v2895
        %v2900 = vcombine.low %v1584, %v1585
        %v2901 = vcombine.high %v1584, %v1585
        %v2903 = vunpack.c.l.s4 1966171168
        %v2904 = vunpack.c.0.s8 %v2903
        %v2905 = vlaneseq
        %v2906 = vshrl.u32 %v2905, 7
        %v2907 = vsub.s32 %v2904, %v2906
        %v2908 = vrot.slane %v2900, %v2907
        %v2910 = vunpack.c.l.s4 1966171168
        %v2911 = vunpack.c.0.s8 %v2910
        %v2912 = vlaneseq
        %v2913 = vshrl.u32 %v2912, 7
        %v2914 = vsub.s32 %v2911, %v2913
        %v2915 = vrot.slane %v2901, %v2914
        %v2916 = vcombine.high %v2908, %v2908
        %v2917 = vcombine.high %v2915, %v2915
        %v2919 = vunpack.c.l.s4 1966171168
        %v2920 = vunpack.c.0.s8 %v2919
        %v2921 = vlaneseq
        %v2922 = vshrl.u32 %v2921, 7
        %v2923 = vsub.s32 %v2920, %v2922
        %v2924 = vrot.slane %v2908, %v2923
        %v2926 = vunpack.c.l.s4 1966171168
        %v2927 = vunpack.c.0.s8 %v2926
        %v2928 = vlaneseq
        %v2929 = vshrl.u32 %v2928, 7
        %v2930 = vsub.s32 %v2927, %v2929
        %v2931 = vrot.slane %v2915, %v2930
        %v2933 = vunpack.c.l.s4 1966171168
        %v2934 = vunpack.c.0.s8 %v2933
        %v2935 = vlaneseq
        %v2936 = vshrl.u32 %v2935, 7
        %v2937 = vsub.s32 %v2934, %v2936
        %v2938 = vrot.slane %v2916, %v2937
        %v2940 = vunpack.c.l.s4 1966171168
        %v2941 = vunpack.c.0.s8 %v2940
        %v2942 = vlaneseq
        %v2943 = vshrl.u32 %v2942, 7
        %v2944 = vsub.s32 %v2941, %v2943
        %v2945 = vrot.slane %v2917, %v2944
        %v2946 = vcombine.high %v2924, %v2924
        %v2947 = vcombine.high %v2931, %v2931
        %v2948 = vcombine.high %v2938, %v2938
        %v2949 = vcombine.high %v2945, %v2945
        %v2950 = vcombine.low %v1586, %v1587
        %v2951 = vcombine.high %v1586, %v1587
        %v2953 = vunpack.c.l.s4 1966171168
        %v2954 = vunpack.c.0.s8 %v2953
        %v2955 = vlaneseq
        %v2956 = vshrl.u32 %v2955, 7
        %v2957 = vsub.s32 %v2954, %v2956
        %v2958 = vrot.slane %v2950, %v2957
        %v2960 = vunpack.c.l.s4 1966171168
        %v2961 = vunpack.c.0.s8 %v2960
        %v2962 = vlaneseq
        %v2963 = vshrl.u32 %v2962, 7
        %v2964 = vsub.s32 %v2961, %v2963
        %v2965 = vrot.slane %v2951, %v2964
        %v2966 = vcombine.high %v2958, %v2958
        %v2967 = vcombine.high %v2965, %v2965
        %v2969 = vunpack.c.l.s4 1966171168
        %v2970 = vunpack.c.0.s8 %v2969
        %v2971 = vlaneseq
        %v2972 = vshrl.u32 %v2971, 7
        %v2973 = vsub.s32 %v2970, %v2972
        %v2974 = vrot.slane %v2958, %v2973
        %v2976 = vunpack.c.l.s4 1966171168
        %v2977 = vunpack.c.0.s8 %v2976
        %v2978 = vlaneseq
        %v2979 = vshrl.u32 %v2978, 7
        %v2980 = vsub.s32 %v2977, %v2979
        %v2981 = vrot.slane %v2965, %v2980
        %v2983 = vunpack.c.l.s4 1966171168
        %v2984 = vunpack.c.0.s8 %v2983
        %v2985 = vlaneseq
        %v2986 = vshrl.u32 %v2985, 7
        %v2987 = vsub.s32 %v2984, %v2986
        %v2988 = vrot.slane %v2966, %v2987
        %v2990 = vunpack.c.l.s4 1966171168
        %v2991 = vunpack.c.0.s8 %v2990
        %v2992 = vlaneseq
        %v2993 = vshrl.u32 %v2992, 7
        %v2994 = vsub.s32 %v2991, %v2993
        %v2995 = vrot.slane %v2967, %v2994
        %v2996 = vcombine.high %v2974, %v2974
        %v2997 = vcombine.high %v2981, %v2981
        %v2998 = vcombine.high %v2988, %v2988
        %v2999 = vcombine.high %v2995, %v2995
        %v3000 = vcombine.low %v1588, %v1589
        %v3001 = vcombine.high %v1588, %v1589
        %v3003 = vunpack.c.l.s4 1966171168
        %v3004 = vunpack.c.0.s8 %v3003
        %v3005 = vlaneseq
        %v3006 = vshrl.u32 %v3005, 7
        %v3007 = vsub.s32 %v3004, %v3006
        %v3008 = vrot.slane %v3000, %v3007
        %v3010 = vunpack.c.l.s4 1966171168
        %v3011 = vunpack.c.0.s8 %v3010
        %v3012 = vlaneseq
        %v3013 = vshrl.u32 %v3012, 7
        %v3014 = vsub.s32 %v3011, %v3013
        %v3015 = vrot.slane %v3001, %v3014
        %v3016 = vcombine.high %v3008, %v3008
        %v3017 = vcombine.high %v3015, %v3015
        %v3019 = vunpack.c.l.s4 1966171168
        %v3020 = vunpack.c.0.s8 %v3019
        %v3021 = vlaneseq
        %v3022 = vshrl.u32 %v3021, 7
        %v3023 = vsub.s32 %v3020, %v3022
        %v3024 = vrot.slane %v3008, %v3023
        %v3026 = vunpack.c.l.s4 1966171168
        %v3027 = vunpack.c.0.s8 %v3026
        %v3028 = vlaneseq
        %v3029 = vshrl.u32 %v3028, 7
        %v3030 = vsub.s32 %v3027, %v3029
        %v3031 = vrot.slane %v3015, %v3030
        %v3033 = vunpack.c.l.s4 1966171168
        %v3034 = vunpack.c.0.s8 %v3033
        %v3035 = vlaneseq
        %v3036 = vshrl.u32 %v3035, 7
        %v3037 = vsub.s32 %v3034, %v3036
        %v3038 = vrot.slane %v3016, %v3037
        %v3040 = vunpack.c.l.s4 1966171168
        %v3041 = vunpack.c.0.s8 %v3040
        %v3042 = vlaneseq
        %v3043 = vshrl.u32 %v3042, 7
        %v3044 = vsub.s32 %v3041, %v3043
        %v3045 = vrot.slane %v3017, %v3044
        %v3046 = vcombine.high %v3024, %v3024
        %v3047 = vcombine.high %v3038, %v3038
        %v3048 = vcombine.low %v1590, %v1591
        %v3049 = vcombine.high %v1590, %v1591
        %v3051 = vunpack.c.l.s4 1966171168
        %v3052 = vunpack.c.0.s8 %v3051
        %v3053 = vlaneseq
        %v3054 = vshrl.u32 %v3053, 7
        %v3055 = vsub.s32 %v3052, %v3054
        %v3056 = vrot.slane %v3048, %v3055
        %v3058 = vunpack.c.l.s4 1966171168
        %v3059 = vunpack.c.0.s8 %v3058
        %v3060 = vlaneseq
        %v3061 = vshrl.u32 %v3060, 7
        %v3062 = vsub.s32 %v3059, %v3061
        %v3063 = vrot.slane %v3049, %v3062
        %v3064 = vcombine.high %v3056, %v3056
        %v3065 = vcombine.high %v3063, %v3063
        %v3067 = vunpack.c.l.s4 1966171168
        %v3068 = vunpack.c.0.s8 %v3067
        %v3069 = vlaneseq
        %v3070 = vshrl.u32 %v3069, 7
        %v3071 = vsub.s32 %v3068, %v3070
        %v3072 = vrot.slane %v3056, %v3071
        %v3074 = vunpack.c.l.s4 1966171168
        %v3075 = vunpack.c.0.s8 %v3074
        %v3076 = vlaneseq
        %v3077 = vshrl.u32 %v3076, 7
        %v3078 = vsub.s32 %v3075, %v3077
        %v3079 = vrot.slane %v3063, %v3078
        %v3081 = vunpack.c.l.s4 1966171168
        %v3082 = vunpack.c.0.s8 %v3081
        %v3083 = vlaneseq
        %v3084 = vshrl.u32 %v3083, 7
        %v3085 = vsub.s32 %v3082, %v3084
        %v3086 = vrot.slane %v3064, %v3085
        %v3088 = vunpack.c.l.s4 1966171168
        %v3089 = vunpack.c.0.s8 %v3088
        %v3090 = vlaneseq
        %v3091 = vshrl.u32 %v3090, 7
        %v3092 = vsub.s32 %v3089, %v3091
        %v3093 = vrot.slane %v3065, %v3092
        %v3094 = vcombine.high %v3072, %v3072
        %v3095 = vcombine.high %v3079, %v3079
        %v3096 = vcombine.high %v3086, %v3086
        %v3097 = vcombine.high %v3093, %v3093
        %v3098 = vcombine.low %v1592, %v1593
        %v3099 = vcombine.high %v1592, %v1593
        %v3101 = vunpack.c.l.s4 1966171168
        %v3102 = vunpack.c.0.s8 %v3101
        %v3103 = vlaneseq
        %v3104 = vshrl.u32 %v3103, 7
        %v3105 = vsub.s32 %v3102, %v3104
        %v3106 = vrot.slane %v3098, %v3105
        %v3108 = vunpack.c.l.s4 1966171168
        %v3109 = vunpack.c.0.s8 %v3108
        %v3110 = vlaneseq
        %v3111 = vshrl.u32 %v3110, 7
        %v3112 = vsub.s32 %v3109, %v3111
        %v3113 = vrot.slane %v3099, %v3112
        %v3114 = vcombine.high %v3106, %v3106
        %v3115 = vcombine.high %v3113, %v3113
        %v3117 = vunpack.c.l.s4 1966171168
        %v3118 = vunpack.c.0.s8 %v3117
        %v3119 = vlaneseq
        %v3120 = vshrl.u32 %v3119, 7
        %v3121 = vsub.s32 %v3118, %v3120
        %v3122 = vrot.slane %v3106, %v3121
        %v3124 = vunpack.c.l.s4 1966171168
        %v3125 = vunpack.c.0.s8 %v3124
        %v3126 = vlaneseq
        %v3127 = vshrl.u32 %v3126, 7
        %v3128 = vsub.s32 %v3125, %v3127
        %v3129 = vrot.slane %v3113, %v3128
        %v3131 = vunpack.c.l.s4 1966171168
        %v3132 = vunpack.c.0.s8 %v3131
        %v3133 = vlaneseq
        %v3134 = vshrl.u32 %v3133, 7
        %v3135 = vsub.s32 %v3132, %v3134
        %v3136 = vrot.slane %v3114, %v3135
        %v3138 = vunpack.c.l.s4 1966171168
        %v3139 = vunpack.c.0.s8 %v3138
        %v3140 = vlaneseq
        %v3141 = vshrl.u32 %v3140, 7
        %v3142 = vsub.s32 %v3139, %v3141
        %v3143 = vrot.slane %v3115, %v3142
        %v3144 = vcombine.high %v3122, %v3122
        %v3145 = vcombine.high %v3129, %v3129
        %v3146 = vcombine.high %v3136, %v3136
        %v3147 = vcombine.high %v3143, %v3143
        %v3148 = vcombine.low %v1594, %v1595
        %v3149 = vcombine.high %v1594, %v1595
        %v3151 = vunpack.c.l.s4 1966171168
        %v3152 = vunpack.c.0.s8 %v3151
        %v3153 = vlaneseq
        %v3154 = vshrl.u32 %v3153, 7
        %v3155 = vsub.s32 %v3152, %v3154
        %v3156 = vrot.slane %v3148, %v3155
        %v3158 = vunpack.c.l.s4 1966171168
        %v3159 = vunpack.c.0.s8 %v3158
        %v3160 = vlaneseq
        %v3161 = vshrl.u32 %v3160, 7
        %v3162 = vsub.s32 %v3159, %v3161
        %v3163 = vrot.slane %v3149, %v3162
        %v3164 = vcombine.high %v3156, %v3156
        %v3165 = vcombine.high %v3163, %v3163
        %v3167 = vunpack.c.l.s4 1966171168
        %v3168 = vunpack.c.0.s8 %v3167
        %v3169 = vlaneseq
        %v3170 = vshrl.u32 %v3169, 7
        %v3171 = vsub.s32 %v3168, %v3170
        %v3172 = vrot.slane %v3156, %v3171
        %v3174 = vunpack.c.l.s4 1966171168
        %v3175 = vunpack.c.0.s8 %v3174
        %v3176 = vlaneseq
        %v3177 = vshrl.u32 %v3176, 7
        %v3178 = vsub.s32 %v3175, %v3177
        %v3179 = vrot.slane %v3163, %v3178
        %v3181 = vunpack.c.l.s4 1966171168
        %v3182 = vunpack.c.0.s8 %v3181
        %v3183 = vlaneseq
        %v3184 = vshrl.u32 %v3183, 7
        %v3185 = vsub.s32 %v3182, %v3184
        %v3186 = vrot.slane %v3164, %v3185
        %v3188 = vunpack.c.l.s4 1966171168
        %v3189 = vunpack.c.0.s8 %v3188
        %v3190 = vlaneseq
        %v3191 = vshrl.u32 %v3190, 7
        %v3192 = vsub.s32 %v3189, %v3191
        %v3193 = vrot.slane %v3165, %v3192
        %v3194 = vcombine.high %v3172, %v3172
        %v3195 = vcombine.high %v3179, %v3179
        %v3196 = vcombine.high %v3186, %v3186
        %v3197 = vcombine.high %v3193, %v3193
        %v3198 = vcombine.low %v1596, %v1597
        %v3199 = vcombine.high %v1596, %v1597
        %v3201 = vunpack.c.l.s4 1966171168
        %v3202 = vunpack.c.0.s8 %v3201
        %v3203 = vlaneseq
        %v3204 = vshrl.u32 %v3203, 7
        %v3205 = vsub.s32 %v3202, %v3204
        %v3206 = vrot.slane %v3198, %v3205
        %v3208 = vunpack.c.l.s4 1966171168
        %v3209 = vunpack.c.0.s8 %v3208
        %v3210 = vlaneseq
        %v3211 = vshrl.u32 %v3210, 7
        %v3212 = vsub.s32 %v3209, %v3211
        %v3213 = vrot.slane %v3199, %v3212
        %v3214 = vcombine.high %v3206, %v3206
        %v3215 = vcombine.high %v3213, %v3213
        %v3217 = vunpack.c.l.s4 1966171168
        %v3218 = vunpack.c.0.s8 %v3217
        %v3219 = vlaneseq
        %v3220 = vshrl.u32 %v3219, 7
        %v3221 = vsub.s32 %v3218, %v3220
        %v3222 = vrot.slane %v3206, %v3221
        %v3224 = vunpack.c.l.s4 1966171168
        %v3225 = vunpack.c.0.s8 %v3224
        %v3226 = vlaneseq
        %v3227 = vshrl.u32 %v3226, 7
        %v3228 = vsub.s32 %v3225, %v3227
        %v3229 = vrot.slane %v3213, %v3228
        %v3231 = vunpack.c.l.s4 1966171168
        %v3232 = vunpack.c.0.s8 %v3231
        %v3233 = vlaneseq
        %v3234 = vshrl.u32 %v3233, 7
        %v3235 = vsub.s32 %v3232, %v3234
        %v3236 = vrot.slane %v3214, %v3235
        %v3238 = vunpack.c.l.s4 1966171168
        %v3239 = vunpack.c.0.s8 %v3238
        %v3240 = vlaneseq
        %v3241 = vshrl.u32 %v3240, 7
        %v3242 = vsub.s32 %v3239, %v3241
        %v3243 = vrot.slane %v3215, %v3242
        %v3244 = vcombine.high %v3222, %v3222
        %v3245 = vcombine.high %v3236, %v3236
        %v3246 = vcombine.low %v1686, %v1700
        %v3248 = vunpack.c.l.s4 1966171168
        %v3249 = vunpack.c.0.s8 %v3248
        %v3250 = vlaneseq
        %v3251 = vshrl.u32 %v3250, 7
        %v3252 = vsub.s32 %v3249, %v3251
        %v3253 = vrot.slane %v3246, %v3252
        %v3255 = vunpack.c.l.s4 1966171168
        %v3256 = vunpack.c.0.s8 %v3255
        %v3257 = vlaneseq
        %v3258 = vshrl.u32 %v3257, 7
        %v3259 = vsub.s32 %v3256, %v3258
        %v3260 = vrot.slane %v1708, %v3259
        %v3261 = vcombine.low %v3253, %v3260
        %v3262 = vcombine.high %v3253, %v3260
        %v3264 = vunpack.c.l.s4 1966171168
        %v3265 = vunpack.c.0.s8 %v3264
        %v3266 = vlaneseq
        %v3267 = vshrl.u32 %v3266, 7
        %v3268 = vsub.s32 %v3265, %v3267
        %v3269 = vrot.slane %v3261, %v3268
        %v3271 = vunpack.c.l.s4 1966171168
        %v3272 = vunpack.c.0.s8 %v3271
        %v3273 = vlaneseq
        %v3274 = vshrl.u32 %v3273, 7
        %v3275 = vsub.s32 %v3272, %v3274
        %v3276 = vrot.slane %v3262, %v3275
        %v3277 = vcombine.low %v1710, %v1693
        %v3279 = vunpack.c.l.s4 1966171168
        %v3280 = vunpack.c.0.s8 %v3279
        %v3281 = vlaneseq
        %v3282 = vshrl.u32 %v3281, 7
        %v3283 = vsub.s32 %v3280, %v3282
        %v3284 = vrot.slane %v3277, %v3283
        %v3286 = vunpack.c.l.s4 1966171168
        %v3287 = vunpack.c.0.s8 %v3286
        %v3288 = vlaneseq
        %v3289 = vshrl.u32 %v3288, 7
        %v3290 = vsub.s32 %v3287, %v3289
        %v3291 = vrot.slane %v1707, %v3290
        %v3292 = vcombine.low %v3284, %v3291
        %v3293 = vcombine.high %v3284, %v3291
        %v3295 = vunpack.c.l.s4 1966171168
        %v3296 = vunpack.c.0.s8 %v3295
        %v3297 = vlaneseq
        %v3298 = vshrl.u32 %v3297, 7
        %v3299 = vsub.s32 %v3296, %v3298
        %v3300 = vrot.slane %v3292, %v3299
        %v3302 = vunpack.c.l.s4 1966171168
        %v3303 = vunpack.c.0.s8 %v3302
        %v3304 = vlaneseq
        %v3305 = vshrl.u32 %v3304, 7
        %v3306 = vsub.s32 %v3303, %v3305
        %v3307 = vrot.slane %v3293, %v3306
        %v3308 = vcombine.low %v1709, %v1711
        %v3310 = vunpack.c.l.s4 1966171168
        %v3311 = vunpack.c.0.s8 %v3310
        %v3312 = vlaneseq
        %v3313 = vshrl.u32 %v3312, 7
        %v3314 = vsub.s32 %v3311, %v3313
        %v3315 = vrot.slane %v3308, %v3314
        %v3317 = vunpack.c.l.s4 1966171168
        %v3318 = vunpack.c.0.s8 %v3317
        %v3319 = vlaneseq
        %v3320 = vshrl.u32 %v3319, 7
        %v3321 = vsub.s32 %v3318, %v3320
        %v3322 = vrot.slane %v1736, %v3321
        %v3323 = vcombine.low %v3315, %v3322
        %v3324 = vcombine.high %v3315, %v3322
        %v3326 = vunpack.c.l.s4 1966171168
        %v3327 = vunpack.c.0.s8 %v3326
        %v3328 = vlaneseq
        %v3329 = vshrl.u32 %v3328, 7
        %v3330 = vsub.s32 %v3327, %v3329
        %v3331 = vrot.slane %v3323, %v3330
        %v3333 = vunpack.c.l.s4 1966171168
        %v3334 = vunpack.c.0.s8 %v3333
        %v3335 = vlaneseq
        %v3336 = vshrl.u32 %v3335, 7
        %v3337 = vsub.s32 %v3334, %v3336
        %v3338 = vrot.slane %v3324, %v3337
        %v3339 = vcombine.low %v1750, %v1758
        %v3341 = vunpack.c.l.s4 1966171168
        %v3342 = vunpack.c.0.s8 %v3341
        %v3343 = vlaneseq
        %v3344 = vshrl.u32 %v3343, 7
        %v3345 = vsub.s32 %v3342, %v3344
        %v3346 = vrot.slane %v3339, %v3345
        %v3348 = vunpack.c.l.s4 1966171168
        %v3349 = vunpack.c.0.s8 %v3348
        %v3350 = vlaneseq
        %v3351 = vshrl.u32 %v3350, 7
        %v3352 = vsub.s32 %v3349, %v3351
        %v3353 = vrot.slane %v1760, %v3352
        %v3354 = vcombine.low %v3346, %v3353
        %v3355 = vcombine.high %v3346, %v3353
        %v3357 = vunpack.c.l.s4 1966171168
        %v3358 = vunpack.c.0.s8 %v3357
        %v3359 = vlaneseq
        %v3360 = vshrl.u32 %v3359, 7
        %v3361 = vsub.s32 %v3358, %v3360
        %v3362 = vrot.slane %v3354, %v3361
        %v3364 = vunpack.c.l.s4 1966171168
        %v3365 = vunpack.c.0.s8 %v3364
        %v3366 = vlaneseq
        %v3367 = vshrl.u32 %v3366, 7
        %v3368 = vsub.s32 %v3365, %v3367
        %v3369 = vrot.slane %v3355, %v3368
        %v3370 = vcombine.low %v1743, %v1757
        %v3372 = vunpack.c.l.s4 1966171168
        %v3373 = vunpack.c.0.s8 %v3372
        %v3374 = vlaneseq
        %v3375 = vshrl.u32 %v3374, 7
        %v3376 = vsub.s32 %v3373, %v3375
        %v3377 = vrot.slane %v3370, %v3376
        %v3379 = vunpack.c.l.s4 1966171168
        %v3380 = vunpack.c.0.s8 %v3379
        %v3381 = vlaneseq
        %v3382 = vshrl.u32 %v3381, 7
        %v3383 = vsub.s32 %v3380, %v3382
        %v3384 = vrot.slane %v1759, %v3383
        %v3385 = vcombine.low %v3377, %v3384
        %v3386 = vcombine.high %v3377, %v3384
        %v3388 = vunpack.c.l.s4 1966171168
        %v3389 = vunpack.c.0.s8 %v3388
        %v3390 = vlaneseq
        %v3391 = vshrl.u32 %v3390, 7
        %v3392 = vsub.s32 %v3389, %v3391
        %v3393 = vrot.slane %v3385, %v3392
        %v3395 = vunpack.c.l.s4 1966171168
        %v3396 = vunpack.c.0.s8 %v3395
        %v3397 = vlaneseq
        %v3398 = vshrl.u32 %v3397, 7
        %v3399 = vsub.s32 %v3396, %v3398
        %v3400 = vrot.slane %v3386, %v3399
        %v3401 = vcombine.low %v1761, %v1786
        %v3403 = vunpack.c.l.s4 1966171168
        %v3404 = vunpack.c.0.s8 %v3403
        %v3405 = vlaneseq
        %v3406 = vshrl.u32 %v3405, 7
        %v3407 = vsub.s32 %v3404, %v3406
        %v3408 = vrot.slane %v3401, %v3407
        %v3410 = vunpack.c.l.s4 1966171168
        %v3411 = vunpack.c.0.s8 %v3410
        %v3412 = vlaneseq
        %v3413 = vshrl.u32 %v3412, 7
        %v3414 = vsub.s32 %v3411, %v3413
        %v3415 = vrot.slane %v1800, %v3414
        %v3416 = vcombine.low %v3408, %v3415
        %v3417 = vcombine.high %v3408, %v3415
        %v3419 = vunpack.c.l.s4 1966171168
        %v3420 = vunpack.c.0.s8 %v3419
        %v3421 = vlaneseq
        %v3422 = vshrl.u32 %v3421, 7
        %v3423 = vsub.s32 %v3420, %v3422
        %v3424 = vrot.slane %v3416, %v3423
        %v3426 = vunpack.c.l.s4 1966171168
        %v3427 = vunpack.c.0.s8 %v3426
        %v3428 = vlaneseq
        %v3429 = vshrl.u32 %v3428, 7
        %v3430 = vsub.s32 %v3427, %v3429
        %v3431 = vrot.slane %v3417, %v3430
        %v3432 = vcombine.low %v1808, %v1810
        %v3434 = vunpack.c.l.s4 1966171168
        %v3435 = vunpack.c.0.s8 %v3434
        %v3436 = vlaneseq
        %v3437 = vshrl.u32 %v3436, 7
        %v3438 = vsub.s32 %v3435, %v3437
        %v3439 = vrot.slane %v3432, %v3438
        %v3441 = vunpack.c.l.s4 1966171168
        %v3442 = vunpack.c.0.s8 %v3441
        %v3443 = vlaneseq
        %v3444 = vshrl.u32 %v3443, 7
        %v3445 = vsub.s32 %v3442, %v3444
        %v3446 = vrot.slane %v1793, %v3445
        %v3447 = vcombine.low %v3439, %v3446
        %v3448 = vcombine.high %v3439, %v3446
        %v3450 = vunpack.c.l.s4 1966171168
        %v3451 = vunpack.c.0.s8 %v3450
        %v3452 = vlaneseq
        %v3453 = vshrl.u32 %v3452, 7
        %v3454 = vsub.s32 %v3451, %v3453
        %v3455 = vrot.slane %v3447, %v3454
        %v3457 = vunpack.c.l.s4 1966171168
        %v3458 = vunpack.c.0.s8 %v3457
        %v3459 = vlaneseq
        %v3460 = vshrl.u32 %v3459, 7
        %v3461 = vsub.s32 %v3458, %v3460
        %v3462 = vrot.slane %v3448, %v3461
        %v3463 = vcombine.low %v1807, %v1809
        %v3465 = vunpack.c.l.s4 1966171168
        %v3466 = vunpack.c.0.s8 %v3465
        %v3467 = vlaneseq
        %v3468 = vshrl.u32 %v3467, 7
        %v3469 = vsub.s32 %v3466, %v3468
        %v3470 = vrot.slane %v3463, %v3469
        %v3472 = vunpack.c.l.s4 1966171168
        %v3473 = vunpack.c.0.s8 %v3472
        %v3474 = vlaneseq
        %v3475 = vshrl.u32 %v3474, 7
        %v3476 = vsub.s32 %v3473, %v3475
        %v3477 = vrot.slane %v1811, %v3476
        %v3478 = vcombine.low %v3470, %v3477
        %v3479 = vcombine.high %v3470, %v3477
        %v3481 = vunpack.c.l.s4 1966171168
        %v3482 = vunpack.c.0.s8 %v3481
        %v3483 = vlaneseq
        %v3484 = vshrl.u32 %v3483, 7
        %v3485 = vsub.s32 %v3482, %v3484
        %v3486 = vrot.slane %v3478, %v3485
        %v3488 = vunpack.c.l.s4 1966171168
        %v3489 = vunpack.c.0.s8 %v3488
        %v3490 = vlaneseq
        %v3491 = vshrl.u32 %v3490, 7
        %v3492 = vsub.s32 %v3489, %v3491
        %v3493 = vrot.slane %v3479, %v3492
        %v3494 = vcombine.low %v1836, %v1850
        %v3496 = vunpack.c.l.s4 1966171168
        %v3497 = vunpack.c.0.s8 %v3496
        %v3498 = vlaneseq
        %v3499 = vshrl.u32 %v3498, 7
        %v3500 = vsub.s32 %v3497, %v3499
        %v3501 = vrot.slane %v3494, %v3500
        %v3503 = vunpack.c.l.s4 1966171168
        %v3504 = vunpack.c.0.s8 %v3503
        %v3505 = vlaneseq
        %v3506 = vshrl.u32 %v3505, 7
        %v3507 = vsub.s32 %v3504, %v3506
        %v3508 = vrot.slane %v1858, %v3507
        %v3509 = vcombine.low %v3501, %v3508
        %v3510 = vcombine.high %v3501, %v3508
        %v3512 = vunpack.c.l.s4 1966171168
        %v3513 = vunpack.c.0.s8 %v3512
        %v3514 = vlaneseq
        %v3515 = vshrl.u32 %v3514, 7
        %v3516 = vsub.s32 %v3513, %v3515
        %v3517 = vrot.slane %v3509, %v3516
        %v3519 = vunpack.c.l.s4 1966171168
        %v3520 = vunpack.c.0.s8 %v3519
        %v3521 = vlaneseq
        %v3522 = vshrl.u32 %v3521, 7
        %v3523 = vsub.s32 %v3520, %v3522
        %v3524 = vrot.slane %v3510, %v3523
        %v3525 = vcombine.low %v1859, %v1843
        %v3527 = vunpack.c.l.s4 1966171168
        %v3528 = vunpack.c.0.s8 %v3527
        %v3529 = vlaneseq
        %v3530 = vshrl.u32 %v3529, 7
        %v3531 = vsub.s32 %v3528, %v3530
        %v3532 = vrot.slane %v3525, %v3531
        %v3534 = vunpack.c.l.s4 1966171168
        %v3535 = vunpack.c.0.s8 %v3534
        %v3536 = vlaneseq
        %v3537 = vshrl.u32 %v3536, 7
        %v3538 = vsub.s32 %v3535, %v3537
        %v3539 = vrot.slane %v1857, %v3538
        %v3540 = vcombine.low %v3532, %v3539
        %v3541 = vcombine.high %v3532, %v3539
        %v3543 = vunpack.c.l.s4 1966171168
        %v3544 = vunpack.c.0.s8 %v3543
        %v3545 = vlaneseq
        %v3546 = vshrl.u32 %v3545, 7
        %v3547 = vsub.s32 %v3544, %v3546
        %v3548 = vrot.slane %v3540, %v3547
        %v3550 = vunpack.c.l.s4 1966171168
        %v3551 = vunpack.c.0.s8 %v3550
        %v3552 = vlaneseq
        %v3553 = vshrl.u32 %v3552, 7
        %v3554 = vsub.s32 %v3551, %v3553
        %v3555 = vrot.slane %v3541, %v3554
        %v3556 = vcombine.low %v1884, %v1898
        %v3558 = vunpack.c.l.s4 1966171168
        %v3559 = vunpack.c.0.s8 %v3558
        %v3560 = vlaneseq
        %v3561 = vshrl.u32 %v3560, 7
        %v3562 = vsub.s32 %v3559, %v3561
        %v3563 = vrot.slane %v3556, %v3562
        %v3565 = vunpack.c.l.s4 1966171168
        %v3566 = vunpack.c.0.s8 %v3565
        %v3567 = vlaneseq
        %v3568 = vshrl.u32 %v3567, 7
        %v3569 = vsub.s32 %v3566, %v3568
        %v3570 = vrot.slane %v1906, %v3569
        %v3571 = vcombine.low %v3563, %v3570
        %v3572 = vcombine.high %v3563, %v3570
        %v3574 = vunpack.c.l.s4 1966171168
        %v3575 = vunpack.c.0.s8 %v3574
        %v3576 = vlaneseq
        %v3577 = vshrl.u32 %v3576, 7
        %v3578 = vsub.s32 %v3575, %v3577
        %v3579 = vrot.slane %v3571, %v3578
        %v3581 = vunpack.c.l.s4 1966171168
        %v3582 = vunpack.c.0.s8 %v3581
        %v3583 = vlaneseq
        %v3584 = vshrl.u32 %v3583, 7
        %v3585 = vsub.s32 %v3582, %v3584
        %v3586 = vrot.slane %v3572, %v3585
        %v3587 = vcombine.low %v1908, %v1891
        %v3589 = vunpack.c.l.s4 1966171168
        %v3590 = vunpack.c.0.s8 %v3589
        %v3591 = vlaneseq
        %v3592 = vshrl.u32 %v3591, 7
        %v3593 = vsub.s32 %v3590, %v3592
        %v3594 = vrot.slane %v3587, %v3593
        %v3596 = vunpack.c.l.s4 1966171168
        %v3597 = vunpack.c.0.s8 %v3596
        %v3598 = vlaneseq
        %v3599 = vshrl.u32 %v3598, 7
        %v3600 = vsub.s32 %v3597, %v3599
        %v3601 = vrot.slane %v1905, %v3600
        %v3602 = vcombine.low %v3594, %v3601
        %v3603 = vcombine.high %v3594, %v3601
        %v3605 = vunpack.c.l.s4 1966171168
        %v3606 = vunpack.c.0.s8 %v3605
        %v3607 = vlaneseq
        %v3608 = vshrl.u32 %v3607, 7
        %v3609 = vsub.s32 %v3606, %v3608
        %v3610 = vrot.slane %v3602, %v3609
        %v3612 = vunpack.c.l.s4 1966171168
        %v3613 = vunpack.c.0.s8 %v3612
        %v3614 = vlaneseq
        %v3615 = vshrl.u32 %v3614, 7
        %v3616 = vsub.s32 %v3613, %v3615
        %v3617 = vrot.slane %v3603, %v3616
        %v3618 = vcombine.low %v1907, %v1909
        %v3620 = vunpack.c.l.s4 1966171168
        %v3621 = vunpack.c.0.s8 %v3620
        %v3622 = vlaneseq
        %v3623 = vshrl.u32 %v3622, 7
        %v3624 = vsub.s32 %v3621, %v3623
        %v3625 = vrot.slane %v3618, %v3624
        %v3627 = vunpack.c.l.s4 1966171168
        %v3628 = vunpack.c.0.s8 %v3627
        %v3629 = vlaneseq
        %v3630 = vshrl.u32 %v3629, 7
        %v3631 = vsub.s32 %v3628, %v3630
        %v3632 = vrot.slane %v1934, %v3631
        %v3633 = vcombine.low %v3625, %v3632
        %v3634 = vcombine.high %v3625, %v3632
        %v3636 = vunpack.c.l.s4 1966171168
        %v3637 = vunpack.c.0.s8 %v3636
        %v3638 = vlaneseq
        %v3639 = vshrl.u32 %v3638, 7
        %v3640 = vsub.s32 %v3637, %v3639
        %v3641 = vrot.slane %v3633, %v3640
        %v3643 = vunpack.c.l.s4 1966171168
        %v3644 = vunpack.c.0.s8 %v3643
        %v3645 = vlaneseq
        %v3646 = vshrl.u32 %v3645, 7
        %v3647 = vsub.s32 %v3644, %v3646
        %v3648 = vrot.slane %v3634, %v3647
        %v3649 = vcombine.low %v1948, %v1956
        %v3651 = vunpack.c.l.s4 1966171168
        %v3652 = vunpack.c.0.s8 %v3651
        %v3653 = vlaneseq
        %v3654 = vshrl.u32 %v3653, 7
        %v3655 = vsub.s32 %v3652, %v3654
        %v3656 = vrot.slane %v3649, %v3655
        %v3658 = vunpack.c.l.s4 1966171168
        %v3659 = vunpack.c.0.s8 %v3658
        %v3660 = vlaneseq
        %v3661 = vshrl.u32 %v3660, 7
        %v3662 = vsub.s32 %v3659, %v3661
        %v3663 = vrot.slane %v1958, %v3662
        %v3664 = vcombine.low %v3656, %v3663
        %v3665 = vcombine.high %v3656, %v3663
        %v3667 = vunpack.c.l.s4 1966171168
        %v3668 = vunpack.c.0.s8 %v3667
        %v3669 = vlaneseq
        %v3670 = vshrl.u32 %v3669, 7
        %v3671 = vsub.s32 %v3668, %v3670
        %v3672 = vrot.slane %v3664, %v3671
        %v3674 = vunpack.c.l.s4 1966171168
        %v3675 = vunpack.c.0.s8 %v3674
        %v3676 = vlaneseq
        %v3677 = vshrl.u32 %v3676, 7
        %v3678 = vsub.s32 %v3675, %v3677
        %v3679 = vrot.slane %v3665, %v3678
        %v3680 = vcombine.low %v1941, %v1955
        %v3682 = vunpack.c.l.s4 1966171168
        %v3683 = vunpack.c.0.s8 %v3682
        %v3684 = vlaneseq
        %v3685 = vshrl.u32 %v3684, 7
        %v3686 = vsub.s32 %v3683, %v3685
        %v3687 = vrot.slane %v3680, %v3686
        %v3689 = vunpack.c.l.s4 1966171168
        %v3690 = vunpack.c.0.s8 %v3689
        %v3691 = vlaneseq
        %v3692 = vshrl.u32 %v3691, 7
        %v3693 = vsub.s32 %v3690, %v3692
        %v3694 = vrot.slane %v1957, %v3693
        %v3695 = vcombine.low %v3687, %v3694
        %v3696 = vcombine.high %v3687, %v3694
        %v3698 = vunpack.c.l.s4 1966171168
        %v3699 = vunpack.c.0.s8 %v3698
        %v3700 = vlaneseq
        %v3701 = vshrl.u32 %v3700, 7
        %v3702 = vsub.s32 %v3699, %v3701
        %v3703 = vrot.slane %v3695, %v3702
        %v3705 = vunpack.c.l.s4 1966171168
        %v3706 = vunpack.c.0.s8 %v3705
        %v3707 = vlaneseq
        %v3708 = vshrl.u32 %v3707, 7
        %v3709 = vsub.s32 %v3706, %v3708
        %v3710 = vrot.slane %v3696, %v3709
        %v3711 = vcombine.low %v1959, %v1984
        %v3713 = vunpack.c.l.s4 1966171168
        %v3714 = vunpack.c.0.s8 %v3713
        %v3715 = vlaneseq
        %v3716 = vshrl.u32 %v3715, 7
        %v3717 = vsub.s32 %v3714, %v3716
        %v3718 = vrot.slane %v3711, %v3717
        %v3720 = vunpack.c.l.s4 1966171168
        %v3721 = vunpack.c.0.s8 %v3720
        %v3722 = vlaneseq
        %v3723 = vshrl.u32 %v3722, 7
        %v3724 = vsub.s32 %v3721, %v3723
        %v3725 = vrot.slane %v1998, %v3724
        %v3726 = vcombine.low %v3718, %v3725
        %v3727 = vcombine.high %v3718, %v3725
        %v3729 = vunpack.c.l.s4 1966171168
        %v3730 = vunpack.c.0.s8 %v3729
        %v3731 = vlaneseq
        %v3732 = vshrl.u32 %v3731, 7
        %v3733 = vsub.s32 %v3730, %v3732
        %v3734 = vrot.slane %v3726, %v3733
        %v3736 = vunpack.c.l.s4 1966171168
        %v3737 = vunpack.c.0.s8 %v3736
        %v3738 = vlaneseq
        %v3739 = vshrl.u32 %v3738, 7
        %v3740 = vsub.s32 %v3737, %v3739
        %v3741 = vrot.slane %v3727, %v3740
        %v3742 = vcombine.low %v2006, %v2008
        %v3744 = vunpack.c.l.s4 1966171168
        %v3745 = vunpack.c.0.s8 %v3744
        %v3746 = vlaneseq
        %v3747 = vshrl.u32 %v3746, 7
        %v3748 = vsub.s32 %v3745, %v3747
        %v3749 = vrot.slane %v3742, %v3748
        %v3751 = vunpack.c.l.s4 1966171168
        %v3752 = vunpack.c.0.s8 %v3751
        %v3753 = vlaneseq
        %v3754 = vshrl.u32 %v3753, 7
        %v3755 = vsub.s32 %v3752, %v3754
        %v3756 = vrot.slane %v1991, %v3755
        %v3757 = vcombine.low %v3749, %v3756
        %v3758 = vcombine.high %v3749, %v3756
        %v3760 = vunpack.c.l.s4 1966171168
        %v3761 = vunpack.c.0.s8 %v3760
        %v3762 = vlaneseq
        %v3763 = vshrl.u32 %v3762, 7
        %v3764 = vsub.s32 %v3761, %v3763
        %v3765 = vrot.slane %v3757, %v3764
        %v3767 = vunpack.c.l.s4 1966171168
        %v3768 = vunpack.c.0.s8 %v3767
        %v3769 = vlaneseq
        %v3770 = vshrl.u32 %v3769, 7
        %v3771 = vsub.s32 %v3768, %v3770
        %v3772 = vrot.slane %v3758, %v3771
        %v3773 = vcombine.low %v2005, %v2007
        %v3775 = vunpack.c.l.s4 1966171168
        %v3776 = vunpack.c.0.s8 %v3775
        %v3777 = vlaneseq
        %v3778 = vshrl.u32 %v3777, 7
        %v3779 = vsub.s32 %v3776, %v3778
        %v3780 = vrot.slane %v3773, %v3779
        %v3782 = vunpack.c.l.s4 1966171168
        %v3783 = vunpack.c.0.s8 %v3782
        %v3784 = vlaneseq
        %v3785 = vshrl.u32 %v3784, 7
        %v3786 = vsub.s32 %v3783, %v3785
        %v3787 = vrot.slane %v2009, %v3786
        %v3788 = vcombine.low %v3780, %v3787
        %v3789 = vcombine.high %v3780, %v3787
        %v3791 = vunpack.c.l.s4 1966171168
        %v3792 = vunpack.c.0.s8 %v3791
        %v3793 = vlaneseq
        %v3794 = vshrl.u32 %v3793, 7
        %v3795 = vsub.s32 %v3792, %v3794
        %v3796 = vrot.slane %v3788, %v3795
        %v3798 = vunpack.c.l.s4 1966171168
        %v3799 = vunpack.c.0.s8 %v3798
        %v3800 = vlaneseq
        %v3801 = vshrl.u32 %v3800, 7
        %v3802 = vsub.s32 %v3799, %v3801
        %v3803 = vrot.slane %v3789, %v3802
        %v3804 = vcombine.low %v2034, %v2048
        %v3806 = vunpack.c.l.s4 1966171168
        %v3807 = vunpack.c.0.s8 %v3806
        %v3808 = vlaneseq
        %v3809 = vshrl.u32 %v3808, 7
        %v3810 = vsub.s32 %v3807, %v3809
        %v3811 = vrot.slane %v3804, %v3810
        %v3813 = vunpack.c.l.s4 1966171168
        %v3814 = vunpack.c.0.s8 %v3813
        %v3815 = vlaneseq
        %v3816 = vshrl.u32 %v3815, 7
        %v3817 = vsub.s32 %v3814, %v3816
        %v3818 = vrot.slane %v2056, %v3817
        %v3819 = vcombine.low %v3811, %v3818
        %v3820 = vcombine.high %v3811, %v3818
        %v3822 = vunpack.c.l.s4 1966171168
        %v3823 = vunpack.c.0.s8 %v3822
        %v3824 = vlaneseq
        %v3825 = vshrl.u32 %v3824, 7
        %v3826 = vsub.s32 %v3823, %v3825
        %v3827 = vrot.slane %v3819, %v3826
        %v3829 = vunpack.c.l.s4 1966171168
        %v3830 = vunpack.c.0.s8 %v3829
        %v3831 = vlaneseq
        %v3832 = vshrl.u32 %v3831, 7
        %v3833 = vsub.s32 %v3830, %v3832
        %v3834 = vrot.slane %v3820, %v3833
        %v3835 = vcombine.low %v2057, %v2041
        %v3837 = vunpack.c.l.s4 1966171168
        %v3838 = vunpack.c.0.s8 %v3837
        %v3839 = vlaneseq
        %v3840 = vshrl.u32 %v3839, 7
        %v3841 = vsub.s32 %v3838, %v3840
        %v3842 = vrot.slane %v3835, %v3841
        %v3844 = vunpack.c.l.s4 1966171168
        %v3845 = vunpack.c.0.s8 %v3844
        %v3846 = vlaneseq
        %v3847 = vshrl.u32 %v3846, 7
        %v3848 = vsub.s32 %v3845, %v3847
        %v3849 = vrot.slane %v2055, %v3848
        %v3850 = vcombine.low %v3842, %v3849
        %v3851 = vcombine.high %v3842, %v3849
        %v3853 = vunpack.c.l.s4 1966171168
        %v3854 = vunpack.c.0.s8 %v3853
        %v3855 = vlaneseq
        %v3856 = vshrl.u32 %v3855, 7
        %v3857 = vsub.s32 %v3854, %v3856
        %v3858 = vrot.slane %v3850, %v3857
        %v3860 = vunpack.c.l.s4 1966171168
        %v3861 = vunpack.c.0.s8 %v3860
        %v3862 = vlaneseq
        %v3863 = vshrl.u32 %v3862, 7
        %v3864 = vsub.s32 %v3861, %v3863
        %v3865 = vrot.slane %v3851, %v3864
        %v3866 = vcombine.low %v2082, %v2096
        %v3868 = vunpack.c.l.s4 1966171168
        %v3869 = vunpack.c.0.s8 %v3868
        %v3870 = vlaneseq
        %v3871 = vshrl.u32 %v3870, 7
        %v3872 = vsub.s32 %v3869, %v3871
        %v3873 = vrot.slane %v3866, %v3872
        %v3875 = vunpack.c.l.s4 1966171168
        %v3876 = vunpack.c.0.s8 %v3875
        %v3877 = vlaneseq
        %v3878 = vshrl.u32 %v3877, 7
        %v3879 = vsub.s32 %v3876, %v3878
        %v3880 = vrot.slane %v2104, %v3879
        %v3881 = vcombine.low %v3873, %v3880
        %v3882 = vcombine.high %v3873, %v3880
        %v3884 = vunpack.c.l.s4 1966171168
        %v3885 = vunpack.c.0.s8 %v3884
        %v3886 = vlaneseq
        %v3887 = vshrl.u32 %v3886, 7
        %v3888 = vsub.s32 %v3885, %v3887
        %v3889 = vrot.slane %v3881, %v3888
        %v3891 = vunpack.c.l.s4 1966171168
        %v3892 = vunpack.c.0.s8 %v3891
        %v3893 = vlaneseq
        %v3894 = vshrl.u32 %v3893, 7
        %v3895 = vsub.s32 %v3892, %v3894
        %v3896 = vrot.slane %v3882, %v3895
        %v3897 = vcombine.low %v2106, %v2089
        %v3899 = vunpack.c.l.s4 1966171168
        %v3900 = vunpack.c.0.s8 %v3899
        %v3901 = vlaneseq
        %v3902 = vshrl.u32 %v3901, 7
        %v3903 = vsub.s32 %v3900, %v3902
        %v3904 = vrot.slane %v3897, %v3903
        %v3906 = vunpack.c.l.s4 1966171168
        %v3907 = vunpack.c.0.s8 %v3906
        %v3908 = vlaneseq
        %v3909 = vshrl.u32 %v3908, 7
        %v3910 = vsub.s32 %v3907, %v3909
        %v3911 = vrot.slane %v2103, %v3910
        %v3912 = vcombine.low %v3904, %v3911
        %v3913 = vcombine.high %v3904, %v3911
        %v3915 = vunpack.c.l.s4 1966171168
        %v3916 = vunpack.c.0.s8 %v3915
        %v3917 = vlaneseq
        %v3918 = vshrl.u32 %v3917, 7
        %v3919 = vsub.s32 %v3916, %v3918
        %v3920 = vrot.slane %v3912, %v3919
        %v3922 = vunpack.c.l.s4 1966171168
        %v3923 = vunpack.c.0.s8 %v3922
        %v3924 = vlaneseq
        %v3925 = vshrl.u32 %v3924, 7
        %v3926 = vsub.s32 %v3923, %v3925
        %v3927 = vrot.slane %v3913, %v3926
        %v3928 = vcombine.low %v2105, %v2107
        %v3930 = vunpack.c.l.s4 1966171168
        %v3931 = vunpack.c.0.s8 %v3930
        %v3932 = vlaneseq
        %v3933 = vshrl.u32 %v3932, 7
        %v3934 = vsub.s32 %v3931, %v3933
        %v3935 = vrot.slane %v3928, %v3934
        %v3937 = vunpack.c.l.s4 1966171168
        %v3938 = vunpack.c.0.s8 %v3937
        %v3939 = vlaneseq
        %v3940 = vshrl.u32 %v3939, 7
        %v3941 = vsub.s32 %v3938, %v3940
        %v3942 = vrot.slane %v2132, %v3941
        %v3943 = vcombine.low %v3935, %v3942
        %v3944 = vcombine.high %v3935, %v3942
        %v3946 = vunpack.c.l.s4 1966171168
        %v3947 = vunpack.c.0.s8 %v3946
        %v3948 = vlaneseq
        %v3949 = vshrl.u32 %v3948, 7
        %v3950 = vsub.s32 %v3947, %v3949
        %v3951 = vrot.slane %v3943, %v3950
        %v3953 = vunpack.c.l.s4 1966171168
        %v3954 = vunpack.c.0.s8 %v3953
        %v3955 = vlaneseq
        %v3956 = vshrl.u32 %v3955, 7
        %v3957 = vsub.s32 %v3954, %v3956
        %v3958 = vrot.slane %v3944, %v3957
        %v3959 = vcombine.low %v2146, %v2154
        %v3961 = vunpack.c.l.s4 1966171168
        %v3962 = vunpack.c.0.s8 %v3961
        %v3963 = vlaneseq
        %v3964 = vshrl.u32 %v3963, 7
        %v3965 = vsub.s32 %v3962, %v3964
        %v3966 = vrot.slane %v3959, %v3965
        %v3968 = vunpack.c.l.s4 1966171168
        %v3969 = vunpack.c.0.s8 %v3968
        %v3970 = vlaneseq
        %v3971 = vshrl.u32 %v3970, 7
        %v3972 = vsub.s32 %v3969, %v3971
        %v3973 = vrot.slane %v2156, %v3972
        %v3974 = vcombine.low %v3966, %v3973
        %v3975 = vcombine.high %v3966, %v3973
        %v3977 = vunpack.c.l.s4 1966171168
        %v3978 = vunpack.c.0.s8 %v3977
        %v3979 = vlaneseq
        %v3980 = vshrl.u32 %v3979, 7
        %v3981 = vsub.s32 %v3978, %v3980
        %v3982 = vrot.slane %v3974, %v3981
        %v3984 = vunpack.c.l.s4 1966171168
        %v3985 = vunpack.c.0.s8 %v3984
        %v3986 = vlaneseq
        %v3987 = vshrl.u32 %v3986, 7
        %v3988 = vsub.s32 %v3985, %v3987
        %v3989 = vrot.slane %v3975, %v3988
        %v3990 = vcombine.low %v2139, %v2153
        %v3992 = vunpack.c.l.s4 1966171168
        %v3993 = vunpack.c.0.s8 %v3992
        %v3994 = vlaneseq
        %v3995 = vshrl.u32 %v3994, 7
        %v3996 = vsub.s32 %v3993, %v3995
        %v3997 = vrot.slane %v3990, %v3996
        %v3999 = vunpack.c.l.s4 1966171168
        %v4000 = vunpack.c.0.s8 %v3999
        %v4001 = vlaneseq
        %v4002 = vshrl.u32 %v4001, 7
        %v4003 = vsub.s32 %v4000, %v4002
        %v4004 = vrot.slane %v2155, %v4003
        %v4005 = vcombine.low %v3997, %v4004
        %v4006 = vcombine.high %v3997, %v4004
        %v4008 = vunpack.c.l.s4 1966171168
        %v4009 = vunpack.c.0.s8 %v4008
        %v4010 = vlaneseq
        %v4011 = vshrl.u32 %v4010, 7
        %v4012 = vsub.s32 %v4009, %v4011
        %v4013 = vrot.slane %v4005, %v4012
        %v4015 = vunpack.c.l.s4 1966171168
        %v4016 = vunpack.c.0.s8 %v4015
        %v4017 = vlaneseq
        %v4018 = vshrl.u32 %v4017, 7
        %v4019 = vsub.s32 %v4016, %v4018
        %v4020 = vrot.slane %v4006, %v4019
        %v4021 = vcombine.low %v2157, %v2182
        %v4023 = vunpack.c.l.s4 1966171168
        %v4024 = vunpack.c.0.s8 %v4023
        %v4025 = vlaneseq
        %v4026 = vshrl.u32 %v4025, 7
        %v4027 = vsub.s32 %v4024, %v4026
        %v4028 = vrot.slane %v4021, %v4027
        %v4030 = vunpack.c.l.s4 1966171168
        %v4031 = vunpack.c.0.s8 %v4030
        %v4032 = vlaneseq
        %v4033 = vshrl.u32 %v4032, 7
        %v4034 = vsub.s32 %v4031, %v4033
        %v4035 = vrot.slane %v2196, %v4034
        %v4036 = vcombine.low %v4028, %v4035
        %v4037 = vcombine.high %v4028, %v4035
        %v4039 = vunpack.c.l.s4 1966171168
        %v4040 = vunpack.c.0.s8 %v4039
        %v4041 = vlaneseq
        %v4042 = vshrl.u32 %v4041, 7
        %v4043 = vsub.s32 %v4040, %v4042
        %v4044 = vrot.slane %v4036, %v4043
        %v4046 = vunpack.c.l.s4 1966171168
        %v4047 = vunpack.c.0.s8 %v4046
        %v4048 = vlaneseq
        %v4049 = vshrl.u32 %v4048, 7
        %v4050 = vsub.s32 %v4047, %v4049
        %v4051 = vrot.slane %v4037, %v4050
        %v4052 = vcombine.low %v2204, %v2206
        %v4054 = vunpack.c.l.s4 1966171168
        %v4055 = vunpack.c.0.s8 %v4054
        %v4056 = vlaneseq
        %v4057 = vshrl.u32 %v4056, 7
        %v4058 = vsub.s32 %v4055, %v4057
        %v4059 = vrot.slane %v4052, %v4058
        %v4061 = vunpack.c.l.s4 1966171168
        %v4062 = vunpack.c.0.s8 %v4061
        %v4063 = vlaneseq
        %v4064 = vshrl.u32 %v4063, 7
        %v4065 = vsub.s32 %v4062, %v4064
        %v4066 = vrot.slane %v2189, %v4065
        %v4067 = vcombine.low %v4059, %v4066
        %v4068 = vcombine.high %v4059, %v4066
        %v4070 = vunpack.c.l.s4 1966171168
        %v4071 = vunpack.c.0.s8 %v4070
        %v4072 = vlaneseq
        %v4073 = vshrl.u32 %v4072, 7
        %v4074 = vsub.s32 %v4071, %v4073
        %v4075 = vrot.slane %v4067, %v4074
        %v4077 = vunpack.c.l.s4 1966171168
        %v4078 = vunpack.c.0.s8 %v4077
        %v4079 = vlaneseq
        %v4080 = vshrl.u32 %v4079, 7
        %v4081 = vsub.s32 %v4078, %v4080
        %v4082 = vrot.slane %v4068, %v4081
        %v4083 = vcombine.low %v2203, %v2205
        %v4085 = vunpack.c.l.s4 1966171168
        %v4086 = vunpack.c.0.s8 %v4085
        %v4087 = vlaneseq
        %v4088 = vshrl.u32 %v4087, 7
        %v4089 = vsub.s32 %v4086, %v4088
        %v4090 = vrot.slane %v4083, %v4089
        %v4092 = vunpack.c.l.s4 1966171168
        %v4093 = vunpack.c.0.s8 %v4092
        %v4094 = vlaneseq
        %v4095 = vshrl.u32 %v4094, 7
        %v4096 = vsub.s32 %v4093, %v4095
        %v4097 = vrot.slane %v2207, %v4096
        %v4098 = vcombine.low %v4090, %v4097
        %v4099 = vcombine.high %v4090, %v4097
        %v4101 = vunpack.c.l.s4 1966171168
        %v4102 = vunpack.c.0.s8 %v4101
        %v4103 = vlaneseq
        %v4104 = vshrl.u32 %v4103, 7
        %v4105 = vsub.s32 %v4102, %v4104
        %v4106 = vrot.slane %v4098, %v4105
        %v4108 = vunpack.c.l.s4 1966171168
        %v4109 = vunpack.c.0.s8 %v4108
        %v4110 = vlaneseq
        %v4111 = vshrl.u32 %v4110, 7
        %v4112 = vsub.s32 %v4109, %v4111
        %v4113 = vrot.slane %v4099, %v4112
        %v4114 = vcombine.low %v2232, %v2246
        %v4116 = vunpack.c.l.s4 1966171168
        %v4117 = vunpack.c.0.s8 %v4116
        %v4118 = vlaneseq
        %v4119 = vshrl.u32 %v4118, 7
        %v4120 = vsub.s32 %v4117, %v4119
        %v4121 = vrot.slane %v4114, %v4120
        %v4123 = vunpack.c.l.s4 1966171168
        %v4124 = vunpack.c.0.s8 %v4123
        %v4125 = vlaneseq
        %v4126 = vshrl.u32 %v4125, 7
        %v4127 = vsub.s32 %v4124, %v4126
        %v4128 = vrot.slane %v2254, %v4127
        %v4129 = vcombine.low %v4121, %v4128
        %v4130 = vcombine.high %v4121, %v4128
        %v4132 = vunpack.c.l.s4 1966171168
        %v4133 = vunpack.c.0.s8 %v4132
        %v4134 = vlaneseq
        %v4135 = vshrl.u32 %v4134, 7
        %v4136 = vsub.s32 %v4133, %v4135
        %v4137 = vrot.slane %v4129, %v4136
        %v4139 = vunpack.c.l.s4 1966171168
        %v4140 = vunpack.c.0.s8 %v4139
        %v4141 = vlaneseq
        %v4142 = vshrl.u32 %v4141, 7
        %v4143 = vsub.s32 %v4140, %v4142
        %v4144 = vrot.slane %v4130, %v4143
        %v4145 = vcombine.low %v2255, %v2239
        %v4147 = vunpack.c.l.s4 1966171168
        %v4148 = vunpack.c.0.s8 %v4147
        %v4149 = vlaneseq
        %v4150 = vshrl.u32 %v4149, 7
        %v4151 = vsub.s32 %v4148, %v4150
        %v4152 = vrot.slane %v4145, %v4151
        %v4154 = vunpack.c.l.s4 1966171168
        %v4155 = vunpack.c.0.s8 %v4154
        %v4156 = vlaneseq
        %v4157 = vshrl.u32 %v4156, 7
        %v4158 = vsub.s32 %v4155, %v4157
        %v4159 = vrot.slane %v2253, %v4158
        %v4160 = vcombine.low %v4152, %v4159
        %v4161 = vcombine.high %v4152, %v4159
        %v4163 = vunpack.c.l.s4 1966171168
        %v4164 = vunpack.c.0.s8 %v4163
        %v4165 = vlaneseq
        %v4166 = vshrl.u32 %v4165, 7
        %v4167 = vsub.s32 %v4164, %v4166
        %v4168 = vrot.slane %v4160, %v4167
        %v4170 = vunpack.c.l.s4 1966171168
        %v4171 = vunpack.c.0.s8 %v4170
        %v4172 = vlaneseq
        %v4173 = vshrl.u32 %v4172, 7
        %v4174 = vsub.s32 %v4171, %v4173
        %v4175 = vrot.slane %v4161, %v4174
        %v4176 = vcombine.low %v2280, %v2294
        %v4178 = vunpack.c.l.s4 1966171168
        %v4179 = vunpack.c.0.s8 %v4178
        %v4180 = vlaneseq
        %v4181 = vshrl.u32 %v4180, 7
        %v4182 = vsub.s32 %v4179, %v4181
        %v4183 = vrot.slane %v4176, %v4182
        %v4185 = vunpack.c.l.s4 1966171168
        %v4186 = vunpack.c.0.s8 %v4185
        %v4187 = vlaneseq
        %v4188 = vshrl.u32 %v4187, 7
        %v4189 = vsub.s32 %v4186, %v4188
        %v4190 = vrot.slane %v2302, %v4189
        %v4191 = vcombine.low %v4183, %v4190
        %v4192 = vcombine.high %v4183, %v4190
        %v4194 = vunpack.c.l.s4 1966171168
        %v4195 = vunpack.c.0.s8 %v4194
        %v4196 = vlaneseq
        %v4197 = vshrl.u32 %v4196, 7
        %v4198 = vsub.s32 %v4195, %v4197
        %v4199 = vrot.slane %v4191, %v4198
        %v4201 = vunpack.c.l.s4 1966171168
        %v4202 = vunpack.c.0.s8 %v4201
        %v4203 = vlaneseq
        %v4204 = vshrl.u32 %v4203, 7
        %v4205 = vsub.s32 %v4202, %v4204
        %v4206 = vrot.slane %v4192, %v4205
        %v4207 = vcombine.low %v2304, %v2287
        %v4209 = vunpack.c.l.s4 1966171168
        %v4210 = vunpack.c.0.s8 %v4209
        %v4211 = vlaneseq
        %v4212 = vshrl.u32 %v4211, 7
        %v4213 = vsub.s32 %v4210, %v4212
        %v4214 = vrot.slane %v4207, %v4213
        %v4216 = vunpack.c.l.s4 1966171168
        %v4217 = vunpack.c.0.s8 %v4216
        %v4218 = vlaneseq
        %v4219 = vshrl.u32 %v4218, 7
        %v4220 = vsub.s32 %v4217, %v4219
        %v4221 = vrot.slane %v2301, %v4220
        %v4222 = vcombine.low %v4214, %v4221
        %v4223 = vcombine.high %v4214, %v4221
        %v4225 = vunpack.c.l.s4 1966171168
        %v4226 = vunpack.c.0.s8 %v4225
        %v4227 = vlaneseq
        %v4228 = vshrl.u32 %v4227, 7
        %v4229 = vsub.s32 %v4226, %v4228
        %v4230 = vrot.slane %v4222, %v4229
        %v4232 = vunpack.c.l.s4 1966171168
        %v4233 = vunpack.c.0.s8 %v4232
        %v4234 = vlaneseq
        %v4235 = vshrl.u32 %v4234, 7
        %v4236 = vsub.s32 %v4233, %v4235
        %v4237 = vrot.slane %v4223, %v4236
        %v4238 = vcombine.low %v2303, %v2305
        %v4240 = vunpack.c.l.s4 1966171168
        %v4241 = vunpack.c.0.s8 %v4240
        %v4242 = vlaneseq
        %v4243 = vshrl.u32 %v4242, 7
        %v4244 = vsub.s32 %v4241, %v4243
        %v4245 = vrot.slane %v4238, %v4244
        %v4247 = vunpack.c.l.s4 1966171168
        %v4248 = vunpack.c.0.s8 %v4247
        %v4249 = vlaneseq
        %v4250 = vshrl.u32 %v4249, 7
        %v4251 = vsub.s32 %v4248, %v4250
        %v4252 = vrot.slane %v2330, %v4251
        %v4253 = vcombine.low %v4245, %v4252
        %v4254 = vcombine.high %v4245, %v4252
        %v4256 = vunpack.c.l.s4 1966171168
        %v4257 = vunpack.c.0.s8 %v4256
        %v4258 = vlaneseq
        %v4259 = vshrl.u32 %v4258, 7
        %v4260 = vsub.s32 %v4257, %v4259
        %v4261 = vrot.slane %v4253, %v4260
        %v4263 = vunpack.c.l.s4 1966171168
        %v4264 = vunpack.c.0.s8 %v4263
        %v4265 = vlaneseq
        %v4266 = vshrl.u32 %v4265, 7
        %v4267 = vsub.s32 %v4264, %v4266
        %v4268 = vrot.slane %v4254, %v4267
        %v4269 = vcombine.low %v2344, %v2352
        %v4271 = vunpack.c.l.s4 1966171168
        %v4272 = vunpack.c.0.s8 %v4271
        %v4273 = vlaneseq
        %v4274 = vshrl.u32 %v4273, 7
        %v4275 = vsub.s32 %v4272, %v4274
        %v4276 = vrot.slane %v4269, %v4275
        %v4278 = vunpack.c.l.s4 1966171168
        %v4279 = vunpack.c.0.s8 %v4278
        %v4280 = vlaneseq
        %v4281 = vshrl.u32 %v4280, 7
        %v4282 = vsub.s32 %v4279, %v4281
        %v4283 = vrot.slane %v2354, %v4282
        %v4284 = vcombine.low %v4276, %v4283
        %v4285 = vcombine.high %v4276, %v4283
        %v4287 = vunpack.c.l.s4 1966171168
        %v4288 = vunpack.c.0.s8 %v4287
        %v4289 = vlaneseq
        %v4290 = vshrl.u32 %v4289, 7
        %v4291 = vsub.s32 %v4288, %v4290
        %v4292 = vrot.slane %v4284, %v4291
        %v4294 = vunpack.c.l.s4 1966171168
        %v4295 = vunpack.c.0.s8 %v4294
        %v4296 = vlaneseq
        %v4297 = vshrl.u32 %v4296, 7
        %v4298 = vsub.s32 %v4295, %v4297
        %v4299 = vrot.slane %v4285, %v4298
        %v4300 = vcombine.low %v2337, %v2351
        %v4302 = vunpack.c.l.s4 1966171168
        %v4303 = vunpack.c.0.s8 %v4302
        %v4304 = vlaneseq
        %v4305 = vshrl.u32 %v4304, 7
        %v4306 = vsub.s32 %v4303, %v4305
        %v4307 = vrot.slane %v4300, %v4306
        %v4309 = vunpack.c.l.s4 1966171168
        %v4310 = vunpack.c.0.s8 %v4309
        %v4311 = vlaneseq
        %v4312 = vshrl.u32 %v4311, 7
        %v4313 = vsub.s32 %v4310, %v4312
        %v4314 = vrot.slane %v2353, %v4313
        %v4315 = vcombine.low %v4307, %v4314
        %v4316 = vcombine.high %v4307, %v4314
        %v4318 = vunpack.c.l.s4 1966171168
        %v4319 = vunpack.c.0.s8 %v4318
        %v4320 = vlaneseq
        %v4321 = vshrl.u32 %v4320, 7
        %v4322 = vsub.s32 %v4319, %v4321
        %v4323 = vrot.slane %v4315, %v4322
        %v4325 = vunpack.c.l.s4 1966171168
        %v4326 = vunpack.c.0.s8 %v4325
        %v4327 = vlaneseq
        %v4328 = vshrl.u32 %v4327, 7
        %v4329 = vsub.s32 %v4326, %v4328
        %v4330 = vrot.slane %v4316, %v4329
        %v4331 = vcombine.low %v2355, %v2380
        %v4333 = vunpack.c.l.s4 1966171168
        %v4334 = vunpack.c.0.s8 %v4333
        %v4335 = vlaneseq
        %v4336 = vshrl.u32 %v4335, 7
        %v4337 = vsub.s32 %v4334, %v4336
        %v4338 = vrot.slane %v4331, %v4337
        %v4340 = vunpack.c.l.s4 1966171168
        %v4341 = vunpack.c.0.s8 %v4340
        %v4342 = vlaneseq
        %v4343 = vshrl.u32 %v4342, 7
        %v4344 = vsub.s32 %v4341, %v4343
        %v4345 = vrot.slane %v2394, %v4344
        %v4346 = vcombine.low %v4338, %v4345
        %v4347 = vcombine.high %v4338, %v4345
        %v4349 = vunpack.c.l.s4 1966171168
        %v4350 = vunpack.c.0.s8 %v4349
        %v4351 = vlaneseq
        %v4352 = vshrl.u32 %v4351, 7
        %v4353 = vsub.s32 %v4350, %v4352
        %v4354 = vrot.slane %v4346, %v4353
        %v4356 = vunpack.c.l.s4 1966171168
        %v4357 = vunpack.c.0.s8 %v4356
        %v4358 = vlaneseq
        %v4359 = vshrl.u32 %v4358, 7
        %v4360 = vsub.s32 %v4357, %v4359
        %v4361 = vrot.slane %v4347, %v4360
        %v4362 = vcombine.low %v2402, %v2404
        %v4364 = vunpack.c.l.s4 1966171168
        %v4365 = vunpack.c.0.s8 %v4364
        %v4366 = vlaneseq
        %v4367 = vshrl.u32 %v4366, 7
        %v4368 = vsub.s32 %v4365, %v4367
        %v4369 = vrot.slane %v4362, %v4368
        %v4371 = vunpack.c.l.s4 1966171168
        %v4372 = vunpack.c.0.s8 %v4371
        %v4373 = vlaneseq
        %v4374 = vshrl.u32 %v4373, 7
        %v4375 = vsub.s32 %v4372, %v4374
        %v4376 = vrot.slane %v2387, %v4375
        %v4377 = vcombine.low %v4369, %v4376
        %v4378 = vcombine.high %v4369, %v4376
        %v4380 = vunpack.c.l.s4 1966171168
        %v4381 = vunpack.c.0.s8 %v4380
        %v4382 = vlaneseq
        %v4383 = vshrl.u32 %v4382, 7
        %v4384 = vsub.s32 %v4381, %v4383
        %v4385 = vrot.slane %v4377, %v4384
        %v4387 = vunpack.c.l.s4 1966171168
        %v4388 = vunpack.c.0.s8 %v4387
        %v4389 = vlaneseq
        %v4390 = vshrl.u32 %v4389, 7
        %v4391 = vsub.s32 %v4388, %v4390
        %v4392 = vrot.slane %v4378, %v4391
        %v4393 = vcombine.low %v2401, %v2403
        %v4395 = vunpack.c.l.s4 1966171168
        %v4396 = vunpack.c.0.s8 %v4395
        %v4397 = vlaneseq
        %v4398 = vshrl.u32 %v4397, 7
        %v4399 = vsub.s32 %v4396, %v4398
        %v4400 = vrot.slane %v4393, %v4399
        %v4402 = vunpack.c.l.s4 1966171168
        %v4403 = vunpack.c.0.s8 %v4402
        %v4404 = vlaneseq
        %v4405 = vshrl.u32 %v4404, 7
        %v4406 = vsub.s32 %v4403, %v4405
        %v4407 = vrot.slane %v2405, %v4406
        %v4408 = vcombine.low %v4400, %v4407
        %v4409 = vcombine.high %v4400, %v4407
        %v4411 = vunpack.c.l.s4 1966171168
        %v4412 = vunpack.c.0.s8 %v4411
        %v4413 = vlaneseq
        %v4414 = vshrl.u32 %v4413, 7
        %v4415 = vsub.s32 %v4412, %v4414
        %v4416 = vrot.slane %v4408, %v4415
        %v4418 = vunpack.c.l.s4 1966171168
        %v4419 = vunpack.c.0.s8 %v4418
        %v4420 = vlaneseq
        %v4421 = vshrl.u32 %v4420, 7
        %v4422 = vsub.s32 %v4419, %v4421
        %v4423 = vrot.slane %v4409, %v4422
        %v4424 = vcombine.low %v2430, %v2444
        %v4426 = vunpack.c.l.s4 1966171168
        %v4427 = vunpack.c.0.s8 %v4426
        %v4428 = vlaneseq
        %v4429 = vshrl.u32 %v4428, 7
        %v4430 = vsub.s32 %v4427, %v4429
        %v4431 = vrot.slane %v4424, %v4430
        %v4433 = vunpack.c.l.s4 1966171168
        %v4434 = vunpack.c.0.s8 %v4433
        %v4435 = vlaneseq
        %v4436 = vshrl.u32 %v4435, 7
        %v4437 = vsub.s32 %v4434, %v4436
        %v4438 = vrot.slane %v2452, %v4437
        %v4439 = vcombine.low %v4431, %v4438
        %v4440 = vcombine.high %v4431, %v4438
        %v4442 = vunpack.c.l.s4 1966171168
        %v4443 = vunpack.c.0.s8 %v4442
        %v4444 = vlaneseq
        %v4445 = vshrl.u32 %v4444, 7
        %v4446 = vsub.s32 %v4443, %v4445
        %v4447 = vrot.slane %v4439, %v4446
        %v4449 = vunpack.c.l.s4 1966171168
        %v4450 = vunpack.c.0.s8 %v4449
        %v4451 = vlaneseq
        %v4452 = vshrl.u32 %v4451, 7
        %v4453 = vsub.s32 %v4450, %v4452
        %v4454 = vrot.slane %v4440, %v4453
        %v4455 = vcombine.low %v2453, %v2437
        %v4457 = vunpack.c.l.s4 1966171168
        %v4458 = vunpack.c.0.s8 %v4457
        %v4459 = vlaneseq
        %v4460 = vshrl.u32 %v4459, 7
        %v4461 = vsub.s32 %v4458, %v4460
        %v4462 = vrot.slane %v4455, %v4461
        %v4464 = vunpack.c.l.s4 1966171168
        %v4465 = vunpack.c.0.s8 %v4464
        %v4466 = vlaneseq
        %v4467 = vshrl.u32 %v4466, 7
        %v4468 = vsub.s32 %v4465, %v4467
        %v4469 = vrot.slane %v2451, %v4468
        %v4470 = vcombine.low %v4462, %v4469
        %v4471 = vcombine.high %v4462, %v4469
        %v4473 = vunpack.c.l.s4 1966171168
        %v4474 = vunpack.c.0.s8 %v4473
        %v4475 = vlaneseq
        %v4476 = vshrl.u32 %v4475, 7
        %v4477 = vsub.s32 %v4474, %v4476
        %v4478 = vrot.slane %v4470, %v4477
        %v4480 = vunpack.c.l.s4 1966171168
        %v4481 = vunpack.c.0.s8 %v4480
        %v4482 = vlaneseq
        %v4483 = vshrl.u32 %v4482, 7
        %v4484 = vsub.s32 %v4481, %v4483
        %v4485 = vrot.slane %v4471, %v4484
        %v4486 = vcombine.low %v2478, %v2492
        %v4488 = vunpack.c.l.s4 1966171168
        %v4489 = vunpack.c.0.s8 %v4488
        %v4490 = vlaneseq
        %v4491 = vshrl.u32 %v4490, 7
        %v4492 = vsub.s32 %v4489, %v4491
        %v4493 = vrot.slane %v4486, %v4492
        %v4495 = vunpack.c.l.s4 1966171168
        %v4496 = vunpack.c.0.s8 %v4495
        %v4497 = vlaneseq
        %v4498 = vshrl.u32 %v4497, 7
        %v4499 = vsub.s32 %v4496, %v4498
        %v4500 = vrot.slane %v2500, %v4499
        %v4501 = vcombine.low %v4493, %v4500
        %v4502 = vcombine.high %v4493, %v4500
        %v4504 = vunpack.c.l.s4 1966171168
        %v4505 = vunpack.c.0.s8 %v4504
        %v4506 = vlaneseq
        %v4507 = vshrl.u32 %v4506, 7
        %v4508 = vsub.s32 %v4505, %v4507
        %v4509 = vrot.slane %v4501, %v4508
        %v4511 = vunpack.c.l.s4 1966171168
        %v4512 = vunpack.c.0.s8 %v4511
        %v4513 = vlaneseq
        %v4514 = vshrl.u32 %v4513, 7
        %v4515 = vsub.s32 %v4512, %v4514
        %v4516 = vrot.slane %v4502, %v4515
        %v4517 = vcombine.low %v2502, %v2485
        %v4519 = vunpack.c.l.s4 1966171168
        %v4520 = vunpack.c.0.s8 %v4519
        %v4521 = vlaneseq
        %v4522 = vshrl.u32 %v4521, 7
        %v4523 = vsub.s32 %v4520, %v4522
        %v4524 = vrot.slane %v4517, %v4523
        %v4526 = vunpack.c.l.s4 1966171168
        %v4527 = vunpack.c.0.s8 %v4526
        %v4528 = vlaneseq
        %v4529 = vshrl.u32 %v4528, 7
        %v4530 = vsub.s32 %v4527, %v4529
        %v4531 = vrot.slane %v2499, %v4530
        %v4532 = vcombine.low %v4524, %v4531
        %v4533 = vcombine.high %v4524, %v4531
        %v4535 = vunpack.c.l.s4 1966171168
        %v4536 = vunpack.c.0.s8 %v4535
        %v4537 = vlaneseq
        %v4538 = vshrl.u32 %v4537, 7
        %v4539 = vsub.s32 %v4536, %v4538
        %v4540 = vrot.slane %v4532, %v4539
        %v4542 = vunpack.c.l.s4 1966171168
        %v4543 = vunpack.c.0.s8 %v4542
        %v4544 = vlaneseq
        %v4545 = vshrl.u32 %v4544, 7
        %v4546 = vsub.s32 %v4543, %v4545
        %v4547 = vrot.slane %v4533, %v4546
        %v4548 = vcombine.low %v2501, %v2503
        %v4550 = vunpack.c.l.s4 1966171168
        %v4551 = vunpack.c.0.s8 %v4550
        %v4552 = vlaneseq
        %v4553 = vshrl.u32 %v4552, 7
        %v4554 = vsub.s32 %v4551, %v4553
        %v4555 = vrot.slane %v4548, %v4554
        %v4557 = vunpack.c.l.s4 1966171168
        %v4558 = vunpack.c.0.s8 %v4557
        %v4559 = vlaneseq
        %v4560 = vshrl.u32 %v4559, 7
        %v4561 = vsub.s32 %v4558, %v4560
        %v4562 = vrot.slane %v2528, %v4561
        %v4563 = vcombine.low %v4555, %v4562
        %v4564 = vcombine.high %v4555, %v4562
        %v4566 = vunpack.c.l.s4 1966171168
        %v4567 = vunpack.c.0.s8 %v4566
        %v4568 = vlaneseq
        %v4569 = vshrl.u32 %v4568, 7
        %v4570 = vsub.s32 %v4567, %v4569
        %v4571 = vrot.slane %v4563, %v4570
        %v4573 = vunpack.c.l.s4 1966171168
        %v4574 = vunpack.c.0.s8 %v4573
        %v4575 = vlaneseq
        %v4576 = vshrl.u32 %v4575, 7
        %v4577 = vsub.s32 %v4574, %v4576
        %v4578 = vrot.slane %v4564, %v4577
        %v4579 = vcombine.low %v2542, %v2550
        %v4581 = vunpack.c.l.s4 1966171168
        %v4582 = vunpack.c.0.s8 %v4581
        %v4583 = vlaneseq
        %v4584 = vshrl.u32 %v4583, 7
        %v4585 = vsub.s32 %v4582, %v4584
        %v4586 = vrot.slane %v4579, %v4585
        %v4588 = vunpack.c.l.s4 1966171168
        %v4589 = vunpack.c.0.s8 %v4588
        %v4590 = vlaneseq
        %v4591 = vshrl.u32 %v4590, 7
        %v4592 = vsub.s32 %v4589, %v4591
        %v4593 = vrot.slane %v2552, %v4592
        %v4594 = vcombine.low %v4586, %v4593
        %v4595 = vcombine.high %v4586, %v4593
        %v4597 = vunpack.c.l.s4 1966171168
        %v4598 = vunpack.c.0.s8 %v4597
        %v4599 = vlaneseq
        %v4600 = vshrl.u32 %v4599, 7
        %v4601 = vsub.s32 %v4598, %v4600
        %v4602 = vrot.slane %v4594, %v4601
        %v4604 = vunpack.c.l.s4 1966171168
        %v4605 = vunpack.c.0.s8 %v4604
        %v4606 = vlaneseq
        %v4607 = vshrl.u32 %v4606, 7
        %v4608 = vsub.s32 %v4605, %v4607
        %v4609 = vrot.slane %v4595, %v4608
        %v4610 = vcombine.low %v2535, %v2549
        %v4612 = vunpack.c.l.s4 1966171168
        %v4613 = vunpack.c.0.s8 %v4612
        %v4614 = vlaneseq
        %v4615 = vshrl.u32 %v4614, 7
        %v4616 = vsub.s32 %v4613, %v4615
        %v4617 = vrot.slane %v4610, %v4616
        %v4619 = vunpack.c.l.s4 1966171168
        %v4620 = vunpack.c.0.s8 %v4619
        %v4621 = vlaneseq
        %v4622 = vshrl.u32 %v4621, 7
        %v4623 = vsub.s32 %v4620, %v4622
        %v4624 = vrot.slane %v2551, %v4623
        %v4625 = vcombine.low %v4617, %v4624
        %v4626 = vcombine.high %v4617, %v4624
        %v4628 = vunpack.c.l.s4 1966171168
        %v4629 = vunpack.c.0.s8 %v4628
        %v4630 = vlaneseq
        %v4631 = vshrl.u32 %v4630, 7
        %v4632 = vsub.s32 %v4629, %v4631
        %v4633 = vrot.slane %v4625, %v4632
        %v4635 = vunpack.c.l.s4 1966171168
        %v4636 = vunpack.c.0.s8 %v4635
        %v4637 = vlaneseq
        %v4638 = vshrl.u32 %v4637, 7
        %v4639 = vsub.s32 %v4636, %v4638
        %v4640 = vrot.slane %v4626, %v4639
        %v4641 = vcombine.low %v2553, %v2578
        %v4643 = vunpack.c.l.s4 1966171168
        %v4644 = vunpack.c.0.s8 %v4643
        %v4645 = vlaneseq
        %v4646 = vshrl.u32 %v4645, 7
        %v4647 = vsub.s32 %v4644, %v4646
        %v4648 = vrot.slane %v4641, %v4647
        %v4650 = vunpack.c.l.s4 1966171168
        %v4651 = vunpack.c.0.s8 %v4650
        %v4652 = vlaneseq
        %v4653 = vshrl.u32 %v4652, 7
        %v4654 = vsub.s32 %v4651, %v4653
        %v4655 = vrot.slane %v2592, %v4654
        %v4656 = vcombine.low %v4648, %v4655
        %v4657 = vcombine.high %v4648, %v4655
        %v4659 = vunpack.c.l.s4 1966171168
        %v4660 = vunpack.c.0.s8 %v4659
        %v4661 = vlaneseq
        %v4662 = vshrl.u32 %v4661, 7
        %v4663 = vsub.s32 %v4660, %v4662
        %v4664 = vrot.slane %v4656, %v4663
        %v4666 = vunpack.c.l.s4 1966171168
        %v4667 = vunpack.c.0.s8 %v4666
        %v4668 = vlaneseq
        %v4669 = vshrl.u32 %v4668, 7
        %v4670 = vsub.s32 %v4667, %v4669
        %v4671 = vrot.slane %v4657, %v4670
        %v4672 = vcombine.low %v2600, %v2602
        %v4674 = vunpack.c.l.s4 1966171168
        %v4675 = vunpack.c.0.s8 %v4674
        %v4676 = vlaneseq
        %v4677 = vshrl.u32 %v4676, 7
        %v4678 = vsub.s32 %v4675, %v4677
        %v4679 = vrot.slane %v4672, %v4678
        %v4681 = vunpack.c.l.s4 1966171168
        %v4682 = vunpack.c.0.s8 %v4681
        %v4683 = vlaneseq
        %v4684 = vshrl.u32 %v4683, 7
        %v4685 = vsub.s32 %v4682, %v4684
        %v4686 = vrot.slane %v2585, %v4685
        %v4687 = vcombine.low %v4679, %v4686
        %v4688 = vcombine.high %v4679, %v4686
        %v4690 = vunpack.c.l.s4 1966171168
        %v4691 = vunpack.c.0.s8 %v4690
        %v4692 = vlaneseq
        %v4693 = vshrl.u32 %v4692, 7
        %v4694 = vsub.s32 %v4691, %v4693
        %v4695 = vrot.slane %v4687, %v4694
        %v4697 = vunpack.c.l.s4 1966171168
        %v4698 = vunpack.c.0.s8 %v4697
        %v4699 = vlaneseq
        %v4700 = vshrl.u32 %v4699, 7
        %v4701 = vsub.s32 %v4698, %v4700
        %v4702 = vrot.slane %v4688, %v4701
        %v4703 = vcombine.low %v2599, %v2601
        %v4705 = vunpack.c.l.s4 1966171168
        %v4706 = vunpack.c.0.s8 %v4705
        %v4707 = vlaneseq
        %v4708 = vshrl.u32 %v4707, 7
        %v4709 = vsub.s32 %v4706, %v4708
        %v4710 = vrot.slane %v4703, %v4709
        %v4712 = vunpack.c.l.s4 1966171168
        %v4713 = vunpack.c.0.s8 %v4712
        %v4714 = vlaneseq
        %v4715 = vshrl.u32 %v4714, 7
        %v4716 = vsub.s32 %v4713, %v4715
        %v4717 = vrot.slane %v2603, %v4716
        %v4718 = vcombine.low %v4710, %v4717
        %v4719 = vcombine.high %v4710, %v4717
        %v4721 = vunpack.c.l.s4 1966171168
        %v4722 = vunpack.c.0.s8 %v4721
        %v4723 = vlaneseq
        %v4724 = vshrl.u32 %v4723, 7
        %v4725 = vsub.s32 %v4722, %v4724
        %v4726 = vrot.slane %v4718, %v4725
        %v4728 = vunpack.c.l.s4 1966171168
        %v4729 = vunpack.c.0.s8 %v4728
        %v4730 = vlaneseq
        %v4731 = vshrl.u32 %v4730, 7
        %v4732 = vsub.s32 %v4729, %v4731
        %v4733 = vrot.slane %v4719, %v4732
        %v4734 = vcombine.low %v2628, %v2642
        %v4736 = vunpack.c.l.s4 1966171168
        %v4737 = vunpack.c.0.s8 %v4736
        %v4738 = vlaneseq
        %v4739 = vshrl.u32 %v4738, 7
        %v4740 = vsub.s32 %v4737, %v4739
        %v4741 = vrot.slane %v4734, %v4740
        %v4743 = vunpack.c.l.s4 1966171168
        %v4744 = vunpack.c.0.s8 %v4743
        %v4745 = vlaneseq
        %v4746 = vshrl.u32 %v4745, 7
        %v4747 = vsub.s32 %v4744, %v4746
        %v4748 = vrot.slane %v2650, %v4747
        %v4749 = vcombine.low %v4741, %v4748
        %v4750 = vcombine.high %v4741, %v4748
        %v4752 = vunpack.c.l.s4 1966171168
        %v4753 = vunpack.c.0.s8 %v4752
        %v4754 = vlaneseq
        %v4755 = vshrl.u32 %v4754, 7
        %v4756 = vsub.s32 %v4753, %v4755
        %v4757 = vrot.slane %v4749, %v4756
        %v4759 = vunpack.c.l.s4 1966171168
        %v4760 = vunpack.c.0.s8 %v4759
        %v4761 = vlaneseq
        %v4762 = vshrl.u32 %v4761, 7
        %v4763 = vsub.s32 %v4760, %v4762
        %v4764 = vrot.slane %v4750, %v4763
        %v4765 = vcombine.low %v2651, %v2635
        %v4767 = vunpack.c.l.s4 1966171168
        %v4768 = vunpack.c.0.s8 %v4767
        %v4769 = vlaneseq
        %v4770 = vshrl.u32 %v4769, 7
        %v4771 = vsub.s32 %v4768, %v4770
        %v4772 = vrot.slane %v4765, %v4771
        %v4774 = vunpack.c.l.s4 1966171168
        %v4775 = vunpack.c.0.s8 %v4774
        %v4776 = vlaneseq
        %v4777 = vshrl.u32 %v4776, 7
        %v4778 = vsub.s32 %v4775, %v4777
        %v4779 = vrot.slane %v2649, %v4778
        %v4780 = vcombine.low %v4772, %v4779
        %v4781 = vcombine.high %v4772, %v4779
        %v4783 = vunpack.c.l.s4 1966171168
        %v4784 = vunpack.c.0.s8 %v4783
        %v4785 = vlaneseq
        %v4786 = vshrl.u32 %v4785, 7
        %v4787 = vsub.s32 %v4784, %v4786
        %v4788 = vrot.slane %v4780, %v4787
        %v4790 = vunpack.c.l.s4 1966171168
        %v4791 = vunpack.c.0.s8 %v4790
        %v4792 = vlaneseq
        %v4793 = vshrl.u32 %v4792, 7
        %v4794 = vsub.s32 %v4791, %v4793
        %v4795 = vrot.slane %v4781, %v4794
        %v4796 = vcombine.low %v2676, %v2690
        %v4798 = vunpack.c.l.s4 1966171168
        %v4799 = vunpack.c.0.s8 %v4798
        %v4800 = vlaneseq
        %v4801 = vshrl.u32 %v4800, 7
        %v4802 = vsub.s32 %v4799, %v4801
        %v4803 = vrot.slane %v4796, %v4802
        %v4805 = vunpack.c.l.s4 1966171168
        %v4806 = vunpack.c.0.s8 %v4805
        %v4807 = vlaneseq
        %v4808 = vshrl.u32 %v4807, 7
        %v4809 = vsub.s32 %v4806, %v4808
        %v4810 = vrot.slane %v2698, %v4809
        %v4811 = vcombine.low %v4803, %v4810
        %v4812 = vcombine.high %v4803, %v4810
        %v4814 = vunpack.c.l.s4 1966171168
        %v4815 = vunpack.c.0.s8 %v4814
        %v4816 = vlaneseq
        %v4817 = vshrl.u32 %v4816, 7
        %v4818 = vsub.s32 %v4815, %v4817
        %v4819 = vrot.slane %v4811, %v4818
        %v4821 = vunpack.c.l.s4 1966171168
        %v4822 = vunpack.c.0.s8 %v4821
        %v4823 = vlaneseq
        %v4824 = vshrl.u32 %v4823, 7
        %v4825 = vsub.s32 %v4822, %v4824
        %v4826 = vrot.slane %v4812, %v4825
        %v4827 = vcombine.low %v2700, %v2683
        %v4829 = vunpack.c.l.s4 1966171168
        %v4830 = vunpack.c.0.s8 %v4829
        %v4831 = vlaneseq
        %v4832 = vshrl.u32 %v4831, 7
        %v4833 = vsub.s32 %v4830, %v4832
        %v4834 = vrot.slane %v4827, %v4833
        %v4836 = vunpack.c.l.s4 1966171168
        %v4837 = vunpack.c.0.s8 %v4836
        %v4838 = vlaneseq
        %v4839 = vshrl.u32 %v4838, 7
        %v4840 = vsub.s32 %v4837, %v4839
        %v4841 = vrot.slane %v2697, %v4840
        %v4842 = vcombine.low %v4834, %v4841
        %v4843 = vcombine.high %v4834, %v4841
        %v4845 = vunpack.c.l.s4 1966171168
        %v4846 = vunpack.c.0.s8 %v4845
        %v4847 = vlaneseq
        %v4848 = vshrl.u32 %v4847, 7
        %v4849 = vsub.s32 %v4846, %v4848
        %v4850 = vrot.slane %v4842, %v4849
        %v4852 = vunpack.c.l.s4 1966171168
        %v4853 = vunpack.c.0.s8 %v4852
        %v4854 = vlaneseq
        %v4855 = vshrl.u32 %v4854, 7
        %v4856 = vsub.s32 %v4853, %v4855
        %v4857 = vrot.slane %v4843, %v4856
        %v4858 = vcombine.low %v2699, %v2701
        %v4860 = vunpack.c.l.s4 1966171168
        %v4861 = vunpack.c.0.s8 %v4860
        %v4862 = vlaneseq
        %v4863 = vshrl.u32 %v4862, 7
        %v4864 = vsub.s32 %v4861, %v4863
        %v4865 = vrot.slane %v4858, %v4864
        %v4867 = vunpack.c.l.s4 1966171168
        %v4868 = vunpack.c.0.s8 %v4867
        %v4869 = vlaneseq
        %v4870 = vshrl.u32 %v4869, 7
        %v4871 = vsub.s32 %v4868, %v4870
        %v4872 = vrot.slane %v2726, %v4871
        %v4873 = vcombine.low %v4865, %v4872
        %v4874 = vcombine.high %v4865, %v4872
        %v4876 = vunpack.c.l.s4 1966171168
        %v4877 = vunpack.c.0.s8 %v4876
        %v4878 = vlaneseq
        %v4879 = vshrl.u32 %v4878, 7
        %v4880 = vsub.s32 %v4877, %v4879
        %v4881 = vrot.slane %v4873, %v4880
        %v4883 = vunpack.c.l.s4 1966171168
        %v4884 = vunpack.c.0.s8 %v4883
        %v4885 = vlaneseq
        %v4886 = vshrl.u32 %v4885, 7
        %v4887 = vsub.s32 %v4884, %v4886
        %v4888 = vrot.slane %v4874, %v4887
        %v4889 = vcombine.low %v2740, %v2748
        %v4891 = vunpack.c.l.s4 1966171168
        %v4892 = vunpack.c.0.s8 %v4891
        %v4893 = vlaneseq
        %v4894 = vshrl.u32 %v4893, 7
        %v4895 = vsub.s32 %v4892, %v4894
        %v4896 = vrot.slane %v4889, %v4895
        %v4898 = vunpack.c.l.s4 1966171168
        %v4899 = vunpack.c.0.s8 %v4898
        %v4900 = vlaneseq
        %v4901 = vshrl.u32 %v4900, 7
        %v4902 = vsub.s32 %v4899, %v4901
        %v4903 = vrot.slane %v2750, %v4902
        %v4904 = vcombine.low %v4896, %v4903
        %v4905 = vcombine.high %v4896, %v4903
        %v4907 = vunpack.c.l.s4 1966171168
        %v4908 = vunpack.c.0.s8 %v4907
        %v4909 = vlaneseq
        %v4910 = vshrl.u32 %v4909, 7
        %v4911 = vsub.s32 %v4908, %v4910
        %v4912 = vrot.slane %v4904, %v4911
        %v4914 = vunpack.c.l.s4 1966171168
        %v4915 = vunpack.c.0.s8 %v4914
        %v4916 = vlaneseq
        %v4917 = vshrl.u32 %v4916, 7
        %v4918 = vsub.s32 %v4915, %v4917
        %v4919 = vrot.slane %v4905, %v4918
        %v4920 = vcombine.low %v2733, %v2747
        %v4922 = vunpack.c.l.s4 1966171168
        %v4923 = vunpack.c.0.s8 %v4922
        %v4924 = vlaneseq
        %v4925 = vshrl.u32 %v4924, 7
        %v4926 = vsub.s32 %v4923, %v4925
        %v4927 = vrot.slane %v4920, %v4926
        %v4929 = vunpack.c.l.s4 1966171168
        %v4930 = vunpack.c.0.s8 %v4929
        %v4931 = vlaneseq
        %v4932 = vshrl.u32 %v4931, 7
        %v4933 = vsub.s32 %v4930, %v4932
        %v4934 = vrot.slane %v2749, %v4933
        %v4935 = vcombine.low %v4927, %v4934
        %v4936 = vcombine.high %v4927, %v4934
        %v4938 = vunpack.c.l.s4 1966171168
        %v4939 = vunpack.c.0.s8 %v4938
        %v4940 = vlaneseq
        %v4941 = vshrl.u32 %v4940, 7
        %v4942 = vsub.s32 %v4939, %v4941
        %v4943 = vrot.slane %v4935, %v4942
        %v4945 = vunpack.c.l.s4 1966171168
        %v4946 = vunpack.c.0.s8 %v4945
        %v4947 = vlaneseq
        %v4948 = vshrl.u32 %v4947, 7
        %v4949 = vsub.s32 %v4946, %v4948
        %v4950 = vrot.slane %v4936, %v4949
        %v4951 = vcombine.low %v2751, %v2776
        %v4953 = vunpack.c.l.s4 1966171168
        %v4954 = vunpack.c.0.s8 %v4953
        %v4955 = vlaneseq
        %v4956 = vshrl.u32 %v4955, 7
        %v4957 = vsub.s32 %v4954, %v4956
        %v4958 = vrot.slane %v4951, %v4957
        %v4960 = vunpack.c.l.s4 1966171168
        %v4961 = vunpack.c.0.s8 %v4960
        %v4962 = vlaneseq
        %v4963 = vshrl.u32 %v4962, 7
        %v4964 = vsub.s32 %v4961, %v4963
        %v4965 = vrot.slane %v2790, %v4964
        %v4966 = vcombine.low %v4958, %v4965
        %v4967 = vcombine.high %v4958, %v4965
        %v4969 = vunpack.c.l.s4 1966171168
        %v4970 = vunpack.c.0.s8 %v4969
        %v4971 = vlaneseq
        %v4972 = vshrl.u32 %v4971, 7
        %v4973 = vsub.s32 %v4970, %v4972
        %v4974 = vrot.slane %v4966, %v4973
        %v4976 = vunpack.c.l.s4 1966171168
        %v4977 = vunpack.c.0.s8 %v4976
        %v4978 = vlaneseq
        %v4979 = vshrl.u32 %v4978, 7
        %v4980 = vsub.s32 %v4977, %v4979
        %v4981 = vrot.slane %v4967, %v4980
        %v4982 = vcombine.low %v2798, %v2800
        %v4984 = vunpack.c.l.s4 1966171168
        %v4985 = vunpack.c.0.s8 %v4984
        %v4986 = vlaneseq
        %v4987 = vshrl.u32 %v4986, 7
        %v4988 = vsub.s32 %v4985, %v4987
        %v4989 = vrot.slane %v4982, %v4988
        %v4991 = vunpack.c.l.s4 1966171168
        %v4992 = vunpack.c.0.s8 %v4991
        %v4993 = vlaneseq
        %v4994 = vshrl.u32 %v4993, 7
        %v4995 = vsub.s32 %v4992, %v4994
        %v4996 = vrot.slane %v2783, %v4995
        %v4997 = vcombine.low %v4989, %v4996
        %v4998 = vcombine.high %v4989, %v4996
        %v5000 = vunpack.c.l.s4 1966171168
        %v5001 = vunpack.c.0.s8 %v5000
        %v5002 = vlaneseq
        %v5003 = vshrl.u32 %v5002, 7
        %v5004 = vsub.s32 %v5001, %v5003
        %v5005 = vrot.slane %v4997, %v5004
        %v5007 = vunpack.c.l.s4 1966171168
        %v5008 = vunpack.c.0.s8 %v5007
        %v5009 = vlaneseq
        %v5010 = vshrl.u32 %v5009, 7
        %v5011 = vsub.s32 %v5008, %v5010
        %v5012 = vrot.slane %v4998, %v5011
        %v5013 = vcombine.low %v2797, %v2799
        %v5015 = vunpack.c.l.s4 1966171168
        %v5016 = vunpack.c.0.s8 %v5015
        %v5017 = vlaneseq
        %v5018 = vshrl.u32 %v5017, 7
        %v5019 = vsub.s32 %v5016, %v5018
        %v5020 = vrot.slane %v5013, %v5019
        %v5022 = vunpack.c.l.s4 1966171168
        %v5023 = vunpack.c.0.s8 %v5022
        %v5024 = vlaneseq
        %v5025 = vshrl.u32 %v5024, 7
        %v5026 = vsub.s32 %v5023, %v5025
        %v5027 = vrot.slane %v2801, %v5026
        %v5028 = vcombine.low %v5020, %v5027
        %v5029 = vcombine.high %v5020, %v5027
        %v5031 = vunpack.c.l.s4 1966171168
        %v5032 = vunpack.c.0.s8 %v5031
        %v5033 = vlaneseq
        %v5034 = vshrl.u32 %v5033, 7
        %v5035 = vsub.s32 %v5032, %v5034
        %v5036 = vrot.slane %v5028, %v5035
        %v5038 = vunpack.c.l.s4 1966171168
        %v5039 = vunpack.c.0.s8 %v5038
        %v5040 = vlaneseq
        %v5041 = vshrl.u32 %v5040, 7
        %v5042 = vsub.s32 %v5039, %v5041
        %v5043 = vrot.slane %v5029, %v5042
        %v5044 = vcombine.low %v2826, %v2840
        %v5046 = vunpack.c.l.s4 1966171168
        %v5047 = vunpack.c.0.s8 %v5046
        %v5048 = vlaneseq
        %v5049 = vshrl.u32 %v5048, 7
        %v5050 = vsub.s32 %v5047, %v5049
        %v5051 = vrot.slane %v5044, %v5050
        %v5053 = vunpack.c.l.s4 1966171168
        %v5054 = vunpack.c.0.s8 %v5053
        %v5055 = vlaneseq
        %v5056 = vshrl.u32 %v5055, 7
        %v5057 = vsub.s32 %v5054, %v5056
        %v5058 = vrot.slane %v2848, %v5057
        %v5059 = vcombine.low %v5051, %v5058
        %v5060 = vcombine.high %v5051, %v5058
        %v5062 = vunpack.c.l.s4 1966171168
        %v5063 = vunpack.c.0.s8 %v5062
        %v5064 = vlaneseq
        %v5065 = vshrl.u32 %v5064, 7
        %v5066 = vsub.s32 %v5063, %v5065
        %v5067 = vrot.slane %v5059, %v5066
        %v5069 = vunpack.c.l.s4 1966171168
        %v5070 = vunpack.c.0.s8 %v5069
        %v5071 = vlaneseq
        %v5072 = vshrl.u32 %v5071, 7
        %v5073 = vsub.s32 %v5070, %v5072
        %v5074 = vrot.slane %v5060, %v5073
        %v5075 = vcombine.low %v2849, %v2833
        %v5077 = vunpack.c.l.s4 1966171168
        %v5078 = vunpack.c.0.s8 %v5077
        %v5079 = vlaneseq
        %v5080 = vshrl.u32 %v5079, 7
        %v5081 = vsub.s32 %v5078, %v5080
        %v5082 = vrot.slane %v5075, %v5081
        %v5084 = vunpack.c.l.s4 1966171168
        %v5085 = vunpack.c.0.s8 %v5084
        %v5086 = vlaneseq
        %v5087 = vshrl.u32 %v5086, 7
        %v5088 = vsub.s32 %v5085, %v5087
        %v5089 = vrot.slane %v2847, %v5088
        %v5090 = vcombine.low %v5082, %v5089
        %v5091 = vcombine.high %v5082, %v5089
        %v5093 = vunpack.c.l.s4 1966171168
        %v5094 = vunpack.c.0.s8 %v5093
        %v5095 = vlaneseq
        %v5096 = vshrl.u32 %v5095, 7
        %v5097 = vsub.s32 %v5094, %v5096
        %v5098 = vrot.slane %v5090, %v5097
        %v5100 = vunpack.c.l.s4 1966171168
        %v5101 = vunpack.c.0.s8 %v5100
        %v5102 = vlaneseq
        %v5103 = vshrl.u32 %v5102, 7
        %v5104 = vsub.s32 %v5101, %v5103
        %v5105 = vrot.slane %v5091, %v5104
        %v5106 = vcombine.low %v2874, %v2888
        %v5108 = vunpack.c.l.s4 1966171168
        %v5109 = vunpack.c.0.s8 %v5108
        %v5110 = vlaneseq
        %v5111 = vshrl.u32 %v5110, 7
        %v5112 = vsub.s32 %v5109, %v5111
        %v5113 = vrot.slane %v5106, %v5112
        %v5115 = vunpack.c.l.s4 1966171168
        %v5116 = vunpack.c.0.s8 %v5115
        %v5117 = vlaneseq
        %v5118 = vshrl.u32 %v5117, 7
        %v5119 = vsub.s32 %v5116, %v5118
        %v5120 = vrot.slane %v2896, %v5119
        %v5121 = vcombine.low %v5113, %v5120
        %v5122 = vcombine.high %v5113, %v5120
        %v5124 = vunpack.c.l.s4 1966171168
        %v5125 = vunpack.c.0.s8 %v5124
        %v5126 = vlaneseq
        %v5127 = vshrl.u32 %v5126, 7
        %v5128 = vsub.s32 %v5125, %v5127
        %v5129 = vrot.slane %v5121, %v5128
        %v5131 = vunpack.c.l.s4 1966171168
        %v5132 = vunpack.c.0.s8 %v5131
        %v5133 = vlaneseq
        %v5134 = vshrl.u32 %v5133, 7
        %v5135 = vsub.s32 %v5132, %v5134
        %v5136 = vrot.slane %v5122, %v5135
        %v5137 = vcombine.low %v2898, %v2881
        %v5139 = vunpack.c.l.s4 1966171168
        %v5140 = vunpack.c.0.s8 %v5139
        %v5141 = vlaneseq
        %v5142 = vshrl.u32 %v5141, 7
        %v5143 = vsub.s32 %v5140, %v5142
        %v5144 = vrot.slane %v5137, %v5143
        %v5146 = vunpack.c.l.s4 1966171168
        %v5147 = vunpack.c.0.s8 %v5146
        %v5148 = vlaneseq
        %v5149 = vshrl.u32 %v5148, 7
        %v5150 = vsub.s32 %v5147, %v5149
        %v5151 = vrot.slane %v2895, %v5150
        %v5152 = vcombine.low %v5144, %v5151
        %v5153 = vcombine.high %v5144, %v5151
        %v5155 = vunpack.c.l.s4 1966171168
        %v5156 = vunpack.c.0.s8 %v5155
        %v5157 = vlaneseq
        %v5158 = vshrl.u32 %v5157, 7
        %v5159 = vsub.s32 %v5156, %v5158
        %v5160 = vrot.slane %v5152, %v5159
        %v5162 = vunpack.c.l.s4 1966171168
        %v5163 = vunpack.c.0.s8 %v5162
        %v5164 = vlaneseq
        %v5165 = vshrl.u32 %v5164, 7
        %v5166 = vsub.s32 %v5163, %v5165
        %v5167 = vrot.slane %v5153, %v5166
        %v5168 = vcombine.low %v2897, %v2899
        %v5170 = vunpack.c.l.s4 1966171168
        %v5171 = vunpack.c.0.s8 %v5170
        %v5172 = vlaneseq
        %v5173 = vshrl.u32 %v5172, 7
        %v5174 = vsub.s32 %v5171, %v5173
        %v5175 = vrot.slane %v5168, %v5174
        %v5177 = vunpack.c.l.s4 1966171168
        %v5178 = vunpack.c.0.s8 %v5177
        %v5179 = vlaneseq
        %v5180 = vshrl.u32 %v5179, 7
        %v5181 = vsub.s32 %v5178, %v5180
        %v5182 = vrot.slane %v2924, %v5181
        %v5183 = vcombine.low %v5175, %v5182
        %v5184 = vcombine.high %v5175, %v5182
        %v5186 = vunpack.c.l.s4 1966171168
        %v5187 = vunpack.c.0.s8 %v5186
        %v5188 = vlaneseq
        %v5189 = vshrl.u32 %v5188, 7
        %v5190 = vsub.s32 %v5187, %v5189
        %v5191 = vrot.slane %v5183, %v5190
        %v5193 = vunpack.c.l.s4 1966171168
        %v5194 = vunpack.c.0.s8 %v5193
        %v5195 = vlaneseq
        %v5196 = vshrl.u32 %v5195, 7
        %v5197 = vsub.s32 %v5194, %v5196
        %v5198 = vrot.slane %v5184, %v5197
        %v5199 = vcombine.low %v2938, %v2946
        %v5201 = vunpack.c.l.s4 1966171168
        %v5202 = vunpack.c.0.s8 %v5201
        %v5203 = vlaneseq
        %v5204 = vshrl.u32 %v5203, 7
        %v5205 = vsub.s32 %v5202, %v5204
        %v5206 = vrot.slane %v5199, %v5205
        %v5208 = vunpack.c.l.s4 1966171168
        %v5209 = vunpack.c.0.s8 %v5208
        %v5210 = vlaneseq
        %v5211 = vshrl.u32 %v5210, 7
        %v5212 = vsub.s32 %v5209, %v5211
        %v5213 = vrot.slane %v2948, %v5212
        %v5214 = vcombine.low %v5206, %v5213
        %v5215 = vcombine.high %v5206, %v5213
        %v5217 = vunpack.c.l.s4 1966171168
        %v5218 = vunpack.c.0.s8 %v5217
        %v5219 = vlaneseq
        %v5220 = vshrl.u32 %v5219, 7
        %v5221 = vsub.s32 %v5218, %v5220
        %v5222 = vrot.slane %v5214, %v5221
        %v5224 = vunpack.c.l.s4 1966171168
        %v5225 = vunpack.c.0.s8 %v5224
        %v5226 = vlaneseq
        %v5227 = vshrl.u32 %v5226, 7
        %v5228 = vsub.s32 %v5225, %v5227
        %v5229 = vrot.slane %v5215, %v5228
        %v5230 = vcombine.low %v2931, %v2945
        %v5232 = vunpack.c.l.s4 1966171168
        %v5233 = vunpack.c.0.s8 %v5232
        %v5234 = vlaneseq
        %v5235 = vshrl.u32 %v5234, 7
        %v5236 = vsub.s32 %v5233, %v5235
        %v5237 = vrot.slane %v5230, %v5236
        %v5239 = vunpack.c.l.s4 1966171168
        %v5240 = vunpack.c.0.s8 %v5239
        %v5241 = vlaneseq
        %v5242 = vshrl.u32 %v5241, 7
        %v5243 = vsub.s32 %v5240, %v5242
        %v5244 = vrot.slane %v2947, %v5243
        %v5245 = vcombine.low %v5237, %v5244
        %v5246 = vcombine.high %v5237, %v5244
        %v5248 = vunpack.c.l.s4 1966171168
        %v5249 = vunpack.c.0.s8 %v5248
        %v5250 = vlaneseq
        %v5251 = vshrl.u32 %v5250, 7
        %v5252 = vsub.s32 %v5249, %v5251
        %v5253 = vrot.slane %v5245, %v5252
        %v5255 = vunpack.c.l.s4 1966171168
        %v5256 = vunpack.c.0.s8 %v5255
        %v5257 = vlaneseq
        %v5258 = vshrl.u32 %v5257, 7
        %v5259 = vsub.s32 %v5256, %v5258
        %v5260 = vrot.slane %v5246, %v5259
        %v5261 = vcombine.low %v2949, %v2974
        %v5263 = vunpack.c.l.s4 1966171168
        %v5264 = vunpack.c.0.s8 %v5263
        %v5265 = vlaneseq
        %v5266 = vshrl.u32 %v5265, 7
        %v5267 = vsub.s32 %v5264, %v5266
        %v5268 = vrot.slane %v5261, %v5267
        %v5270 = vunpack.c.l.s4 1966171168
        %v5271 = vunpack.c.0.s8 %v5270
        %v5272 = vlaneseq
        %v5273 = vshrl.u32 %v5272, 7
        %v5274 = vsub.s32 %v5271, %v5273
        %v5275 = vrot.slane %v2988, %v5274
        %v5276 = vcombine.low %v5268, %v5275
        %v5277 = vcombine.high %v5268, %v5275
        %v5279 = vunpack.c.l.s4 1966171168
        %v5280 = vunpack.c.0.s8 %v5279
        %v5281 = vlaneseq
        %v5282 = vshrl.u32 %v5281, 7
        %v5283 = vsub.s32 %v5280, %v5282
        %v5284 = vrot.slane %v5276, %v5283
        %v5286 = vunpack.c.l.s4 1966171168
        %v5287 = vunpack.c.0.s8 %v5286
        %v5288 = vlaneseq
        %v5289 = vshrl.u32 %v5288, 7
        %v5290 = vsub.s32 %v5287, %v5289
        %v5291 = vrot.slane %v5277, %v5290
        %v5292 = vcombine.low %v2996, %v2998
        %v5294 = vunpack.c.l.s4 1966171168
        %v5295 = vunpack.c.0.s8 %v5294
        %v5296 = vlaneseq
        %v5297 = vshrl.u32 %v5296, 7
        %v5298 = vsub.s32 %v5295, %v5297
        %v5299 = vrot.slane %v5292, %v5298
        %v5301 = vunpack.c.l.s4 1966171168
        %v5302 = vunpack.c.0.s8 %v5301
        %v5303 = vlaneseq
        %v5304 = vshrl.u32 %v5303, 7
        %v5305 = vsub.s32 %v5302, %v5304
        %v5306 = vrot.slane %v2981, %v5305
        %v5307 = vcombine.low %v5299, %v5306
        %v5308 = vcombine.high %v5299, %v5306
        %v5310 = vunpack.c.l.s4 1966171168
        %v5311 = vunpack.c.0.s8 %v5310
        %v5312 = vlaneseq
        %v5313 = vshrl.u32 %v5312, 7
        %v5314 = vsub.s32 %v5311, %v5313
        %v5315 = vrot.slane %v5307, %v5314
        %v5317 = vunpack.c.l.s4 1966171168
        %v5318 = vunpack.c.0.s8 %v5317
        %v5319 = vlaneseq
        %v5320 = vshrl.u32 %v5319, 7
        %v5321 = vsub.s32 %v5318, %v5320
        %v5322 = vrot.slane %v5308, %v5321
        %v5323 = vcombine.low %v2995, %v2997
        %v5325 = vunpack.c.l.s4 1966171168
        %v5326 = vunpack.c.0.s8 %v5325
        %v5327 = vlaneseq
        %v5328 = vshrl.u32 %v5327, 7
        %v5329 = vsub.s32 %v5326, %v5328
        %v5330 = vrot.slane %v5323, %v5329
        %v5332 = vunpack.c.l.s4 1966171168
        %v5333 = vunpack.c.0.s8 %v5332
        %v5334 = vlaneseq
        %v5335 = vshrl.u32 %v5334, 7
        %v5336 = vsub.s32 %v5333, %v5335
        %v5337 = vrot.slane %v2999, %v5336
        %v5338 = vcombine.low %v5330, %v5337
        %v5339 = vcombine.high %v5330, %v5337
        %v5341 = vunpack.c.l.s4 1966171168
        %v5342 = vunpack.c.0.s8 %v5341
        %v5343 = vlaneseq
        %v5344 = vshrl.u32 %v5343, 7
        %v5345 = vsub.s32 %v5342, %v5344
        %v5346 = vrot.slane %v5338, %v5345
        %v5348 = vunpack.c.l.s4 1966171168
        %v5349 = vunpack.c.0.s8 %v5348
        %v5350 = vlaneseq
        %v5351 = vshrl.u32 %v5350, 7
        %v5352 = vsub.s32 %v5349, %v5351
        %v5353 = vrot.slane %v5339, %v5352
        %v5354 = vcombine.low %v3024, %v3038
        %v5356 = vunpack.c.l.s4 1966171168
        %v5357 = vunpack.c.0.s8 %v5356
        %v5358 = vlaneseq
        %v5359 = vshrl.u32 %v5358, 7
        %v5360 = vsub.s32 %v5357, %v5359
        %v5361 = vrot.slane %v5354, %v5360
        %v5363 = vunpack.c.l.s4 1966171168
        %v5364 = vunpack.c.0.s8 %v5363
        %v5365 = vlaneseq
        %v5366 = vshrl.u32 %v5365, 7
        %v5367 = vsub.s32 %v5364, %v5366
        %v5368 = vrot.slane %v3046, %v5367
        %v5369 = vcombine.low %v5361, %v5368
        %v5370 = vcombine.high %v5361, %v5368
        %v5372 = vunpack.c.l.s4 1966171168
        %v5373 = vunpack.c.0.s8 %v5372
        %v5374 = vlaneseq
        %v5375 = vshrl.u32 %v5374, 7
        %v5376 = vsub.s32 %v5373, %v5375
        %v5377 = vrot.slane %v5369, %v5376
        %v5379 = vunpack.c.l.s4 1966171168
        %v5380 = vunpack.c.0.s8 %v5379
        %v5381 = vlaneseq
        %v5382 = vshrl.u32 %v5381, 7
        %v5383 = vsub.s32 %v5380, %v5382
        %v5384 = vrot.slane %v5370, %v5383
        %v5385 = vcombine.low %v3047, %v3031
        %v5387 = vunpack.c.l.s4 1966171168
        %v5388 = vunpack.c.0.s8 %v5387
        %v5389 = vlaneseq
        %v5390 = vshrl.u32 %v5389, 7
        %v5391 = vsub.s32 %v5388, %v5390
        %v5392 = vrot.slane %v5385, %v5391
        %v5394 = vunpack.c.l.s4 1966171168
        %v5395 = vunpack.c.0.s8 %v5394
        %v5396 = vlaneseq
        %v5397 = vshrl.u32 %v5396, 7
        %v5398 = vsub.s32 %v5395, %v5397
        %v5399 = vrot.slane %v3045, %v5398
        %v5400 = vcombine.low %v5392, %v5399
        %v5401 = vcombine.high %v5392, %v5399
        %v5403 = vunpack.c.l.s4 1966171168
        %v5404 = vunpack.c.0.s8 %v5403
        %v5405 = vlaneseq
        %v5406 = vshrl.u32 %v5405, 7
        %v5407 = vsub.s32 %v5404, %v5406
        %v5408 = vrot.slane %v5400, %v5407
        %v5410 = vunpack.c.l.s4 1966171168
        %v5411 = vunpack.c.0.s8 %v5410
        %v5412 = vlaneseq
        %v5413 = vshrl.u32 %v5412, 7
        %v5414 = vsub.s32 %v5411, %v5413
        %v5415 = vrot.slane %v5401, %v5414
        %v5416 = vcombine.low %v3072, %v3086
        %v5418 = vunpack.c.l.s4 1966171168
        %v5419 = vunpack.c.0.s8 %v5418
        %v5420 = vlaneseq
        %v5421 = vshrl.u32 %v5420, 7
        %v5422 = vsub.s32 %v5419, %v5421
        %v5423 = vrot.slane %v5416, %v5422
        %v5425 = vunpack.c.l.s4 1966171168
        %v5426 = vunpack.c.0.s8 %v5425
        %v5427 = vlaneseq
        %v5428 = vshrl.u32 %v5427, 7
        %v5429 = vsub.s32 %v5426, %v5428
        %v5430 = vrot.slane %v3094, %v5429
        %v5431 = vcombine.low %v5423, %v5430
        %v5432 = vcombine.high %v5423, %v5430
        %v5434 = vunpack.c.l.s4 1966171168
        %v5435 = vunpack.c.0.s8 %v5434
        %v5436 = vlaneseq
        %v5437 = vshrl.u32 %v5436, 7
        %v5438 = vsub.s32 %v5435, %v5437
        %v5439 = vrot.slane %v5431, %v5438
        %v5441 = vunpack.c.l.s4 1966171168
        %v5442 = vunpack.c.0.s8 %v5441
        %v5443 = vlaneseq
        %v5444 = vshrl.u32 %v5443, 7
        %v5445 = vsub.s32 %v5442, %v5444
        %v5446 = vrot.slane %v5432, %v5445
        %v5447 = vcombine.low %v3096, %v3079
        %v5449 = vunpack.c.l.s4 1966171168
        %v5450 = vunpack.c.0.s8 %v5449
        %v5451 = vlaneseq
        %v5452 = vshrl.u32 %v5451, 7
        %v5453 = vsub.s32 %v5450, %v5452
        %v5454 = vrot.slane %v5447, %v5453
        %v5456 = vunpack.c.l.s4 1966171168
        %v5457 = vunpack.c.0.s8 %v5456
        %v5458 = vlaneseq
        %v5459 = vshrl.u32 %v5458, 7
        %v5460 = vsub.s32 %v5457, %v5459
        %v5461 = vrot.slane %v3093, %v5460
        %v5462 = vcombine.low %v5454, %v5461
        %v5463 = vcombine.high %v5454, %v5461
        %v5465 = vunpack.c.l.s4 1966171168
        %v5466 = vunpack.c.0.s8 %v5465
        %v5467 = vlaneseq
        %v5468 = vshrl.u32 %v5467, 7
        %v5469 = vsub.s32 %v5466, %v5468
        %v5470 = vrot.slane %v5462, %v5469
        %v5472 = vunpack.c.l.s4 1966171168
        %v5473 = vunpack.c.0.s8 %v5472
        %v5474 = vlaneseq
        %v5475 = vshrl.u32 %v5474, 7
        %v5476 = vsub.s32 %v5473, %v5475
        %v5477 = vrot.slane %v5463, %v5476
        %v5478 = vcombine.low %v3095, %v3097
        %v5480 = vunpack.c.l.s4 1966171168
        %v5481 = vunpack.c.0.s8 %v5480
        %v5482 = vlaneseq
        %v5483 = vshrl.u32 %v5482, 7
        %v5484 = vsub.s32 %v5481, %v5483
        %v5485 = vrot.slane %v5478, %v5484
        %v5487 = vunpack.c.l.s4 1966171168
        %v5488 = vunpack.c.0.s8 %v5487
        %v5489 = vlaneseq
        %v5490 = vshrl.u32 %v5489, 7
        %v5491 = vsub.s32 %v5488, %v5490
        %v5492 = vrot.slane %v3122, %v5491
        %v5493 = vcombine.low %v5485, %v5492
        %v5494 = vcombine.high %v5485, %v5492
        %v5496 = vunpack.c.l.s4 1966171168
        %v5497 = vunpack.c.0.s8 %v5496
        %v5498 = vlaneseq
        %v5499 = vshrl.u32 %v5498, 7
        %v5500 = vsub.s32 %v5497, %v5499
        %v5501 = vrot.slane %v5493, %v5500
        %v5503 = vunpack.c.l.s4 1966171168
        %v5504 = vunpack.c.0.s8 %v5503
        %v5505 = vlaneseq
        %v5506 = vshrl.u32 %v5505, 7
        %v5507 = vsub.s32 %v5504, %v5506
        %v5508 = vrot.slane %v5494, %v5507
        %v5509 = vcombine.low %v3136, %v3144
        %v5511 = vunpack.c.l.s4 1966171168
        %v5512 = vunpack.c.0.s8 %v5511
        %v5513 = vlaneseq
        %v5514 = vshrl.u32 %v5513, 7
        %v5515 = vsub.s32 %v5512, %v5514
        %v5516 = vrot.slane %v5509, %v5515
        %v5518 = vunpack.c.l.s4 1966171168
        %v5519 = vunpack.c.0.s8 %v5518
        %v5520 = vlaneseq
        %v5521 = vshrl.u32 %v5520, 7
        %v5522 = vsub.s32 %v5519, %v5521
        %v5523 = vrot.slane %v3146, %v5522
        %v5524 = vcombine.low %v5516, %v5523
        %v5525 = vcombine.high %v5516, %v5523
        %v5527 = vunpack.c.l.s4 1966171168
        %v5528 = vunpack.c.0.s8 %v5527
        %v5529 = vlaneseq
        %v5530 = vshrl.u32 %v5529, 7
        %v5531 = vsub.s32 %v5528, %v5530
        %v5532 = vrot.slane %v5524, %v5531
        %v5534 = vunpack.c.l.s4 1966171168
        %v5535 = vunpack.c.0.s8 %v5534
        %v5536 = vlaneseq
        %v5537 = vshrl.u32 %v5536, 7
        %v5538 = vsub.s32 %v5535, %v5537
        %v5539 = vrot.slane %v5525, %v5538
        %v5540 = vcombine.low %v3129, %v3143
        %v5542 = vunpack.c.l.s4 1966171168
        %v5543 = vunpack.c.0.s8 %v5542
        %v5544 = vlaneseq
        %v5545 = vshrl.u32 %v5544, 7
        %v5546 = vsub.s32 %v5543, %v5545
        %v5547 = vrot.slane %v5540, %v5546
        %v5549 = vunpack.c.l.s4 1966171168
        %v5550 = vunpack.c.0.s8 %v5549
        %v5551 = vlaneseq
        %v5552 = vshrl.u32 %v5551, 7
        %v5553 = vsub.s32 %v5550, %v5552
        %v5554 = vrot.slane %v3145, %v5553
        %v5555 = vcombine.low %v5547, %v5554
        %v5556 = vcombine.high %v5547, %v5554
        %v5558 = vunpack.c.l.s4 1966171168
        %v5559 = vunpack.c.0.s8 %v5558
        %v5560 = vlaneseq
        %v5561 = vshrl.u32 %v5560, 7
        %v5562 = vsub.s32 %v5559, %v5561
        %v5563 = vrot.slane %v5555, %v5562
        %v5565 = vunpack.c.l.s4 1966171168
        %v5566 = vunpack.c.0.s8 %v5565
        %v5567 = vlaneseq
        %v5568 = vshrl.u32 %v5567, 7
        %v5569 = vsub.s32 %v5566, %v5568
        %v5570 = vrot.slane %v5556, %v5569
        %v5571 = vcombine.low %v3147, %v3172
        %v5573 = vunpack.c.l.s4 1966171168
        %v5574 = vunpack.c.0.s8 %v5573
        %v5575 = vlaneseq
        %v5576 = vshrl.u32 %v5575, 7
        %v5577 = vsub.s32 %v5574, %v5576
        %v5578 = vrot.slane %v5571, %v5577
        %v5580 = vunpack.c.l.s4 1966171168
        %v5581 = vunpack.c.0.s8 %v5580
        %v5582 = vlaneseq
        %v5583 = vshrl.u32 %v5582, 7
        %v5584 = vsub.s32 %v5581, %v5583
        %v5585 = vrot.slane %v3186, %v5584
        %v5586 = vcombine.low %v5578, %v5585
        %v5587 = vcombine.high %v5578, %v5585
        %v5589 = vunpack.c.l.s4 1966171168
        %v5590 = vunpack.c.0.s8 %v5589
        %v5591 = vlaneseq
        %v5592 = vshrl.u32 %v5591, 7
        %v5593 = vsub.s32 %v5590, %v5592
        %v5594 = vrot.slane %v5586, %v5593
        %v5596 = vunpack.c.l.s4 1966171168
        %v5597 = vunpack.c.0.s8 %v5596
        %v5598 = vlaneseq
        %v5599 = vshrl.u32 %v5598, 7
        %v5600 = vsub.s32 %v5597, %v5599
        %v5601 = vrot.slane %v5587, %v5600
        %v5602 = vcombine.low %v3194, %v3196
        %v5604 = vunpack.c.l.s4 1966171168
        %v5605 = vunpack.c.0.s8 %v5604
        %v5606 = vlaneseq
        %v5607 = vshrl.u32 %v5606, 7
        %v5608 = vsub.s32 %v5605, %v5607
        %v5609 = vrot.slane %v5602, %v5608
        %v5611 = vunpack.c.l.s4 1966171168
        %v5612 = vunpack.c.0.s8 %v5611
        %v5613 = vlaneseq
        %v5614 = vshrl.u32 %v5613, 7
        %v5615 = vsub.s32 %v5612, %v5614
        %v5616 = vrot.slane %v3179, %v5615
        %v5617 = vcombine.low %v5609, %v5616
        %v5618 = vcombine.high %v5609, %v5616
        %v5620 = vunpack.c.l.s4 1966171168
        %v5621 = vunpack.c.0.s8 %v5620
        %v5622 = vlaneseq
        %v5623 = vshrl.u32 %v5622, 7
        %v5624 = vsub.s32 %v5621, %v5623
        %v5625 = vrot.slane %v5617, %v5624
        %v5627 = vunpack.c.l.s4 1966171168
        %v5628 = vunpack.c.0.s8 %v5627
        %v5629 = vlaneseq
        %v5630 = vshrl.u32 %v5629, 7
        %v5631 = vsub.s32 %v5628, %v5630
        %v5632 = vrot.slane %v5618, %v5631
        %v5633 = vcombine.low %v3193, %v3195
        %v5635 = vunpack.c.l.s4 1966171168
        %v5636 = vunpack.c.0.s8 %v5635
        %v5637 = vlaneseq
        %v5638 = vshrl.u32 %v5637, 7
        %v5639 = vsub.s32 %v5636, %v5638
        %v5640 = vrot.slane %v5633, %v5639
        %v5642 = vunpack.c.l.s4 1966171168
        %v5643 = vunpack.c.0.s8 %v5642
        %v5644 = vlaneseq
        %v5645 = vshrl.u32 %v5644, 7
        %v5646 = vsub.s32 %v5643, %v5645
        %v5647 = vrot.slane %v3197, %v5646
        %v5648 = vcombine.low %v5640, %v5647
        %v5649 = vcombine.high %v5640, %v5647
        %v5651 = vunpack.c.l.s4 1966171168
        %v5652 = vunpack.c.0.s8 %v5651
        %v5653 = vlaneseq
        %v5654 = vshrl.u32 %v5653, 7
        %v5655 = vsub.s32 %v5652, %v5654
        %v5656 = vrot.slane %v5648, %v5655
        %v5658 = vunpack.c.l.s4 1966171168
        %v5659 = vunpack.c.0.s8 %v5658
        %v5660 = vlaneseq
        %v5661 = vshrl.u32 %v5660, 7
        %v5662 = vsub.s32 %v5659, %v5661
        %v5663 = vrot.slane %v5649, %v5662
        %v5664 = vcombine.low %v3222, %v3236
        %v5666 = vunpack.c.l.s4 1966171168
        %v5667 = vunpack.c.0.s8 %v5666
        %v5668 = vlaneseq
        %v5669 = vshrl.u32 %v5668, 7
        %v5670 = vsub.s32 %v5667, %v5669
        %v5671 = vrot.slane %v5664, %v5670
        %v5673 = vunpack.c.l.s4 1966171168
        %v5674 = vunpack.c.0.s8 %v5673
        %v5675 = vlaneseq
        %v5676 = vshrl.u32 %v5675, 7
        %v5677 = vsub.s32 %v5674, %v5676
        %v5678 = vrot.slane %v3244, %v5677
        %v5679 = vcombine.low %v5671, %v5678
        %v5680 = vcombine.high %v5671, %v5678
        %v5682 = vunpack.c.l.s4 1966171168
        %v5683 = vunpack.c.0.s8 %v5682
        %v5684 = vlaneseq
        %v5685 = vshrl.u32 %v5684, 7
        %v5686 = vsub.s32 %v5683, %v5685
        %v5687 = vrot.slane %v5679, %v5686
        %v5689 = vunpack.c.l.s4 1966171168
        %v5690 = vunpack.c.0.s8 %v5689
        %v5691 = vlaneseq
        %v5692 = vshrl.u32 %v5691, 7
        %v5693 = vsub.s32 %v5690, %v5692
        %v5694 = vrot.slane %v5680, %v5693
        %v5695 = vcombine.low %v3245, %v3229
        %v5697 = vunpack.c.l.s4 1966171168
        %v5698 = vunpack.c.0.s8 %v5697
        %v5699 = vlaneseq
        %v5700 = vshrl.u32 %v5699, 7
        %v5701 = vsub.s32 %v5698, %v5700
        %v5702 = vrot.slane %v5695, %v5701
        %v5704 = vunpack.c.l.s4 1966171168
        %v5705 = vunpack.c.0.s8 %v5704
        %v5706 = vlaneseq
        %v5707 = vshrl.u32 %v5706, 7
        %v5708 = vsub.s32 %v5705, %v5707
        %v5709 = vrot.slane %v3243, %v5708
        %v5710 = vcombine.low %v5702, %v5709
        %v5711 = vcombine.high %v5702, %v5709
        %v5713 = vunpack.c.l.s4 1966171168
        %v5714 = vunpack.c.0.s8 %v5713
        %v5715 = vlaneseq
        %v5716 = vshrl.u32 %v5715, 7
        %v5717 = vsub.s32 %v5714, %v5716
        %v5718 = vrot.slane %v5710, %v5717
        %v5720 = vunpack.c.l.s4 1966171168
        %v5721 = vunpack.c.0.s8 %v5720
        %v5722 = vlaneseq
        %v5723 = vshrl.u32 %v5722, 7
        %v5724 = vsub.s32 %v5721, %v5723
        %v5725 = vrot.slane %v5711, %v5724
        %vm5886 = vcmask 1042432
        %v5887 = vsel %vm5886, %v3269, -inf
        %v5888 = vrot.slane %v5887, 4
        %v5889 = vmax.f32 %v5887, %v5888
        %v5890 = vrot.slane %v5889, 2
        %v5891 = vmax.f32 %v5889, %v5890
        %v5892 = vrot.slane %v5891, 1
        %v5893 = vmax.f32 %v5891, %v5892
        %v5894 = vsel %vm5886, %v3276, -inf
        %v5895 = vrot.slane %v5894, 4
        %v5896 = vmax.f32 %v5894, %v5895
        %v5897 = vrot.slane %v5896, 2
        %v5898 = vmax.f32 %v5896, %v5897
        %v5899 = vrot.slane %v5898, 1
        %v5900 = vmax.f32 %v5898, %v5899
        %v5901 = vsel %vm5886, %v3300, -inf
        %v5902 = vrot.slane %v5901, 4
        %v5903 = vmax.f32 %v5901, %v5902
        %v5904 = vrot.slane %v5903, 2
        %v5905 = vmax.f32 %v5903, %v5904
        %v5906 = vrot.slane %v5905, 1
        %v5907 = vmax.f32 %v5905, %v5906
        %v5908 = vsel %vm5886, %v3307, -inf
        %v5909 = vrot.slane %v5908, 4
        %v5910 = vmax.f32 %v5908, %v5909
        %v5911 = vrot.slane %v5910, 2
        %v5912 = vmax.f32 %v5910, %v5911
        %v5913 = vrot.slane %v5912, 1
        %v5914 = vmax.f32 %v5912, %v5913
        %v5915 = vsel %vm5886, %v3331, -inf
        %v5916 = vrot.slane %v5915, 4
        %v5917 = vmax.f32 %v5915, %v5916
        %v5918 = vrot.slane %v5917, 2
        %v5919 = vmax.f32 %v5917, %v5918
        %v5920 = vrot.slane %v5919, 1
        %v5921 = vmax.f32 %v5919, %v5920
        %v5922 = vsel %vm5886, %v3338, -inf
        %v5923 = vrot.slane %v5922, 4
        %v5924 = vmax.f32 %v5922, %v5923
        %v5925 = vrot.slane %v5924, 2
        %v5926 = vmax.f32 %v5924, %v5925
        %v5927 = vrot.slane %v5926, 1
        %v5928 = vmax.f32 %v5926, %v5927
        %v5929 = vsel %vm5886, %v3362, -inf
        %v5930 = vrot.slane %v5929, 4
        %v5931 = vmax.f32 %v5929, %v5930
        %v5932 = vrot.slane %v5931, 2
        %v5933 = vmax.f32 %v5931, %v5932
        %v5934 = vrot.slane %v5933, 1
        %v5935 = vmax.f32 %v5933, %v5934
        %v5936 = vsel %vm5886, %v3369, -inf
        %v5937 = vrot.slane %v5936, 4
        %v5938 = vmax.f32 %v5936, %v5937
        %v5939 = vrot.slane %v5938, 2
        %v5940 = vmax.f32 %v5938, %v5939
        %v5941 = vrot.slane %v5940, 1
        %v5942 = vmax.f32 %v5940, %v5941
        %v5943 = vsel %vm5886, %v3393, -inf
        %v5944 = vrot.slane %v5943, 4
        %v5945 = vmax.f32 %v5943, %v5944
        %v5946 = vrot.slane %v5945, 2
        %v5947 = vmax.f32 %v5945, %v5946
        %v5948 = vrot.slane %v5947, 1
        %v5949 = vmax.f32 %v5947, %v5948
        %v5950 = vsel %vm5886, %v3400, -inf
        %v5951 = vrot.slane %v5950, 4
        %v5952 = vmax.f32 %v5950, %v5951
        %v5953 = vrot.slane %v5952, 2
        %v5954 = vmax.f32 %v5952, %v5953
        %v5955 = vrot.slane %v5954, 1
        %v5956 = vmax.f32 %v5954, %v5955
        %v5957 = vsel %vm5886, %v3424, -inf
        %v5958 = vrot.slane %v5957, 4
        %v5959 = vmax.f32 %v5957, %v5958
        %v5960 = vrot.slane %v5959, 2
        %v5961 = vmax.f32 %v5959, %v5960
        %v5962 = vrot.slane %v5961, 1
        %v5963 = vmax.f32 %v5961, %v5962
        %v5964 = vsel %vm5886, %v3431, -inf
        %v5965 = vrot.slane %v5964, 4
        %v5966 = vmax.f32 %v5964, %v5965
        %v5967 = vrot.slane %v5966, 2
        %v5968 = vmax.f32 %v5966, %v5967
        %v5969 = vrot.slane %v5968, 1
        %v5970 = vmax.f32 %v5968, %v5969
        %v5971 = vsel %vm5886, %v3455, -inf
        %v5972 = vrot.slane %v5971, 4
        %v5973 = vmax.f32 %v5971, %v5972
        %v5974 = vrot.slane %v5973, 2
        %v5975 = vmax.f32 %v5973, %v5974
        %v5976 = vrot.slane %v5975, 1
        %v5977 = vmax.f32 %v5975, %v5976
        %v5978 = vsel %vm5886, %v3462, -inf
        %v5979 = vrot.slane %v5978, 4
        %v5980 = vmax.f32 %v5978, %v5979
        %v5981 = vrot.slane %v5980, 2
        %v5982 = vmax.f32 %v5980, %v5981
        %v5983 = vrot.slane %v5982, 1
        %v5984 = vmax.f32 %v5982, %v5983
        %v5985 = vsel %vm5886, %v3486, -inf
        %v5986 = vrot.slane %v5985, 4
        %v5987 = vmax.f32 %v5985, %v5986
        %v5988 = vrot.slane %v5987, 2
        %v5989 = vmax.f32 %v5987, %v5988
        %v5990 = vrot.slane %v5989, 1
        %v5991 = vmax.f32 %v5989, %v5990
        %v5992 = vsel %vm5886, %v3493, -inf
        %v5993 = vrot.slane %v5992, 4
        %v5994 = vmax.f32 %v5992, %v5993
        %v5995 = vrot.slane %v5994, 2
        %v5996 = vmax.f32 %v5994, %v5995
        %v5997 = vrot.slane %v5996, 1
        %v5998 = vmax.f32 %v5996, %v5997
        %v5999 = vsel %vm5886, %v3517, -inf
        %v6000 = vrot.slane %v5999, 4
        %v6001 = vmax.f32 %v5999, %v6000
        %v6002 = vrot.slane %v6001, 2
        %v6003 = vmax.f32 %v6001, %v6002
        %v6004 = vrot.slane %v6003, 1
        %v6005 = vmax.f32 %v6003, %v6004
        %v6006 = vsel %vm5886, %v3524, -inf
        %v6007 = vrot.slane %v6006, 4
        %v6008 = vmax.f32 %v6006, %v6007
        %v6009 = vrot.slane %v6008, 2
        %v6010 = vmax.f32 %v6008, %v6009
        %v6011 = vrot.slane %v6010, 1
        %v6012 = vmax.f32 %v6010, %v6011
        %v6013 = vsel %vm5886, %v3548, -inf
        %v6014 = vrot.slane %v6013, 4
        %v6015 = vmax.f32 %v6013, %v6014
        %v6016 = vrot.slane %v6015, 2
        %v6017 = vmax.f32 %v6015, %v6016
        %v6018 = vrot.slane %v6017, 1
        %v6019 = vmax.f32 %v6017, %v6018
        %v6020 = vsel %vm5886, %v3555, -inf
        %v6021 = vrot.slane %v6020, 4
        %v6022 = vmax.f32 %v6020, %v6021
        %v6023 = vrot.slane %v6022, 2
        %v6024 = vmax.f32 %v6022, %v6023
        %v6025 = vrot.slane %v6024, 1
        %v6026 = vmax.f32 %v6024, %v6025
        %v6027 = vsel %vm5886, %v3579, -inf
        %v6028 = vrot.slane %v6027, 4
        %v6029 = vmax.f32 %v6027, %v6028
        %v6030 = vrot.slane %v6029, 2
        %v6031 = vmax.f32 %v6029, %v6030
        %v6032 = vrot.slane %v6031, 1
        %v6033 = vmax.f32 %v6031, %v6032
        %v6034 = vsel %vm5886, %v3586, -inf
        %v6035 = vrot.slane %v6034, 4
        %v6036 = vmax.f32 %v6034, %v6035
        %v6037 = vrot.slane %v6036, 2
        %v6038 = vmax.f32 %v6036, %v6037
        %v6039 = vrot.slane %v6038, 1
        %v6040 = vmax.f32 %v6038, %v6039
        %v6041 = vsel %vm5886, %v3610, -inf
        %v6042 = vrot.slane %v6041, 4
        %v6043 = vmax.f32 %v6041, %v6042
        %v6044 = vrot.slane %v6043, 2
        %v6045 = vmax.f32 %v6043, %v6044
        %v6046 = vrot.slane %v6045, 1
        %v6047 = vmax.f32 %v6045, %v6046
        %v6048 = vsel %vm5886, %v3617, -inf
        %v6049 = vrot.slane %v6048, 4
        %v6050 = vmax.f32 %v6048, %v6049
        %v6051 = vrot.slane %v6050, 2
        %v6052 = vmax.f32 %v6050, %v6051
        %v6053 = vrot.slane %v6052, 1
        %v6054 = vmax.f32 %v6052, %v6053
        %v6055 = vsel %vm5886, %v3641, -inf
        %v6056 = vrot.slane %v6055, 4
        %v6057 = vmax.f32 %v6055, %v6056
        %v6058 = vrot.slane %v6057, 2
        %v6059 = vmax.f32 %v6057, %v6058
        %v6060 = vrot.slane %v6059, 1
        %v6061 = vmax.f32 %v6059, %v6060
        %v6062 = vsel %vm5886, %v3648, -inf
        %v6063 = vrot.slane %v6062, 4
        %v6064 = vmax.f32 %v6062, %v6063
        %v6065 = vrot.slane %v6064, 2
        %v6066 = vmax.f32 %v6064, %v6065
        %v6067 = vrot.slane %v6066, 1
        %v6068 = vmax.f32 %v6066, %v6067
        %v6069 = vsel %vm5886, %v3672, -inf
        %v6070 = vrot.slane %v6069, 4
        %v6071 = vmax.f32 %v6069, %v6070
        %v6072 = vrot.slane %v6071, 2
        %v6073 = vmax.f32 %v6071, %v6072
        %v6074 = vrot.slane %v6073, 1
        %v6075 = vmax.f32 %v6073, %v6074
        %v6076 = vsel %vm5886, %v3679, -inf
        %v6077 = vrot.slane %v6076, 4
        %v6078 = vmax.f32 %v6076, %v6077
        %v6079 = vrot.slane %v6078, 2
        %v6080 = vmax.f32 %v6078, %v6079
        %v6081 = vrot.slane %v6080, 1
        %v6082 = vmax.f32 %v6080, %v6081
        %v6083 = vsel %vm5886, %v3703, -inf
        %v6084 = vrot.slane %v6083, 4
        %v6085 = vmax.f32 %v6083, %v6084
        %v6086 = vrot.slane %v6085, 2
        %v6087 = vmax.f32 %v6085, %v6086
        %v6088 = vrot.slane %v6087, 1
        %v6089 = vmax.f32 %v6087, %v6088
        %v6090 = vsel %vm5886, %v3710, -inf
        %v6091 = vrot.slane %v6090, 4
        %v6092 = vmax.f32 %v6090, %v6091
        %v6093 = vrot.slane %v6092, 2
        %v6094 = vmax.f32 %v6092, %v6093
        %v6095 = vrot.slane %v6094, 1
        %v6096 = vmax.f32 %v6094, %v6095
        %v6097 = vsel %vm5886, %v3734, -inf
        %v6098 = vrot.slane %v6097, 4
        %v6099 = vmax.f32 %v6097, %v6098
        %v6100 = vrot.slane %v6099, 2
        %v6101 = vmax.f32 %v6099, %v6100
        %v6102 = vrot.slane %v6101, 1
        %v6103 = vmax.f32 %v6101, %v6102
        %v6104 = vsel %vm5886, %v3741, -inf
        %v6105 = vrot.slane %v6104, 4
        %v6106 = vmax.f32 %v6104, %v6105
        %v6107 = vrot.slane %v6106, 2
        %v6108 = vmax.f32 %v6106, %v6107
        %v6109 = vrot.slane %v6108, 1
        %v6110 = vmax.f32 %v6108, %v6109
        %v6111 = vsel %vm5886, %v3765, -inf
        %v6112 = vrot.slane %v6111, 4
        %v6113 = vmax.f32 %v6111, %v6112
        %v6114 = vrot.slane %v6113, 2
        %v6115 = vmax.f32 %v6113, %v6114
        %v6116 = vrot.slane %v6115, 1
        %v6117 = vmax.f32 %v6115, %v6116
        %v6118 = vsel %vm5886, %v3772, -inf
        %v6119 = vrot.slane %v6118, 4
        %v6120 = vmax.f32 %v6118, %v6119
        %v6121 = vrot.slane %v6120, 2
        %v6122 = vmax.f32 %v6120, %v6121
        %v6123 = vrot.slane %v6122, 1
        %v6124 = vmax.f32 %v6122, %v6123
        %v6125 = vsel %vm5886, %v3796, -inf
        %v6126 = vrot.slane %v6125, 4
        %v6127 = vmax.f32 %v6125, %v6126
        %v6128 = vrot.slane %v6127, 2
        %v6129 = vmax.f32 %v6127, %v6128
        %v6130 = vrot.slane %v6129, 1
        %v6131 = vmax.f32 %v6129, %v6130
        %v6132 = vsel %vm5886, %v3803, -inf
        %v6133 = vrot.slane %v6132, 4
        %v6134 = vmax.f32 %v6132, %v6133
        %v6135 = vrot.slane %v6134, 2
        %v6136 = vmax.f32 %v6134, %v6135
        %v6137 = vrot.slane %v6136, 1
        %v6138 = vmax.f32 %v6136, %v6137
        %v6139 = vsel %vm5886, %v3827, -inf
        %v6140 = vrot.slane %v6139, 4
        %v6141 = vmax.f32 %v6139, %v6140
        %v6142 = vrot.slane %v6141, 2
        %v6143 = vmax.f32 %v6141, %v6142
        %v6144 = vrot.slane %v6143, 1
        %v6145 = vmax.f32 %v6143, %v6144
        %v6146 = vsel %vm5886, %v3834, -inf
        %v6147 = vrot.slane %v6146, 4
        %v6148 = vmax.f32 %v6146, %v6147
        %v6149 = vrot.slane %v6148, 2
        %v6150 = vmax.f32 %v6148, %v6149
        %v6151 = vrot.slane %v6150, 1
        %v6152 = vmax.f32 %v6150, %v6151
        %v6153 = vsel %vm5886, %v3858, -inf
        %v6154 = vrot.slane %v6153, 4
        %v6155 = vmax.f32 %v6153, %v6154
        %v6156 = vrot.slane %v6155, 2
        %v6157 = vmax.f32 %v6155, %v6156
        %v6158 = vrot.slane %v6157, 1
        %v6159 = vmax.f32 %v6157, %v6158
        %v6160 = vsel %vm5886, %v3865, -inf
        %v6161 = vrot.slane %v6160, 4
        %v6162 = vmax.f32 %v6160, %v6161
        %v6163 = vrot.slane %v6162, 2
        %v6164 = vmax.f32 %v6162, %v6163
        %v6165 = vrot.slane %v6164, 1
        %v6166 = vmax.f32 %v6164, %v6165
        %v6167 = vsel %vm5886, %v3889, -inf
        %v6168 = vrot.slane %v6167, 4
        %v6169 = vmax.f32 %v6167, %v6168
        %v6170 = vrot.slane %v6169, 2
        %v6171 = vmax.f32 %v6169, %v6170
        %v6172 = vrot.slane %v6171, 1
        %v6173 = vmax.f32 %v6171, %v6172
        %v6174 = vsel %vm5886, %v3896, -inf
        %v6175 = vrot.slane %v6174, 4
        %v6176 = vmax.f32 %v6174, %v6175
        %v6177 = vrot.slane %v6176, 2
        %v6178 = vmax.f32 %v6176, %v6177
        %v6179 = vrot.slane %v6178, 1
        %v6180 = vmax.f32 %v6178, %v6179
        %v6181 = vsel %vm5886, %v3920, -inf
        %v6182 = vrot.slane %v6181, 4
        %v6183 = vmax.f32 %v6181, %v6182
        %v6184 = vrot.slane %v6183, 2
        %v6185 = vmax.f32 %v6183, %v6184
        %v6186 = vrot.slane %v6185, 1
        %v6187 = vmax.f32 %v6185, %v6186
        %v6188 = vsel %vm5886, %v3927, -inf
        %v6189 = vrot.slane %v6188, 4
        %v6190 = vmax.f32 %v6188, %v6189
        %v6191 = vrot.slane %v6190, 2
        %v6192 = vmax.f32 %v6190, %v6191
        %v6193 = vrot.slane %v6192, 1
        %v6194 = vmax.f32 %v6192, %v6193
        %v6195 = vsel %vm5886, %v3951, -inf
        %v6196 = vrot.slane %v6195, 4
        %v6197 = vmax.f32 %v6195, %v6196
        %v6198 = vrot.slane %v6197, 2
        %v6199 = vmax.f32 %v6197, %v6198
        %v6200 = vrot.slane %v6199, 1
        %v6201 = vmax.f32 %v6199, %v6200
        %v6202 = vsel %vm5886, %v3958, -inf
        %v6203 = vrot.slane %v6202, 4
        %v6204 = vmax.f32 %v6202, %v6203
        %v6205 = vrot.slane %v6204, 2
        %v6206 = vmax.f32 %v6204, %v6205
        %v6207 = vrot.slane %v6206, 1
        %v6208 = vmax.f32 %v6206, %v6207
        %v6209 = vsel %vm5886, %v3982, -inf
        %v6210 = vrot.slane %v6209, 4
        %v6211 = vmax.f32 %v6209, %v6210
        %v6212 = vrot.slane %v6211, 2
        %v6213 = vmax.f32 %v6211, %v6212
        %v6214 = vrot.slane %v6213, 1
        %v6215 = vmax.f32 %v6213, %v6214
        %v6216 = vsel %vm5886, %v3989, -inf
        %v6217 = vrot.slane %v6216, 4
        %v6218 = vmax.f32 %v6216, %v6217
        %v6219 = vrot.slane %v6218, 2
        %v6220 = vmax.f32 %v6218, %v6219
        %v6221 = vrot.slane %v6220, 1
        %v6222 = vmax.f32 %v6220, %v6221
        %v6223 = vsel %vm5886, %v4013, -inf
        %v6224 = vrot.slane %v6223, 4
        %v6225 = vmax.f32 %v6223, %v6224
        %v6226 = vrot.slane %v6225, 2
        %v6227 = vmax.f32 %v6225, %v6226
        %v6228 = vrot.slane %v6227, 1
        %v6229 = vmax.f32 %v6227, %v6228
        %v6230 = vsel %vm5886, %v4020, -inf
        %v6231 = vrot.slane %v6230, 4
        %v6232 = vmax.f32 %v6230, %v6231
        %v6233 = vrot.slane %v6232, 2
        %v6234 = vmax.f32 %v6232, %v6233
        %v6235 = vrot.slane %v6234, 1
        %v6236 = vmax.f32 %v6234, %v6235
        %v6237 = vsel %vm5886, %v4044, -inf
        %v6238 = vrot.slane %v6237, 4
        %v6239 = vmax.f32 %v6237, %v6238
        %v6240 = vrot.slane %v6239, 2
        %v6241 = vmax.f32 %v6239, %v6240
        %v6242 = vrot.slane %v6241, 1
        %v6243 = vmax.f32 %v6241, %v6242
        %v6244 = vsel %vm5886, %v4051, -inf
        %v6245 = vrot.slane %v6244, 4
        %v6246 = vmax.f32 %v6244, %v6245
        %v6247 = vrot.slane %v6246, 2
        %v6248 = vmax.f32 %v6246, %v6247
        %v6249 = vrot.slane %v6248, 1
        %v6250 = vmax.f32 %v6248, %v6249
        %v6251 = vsel %vm5886, %v4075, -inf
        %v6252 = vrot.slane %v6251, 4
        %v6253 = vmax.f32 %v6251, %v6252
        %v6254 = vrot.slane %v6253, 2
        %v6255 = vmax.f32 %v6253, %v6254
        %v6256 = vrot.slane %v6255, 1
        %v6257 = vmax.f32 %v6255, %v6256
        %v6258 = vsel %vm5886, %v4082, -inf
        %v6259 = vrot.slane %v6258, 4
        %v6260 = vmax.f32 %v6258, %v6259
        %v6261 = vrot.slane %v6260, 2
        %v6262 = vmax.f32 %v6260, %v6261
        %v6263 = vrot.slane %v6262, 1
        %v6264 = vmax.f32 %v6262, %v6263
        %v6265 = vsel %vm5886, %v4106, -inf
        %v6266 = vrot.slane %v6265, 4
        %v6267 = vmax.f32 %v6265, %v6266
        %v6268 = vrot.slane %v6267, 2
        %v6269 = vmax.f32 %v6267, %v6268
        %v6270 = vrot.slane %v6269, 1
        %v6271 = vmax.f32 %v6269, %v6270
        %v6272 = vsel %vm5886, %v4113, -inf
        %v6273 = vrot.slane %v6272, 4
        %v6274 = vmax.f32 %v6272, %v6273
        %v6275 = vrot.slane %v6274, 2
        %v6276 = vmax.f32 %v6274, %v6275
        %v6277 = vrot.slane %v6276, 1
        %v6278 = vmax.f32 %v6276, %v6277
        %v6279 = vsel %vm5886, %v4137, -inf
        %v6280 = vrot.slane %v6279, 4
        %v6281 = vmax.f32 %v6279, %v6280
        %v6282 = vrot.slane %v6281, 2
        %v6283 = vmax.f32 %v6281, %v6282
        %v6284 = vrot.slane %v6283, 1
        %v6285 = vmax.f32 %v6283, %v6284
        %v6286 = vsel %vm5886, %v4144, -inf
        %v6287 = vrot.slane %v6286, 4
        %v6288 = vmax.f32 %v6286, %v6287
        %v6289 = vrot.slane %v6288, 2
        %v6290 = vmax.f32 %v6288, %v6289
        %v6291 = vrot.slane %v6290, 1
        %v6292 = vmax.f32 %v6290, %v6291
        %v6293 = vsel %vm5886, %v4168, -inf
        %v6294 = vrot.slane %v6293, 4
        %v6295 = vmax.f32 %v6293, %v6294
        %v6296 = vrot.slane %v6295, 2
        %v6297 = vmax.f32 %v6295, %v6296
        %v6298 = vrot.slane %v6297, 1
        %v6299 = vmax.f32 %v6297, %v6298
        %v6300 = vsel %vm5886, %v4175, -inf
        %v6301 = vrot.slane %v6300, 4
        %v6302 = vmax.f32 %v6300, %v6301
        %v6303 = vrot.slane %v6302, 2
        %v6304 = vmax.f32 %v6302, %v6303
        %v6305 = vrot.slane %v6304, 1
        %v6306 = vmax.f32 %v6304, %v6305
        %v6307 = vsel %vm5886, %v4199, -inf
        %v6308 = vrot.slane %v6307, 4
        %v6309 = vmax.f32 %v6307, %v6308
        %v6310 = vrot.slane %v6309, 2
        %v6311 = vmax.f32 %v6309, %v6310
        %v6312 = vrot.slane %v6311, 1
        %v6313 = vmax.f32 %v6311, %v6312
        %v6314 = vsel %vm5886, %v4206, -inf
        %v6315 = vrot.slane %v6314, 4
        %v6316 = vmax.f32 %v6314, %v6315
        %v6317 = vrot.slane %v6316, 2
        %v6318 = vmax.f32 %v6316, %v6317
        %v6319 = vrot.slane %v6318, 1
        %v6320 = vmax.f32 %v6318, %v6319
        %v6321 = vsel %vm5886, %v4230, -inf
        %v6322 = vrot.slane %v6321, 4
        %v6323 = vmax.f32 %v6321, %v6322
        %v6324 = vrot.slane %v6323, 2
        %v6325 = vmax.f32 %v6323, %v6324
        %v6326 = vrot.slane %v6325, 1
        %v6327 = vmax.f32 %v6325, %v6326
        %v6328 = vsel %vm5886, %v4237, -inf
        %v6329 = vrot.slane %v6328, 4
        %v6330 = vmax.f32 %v6328, %v6329
        %v6331 = vrot.slane %v6330, 2
        %v6332 = vmax.f32 %v6330, %v6331
        %v6333 = vrot.slane %v6332, 1
        %v6334 = vmax.f32 %v6332, %v6333
        %v6335 = vsel %vm5886, %v4261, -inf
        %v6336 = vrot.slane %v6335, 4
        %v6337 = vmax.f32 %v6335, %v6336
        %v6338 = vrot.slane %v6337, 2
        %v6339 = vmax.f32 %v6337, %v6338
        %v6340 = vrot.slane %v6339, 1
        %v6341 = vmax.f32 %v6339, %v6340
        %v6342 = vsel %vm5886, %v4268, -inf
        %v6343 = vrot.slane %v6342, 4
        %v6344 = vmax.f32 %v6342, %v6343
        %v6345 = vrot.slane %v6344, 2
        %v6346 = vmax.f32 %v6344, %v6345
        %v6347 = vrot.slane %v6346, 1
        %v6348 = vmax.f32 %v6346, %v6347
        %v6349 = vsel %vm5886, %v4292, -inf
        %v6350 = vrot.slane %v6349, 4
        %v6351 = vmax.f32 %v6349, %v6350
        %v6352 = vrot.slane %v6351, 2
        %v6353 = vmax.f32 %v6351, %v6352
        %v6354 = vrot.slane %v6353, 1
        %v6355 = vmax.f32 %v6353, %v6354
        %v6356 = vsel %vm5886, %v4299, -inf
        %v6357 = vrot.slane %v6356, 4
        %v6358 = vmax.f32 %v6356, %v6357
        %v6359 = vrot.slane %v6358, 2
        %v6360 = vmax.f32 %v6358, %v6359
        %v6361 = vrot.slane %v6360, 1
        %v6362 = vmax.f32 %v6360, %v6361
        %v6363 = vsel %vm5886, %v4323, -inf
        %v6364 = vrot.slane %v6363, 4
        %v6365 = vmax.f32 %v6363, %v6364
        %v6366 = vrot.slane %v6365, 2
        %v6367 = vmax.f32 %v6365, %v6366
        %v6368 = vrot.slane %v6367, 1
        %v6369 = vmax.f32 %v6367, %v6368
        %v6370 = vsel %vm5886, %v4330, -inf
        %v6371 = vrot.slane %v6370, 4
        %v6372 = vmax.f32 %v6370, %v6371
        %v6373 = vrot.slane %v6372, 2
        %v6374 = vmax.f32 %v6372, %v6373
        %v6375 = vrot.slane %v6374, 1
        %v6376 = vmax.f32 %v6374, %v6375
        %v6377 = vsel %vm5886, %v4354, -inf
        %v6378 = vrot.slane %v6377, 4
        %v6379 = vmax.f32 %v6377, %v6378
        %v6380 = vrot.slane %v6379, 2
        %v6381 = vmax.f32 %v6379, %v6380
        %v6382 = vrot.slane %v6381, 1
        %v6383 = vmax.f32 %v6381, %v6382
        %v6384 = vsel %vm5886, %v4361, -inf
        %v6385 = vrot.slane %v6384, 4
        %v6386 = vmax.f32 %v6384, %v6385
        %v6387 = vrot.slane %v6386, 2
        %v6388 = vmax.f32 %v6386, %v6387
        %v6389 = vrot.slane %v6388, 1
        %v6390 = vmax.f32 %v6388, %v6389
        %v6391 = vsel %vm5886, %v4385, -inf
        %v6392 = vrot.slane %v6391, 4
        %v6393 = vmax.f32 %v6391, %v6392
        %v6394 = vrot.slane %v6393, 2
        %v6395 = vmax.f32 %v6393, %v6394
        %v6396 = vrot.slane %v6395, 1
        %v6397 = vmax.f32 %v6395, %v6396
        %v6398 = vsel %vm5886, %v4392, -inf
        %v6399 = vrot.slane %v6398, 4
        %v6400 = vmax.f32 %v6398, %v6399
        %v6401 = vrot.slane %v6400, 2
        %v6402 = vmax.f32 %v6400, %v6401
        %v6403 = vrot.slane %v6402, 1
        %v6404 = vmax.f32 %v6402, %v6403
        %v6405 = vsel %vm5886, %v4416, -inf
        %v6406 = vrot.slane %v6405, 4
        %v6407 = vmax.f32 %v6405, %v6406
        %v6408 = vrot.slane %v6407, 2
        %v6409 = vmax.f32 %v6407, %v6408
        %v6410 = vrot.slane %v6409, 1
        %v6411 = vmax.f32 %v6409, %v6410
        %v6412 = vsel %vm5886, %v4423, -inf
        %v6413 = vrot.slane %v6412, 4
        %v6414 = vmax.f32 %v6412, %v6413
        %v6415 = vrot.slane %v6414, 2
        %v6416 = vmax.f32 %v6414, %v6415
        %v6417 = vrot.slane %v6416, 1
        %v6418 = vmax.f32 %v6416, %v6417
        %v6419 = vsel %vm5886, %v4447, -inf
        %v6420 = vrot.slane %v6419, 4
        %v6421 = vmax.f32 %v6419, %v6420
        %v6422 = vrot.slane %v6421, 2
        %v6423 = vmax.f32 %v6421, %v6422
        %v6424 = vrot.slane %v6423, 1
        %v6425 = vmax.f32 %v6423, %v6424
        %v6426 = vsel %vm5886, %v4454, -inf
        %v6427 = vrot.slane %v6426, 4
        %v6428 = vmax.f32 %v6426, %v6427
        %v6429 = vrot.slane %v6428, 2
        %v6430 = vmax.f32 %v6428, %v6429
        %v6431 = vrot.slane %v6430, 1
        %v6432 = vmax.f32 %v6430, %v6431
        %v6433 = vsel %vm5886, %v4478, -inf
        %v6434 = vrot.slane %v6433, 4
        %v6435 = vmax.f32 %v6433, %v6434
        %v6436 = vrot.slane %v6435, 2
        %v6437 = vmax.f32 %v6435, %v6436
        %v6438 = vrot.slane %v6437, 1
        %v6439 = vmax.f32 %v6437, %v6438
        %v6440 = vsel %vm5886, %v4485, -inf
        %v6441 = vrot.slane %v6440, 4
        %v6442 = vmax.f32 %v6440, %v6441
        %v6443 = vrot.slane %v6442, 2
        %v6444 = vmax.f32 %v6442, %v6443
        %v6445 = vrot.slane %v6444, 1
        %v6446 = vmax.f32 %v6444, %v6445
        %v6447 = vsel %vm5886, %v4509, -inf
        %v6448 = vrot.slane %v6447, 4
        %v6449 = vmax.f32 %v6447, %v6448
        %v6450 = vrot.slane %v6449, 2
        %v6451 = vmax.f32 %v6449, %v6450
        %v6452 = vrot.slane %v6451, 1
        %v6453 = vmax.f32 %v6451, %v6452
        %v6454 = vsel %vm5886, %v4516, -inf
        %v6455 = vrot.slane %v6454, 4
        %v6456 = vmax.f32 %v6454, %v6455
        %v6457 = vrot.slane %v6456, 2
        %v6458 = vmax.f32 %v6456, %v6457
        %v6459 = vrot.slane %v6458, 1
        %v6460 = vmax.f32 %v6458, %v6459
        %v6461 = vsel %vm5886, %v4540, -inf
        %v6462 = vrot.slane %v6461, 4
        %v6463 = vmax.f32 %v6461, %v6462
        %v6464 = vrot.slane %v6463, 2
        %v6465 = vmax.f32 %v6463, %v6464
        %v6466 = vrot.slane %v6465, 1
        %v6467 = vmax.f32 %v6465, %v6466
        %v6468 = vsel %vm5886, %v4547, -inf
        %v6469 = vrot.slane %v6468, 4
        %v6470 = vmax.f32 %v6468, %v6469
        %v6471 = vrot.slane %v6470, 2
        %v6472 = vmax.f32 %v6470, %v6471
        %v6473 = vrot.slane %v6472, 1
        %v6474 = vmax.f32 %v6472, %v6473
        %v6475 = vsel %vm5886, %v4571, -inf
        %v6476 = vrot.slane %v6475, 4
        %v6477 = vmax.f32 %v6475, %v6476
        %v6478 = vrot.slane %v6477, 2
        %v6479 = vmax.f32 %v6477, %v6478
        %v6480 = vrot.slane %v6479, 1
        %v6481 = vmax.f32 %v6479, %v6480
        %v6482 = vsel %vm5886, %v4578, -inf
        %v6483 = vrot.slane %v6482, 4
        %v6484 = vmax.f32 %v6482, %v6483
        %v6485 = vrot.slane %v6484, 2
        %v6486 = vmax.f32 %v6484, %v6485
        %v6487 = vrot.slane %v6486, 1
        %v6488 = vmax.f32 %v6486, %v6487
        %v6489 = vsel %vm5886, %v4602, -inf
        %v6490 = vrot.slane %v6489, 4
        %v6491 = vmax.f32 %v6489, %v6490
        %v6492 = vrot.slane %v6491, 2
        %v6493 = vmax.f32 %v6491, %v6492
        %v6494 = vrot.slane %v6493, 1
        %v6495 = vmax.f32 %v6493, %v6494
        %v6496 = vsel %vm5886, %v4609, -inf
        %v6497 = vrot.slane %v6496, 4
        %v6498 = vmax.f32 %v6496, %v6497
        %v6499 = vrot.slane %v6498, 2
        %v6500 = vmax.f32 %v6498, %v6499
        %v6501 = vrot.slane %v6500, 1
        %v6502 = vmax.f32 %v6500, %v6501
        %v6503 = vsel %vm5886, %v4633, -inf
        %v6504 = vrot.slane %v6503, 4
        %v6505 = vmax.f32 %v6503, %v6504
        %v6506 = vrot.slane %v6505, 2
        %v6507 = vmax.f32 %v6505, %v6506
        %v6508 = vrot.slane %v6507, 1
        %v6509 = vmax.f32 %v6507, %v6508
        %v6510 = vsel %vm5886, %v4640, -inf
        %v6511 = vrot.slane %v6510, 4
        %v6512 = vmax.f32 %v6510, %v6511
        %v6513 = vrot.slane %v6512, 2
        %v6514 = vmax.f32 %v6512, %v6513
        %v6515 = vrot.slane %v6514, 1
        %v6516 = vmax.f32 %v6514, %v6515
        %v6517 = vsel %vm5886, %v4664, -inf
        %v6518 = vrot.slane %v6517, 4
        %v6519 = vmax.f32 %v6517, %v6518
        %v6520 = vrot.slane %v6519, 2
        %v6521 = vmax.f32 %v6519, %v6520
        %v6522 = vrot.slane %v6521, 1
        %v6523 = vmax.f32 %v6521, %v6522
        %v6524 = vsel %vm5886, %v4671, -inf
        %v6525 = vrot.slane %v6524, 4
        %v6526 = vmax.f32 %v6524, %v6525
        %v6527 = vrot.slane %v6526, 2
        %v6528 = vmax.f32 %v6526, %v6527
        %v6529 = vrot.slane %v6528, 1
        %v6530 = vmax.f32 %v6528, %v6529
        %v6531 = vsel %vm5886, %v4695, -inf
        %v6532 = vrot.slane %v6531, 4
        %v6533 = vmax.f32 %v6531, %v6532
        %v6534 = vrot.slane %v6533, 2
        %v6535 = vmax.f32 %v6533, %v6534
        %v6536 = vrot.slane %v6535, 1
        %v6537 = vmax.f32 %v6535, %v6536
        %v6538 = vsel %vm5886, %v4702, -inf
        %v6539 = vrot.slane %v6538, 4
        %v6540 = vmax.f32 %v6538, %v6539
        %v6541 = vrot.slane %v6540, 2
        %v6542 = vmax.f32 %v6540, %v6541
        %v6543 = vrot.slane %v6542, 1
        %v6544 = vmax.f32 %v6542, %v6543
        %v6545 = vsel %vm5886, %v4726, -inf
        %v6546 = vrot.slane %v6545, 4
        %v6547 = vmax.f32 %v6545, %v6546
        %v6548 = vrot.slane %v6547, 2
        %v6549 = vmax.f32 %v6547, %v6548
        %v6550 = vrot.slane %v6549, 1
        %v6551 = vmax.f32 %v6549, %v6550
        %v6552 = vsel %vm5886, %v4733, -inf
        %v6553 = vrot.slane %v6552, 4
        %v6554 = vmax.f32 %v6552, %v6553
        %v6555 = vrot.slane %v6554, 2
        %v6556 = vmax.f32 %v6554, %v6555
        %v6557 = vrot.slane %v6556, 1
        %v6558 = vmax.f32 %v6556, %v6557
        %v6559 = vsel %vm5886, %v4757, -inf
        %v6560 = vrot.slane %v6559, 4
        %v6561 = vmax.f32 %v6559, %v6560
        %v6562 = vrot.slane %v6561, 2
        %v6563 = vmax.f32 %v6561, %v6562
        %v6564 = vrot.slane %v6563, 1
        %v6565 = vmax.f32 %v6563, %v6564
        %v6566 = vsel %vm5886, %v4764, -inf
        %v6567 = vrot.slane %v6566, 4
        %v6568 = vmax.f32 %v6566, %v6567
        %v6569 = vrot.slane %v6568, 2
        %v6570 = vmax.f32 %v6568, %v6569
        %v6571 = vrot.slane %v6570, 1
        %v6572 = vmax.f32 %v6570, %v6571
        %v6573 = vsel %vm5886, %v4788, -inf
        %v6574 = vrot.slane %v6573, 4
        %v6575 = vmax.f32 %v6573, %v6574
        %v6576 = vrot.slane %v6575, 2
        %v6577 = vmax.f32 %v6575, %v6576
        %v6578 = vrot.slane %v6577, 1
        %v6579 = vmax.f32 %v6577, %v6578
        %v6580 = vsel %vm5886, %v4795, -inf
        %v6581 = vrot.slane %v6580, 4
        %v6582 = vmax.f32 %v6580, %v6581
        %v6583 = vrot.slane %v6582, 2
        %v6584 = vmax.f32 %v6582, %v6583
        %v6585 = vrot.slane %v6584, 1
        %v6586 = vmax.f32 %v6584, %v6585
        %v6587 = vsel %vm5886, %v4819, -inf
        %v6588 = vrot.slane %v6587, 4
        %v6589 = vmax.f32 %v6587, %v6588
        %v6590 = vrot.slane %v6589, 2
        %v6591 = vmax.f32 %v6589, %v6590
        %v6592 = vrot.slane %v6591, 1
        %v6593 = vmax.f32 %v6591, %v6592
        %v6594 = vsel %vm5886, %v4826, -inf
        %v6595 = vrot.slane %v6594, 4
        %v6596 = vmax.f32 %v6594, %v6595
        %v6597 = vrot.slane %v6596, 2
        %v6598 = vmax.f32 %v6596, %v6597
        %v6599 = vrot.slane %v6598, 1
        %v6600 = vmax.f32 %v6598, %v6599
        %v6601 = vsel %vm5886, %v4850, -inf
        %v6602 = vrot.slane %v6601, 4
        %v6603 = vmax.f32 %v6601, %v6602
        %v6604 = vrot.slane %v6603, 2
        %v6605 = vmax.f32 %v6603, %v6604
        %v6606 = vrot.slane %v6605, 1
        %v6607 = vmax.f32 %v6605, %v6606
        %v6608 = vsel %vm5886, %v4857, -inf
        %v6609 = vrot.slane %v6608, 4
        %v6610 = vmax.f32 %v6608, %v6609
        %v6611 = vrot.slane %v6610, 2
        %v6612 = vmax.f32 %v6610, %v6611
        %v6613 = vrot.slane %v6612, 1
        %v6614 = vmax.f32 %v6612, %v6613
        %v6615 = vsel %vm5886, %v4881, -inf
        %v6616 = vrot.slane %v6615, 4
        %v6617 = vmax.f32 %v6615, %v6616
        %v6618 = vrot.slane %v6617, 2
        %v6619 = vmax.f32 %v6617, %v6618
        %v6620 = vrot.slane %v6619, 1
        %v6621 = vmax.f32 %v6619, %v6620
        %v6622 = vsel %vm5886, %v4888, -inf
        %v6623 = vrot.slane %v6622, 4
        %v6624 = vmax.f32 %v6622, %v6623
        %v6625 = vrot.slane %v6624, 2
        %v6626 = vmax.f32 %v6624, %v6625
        %v6627 = vrot.slane %v6626, 1
        %v6628 = vmax.f32 %v6626, %v6627
        %v6629 = vsel %vm5886, %v4912, -inf
        %v6630 = vrot.slane %v6629, 4
        %v6631 = vmax.f32 %v6629, %v6630
        %v6632 = vrot.slane %v6631, 2
        %v6633 = vmax.f32 %v6631, %v6632
        %v6634 = vrot.slane %v6633, 1
        %v6635 = vmax.f32 %v6633, %v6634
        %v6636 = vsel %vm5886, %v4919, -inf
        %v6637 = vrot.slane %v6636, 4
        %v6638 = vmax.f32 %v6636, %v6637
        %v6639 = vrot.slane %v6638, 2
        %v6640 = vmax.f32 %v6638, %v6639
        %v6641 = vrot.slane %v6640, 1
        %v6642 = vmax.f32 %v6640, %v6641
        %v6643 = vsel %vm5886, %v4943, -inf
        %v6644 = vrot.slane %v6643, 4
        %v6645 = vmax.f32 %v6643, %v6644
        %v6646 = vrot.slane %v6645, 2
        %v6647 = vmax.f32 %v6645, %v6646
        %v6648 = vrot.slane %v6647, 1
        %v6649 = vmax.f32 %v6647, %v6648
        %v6650 = vsel %vm5886, %v4950, -inf
        %v6651 = vrot.slane %v6650, 4
        %v6652 = vmax.f32 %v6650, %v6651
        %v6653 = vrot.slane %v6652, 2
        %v6654 = vmax.f32 %v6652, %v6653
        %v6655 = vrot.slane %v6654, 1
        %v6656 = vmax.f32 %v6654, %v6655
        %v6657 = vsel %vm5886, %v4974, -inf
        %v6658 = vrot.slane %v6657, 4
        %v6659 = vmax.f32 %v6657, %v6658
        %v6660 = vrot.slane %v6659, 2
        %v6661 = vmax.f32 %v6659, %v6660
        %v6662 = vrot.slane %v6661, 1
        %v6663 = vmax.f32 %v6661, %v6662
        %v6664 = vsel %vm5886, %v4981, -inf
        %v6665 = vrot.slane %v6664, 4
        %v6666 = vmax.f32 %v6664, %v6665
        %v6667 = vrot.slane %v6666, 2
        %v6668 = vmax.f32 %v6666, %v6667
        %v6669 = vrot.slane %v6668, 1
        %v6670 = vmax.f32 %v6668, %v6669
        %v6671 = vsel %vm5886, %v5005, -inf
        %v6672 = vrot.slane %v6671, 4
        %v6673 = vmax.f32 %v6671, %v6672
        %v6674 = vrot.slane %v6673, 2
        %v6675 = vmax.f32 %v6673, %v6674
        %v6676 = vrot.slane %v6675, 1
        %v6677 = vmax.f32 %v6675, %v6676
        %v6678 = vsel %vm5886, %v5012, -inf
        %v6679 = vrot.slane %v6678, 4
        %v6680 = vmax.f32 %v6678, %v6679
        %v6681 = vrot.slane %v6680, 2
        %v6682 = vmax.f32 %v6680, %v6681
        %v6683 = vrot.slane %v6682, 1
        %v6684 = vmax.f32 %v6682, %v6683
        %v6685 = vsel %vm5886, %v5036, -inf
        %v6686 = vrot.slane %v6685, 4
        %v6687 = vmax.f32 %v6685, %v6686
        %v6688 = vrot.slane %v6687, 2
        %v6689 = vmax.f32 %v6687, %v6688
        %v6690 = vrot.slane %v6689, 1
        %v6691 = vmax.f32 %v6689, %v6690
        %v6692 = vsel %vm5886, %v5043, -inf
        %v6693 = vrot.slane %v6692, 4
        %v6694 = vmax.f32 %v6692, %v6693
        %v6695 = vrot.slane %v6694, 2
        %v6696 = vmax.f32 %v6694, %v6695
        %v6697 = vrot.slane %v6696, 1
        %v6698 = vmax.f32 %v6696, %v6697
        %v6699 = vsel %vm5886, %v5067, -inf
        %v6700 = vrot.slane %v6699, 4
        %v6701 = vmax.f32 %v6699, %v6700
        %v6702 = vrot.slane %v6701, 2
        %v6703 = vmax.f32 %v6701, %v6702
        %v6704 = vrot.slane %v6703, 1
        %v6705 = vmax.f32 %v6703, %v6704
        %v6706 = vsel %vm5886, %v5074, -inf
        %v6707 = vrot.slane %v6706, 4
        %v6708 = vmax.f32 %v6706, %v6707
        %v6709 = vrot.slane %v6708, 2
        %v6710 = vmax.f32 %v6708, %v6709
        %v6711 = vrot.slane %v6710, 1
        %v6712 = vmax.f32 %v6710, %v6711
        %v6713 = vsel %vm5886, %v5098, -inf
        %v6714 = vrot.slane %v6713, 4
        %v6715 = vmax.f32 %v6713, %v6714
        %v6716 = vrot.slane %v6715, 2
        %v6717 = vmax.f32 %v6715, %v6716
        %v6718 = vrot.slane %v6717, 1
        %v6719 = vmax.f32 %v6717, %v6718
        %v6720 = vsel %vm5886, %v5105, -inf
        %v6721 = vrot.slane %v6720, 4
        %v6722 = vmax.f32 %v6720, %v6721
        %v6723 = vrot.slane %v6722, 2
        %v6724 = vmax.f32 %v6722, %v6723
        %v6725 = vrot.slane %v6724, 1
        %v6726 = vmax.f32 %v6724, %v6725
        %v6727 = vsel %vm5886, %v5129, -inf
        %v6728 = vrot.slane %v6727, 4
        %v6729 = vmax.f32 %v6727, %v6728
        %v6730 = vrot.slane %v6729, 2
        %v6731 = vmax.f32 %v6729, %v6730
        %v6732 = vrot.slane %v6731, 1
        %v6733 = vmax.f32 %v6731, %v6732
        %v6734 = vsel %vm5886, %v5136, -inf
        %v6735 = vrot.slane %v6734, 4
        %v6736 = vmax.f32 %v6734, %v6735
        %v6737 = vrot.slane %v6736, 2
        %v6738 = vmax.f32 %v6736, %v6737
        %v6739 = vrot.slane %v6738, 1
        %v6740 = vmax.f32 %v6738, %v6739
        %v6741 = vsel %vm5886, %v5160, -inf
        %v6742 = vrot.slane %v6741, 4
        %v6743 = vmax.f32 %v6741, %v6742
        %v6744 = vrot.slane %v6743, 2
        %v6745 = vmax.f32 %v6743, %v6744
        %v6746 = vrot.slane %v6745, 1
        %v6747 = vmax.f32 %v6745, %v6746
        %v6748 = vsel %vm5886, %v5167, -inf
        %v6749 = vrot.slane %v6748, 4
        %v6750 = vmax.f32 %v6748, %v6749
        %v6751 = vrot.slane %v6750, 2
        %v6752 = vmax.f32 %v6750, %v6751
        %v6753 = vrot.slane %v6752, 1
        %v6754 = vmax.f32 %v6752, %v6753
        %v6755 = vsel %vm5886, %v5191, -inf
        %v6756 = vrot.slane %v6755, 4
        %v6757 = vmax.f32 %v6755, %v6756
        %v6758 = vrot.slane %v6757, 2
        %v6759 = vmax.f32 %v6757, %v6758
        %v6760 = vrot.slane %v6759, 1
        %v6761 = vmax.f32 %v6759, %v6760
        %v6762 = vsel %vm5886, %v5198, -inf
        %v6763 = vrot.slane %v6762, 4
        %v6764 = vmax.f32 %v6762, %v6763
        %v6765 = vrot.slane %v6764, 2
        %v6766 = vmax.f32 %v6764, %v6765
        %v6767 = vrot.slane %v6766, 1
        %v6768 = vmax.f32 %v6766, %v6767
        %v6769 = vsel %vm5886, %v5222, -inf
        %v6770 = vrot.slane %v6769, 4
        %v6771 = vmax.f32 %v6769, %v6770
        %v6772 = vrot.slane %v6771, 2
        %v6773 = vmax.f32 %v6771, %v6772
        %v6774 = vrot.slane %v6773, 1
        %v6775 = vmax.f32 %v6773, %v6774
        %v6776 = vsel %vm5886, %v5229, -inf
        %v6777 = vrot.slane %v6776, 4
        %v6778 = vmax.f32 %v6776, %v6777
        %v6779 = vrot.slane %v6778, 2
        %v6780 = vmax.f32 %v6778, %v6779
        %v6781 = vrot.slane %v6780, 1
        %v6782 = vmax.f32 %v6780, %v6781
        %v6783 = vsel %vm5886, %v5253, -inf
        %v6784 = vrot.slane %v6783, 4
        %v6785 = vmax.f32 %v6783, %v6784
        %v6786 = vrot.slane %v6785, 2
        %v6787 = vmax.f32 %v6785, %v6786
        %v6788 = vrot.slane %v6787, 1
        %v6789 = vmax.f32 %v6787, %v6788
        %v6790 = vsel %vm5886, %v5260, -inf
        %v6791 = vrot.slane %v6790, 4
        %v6792 = vmax.f32 %v6790, %v6791
        %v6793 = vrot.slane %v6792, 2
        %v6794 = vmax.f32 %v6792, %v6793
        %v6795 = vrot.slane %v6794, 1
        %v6796 = vmax.f32 %v6794, %v6795
        %v6797 = vsel %vm5886, %v5284, -inf
        %v6798 = vrot.slane %v6797, 4
        %v6799 = vmax.f32 %v6797, %v6798
        %v6800 = vrot.slane %v6799, 2
        %v6801 = vmax.f32 %v6799, %v6800
        %v6802 = vrot.slane %v6801, 1
        %v6803 = vmax.f32 %v6801, %v6802
        %v6804 = vsel %vm5886, %v5291, -inf
        %v6805 = vrot.slane %v6804, 4
        %v6806 = vmax.f32 %v6804, %v6805
        %v6807 = vrot.slane %v6806, 2
        %v6808 = vmax.f32 %v6806, %v6807
        %v6809 = vrot.slane %v6808, 1
        %v6810 = vmax.f32 %v6808, %v6809
        %v6811 = vsel %vm5886, %v5315, -inf
        %v6812 = vrot.slane %v6811, 4
        %v6813 = vmax.f32 %v6811, %v6812
        %v6814 = vrot.slane %v6813, 2
        %v6815 = vmax.f32 %v6813, %v6814
        %v6816 = vrot.slane %v6815, 1
        %v6817 = vmax.f32 %v6815, %v6816
        %v6818 = vsel %vm5886, %v5322, -inf
        %v6819 = vrot.slane %v6818, 4
        %v6820 = vmax.f32 %v6818, %v6819
        %v6821 = vrot.slane %v6820, 2
        %v6822 = vmax.f32 %v6820, %v6821
        %v6823 = vrot.slane %v6822, 1
        %v6824 = vmax.f32 %v6822, %v6823
        %v6825 = vsel %vm5886, %v5346, -inf
        %v6826 = vrot.slane %v6825, 4
        %v6827 = vmax.f32 %v6825, %v6826
        %v6828 = vrot.slane %v6827, 2
        %v6829 = vmax.f32 %v6827, %v6828
        %v6830 = vrot.slane %v6829, 1
        %v6831 = vmax.f32 %v6829, %v6830
        %v6832 = vsel %vm5886, %v5353, -inf
        %v6833 = vrot.slane %v6832, 4
        %v6834 = vmax.f32 %v6832, %v6833
        %v6835 = vrot.slane %v6834, 2
        %v6836 = vmax.f32 %v6834, %v6835
        %v6837 = vrot.slane %v6836, 1
        %v6838 = vmax.f32 %v6836, %v6837
        %v6839 = vsel %vm5886, %v5377, -inf
        %v6840 = vrot.slane %v6839, 4
        %v6841 = vmax.f32 %v6839, %v6840
        %v6842 = vrot.slane %v6841, 2
        %v6843 = vmax.f32 %v6841, %v6842
        %v6844 = vrot.slane %v6843, 1
        %v6845 = vmax.f32 %v6843, %v6844
        %v6846 = vsel %vm5886, %v5384, -inf
        %v6847 = vrot.slane %v6846, 4
        %v6848 = vmax.f32 %v6846, %v6847
        %v6849 = vrot.slane %v6848, 2
        %v6850 = vmax.f32 %v6848, %v6849
        %v6851 = vrot.slane %v6850, 1
        %v6852 = vmax.f32 %v6850, %v6851
        %v6853 = vsel %vm5886, %v5408, -inf
        %v6854 = vrot.slane %v6853, 4
        %v6855 = vmax.f32 %v6853, %v6854
        %v6856 = vrot.slane %v6855, 2
        %v6857 = vmax.f32 %v6855, %v6856
        %v6858 = vrot.slane %v6857, 1
        %v6859 = vmax.f32 %v6857, %v6858
        %v6860 = vsel %vm5886, %v5415, -inf
        %v6861 = vrot.slane %v6860, 4
        %v6862 = vmax.f32 %v6860, %v6861
        %v6863 = vrot.slane %v6862, 2
        %v6864 = vmax.f32 %v6862, %v6863
        %v6865 = vrot.slane %v6864, 1
        %v6866 = vmax.f32 %v6864, %v6865
        %v6867 = vsel %vm5886, %v5439, -inf
        %v6868 = vrot.slane %v6867, 4
        %v6869 = vmax.f32 %v6867, %v6868
        %v6870 = vrot.slane %v6869, 2
        %v6871 = vmax.f32 %v6869, %v6870
        %v6872 = vrot.slane %v6871, 1
        %v6873 = vmax.f32 %v6871, %v6872
        %v6874 = vsel %vm5886, %v5446, -inf
        %v6875 = vrot.slane %v6874, 4
        %v6876 = vmax.f32 %v6874, %v6875
        %v6877 = vrot.slane %v6876, 2
        %v6878 = vmax.f32 %v6876, %v6877
        %v6879 = vrot.slane %v6878, 1
        %v6880 = vmax.f32 %v6878, %v6879
        %v6881 = vsel %vm5886, %v5470, -inf
        %v6882 = vrot.slane %v6881, 4
        %v6883 = vmax.f32 %v6881, %v6882
        %v6884 = vrot.slane %v6883, 2
        %v6885 = vmax.f32 %v6883, %v6884
        %v6886 = vrot.slane %v6885, 1
        %v6887 = vmax.f32 %v6885, %v6886
        %v6888 = vsel %vm5886, %v5477, -inf
        %v6889 = vrot.slane %v6888, 4
        %v6890 = vmax.f32 %v6888, %v6889
        %v6891 = vrot.slane %v6890, 2
        %v6892 = vmax.f32 %v6890, %v6891
        %v6893 = vrot.slane %v6892, 1
        %v6894 = vmax.f32 %v6892, %v6893
        %v6895 = vsel %vm5886, %v5501, -inf
        %v6896 = vrot.slane %v6895, 4
        %v6897 = vmax.f32 %v6895, %v6896
        %v6898 = vrot.slane %v6897, 2
        %v6899 = vmax.f32 %v6897, %v6898
        %v6900 = vrot.slane %v6899, 1
        %v6901 = vmax.f32 %v6899, %v6900
        %v6902 = vsel %vm5886, %v5508, -inf
        %v6903 = vrot.slane %v6902, 4
        %v6904 = vmax.f32 %v6902, %v6903
        %v6905 = vrot.slane %v6904, 2
        %v6906 = vmax.f32 %v6904, %v6905
        %v6907 = vrot.slane %v6906, 1
        %v6908 = vmax.f32 %v6906, %v6907
        %v6909 = vsel %vm5886, %v5532, -inf
        %v6910 = vrot.slane %v6909, 4
        %v6911 = vmax.f32 %v6909, %v6910
        %v6912 = vrot.slane %v6911, 2
        %v6913 = vmax.f32 %v6911, %v6912
        %v6914 = vrot.slane %v6913, 1
        %v6915 = vmax.f32 %v6913, %v6914
        %v6916 = vsel %vm5886, %v5539, -inf
        %v6917 = vrot.slane %v6916, 4
        %v6918 = vmax.f32 %v6916, %v6917
        %v6919 = vrot.slane %v6918, 2
        %v6920 = vmax.f32 %v6918, %v6919
        %v6921 = vrot.slane %v6920, 1
        %v6922 = vmax.f32 %v6920, %v6921
        %v6923 = vsel %vm5886, %v5563, -inf
        %v6924 = vrot.slane %v6923, 4
        %v6925 = vmax.f32 %v6923, %v6924
        %v6926 = vrot.slane %v6925, 2
        %v6927 = vmax.f32 %v6925, %v6926
        %v6928 = vrot.slane %v6927, 1
        %v6929 = vmax.f32 %v6927, %v6928
        %v6930 = vsel %vm5886, %v5570, -inf
        %v6931 = vrot.slane %v6930, 4
        %v6932 = vmax.f32 %v6930, %v6931
        %v6933 = vrot.slane %v6932, 2
        %v6934 = vmax.f32 %v6932, %v6933
        %v6935 = vrot.slane %v6934, 1
        %v6936 = vmax.f32 %v6934, %v6935
        %v6937 = vsel %vm5886, %v5594, -inf
        %v6938 = vrot.slane %v6937, 4
        %v6939 = vmax.f32 %v6937, %v6938
        %v6940 = vrot.slane %v6939, 2
        %v6941 = vmax.f32 %v6939, %v6940
        %v6942 = vrot.slane %v6941, 1
        %v6943 = vmax.f32 %v6941, %v6942
        %v6944 = vsel %vm5886, %v5601, -inf
        %v6945 = vrot.slane %v6944, 4
        %v6946 = vmax.f32 %v6944, %v6945
        %v6947 = vrot.slane %v6946, 2
        %v6948 = vmax.f32 %v6946, %v6947
        %v6949 = vrot.slane %v6948, 1
        %v6950 = vmax.f32 %v6948, %v6949
        %v6951 = vsel %vm5886, %v5625, -inf
        %v6952 = vrot.slane %v6951, 4
        %v6953 = vmax.f32 %v6951, %v6952
        %v6954 = vrot.slane %v6953, 2
        %v6955 = vmax.f32 %v6953, %v6954
        %v6956 = vrot.slane %v6955, 1
        %v6957 = vmax.f32 %v6955, %v6956
        %v6958 = vsel %vm5886, %v5632, -inf
        %v6959 = vrot.slane %v6958, 4
        %v6960 = vmax.f32 %v6958, %v6959
        %v6961 = vrot.slane %v6960, 2
        %v6962 = vmax.f32 %v6960, %v6961
        %v6963 = vrot.slane %v6962, 1
        %v6964 = vmax.f32 %v6962, %v6963
        %v6965 = vsel %vm5886, %v5656, -inf
        %v6966 = vrot.slane %v6965, 4
        %v6967 = vmax.f32 %v6965, %v6966
        %v6968 = vrot.slane %v6967, 2
        %v6969 = vmax.f32 %v6967, %v6968
        %v6970 = vrot.slane %v6969, 1
        %v6971 = vmax.f32 %v6969, %v6970
        %v6972 = vsel %vm5886, %v5663, -inf
        %v6973 = vrot.slane %v6972, 4
        %v6974 = vmax.f32 %v6972, %v6973
        %v6975 = vrot.slane %v6974, 2
        %v6976 = vmax.f32 %v6974, %v6975
        %v6977 = vrot.slane %v6976, 1
        %v6978 = vmax.f32 %v6976, %v6977
        %v6979 = vsel %vm5886, %v5687, -inf
        %v6980 = vrot.slane %v6979, 4
        %v6981 = vmax.f32 %v6979, %v6980
        %v6982 = vrot.slane %v6981, 2
        %v6983 = vmax.f32 %v6981, %v6982
        %v6984 = vrot.slane %v6983, 1
        %v6985 = vmax.f32 %v6983, %v6984
        %v6986 = vsel %vm5886, %v5694, -inf
        %v6987 = vrot.slane %v6986, 4
        %v6988 = vmax.f32 %v6986, %v6987
        %v6989 = vrot.slane %v6988, 2
        %v6990 = vmax.f32 %v6988, %v6989
        %v6991 = vrot.slane %v6990, 1
        %v6992 = vmax.f32 %v6990, %v6991
        %v6993 = vsel %vm5886, %v5718, -inf
        %v6994 = vrot.slane %v6993, 4
        %v6995 = vmax.f32 %v6993, %v6994
        %v6996 = vrot.slane %v6995, 2
        %v6997 = vmax.f32 %v6995, %v6996
        %v6998 = vrot.slane %v6997, 1
        %v6999 = vmax.f32 %v6997, %v6998
        %v7000 = vsel %vm5886, %v5725, -inf
        %v7001 = vrot.slane %v7000, 4
        %v7002 = vmax.f32 %v7000, %v7001
        %v7003 = vrot.slane %v7002, 2
        %v7004 = vmax.f32 %v7002, %v7003
        %v7005 = vrot.slane %v7004, 1
        %v7006 = vmax.f32 %v7004, %v7005
        %7007 = vst [vmem:[#allocation3] sm:$0x7] 0.0
        %7008 = vst [vmem:[#allocation3 + $0x8] sm:$0x7] 0.0
        %7009 = vst [vmem:[#allocation3 + $0x10] sm:$0x7] 0.0
        %7010 = vst [vmem:[#allocation3 + $0x18] sm:$0x7] 0.0
        %7011 = vst [vmem:[#allocation3 + $0x20] sm:$0x7] 0.0
        %7012 = vst [vmem:[#allocation3 + $0x28] sm:$0x7] 0.0
        %7013 = vst [vmem:[#allocation3 + $0x30] sm:$0x7] 0.0
        %7014 = vst [vmem:[#allocation3 + $0x38] sm:$0x7] 0.0
        %7015 = vst [vmem:[#allocation3 + $0x80] sm:$0x7] 0.0
        %7016 = vst [vmem:[#allocation3 + $0x88] sm:$0x7] 0.0
        %7017 = vst [vmem:[#allocation3 + $0x90] sm:$0x7] 0.0
        %7018 = vst [vmem:[#allocation3 + $0x98] sm:$0x7] 0.0
        %7019 = vst [vmem:[#allocation3 + $0xa0] sm:$0x7] 0.0
        %7020 = vst [vmem:[#allocation3 + $0xa8] sm:$0x7] 0.0
        %7021 = vst [vmem:[#allocation3 + $0xb0] sm:$0x7] 0.0
        %7022 = vst [vmem:[#allocation3 + $0xb8] sm:$0x7] 0.0
        %7023 = vst [vmem:[#allocation3 + $0x100] sm:$0x7] 0.0
        %7024 = vst [vmem:[#allocation3 + $0x108] sm:$0x7] 0.0
        %7025 = vst [vmem:[#allocation3 + $0x110] sm:$0x7] 0.0
        %7026 = vst [vmem:[#allocation3 + $0x118] sm:$0x7] 0.0
        %7027 = vst [vmem:[#allocation3 + $0x120] sm:$0x7] 0.0
        %7028 = vst [vmem:[#allocation3 + $0x128] sm:$0x7] 0.0
        %7029 = vst [vmem:[#allocation3 + $0x130] sm:$0x7] 0.0
        %7030 = vst [vmem:[#allocation3 + $0x138] sm:$0x7] 0.0
        %7031 = vst [vmem:[#allocation3 + $0x180] sm:$0x7] 0.0
        %7032 = vst [vmem:[#allocation3 + $0x188] sm:$0x7] 0.0
        %7033 = vst [vmem:[#allocation3 + $0x190] sm:$0x7] 0.0
        %7034 = vst [vmem:[#allocation3 + $0x198] sm:$0x7] 0.0
        %7035 = vst [vmem:[#allocation3 + $0x1a0] sm:$0x7] 0.0
        %7036 = vst [vmem:[#allocation3 + $0x1a8] sm:$0x7] 0.0
        %7037 = vst [vmem:[#allocation3 + $0x1b0] sm:$0x7] 0.0
        %7038 = vst [vmem:[#allocation3 + $0x1b8] sm:$0x7] 0.0
        %7039 = vst [vmem:[#allocation3 + $0x200] sm:$0x7] 0.0
        %7040 = vst [vmem:[#allocation3 + $0x208] sm:$0x7] 0.0
        %7041 = vst [vmem:[#allocation3 + $0x210] sm:$0x7] 0.0
        %7042 = vst [vmem:[#allocation3 + $0x218] sm:$0x7] 0.0
        %7043 = vst [vmem:[#allocation3 + $0x220] sm:$0x7] 0.0
        %7044 = vst [vmem:[#allocation3 + $0x228] sm:$0x7] 0.0
        %7045 = vst [vmem:[#allocation3 + $0x230] sm:$0x7] 0.0
        %7046 = vst [vmem:[#allocation3 + $0x238] sm:$0x7] 0.0
        %7047 = vst [vmem:[#allocation3 + $0x280] sm:$0x7] 0.0
        %7048 = vst [vmem:[#allocation3 + $0x288] sm:$0x7] 0.0
        %7049 = vst [vmem:[#allocation3 + $0x290] sm:$0x7] 0.0
        %7050 = vst [vmem:[#allocation3 + $0x298] sm:$0x7] 0.0
        %7051 = vst [vmem:[#allocation3 + $0x2a0] sm:$0x7] 0.0
        %7052 = vst [vmem:[#allocation3 + $0x2a8] sm:$0x7] 0.0
        %7053 = vst [vmem:[#allocation3 + $0x2b0] sm:$0x7] 0.0
        %7054 = vst [vmem:[#allocation3 + $0x2b8] sm:$0x7] 0.0
        %7055 = vst [vmem:[#allocation3 + $0x300] sm:$0x7] 0.0
        %7056 = vst [vmem:[#allocation3 + $0x308] sm:$0x7] 0.0
        %7057 = vst [vmem:[#allocation3 + $0x310] sm:$0x7] 0.0
        %7058 = vst [vmem:[#allocation3 + $0x318] sm:$0x7] 0.0
        %7059 = vst [vmem:[#allocation3 + $0x320] sm:$0x7] 0.0
        %7060 = vst [vmem:[#allocation3 + $0x328] sm:$0x7] 0.0
        %7061 = vst [vmem:[#allocation3 + $0x330] sm:$0x7] 0.0
        %7062 = vst [vmem:[#allocation3 + $0x338] sm:$0x7] 0.0
        %7063 = vst [vmem:[#allocation3 + $0x380] sm:$0x7] 0.0
        %7064 = vst [vmem:[#allocation3 + $0x388] sm:$0x7] 0.0
        %7065 = vst [vmem:[#allocation3 + $0x390] sm:$0x7] 0.0
        %7066 = vst [vmem:[#allocation3 + $0x398] sm:$0x7] 0.0
        %7067 = vst [vmem:[#allocation3 + $0x3a0] sm:$0x7] 0.0
        %7068 = vst [vmem:[#allocation3 + $0x3a8] sm:$0x7] 0.0
        %7069 = vst [vmem:[#allocation3 + $0x3b0] sm:$0x7] 0.0
        %7070 = vst [vmem:[#allocation3 + $0x3b8] sm:$0x7] 0.0
        %7071 = vst [vmem:[#allocation3 + $0x40] sm:$0xfc] 0.0
        %7072 = vst [vmem:[#allocation3 + $0x48] sm:$0xfc] 0.0
        %7073 = vst [vmem:[#allocation3 + $0x50] sm:$0xfc] 0.0
        %7074 = vst [vmem:[#allocation3 + $0x58] sm:$0xfc] 0.0
        %7075 = vst [vmem:[#allocation3 + $0x60] sm:$0xfc] 0.0
        %7076 = vst [vmem:[#allocation3 + $0x68] sm:$0xfc] 0.0
        %7077 = vst [vmem:[#allocation3 + $0x70] sm:$0xfc] 0.0
        %7078 = vst [vmem:[#allocation3 + $0x78] sm:$0xfc] 0.0
        %7079 = vst [vmem:[#allocation3 + $0xc0] sm:$0xfc] 0.0
        %7080 = vst [vmem:[#allocation3 + $0xc8] sm:$0xfc] 0.0
        %7081 = vst [vmem:[#allocation3 + $0xd0] sm:$0xfc] 0.0
        %7082 = vst [vmem:[#allocation3 + $0xd8] sm:$0xfc] 0.0
        %7083 = vst [vmem:[#allocation3 + $0xe0] sm:$0xfc] 0.0
        %7084 = vst [vmem:[#allocation3 + $0xe8] sm:$0xfc] 0.0
        %7085 = vst [vmem:[#allocation3 + $0xf0] sm:$0xfc] 0.0
        %7086 = vst [vmem:[#allocation3 + $0xf8] sm:$0xfc] 0.0
        %7087 = vst [vmem:[#allocation3 + $0x140] sm:$0xfc] 0.0
        %7088 = vst [vmem:[#allocation3 + $0x148] sm:$0xfc] 0.0
        %7089 = vst [vmem:[#allocation3 + $0x150] sm:$0xfc] 0.0
        %7090 = vst [vmem:[#allocation3 + $0x158] sm:$0xfc] 0.0
        %7091 = vst [vmem:[#allocation3 + $0x160] sm:$0xfc] 0.0
        %7092 = vst [vmem:[#allocation3 + $0x168] sm:$0xfc] 0.0
        %7093 = vst [vmem:[#allocation3 + $0x170] sm:$0xfc] 0.0
        %7094 = vst [vmem:[#allocation3 + $0x178] sm:$0xfc] 0.0
        %7095 = vst [vmem:[#allocation3 + $0x1c0] sm:$0xfc] 0.0
        %7096 = vst [vmem:[#allocation3 + $0x1c8] sm:$0xfc] 0.0
        %7097 = vst [vmem:[#allocation3 + $0x1d0] sm:$0xfc] 0.0
        %7098 = vst [vmem:[#allocation3 + $0x1d8] sm:$0xfc] 0.0
        %7099 = vst [vmem:[#allocation3 + $0x1e0] sm:$0xfc] 0.0
        %7100 = vst [vmem:[#allocation3 + $0x1e8] sm:$0xfc] 0.0
        %7101 = vst [vmem:[#allocation3 + $0x1f0] sm:$0xfc] 0.0
        %7102 = vst [vmem:[#allocation3 + $0x1f8] sm:$0xfc] 0.0
        %7103 = vst [vmem:[#allocation3 + $0x240] sm:$0xfc] 0.0
        %7104 = vst [vmem:[#allocation3 + $0x248] sm:$0xfc] 0.0
        %7105 = vst [vmem:[#allocation3 + $0x250] sm:$0xfc] 0.0
        %7106 = vst [vmem:[#allocation3 + $0x258] sm:$0xfc] 0.0
        %7107 = vst [vmem:[#allocation3 + $0x260] sm:$0xfc] 0.0
        %7108 = vst [vmem:[#allocation3 + $0x268] sm:$0xfc] 0.0
        %7109 = vst [vmem:[#allocation3 + $0x270] sm:$0xfc] 0.0
        %7110 = vst [vmem:[#allocation3 + $0x278] sm:$0xfc] 0.0
        %7111 = vst [vmem:[#allocation3 + $0x2c0] sm:$0xfc] 0.0
        %7112 = vst [vmem:[#allocation3 + $0x2c8] sm:$0xfc] 0.0
        %7113 = vst [vmem:[#allocation3 + $0x2d0] sm:$0xfc] 0.0
        %7114 = vst [vmem:[#allocation3 + $0x2d8] sm:$0xfc] 0.0
        %7115 = vst [vmem:[#allocation3 + $0x2e0] sm:$0xfc] 0.0
        %7116 = vst [vmem:[#allocation3 + $0x2e8] sm:$0xfc] 0.0
        %7117 = vst [vmem:[#allocation3 + $0x2f0] sm:$0xfc] 0.0
        %7118 = vst [vmem:[#allocation3 + $0x2f8] sm:$0xfc] 0.0
        %7119 = vst [vmem:[#allocation3 + $0x340] sm:$0xfc] 0.0
        %7120 = vst [vmem:[#allocation3 + $0x348] sm:$0xfc] 0.0
        %7121 = vst [vmem:[#allocation3 + $0x350] sm:$0xfc] 0.0
        %7122 = vst [vmem:[#allocation3 + $0x358] sm:$0xfc] 0.0
        %7123 = vst [vmem:[#allocation3 + $0x360] sm:$0xfc] 0.0
        %7124 = vst [vmem:[#allocation3 + $0x368] sm:$0xfc] 0.0
        %7125 = vst [vmem:[#allocation3 + $0x370] sm:$0xfc] 0.0
        %7126 = vst [vmem:[#allocation3 + $0x378] sm:$0xfc] 0.0
        %7127 = vst [vmem:[#allocation3 + $0x3c0] sm:$0xfc] 0.0
        %7128 = vst [vmem:[#allocation3 + $0x3c8] sm:$0xfc] 0.0
        %7129 = vst [vmem:[#allocation3 + $0x3d0] sm:$0xfc] 0.0
        %7130 = vst [vmem:[#allocation3 + $0x3d8] sm:$0xfc] 0.0
        %7131 = vst [vmem:[#allocation3 + $0x3e0] sm:$0xfc] 0.0
        %7132 = vst [vmem:[#allocation3 + $0x3e8] sm:$0xfc] 0.0
        %7133 = vst [vmem:[#allocation3 + $0x3f0] sm:$0xfc] 0.0
        %7134 = vst [vmem:[#allocation3 + $0x3f8] sm:$0xfc] 0.0
        %vm7295 = vcmask 1044484
        %v7296 = vsel %vm7295, %v5907, %v5893
        %vm7297 = vcmask 1045509
        %v7298 = vsel %vm7297, %v5921, %v7296
        %vm7299 = vcmask 1046534
        %v7300 = vsel %vm7299, %v5935, %v7298
        %vm7301 = vcmask 1047559
        %v7302 = vsel %vm7301, %v5949, %v7300
        %v7303 = vsel %vm7295, %v5914, %v5900
        %v7304 = vsel %vm7297, %v5928, %v7303
        %v7305 = vsel %vm7299, %v5942, %v7304
        %v7306 = vsel %vm7301, %v5956, %v7305
        %vm7307 = vcmask 1041409
        %v7308 = vsel %vm7307, %v5977, %v5963
        %vm7309 = vcmask 1042434
        %v7310 = vsel %vm7309, %v5991, %v7308
        %vm7311 = vcmask 1043459
        %v7312 = vsel %vm7311, %v6005, %v7310
        %v7313 = vsel %vm7295, %v6019, %v7312
        %v7314 = vsel %vm7307, %v5984, %v5970
        %v7315 = vsel %vm7309, %v5998, %v7314
        %v7316 = vsel %vm7311, %v6012, %v7315
        %v7317 = vsel %vm7295, %v6026, %v7316
        %v7318 = vsel %vm7295, %v6047, %v6033
        %v7319 = vsel %vm7297, %v6061, %v7318
        %v7320 = vsel %vm7299, %v6075, %v7319
        %v7321 = vsel %vm7301, %v6089, %v7320
        %v7322 = vsel %vm7295, %v6054, %v6040
        %v7323 = vsel %vm7297, %v6068, %v7322
        %v7324 = vsel %vm7299, %v6082, %v7323
        %v7325 = vsel %vm7301, %v6096, %v7324
        %v7326 = vsel %vm7307, %v6117, %v6103
        %v7327 = vsel %vm7309, %v6131, %v7326
        %v7328 = vsel %vm7311, %v6145, %v7327
        %v7329 = vsel %vm7295, %v6159, %v7328
        %v7330 = vsel %vm7307, %v6124, %v6110
        %v7331 = vsel %vm7309, %v6138, %v7330
        %v7332 = vsel %vm7311, %v6152, %v7331
        %v7333 = vsel %vm7295, %v6166, %v7332
        %v7334 = vsel %vm7295, %v6187, %v6173
        %v7335 = vsel %vm7297, %v6201, %v7334
        %v7336 = vsel %vm7299, %v6215, %v7335
        %v7337 = vsel %vm7301, %v6229, %v7336
        %v7338 = vsel %vm7295, %v6194, %v6180
        %v7339 = vsel %vm7297, %v6208, %v7338
        %v7340 = vsel %vm7299, %v6222, %v7339
        %v7341 = vsel %vm7301, %v6236, %v7340
        %v7342 = vsel %vm7307, %v6257, %v6243
        %v7343 = vsel %vm7309, %v6271, %v7342
        %v7344 = vsel %vm7311, %v6285, %v7343
        %v7345 = vsel %vm7295, %v6299, %v7344
        %v7346 = vsel %vm7307, %v6264, %v6250
        %v7347 = vsel %vm7309, %v6278, %v7346
        %v7348 = vsel %vm7311, %v6292, %v7347
        %v7349 = vsel %vm7295, %v6306, %v7348
        %v7350 = vsel %vm7295, %v6327, %v6313
        %v7351 = vsel %vm7297, %v6341, %v7350
        %v7352 = vsel %vm7299, %v6355, %v7351
        %v7353 = vsel %vm7301, %v6369, %v7352
        %v7354 = vsel %vm7295, %v6334, %v6320
        %v7355 = vsel %vm7297, %v6348, %v7354
        %v7356 = vsel %vm7299, %v6362, %v7355
        %v7357 = vsel %vm7301, %v6376, %v7356
        %v7358 = vsel %vm7307, %v6397, %v6383
        %v7359 = vsel %vm7309, %v6411, %v7358
        %v7360 = vsel %vm7311, %v6425, %v7359
        %v7361 = vsel %vm7295, %v6439, %v7360
        %v7362 = vsel %vm7307, %v6404, %v6390
        %v7363 = vsel %vm7309, %v6418, %v7362
        %v7364 = vsel %vm7311, %v6432, %v7363
        %v7365 = vsel %vm7295, %v6446, %v7364
        %v7366 = vsel %vm7295, %v6467, %v6453
        %v7367 = vsel %vm7297, %v6481, %v7366
        %v7368 = vsel %vm7299, %v6495, %v7367
        %v7369 = vsel %vm7301, %v6509, %v7368
        %v7370 = vsel %vm7295, %v6474, %v6460
        %v7371 = vsel %vm7297, %v6488, %v7370
        %v7372 = vsel %vm7299, %v6502, %v7371
        %v7373 = vsel %vm7301, %v6516, %v7372
        %v7374 = vsel %vm7307, %v6537, %v6523
        %v7375 = vsel %vm7309, %v6551, %v7374
        %v7376 = vsel %vm7311, %v6565, %v7375
        %v7377 = vsel %vm7295, %v6579, %v7376
        %v7378 = vsel %vm7307, %v6544, %v6530
        %v7379 = vsel %vm7309, %v6558, %v7378
        %v7380 = vsel %vm7311, %v6572, %v7379
        %v7381 = vsel %vm7295, %v6586, %v7380
        %v7382 = vsel %vm7295, %v6607, %v6593
        %v7383 = vsel %vm7297, %v6621, %v7382
        %v7384 = vsel %vm7299, %v6635, %v7383
        %v7385 = vsel %vm7301, %v6649, %v7384
        %v7386 = vsel %vm7295, %v6614, %v6600
        %v7387 = vsel %vm7297, %v6628, %v7386
        %v7388 = vsel %vm7299, %v6642, %v7387
        %v7389 = vsel %vm7301, %v6656, %v7388
        %v7390 = vsel %vm7307, %v6677, %v6663
        %v7391 = vsel %vm7309, %v6691, %v7390
        %v7392 = vsel %vm7311, %v6705, %v7391
        %v7393 = vsel %vm7295, %v6719, %v7392
        %v7394 = vsel %vm7307, %v6684, %v6670
        %v7395 = vsel %vm7309, %v6698, %v7394
        %v7396 = vsel %vm7311, %v6712, %v7395
        %v7397 = vsel %vm7295, %v6726, %v7396
        %v7398 = vsel %vm7295, %v6747, %v6733
        %v7399 = vsel %vm7297, %v6761, %v7398
        %v7400 = vsel %vm7299, %v6775, %v7399
        %v7401 = vsel %vm7301, %v6789, %v7400
        %v7402 = vsel %vm7295, %v6754, %v6740
        %v7403 = vsel %vm7297, %v6768, %v7402
        %v7404 = vsel %vm7299, %v6782, %v7403
        %v7405 = vsel %vm7301, %v6796, %v7404
        %v7406 = vsel %vm7307, %v6817, %v6803
        %v7407 = vsel %vm7309, %v6831, %v7406
        %v7408 = vsel %vm7311, %v6845, %v7407
        %v7409 = vsel %vm7295, %v6859, %v7408
        %v7410 = vsel %vm7307, %v6824, %v6810
        %v7411 = vsel %vm7309, %v6838, %v7410
        %v7412 = vsel %vm7311, %v6852, %v7411
        %v7413 = vsel %vm7295, %v6866, %v7412
        %v7414 = vsel %vm7295, %v6887, %v6873
        %v7415 = vsel %vm7297, %v6901, %v7414
        %v7416 = vsel %vm7299, %v6915, %v7415
        %v7417 = vsel %vm7301, %v6929, %v7416
        %v7418 = vsel %vm7295, %v6894, %v6880
        %v7419 = vsel %vm7297, %v6908, %v7418
        %v7420 = vsel %vm7299, %v6922, %v7419
        %v7421 = vsel %vm7301, %v6936, %v7420
        %v7422 = vsel %vm7307, %v6957, %v6943
        %v7423 = vsel %vm7309, %v6971, %v7422
        %v7424 = vsel %vm7311, %v6985, %v7423
        %v7425 = vsel %vm7295, %v6999, %v7424
        %v7426 = vsel %vm7307, %v6964, %v6950
        %v7427 = vsel %vm7309, %v6978, %v7426
        %v7428 = vsel %vm7311, %v6992, %v7427
        %v7429 = vsel %vm7295, %v7006, %v7428
        %7462 = vst [vmem:[#allocation3] sm:$0xf8] %v7302
        %7463 = vst [vmem:[#allocation3 + $0x8] sm:$0xf8] %v7306
        %7464 = vst [vmem:[#allocation3 + $0x40] sm:$0x1f] %v7313
        %7465 = vst [vmem:[#allocation3 + $0x48] sm:$0x1f] %v7317
        %7466 = vst [vmem:[#allocation3 + $0x80] sm:$0xf8] %v7321
        %7467 = vst [vmem:[#allocation3 + $0x88] sm:$0xf8] %v7325
        %7468 = vst [vmem:[#allocation3 + $0xc0] sm:$0x1f] %v7329
        %7469 = vst [vmem:[#allocation3 + $0xc8] sm:$0x1f] %v7333
        %7470 = vst [vmem:[#allocation3 + $0x100] sm:$0xf8] %v7337
        %7471 = vst [vmem:[#allocation3 + $0x108] sm:$0xf8] %v7341
        %7472 = vst [vmem:[#allocation3 + $0x140] sm:$0x1f] %v7345
        %7473 = vst [vmem:[#allocation3 + $0x148] sm:$0x1f] %v7349
        %7474 = vst [vmem:[#allocation3 + $0x180] sm:$0xf8] %v7353
        %7475 = vst [vmem:[#allocation3 + $0x188] sm:$0xf8] %v7357
        %7476 = vst [vmem:[#allocation3 + $0x1c0] sm:$0x1f] %v7361
        %7477 = vst [vmem:[#allocation3 + $0x1c8] sm:$0x1f] %v7365
        %7478 = vst [vmem:[#allocation3 + $0x200] sm:$0xf8] %v7369
        %7479 = vst [vmem:[#allocation3 + $0x208] sm:$0xf8] %v7373
        %7480 = vst [vmem:[#allocation3 + $0x240] sm:$0x1f] %v7377
        %7481 = vst [vmem:[#allocation3 + $0x248] sm:$0x1f] %v7381
        %7482 = vst [vmem:[#allocation3 + $0x280] sm:$0xf8] %v7385
        %7483 = vst [vmem:[#allocation3 + $0x288] sm:$0xf8] %v7389
        %7484 = vst [vmem:[#allocation3 + $0x2c0] sm:$0x1f] %v7393
        %7485 = vst [vmem:[#allocation3 + $0x2c8] sm:$0x1f] %v7397
        %7486 = vst [vmem:[#allocation3 + $0x300] sm:$0xf8] %v7401
        %7487 = vst [vmem:[#allocation3 + $0x308] sm:$0xf8] %v7405
        %7488 = vst [vmem:[#allocation3 + $0x340] sm:$0x1f] %v7409
        %7489 = vst [vmem:[#allocation3 + $0x348] sm:$0x1f] %v7413
        %7490 = vst [vmem:[#allocation3 + $0x380] sm:$0xf8] %v7417
        %7491 = vst [vmem:[#allocation3 + $0x388] sm:$0xf8] %v7421
        %7492 = vst [vmem:[#allocation3 + $0x3c0] sm:$0x1f] %v7425
        %7493 = vst [vmem:[#allocation3 + $0x3c8] sm:$0x1f] %v7429
        %v7494 = vsel %vm7311, %v5907, %v5893
        %v7495 = vsel %vm7295, %v5921, %v7494
        %v7496 = vsel %vm7297, %v5935, %v7495
        %v7497 = vsel %vm7299, %v5949, %v7496
        %v7498 = vsel %vm7301, %v5963, %v7497
        %v7499 = vsel %vm7311, %v5914, %v5900
        %v7500 = vsel %vm7295, %v5928, %v7499
        %v7501 = vsel %vm7297, %v5942, %v7500
        %v7502 = vsel %vm7299, %v5956, %v7501
        %v7503 = vsel %vm7301, %v5970, %v7502
        %v7504 = vsel %vm7307, %v5991, %v5977
        %v7505 = vsel %vm7309, %v6005, %v7504
        %v7506 = vsel %vm7311, %v6019, %v7505
        %v7507 = vsel %vm7307, %v5998, %v5984
        %v7508 = vsel %vm7309, %v6012, %v7507
        %v7509 = vsel %vm7311, %v6026, %v7508
        %v7510 = vsel %vm7311, %v6047, %v6033
        %v7511 = vsel %vm7295, %v6061, %v7510
        %v7512 = vsel %vm7297, %v6075, %v7511
        %v7513 = vsel %vm7299, %v6089, %v7512
        %v7514 = vsel %vm7301, %v6103, %v7513
        %v7515 = vsel %vm7311, %v6054, %v6040
        %v7516 = vsel %vm7295, %v6068, %v7515
        %v7517 = vsel %vm7297, %v6082, %v7516
        %v7518 = vsel %vm7299, %v6096, %v7517
        %v7519 = vsel %vm7301, %v6110, %v7518
        %v7520 = vsel %vm7307, %v6131, %v6117
        %v7521 = vsel %vm7309, %v6145, %v7520
        %v7522 = vsel %vm7311, %v6159, %v7521
        %v7523 = vsel %vm7307, %v6138, %v6124
        %v7524 = vsel %vm7309, %v6152, %v7523
        %v7525 = vsel %vm7311, %v6166, %v7524
        %v7526 = vsel %vm7311, %v6187, %v6173
        %v7527 = vsel %vm7295, %v6201, %v7526
        %v7528 = vsel %vm7297, %v6215, %v7527
        %v7529 = vsel %vm7299, %v6229, %v7528
        %v7530 = vsel %vm7301, %v6243, %v7529
        %v7531 = vsel %vm7311, %v6194, %v6180
        %v7532 = vsel %vm7295, %v6208, %v7531
        %v7533 = vsel %vm7297, %v6222, %v7532
        %v7534 = vsel %vm7299, %v6236, %v7533
        %v7535 = vsel %vm7301, %v6250, %v7534
        %v7536 = vsel %vm7307, %v6271, %v6257
        %v7537 = vsel %vm7309, %v6285, %v7536
        %v7538 = vsel %vm7311, %v6299, %v7537
        %v7539 = vsel %vm7307, %v6278, %v6264
        %v7540 = vsel %vm7309, %v6292, %v7539
        %v7541 = vsel %vm7311, %v6306, %v7540
        %v7542 = vsel %vm7311, %v6327, %v6313
        %v7543 = vsel %vm7295, %v6341, %v7542
        %v7544 = vsel %vm7297, %v6355, %v7543
        %v7545 = vsel %vm7299, %v6369, %v7544
        %v7546 = vsel %vm7301, %v6383, %v7545
        %v7547 = vsel %vm7311, %v6334, %v6320
        %v7548 = vsel %vm7295, %v6348, %v7547
        %v7549 = vsel %vm7297, %v6362, %v7548
        %v7550 = vsel %vm7299, %v6376, %v7549
        %v7551 = vsel %vm7301, %v6390, %v7550
        %v7552 = vsel %vm7307, %v6411, %v6397
        %v7553 = vsel %vm7309, %v6425, %v7552
        %v7554 = vsel %vm7311, %v6439, %v7553
        %v7555 = vsel %vm7307, %v6418, %v6404
        %v7556 = vsel %vm7309, %v6432, %v7555
        %v7557 = vsel %vm7311, %v6446, %v7556
        %v7558 = vsel %vm7311, %v6467, %v6453
        %v7559 = vsel %vm7295, %v6481, %v7558
        %v7560 = vsel %vm7297, %v6495, %v7559
        %v7561 = vsel %vm7299, %v6509, %v7560
        %v7562 = vsel %vm7301, %v6523, %v7561
        %v7563 = vsel %vm7311, %v6474, %v6460
        %v7564 = vsel %vm7295, %v6488, %v7563
        %v7565 = vsel %vm7297, %v6502, %v7564
        %v7566 = vsel %vm7299, %v6516, %v7565
        %v7567 = vsel %vm7301, %v6530, %v7566
        %v7568 = vsel %vm7307, %v6551, %v6537
        %v7569 = vsel %vm7309, %v6565, %v7568
        %v7570 = vsel %vm7311, %v6579, %v7569
        %v7571 = vsel %vm7307, %v6558, %v6544
        %v7572 = vsel %vm7309, %v6572, %v7571
        %v7573 = vsel %vm7311, %v6586, %v7572
        %v7574 = vsel %vm7311, %v6607, %v6593
        %v7575 = vsel %vm7295, %v6621, %v7574
        %v7576 = vsel %vm7297, %v6635, %v7575
        %v7577 = vsel %vm7299, %v6649, %v7576
        %v7578 = vsel %vm7301, %v6663, %v7577
        %v7579 = vsel %vm7311, %v6614, %v6600
        %v7580 = vsel %vm7295, %v6628, %v7579
        %v7581 = vsel %vm7297, %v6642, %v7580
        %v7582 = vsel %vm7299, %v6656, %v7581
        %v7583 = vsel %vm7301, %v6670, %v7582
        %v7584 = vsel %vm7307, %v6691, %v6677
        %v7585 = vsel %vm7309, %v6705, %v7584
        %v7586 = vsel %vm7311, %v6719, %v7585
        %v7587 = vsel %vm7307, %v6698, %v6684
        %v7588 = vsel %vm7309, %v6712, %v7587
        %v7589 = vsel %vm7311, %v6726, %v7588
        %v7590 = vsel %vm7311, %v6747, %v6733
        %v7591 = vsel %vm7295, %v6761, %v7590
        %v7592 = vsel %vm7297, %v6775, %v7591
        %v7593 = vsel %vm7299, %v6789, %v7592
        %v7594 = vsel %vm7301, %v6803, %v7593
        %v7595 = vsel %vm7311, %v6754, %v6740
        %v7596 = vsel %vm7295, %v6768, %v7595
        %v7597 = vsel %vm7297, %v6782, %v7596
        %v7598 = vsel %vm7299, %v6796, %v7597
        %v7599 = vsel %vm7301, %v6810, %v7598
        %v7600 = vsel %vm7307, %v6831, %v6817
        %v7601 = vsel %vm7309, %v6845, %v7600
        %v7602 = vsel %vm7311, %v6859, %v7601
        %v7603 = vsel %vm7307, %v6838, %v6824
        %v7604 = vsel %vm7309, %v6852, %v7603
        %v7605 = vsel %vm7311, %v6866, %v7604
        %v7606 = vsel %vm7311, %v6887, %v6873
        %v7607 = vsel %vm7295, %v6901, %v7606
        %v7608 = vsel %vm7297, %v6915, %v7607
        %v7609 = vsel %vm7299, %v6929, %v7608
        %v7610 = vsel %vm7301, %v6943, %v7609
        %v7611 = vsel %vm7311, %v6894, %v6880
        %v7612 = vsel %vm7295, %v6908, %v7611
        %v7613 = vsel %vm7297, %v6922, %v7612
        %v7614 = vsel %vm7299, %v6936, %v7613
        %v7615 = vsel %vm7301, %v6950, %v7614
        %v7616 = vsel %vm7307, %v6971, %v6957
        %v7617 = vsel %vm7309, %v6985, %v7616
        %v7618 = vsel %vm7311, %v6999, %v7617
        %v7619 = vsel %vm7307, %v6978, %v6964
        %v7620 = vsel %vm7309, %v6992, %v7619
        %v7621 = vsel %vm7311, %v7006, %v7620
        %7654 = vst [vmem:[#allocation3 + $0x10] sm:$0xfc] %v7498
        %7655 = vst [vmem:[#allocation3 + $0x18] sm:$0xfc] %v7503
        %7656 = vst [vmem:[#allocation3 + $0x50] sm:$0xf] %v7506
        %7657 = vst [vmem:[#allocation3 + $0x58] sm:$0xf] %v7509
        %7658 = vst [vmem:[#allocation3 + $0x90] sm:$0xfc] %v7514
        %7659 = vst [vmem:[#allocation3 + $0x98] sm:$0xfc] %v7519
        %7660 = vst [vmem:[#allocation3 + $0xd0] sm:$0xf] %v7522
        %7661 = vst [vmem:[#allocation3 + $0xd8] sm:$0xf] %v7525
        %7662 = vst [vmem:[#allocation3 + $0x110] sm:$0xfc] %v7530
        %7663 = vst [vmem:[#allocation3 + $0x118] sm:$0xfc] %v7535
        %7664 = vst [vmem:[#allocation3 + $0x150] sm:$0xf] %v7538
        %7665 = vst [vmem:[#allocation3 + $0x158] sm:$0xf] %v7541
        %7666 = vst [vmem:[#allocation3 + $0x190] sm:$0xfc] %v7546
        %7667 = vst [vmem:[#allocation3 + $0x198] sm:$0xfc] %v7551
        %7668 = vst [vmem:[#allocation3 + $0x1d0] sm:$0xf] %v7554
        %7669 = vst [vmem:[#allocation3 + $0x1d8] sm:$0xf] %v7557
        %7670 = vst [vmem:[#allocation3 + $0x210] sm:$0xfc] %v7562
        %7671 = vst [vmem:[#allocation3 + $0x218] sm:$0xfc] %v7567
        %7672 = vst [vmem:[#allocation3 + $0x250] sm:$0xf] %v7570
        %7673 = vst [vmem:[#allocation3 + $0x258] sm:$0xf] %v7573
        %7674 = vst [vmem:[#allocation3 + $0x290] sm:$0xfc] %v7578
        %7675 = vst [vmem:[#allocation3 + $0x298] sm:$0xfc] %v7583
        %7676 = vst [vmem:[#allocation3 + $0x2d0] sm:$0xf] %v7586
        %7677 = vst [vmem:[#allocation3 + $0x2d8] sm:$0xf] %v7589
        %7678 = vst [vmem:[#allocation3 + $0x310] sm:$0xfc] %v7594
        %7679 = vst [vmem:[#allocation3 + $0x318] sm:$0xfc] %v7599
        %7680 = vst [vmem:[#allocation3 + $0x350] sm:$0xf] %v7602
        %7681 = vst [vmem:[#allocation3 + $0x358] sm:$0xf] %v7605
        %7682 = vst [vmem:[#allocation3 + $0x390] sm:$0xfc] %v7610
        %7683 = vst [vmem:[#allocation3 + $0x398] sm:$0xfc] %v7615
        %7684 = vst [vmem:[#allocation3 + $0x3d0] sm:$0xf] %v7618
        %7685 = vst [vmem:[#allocation3 + $0x3d8] sm:$0xf] %v7621
        %v7686 = vsel %vm7309, %v5907, %v5893
        %v7687 = vsel %vm7311, %v5921, %v7686
        %v7688 = vsel %vm7295, %v5935, %v7687
        %v7689 = vsel %vm7297, %v5949, %v7688
        %v7690 = vsel %vm7299, %v5963, %v7689
        %v7691 = vsel %vm7301, %v5977, %v7690
        %v7692 = vsel %vm7309, %v5914, %v5900
        %v7693 = vsel %vm7311, %v5928, %v7692
        %v7694 = vsel %vm7295, %v5942, %v7693
        %v7695 = vsel %vm7297, %v5956, %v7694
        %v7696 = vsel %vm7299, %v5970, %v7695
        %v7697 = vsel %vm7301, %v5984, %v7696
        %v7698 = vsel %vm7307, %v6005, %v5991
        %v7699 = vsel %vm7309, %v6019, %v7698
        %v7700 = vsel %vm7307, %v6012, %v5998
        %v7701 = vsel %vm7309, %v6026, %v7700
        %v7702 = vsel %vm7309, %v6047, %v6033
        %v7703 = vsel %vm7311, %v6061, %v7702
        %v7704 = vsel %vm7295, %v6075, %v7703
        %v7705 = vsel %vm7297, %v6089, %v7704
        %v7706 = vsel %vm7299, %v6103, %v7705
        %v7707 = vsel %vm7301, %v6117, %v7706
        %v7708 = vsel %vm7309, %v6054, %v6040
        %v7709 = vsel %vm7311, %v6068, %v7708
        %v7710 = vsel %vm7295, %v6082, %v7709
        %v7711 = vsel %vm7297, %v6096, %v7710
        %v7712 = vsel %vm7299, %v6110, %v7711
        %v7713 = vsel %vm7301, %v6124, %v7712
        %v7714 = vsel %vm7307, %v6145, %v6131
        %v7715 = vsel %vm7309, %v6159, %v7714
        %v7716 = vsel %vm7307, %v6152, %v6138
        %v7717 = vsel %vm7309, %v6166, %v7716
        %v7718 = vsel %vm7309, %v6187, %v6173
        %v7719 = vsel %vm7311, %v6201, %v7718
        %v7720 = vsel %vm7295, %v6215, %v7719
        %v7721 = vsel %vm7297, %v6229, %v7720
        %v7722 = vsel %vm7299, %v6243, %v7721
        %v7723 = vsel %vm7301, %v6257, %v7722
        %v7724 = vsel %vm7309, %v6194, %v6180
        %v7725 = vsel %vm7311, %v6208, %v7724
        %v7726 = vsel %vm7295, %v6222, %v7725
        %v7727 = vsel %vm7297, %v6236, %v7726
        %v7728 = vsel %vm7299, %v6250, %v7727
        %v7729 = vsel %vm7301, %v6264, %v7728
        %v7730 = vsel %vm7307, %v6285, %v6271
        %v7731 = vsel %vm7309, %v6299, %v7730
        %v7732 = vsel %vm7307, %v6292, %v6278
        %v7733 = vsel %vm7309, %v6306, %v7732
        %v7734 = vsel %vm7309, %v6327, %v6313
        %v7735 = vsel %vm7311, %v6341, %v7734
        %v7736 = vsel %vm7295, %v6355, %v7735
        %v7737 = vsel %vm7297, %v6369, %v7736
        %v7738 = vsel %vm7299, %v6383, %v7737
        %v7739 = vsel %vm7301, %v6397, %v7738
        %v7740 = vsel %vm7309, %v6334, %v6320
        %v7741 = vsel %vm7311, %v6348, %v7740
        %v7742 = vsel %vm7295, %v6362, %v7741
        %v7743 = vsel %vm7297, %v6376, %v7742
        %v7744 = vsel %vm7299, %v6390, %v7743
        %v7745 = vsel %vm7301, %v6404, %v7744
        %v7746 = vsel %vm7307, %v6425, %v6411
        %v7747 = vsel %vm7309, %v6439, %v7746
        %v7748 = vsel %vm7307, %v6432, %v6418
        %v7749 = vsel %vm7309, %v6446, %v7748
        %v7750 = vsel %vm7309, %v6467, %v6453
        %v7751 = vsel %vm7311, %v6481, %v7750
        %v7752 = vsel %vm7295, %v6495, %v7751
        %v7753 = vsel %vm7297, %v6509, %v7752
        %v7754 = vsel %vm7299, %v6523, %v7753
        %v7755 = vsel %vm7301, %v6537, %v7754
        %v7756 = vsel %vm7309, %v6474, %v6460
        %v7757 = vsel %vm7311, %v6488, %v7756
        %v7758 = vsel %vm7295, %v6502, %v7757
        %v7759 = vsel %vm7297, %v6516, %v7758
        %v7760 = vsel %vm7299, %v6530, %v7759
        %v7761 = vsel %vm7301, %v6544, %v7760
        %v7762 = vsel %vm7307, %v6565, %v6551
        %v7763 = vsel %vm7309, %v6579, %v7762
        %v7764 = vsel %vm7307, %v6572, %v6558
        %v7765 = vsel %vm7309, %v6586, %v7764
        %v7766 = vsel %vm7309, %v6607, %v6593
        %v7767 = vsel %vm7311, %v6621, %v7766
        %v7768 = vsel %vm7295, %v6635, %v7767
        %v7769 = vsel %vm7297, %v6649, %v7768
        %v7770 = vsel %vm7299, %v6663, %v7769
        %v7771 = vsel %vm7301, %v6677, %v7770
        %v7772 = vsel %vm7309, %v6614, %v6600
        %v7773 = vsel %vm7311, %v6628, %v7772
        %v7774 = vsel %vm7295, %v6642, %v7773
        %v7775 = vsel %vm7297, %v6656, %v7774
        %v7776 = vsel %vm7299, %v6670, %v7775
        %v7777 = vsel %vm7301, %v6684, %v7776
        %v7778 = vsel %vm7307, %v6705, %v6691
        %v7779 = vsel %vm7309, %v6719, %v7778
        %v7780 = vsel %vm7307, %v6712, %v6698
        %v7781 = vsel %vm7309, %v6726, %v7780
        %v7782 = vsel %vm7309, %v6747, %v6733
        %v7783 = vsel %vm7311, %v6761, %v7782
        %v7784 = vsel %vm7295, %v6775, %v7783
        %v7785 = vsel %vm7297, %v6789, %v7784
        %v7786 = vsel %vm7299, %v6803, %v7785
        %v7787 = vsel %vm7301, %v6817, %v7786
        %v7788 = vsel %vm7309, %v6754, %v6740
        %v7789 = vsel %vm7311, %v6768, %v7788
        %v7790 = vsel %vm7295, %v6782, %v7789
        %v7791 = vsel %vm7297, %v6796, %v7790
        %v7792 = vsel %vm7299, %v6810, %v7791
        %v7793 = vsel %vm7301, %v6824, %v7792
        %v7794 = vsel %vm7307, %v6845, %v6831
        %v7795 = vsel %vm7309, %v6859, %v7794
        %v7796 = vsel %vm7307, %v6852, %v6838
        %v7797 = vsel %vm7309, %v6866, %v7796
        %v7798 = vsel %vm7309, %v6887, %v6873
        %v7799 = vsel %vm7311, %v6901, %v7798
        %v7800 = vsel %vm7295, %v6915, %v7799
        %v7801 = vsel %vm7297, %v6929, %v7800
        %v7802 = vsel %vm7299, %v6943, %v7801
        %v7803 = vsel %vm7301, %v6957, %v7802
        %v7804 = vsel %vm7309, %v6894, %v6880
        %v7805 = vsel %vm7311, %v6908, %v7804
        %v7806 = vsel %vm7295, %v6922, %v7805
        %v7807 = vsel %vm7297, %v6936, %v7806
        %v7808 = vsel %vm7299, %v6950, %v7807
        %v7809 = vsel %vm7301, %v6964, %v7808
        %v7810 = vsel %vm7307, %v6985, %v6971
        %v7811 = vsel %vm7309, %v6999, %v7810
        %v7812 = vsel %vm7307, %v6992, %v6978
        %v7813 = vsel %vm7309, %v7006, %v7812
        %7846 = vst [vmem:[#allocation3 + $0x20] sm:$0xfe] %v7691
        %7847 = vst [vmem:[#allocation3 + $0x28] sm:$0xfe] %v7697
        %7848 = vst [vmem:[#allocation3 + $0x60] sm:$0x7] %v7699
        %7849 = vst [vmem:[#allocation3 + $0x68] sm:$0x7] %v7701
        %7850 = vst [vmem:[#allocation3 + $0xa0] sm:$0xfe] %v7707
        %7851 = vst [vmem:[#allocation3 + $0xa8] sm:$0xfe] %v7713
        %7852 = vst [vmem:[#allocation3 + $0xe0] sm:$0x7] %v7715
        %7853 = vst [vmem:[#allocation3 + $0xe8] sm:$0x7] %v7717
        %7854 = vst [vmem:[#allocation3 + $0x120] sm:$0xfe] %v7723
        %7855 = vst [vmem:[#allocation3 + $0x128] sm:$0xfe] %v7729
        %7856 = vst [vmem:[#allocation3 + $0x160] sm:$0x7] %v7731
        %7857 = vst [vmem:[#allocation3 + $0x168] sm:$0x7] %v7733
        %7858 = vst [vmem:[#allocation3 + $0x1a0] sm:$0xfe] %v7739
        %7859 = vst [vmem:[#allocation3 + $0x1a8] sm:$0xfe] %v7745
        %7860 = vst [vmem:[#allocation3 + $0x1e0] sm:$0x7] %v7747
        %7861 = vst [vmem:[#allocation3 + $0x1e8] sm:$0x7] %v7749
        %7862 = vst [vmem:[#allocation3 + $0x220] sm:$0xfe] %v7755
        %7863 = vst [vmem:[#allocation3 + $0x228] sm:$0xfe] %v7761
        %7864 = vst [vmem:[#allocation3 + $0x260] sm:$0x7] %v7763
        %7865 = vst [vmem:[#allocation3 + $0x268] sm:$0x7] %v7765
        %7866 = vst [vmem:[#allocation3 + $0x2a0] sm:$0xfe] %v7771
        %7867 = vst [vmem:[#allocation3 + $0x2a8] sm:$0xfe] %v7777
        %7868 = vst [vmem:[#allocation3 + $0x2e0] sm:$0x7] %v7779
        %7869 = vst [vmem:[#allocation3 + $0x2e8] sm:$0x7] %v7781
        %7870 = vst [vmem:[#allocation3 + $0x320] sm:$0xfe] %v7787
        %7871 = vst [vmem:[#allocation3 + $0x328] sm:$0xfe] %v7793
        %7872 = vst [vmem:[#allocation3 + $0x360] sm:$0x7] %v7795
        %7873 = vst [vmem:[#allocation3 + $0x368] sm:$0x7] %v7797
        %7874 = vst [vmem:[#allocation3 + $0x3a0] sm:$0xfe] %v7803
        %7875 = vst [vmem:[#allocation3 + $0x3a8] sm:$0xfe] %v7809
        %7876 = vst [vmem:[#allocation3 + $0x3e0] sm:$0x7] %v7811
        %7877 = vst [vmem:[#allocation3 + $0x3e8] sm:$0x7] %v7813
        %v7878 = vsel %vm7307, %v5907, %v5893
        %v7879 = vsel %vm7309, %v5921, %v7878
        %v7880 = vsel %vm7311, %v5935, %v7879
        %v7881 = vsel %vm7295, %v5949, %v7880
        %v7882 = vsel %vm7297, %v5963, %v7881
        %v7883 = vsel %vm7299, %v5977, %v7882
        %v7884 = vsel %vm7301, %v5991, %v7883
        %v7885 = vsel %vm7307, %v5914, %v5900
        %v7886 = vsel %vm7309, %v5928, %v7885
        %v7887 = vsel %vm7311, %v5942, %v7886
        %v7888 = vsel %vm7295, %v5956, %v7887
        %v7889 = vsel %vm7297, %v5970, %v7888
        %v7890 = vsel %vm7299, %v5984, %v7889
        %v7891 = vsel %vm7301, %v5998, %v7890
        %v7892 = vsel %vm7307, %v6019, %v6005
        %v7893 = vsel %vm7307, %v6026, %v6012
        %v7894 = vsel %vm7307, %v6047, %v6033
        %v7895 = vsel %vm7309, %v6061, %v7894
        %v7896 = vsel %vm7311, %v6075, %v7895
        %v7897 = vsel %vm7295, %v6089, %v7896
        %v7898 = vsel %vm7297, %v6103, %v7897
        %v7899 = vsel %vm7299, %v6117, %v7898
        %v7900 = vsel %vm7301, %v6131, %v7899
        %v7901 = vsel %vm7307, %v6054, %v6040
        %v7902 = vsel %vm7309, %v6068, %v7901
        %v7903 = vsel %vm7311, %v6082, %v7902
        %v7904 = vsel %vm7295, %v6096, %v7903
        %v7905 = vsel %vm7297, %v6110, %v7904
        %v7906 = vsel %vm7299, %v6124, %v7905
        %v7907 = vsel %vm7301, %v6138, %v7906
        %v7908 = vsel %vm7307, %v6159, %v6145
        %v7909 = vsel %vm7307, %v6166, %v6152
        %v7910 = vsel %vm7307, %v6187, %v6173
        %v7911 = vsel %vm7309, %v6201, %v7910
        %v7912 = vsel %vm7311, %v6215, %v7911
        %v7913 = vsel %vm7295, %v6229, %v7912
        %v7914 = vsel %vm7297, %v6243, %v7913
        %v7915 = vsel %vm7299, %v6257, %v7914
        %v7916 = vsel %vm7301, %v6271, %v7915
        %v7917 = vsel %vm7307, %v6194, %v6180
        %v7918 = vsel %vm7309, %v6208, %v7917
        %v7919 = vsel %vm7311, %v6222, %v7918
        %v7920 = vsel %vm7295, %v6236, %v7919
        %v7921 = vsel %vm7297, %v6250, %v7920
        %v7922 = vsel %vm7299, %v6264, %v7921
        %v7923 = vsel %vm7301, %v6278, %v7922
        %v7924 = vsel %vm7307, %v6299, %v6285
        %v7925 = vsel %vm7307, %v6306, %v6292
        %v7926 = vsel %vm7307, %v6327, %v6313
        %v7927 = vsel %vm7309, %v6341, %v7926
        %v7928 = vsel %vm7311, %v6355, %v7927
        %v7929 = vsel %vm7295, %v6369, %v7928
        %v7930 = vsel %vm7297, %v6383, %v7929
        %v7931 = vsel %vm7299, %v6397, %v7930
        %v7932 = vsel %vm7301, %v6411, %v7931
        %v7933 = vsel %vm7307, %v6334, %v6320
        %v7934 = vsel %vm7309, %v6348, %v7933
        %v7935 = vsel %vm7311, %v6362, %v7934
        %v7936 = vsel %vm7295, %v6376, %v7935
        %v7937 = vsel %vm7297, %v6390, %v7936
        %v7938 = vsel %vm7299, %v6404, %v7937
        %v7939 = vsel %vm7301, %v6418, %v7938
        %v7940 = vsel %vm7307, %v6439, %v6425
        %v7941 = vsel %vm7307, %v6446, %v6432
        %v7942 = vsel %vm7307, %v6467, %v6453
        %v7943 = vsel %vm7309, %v6481, %v7942
        %v7944 = vsel %vm7311, %v6495, %v7943
        %v7945 = vsel %vm7295, %v6509, %v7944
        %v7946 = vsel %vm7297, %v6523, %v7945
        %v7947 = vsel %vm7299, %v6537, %v7946
        %v7948 = vsel %vm7301, %v6551, %v7947
        %v7949 = vsel %vm7307, %v6474, %v6460
        %v7950 = vsel %vm7309, %v6488, %v7949
        %v7951 = vsel %vm7311, %v6502, %v7950
        %v7952 = vsel %vm7295, %v6516, %v7951
        %v7953 = vsel %vm7297, %v6530, %v7952
        %v7954 = vsel %vm7299, %v6544, %v7953
        %v7955 = vsel %vm7301, %v6558, %v7954
        %v7956 = vsel %vm7307, %v6579, %v6565
        %v7957 = vsel %vm7307, %v6586, %v6572
        %v7958 = vsel %vm7307, %v6607, %v6593
        %v7959 = vsel %vm7309, %v6621, %v7958
        %v7960 = vsel %vm7311, %v6635, %v7959
        %v7961 = vsel %vm7295, %v6649, %v7960
        %v7962 = vsel %vm7297, %v6663, %v7961
        %v7963 = vsel %vm7299, %v6677, %v7962
        %v7964 = vsel %vm7301, %v6691, %v7963
        %v7965 = vsel %vm7307, %v6614, %v6600
        %v7966 = vsel %vm7309, %v6628, %v7965
        %v7967 = vsel %vm7311, %v6642, %v7966
        %v7968 = vsel %vm7295, %v6656, %v7967
        %v7969 = vsel %vm7297, %v6670, %v7968
        %v7970 = vsel %vm7299, %v6684, %v7969
        %v7971 = vsel %vm7301, %v6698, %v7970
        %v7972 = vsel %vm7307, %v6719, %v6705
        %v7973 = vsel %vm7307, %v6726, %v6712
        %v7974 = vsel %vm7307, %v6747, %v6733
        %v7975 = vsel %vm7309, %v6761, %v7974
        %v7976 = vsel %vm7311, %v6775, %v7975
        %v7977 = vsel %vm7295, %v6789, %v7976
        %v7978 = vsel %vm7297, %v6803, %v7977
        %v7979 = vsel %vm7299, %v6817, %v7978
        %v7980 = vsel %vm7301, %v6831, %v7979
        %v7981 = vsel %vm7307, %v6754, %v6740
        %v7982 = vsel %vm7309, %v6768, %v7981
        %v7983 = vsel %vm7311, %v6782, %v7982
        %v7984 = vsel %vm7295, %v6796, %v7983
        %v7985 = vsel %vm7297, %v6810, %v7984
        %v7986 = vsel %vm7299, %v6824, %v7985
        %v7987 = vsel %vm7301, %v6838, %v7986
        %v7988 = vsel %vm7307, %v6859, %v6845
        %v7989 = vsel %vm7307, %v6866, %v6852
        %v7990 = vsel %vm7307, %v6887, %v6873
        %v7991 = vsel %vm7309, %v6901, %v7990
        %v7992 = vsel %vm7311, %v6915, %v7991
        %v7993 = vsel %vm7295, %v6929, %v7992
        %v7994 = vsel %vm7297, %v6943, %v7993
        %v7995 = vsel %vm7299, %v6957, %v7994
        %v7996 = vsel %vm7301, %v6971, %v7995
        %v7997 = vsel %vm7307, %v6894, %v6880
        %v7998 = vsel %vm7309, %v6908, %v7997
        %v7999 = vsel %vm7311, %v6922, %v7998
        %v8000 = vsel %vm7295, %v6936, %v7999
        %v8001 = vsel %vm7297, %v6950, %v8000
        %v8002 = vsel %vm7299, %v6964, %v8001
        %v8003 = vsel %vm7301, %v6978, %v8002
        %v8004 = vsel %vm7307, %v6999, %v6985
        %v8005 = vsel %vm7307, %v7006, %v6992
        %8038 = vst [vmem:[#allocation3 + $0x30] sm:$0xff] %v7884
        %8039 = vst [vmem:[#allocation3 + $0x38] sm:$0xff] %v7891
        %8040 = vst [vmem:[#allocation3 + $0x70] sm:$0x3] %v7892
        %8041 = vst [vmem:[#allocation3 + $0x78] sm:$0x3] %v7893
        %8042 = vst [vmem:[#allocation3 + $0xb0] sm:$0xff] %v7900
        %8043 = vst [vmem:[#allocation3 + $0xb8] sm:$0xff] %v7907
        %8044 = vst [vmem:[#allocation3 + $0xf0] sm:$0x3] %v7908
        %8045 = vst [vmem:[#allocation3 + $0xf8] sm:$0x3] %v7909
        %8046 = vst [vmem:[#allocation3 + $0x130] sm:$0xff] %v7916
        %8047 = vst [vmem:[#allocation3 + $0x138] sm:$0xff] %v7923
        %8048 = vst [vmem:[#allocation3 + $0x170] sm:$0x3] %v7924
        %8049 = vst [vmem:[#allocation3 + $0x178] sm:$0x3] %v7925
        %8050 = vst [vmem:[#allocation3 + $0x1b0] sm:$0xff] %v7932
        %8051 = vst [vmem:[#allocation3 + $0x1b8] sm:$0xff] %v7939
        %8052 = vst [vmem:[#allocation3 + $0x1f0] sm:$0x3] %v7940
        %8053 = vst [vmem:[#allocation3 + $0x1f8] sm:$0x3] %v7941
        %8054 = vst [vmem:[#allocation3 + $0x230] sm:$0xff] %v7948
        %8055 = vst [vmem:[#allocation3 + $0x238] sm:$0xff] %v7955
        %8056 = vst [vmem:[#allocation3 + $0x270] sm:$0x3] %v7956
        %8057 = vst [vmem:[#allocation3 + $0x278] sm:$0x3] %v7957
        %8058 = vst [vmem:[#allocation3 + $0x2b0] sm:$0xff] %v7964
        %8059 = vst [vmem:[#allocation3 + $0x2b8] sm:$0xff] %v7971
        %8060 = vst [vmem:[#allocation3 + $0x2f0] sm:$0x3] %v7972
        %8061 = vst [vmem:[#allocation3 + $0x2f8] sm:$0x3] %v7973
        %8062 = vst [vmem:[#allocation3 + $0x330] sm:$0xff] %v7980
        %8063 = vst [vmem:[#allocation3 + $0x338] sm:$0xff] %v7987
        %8064 = vst [vmem:[#allocation3 + $0x370] sm:$0x3] %v7988
        %8065 = vst [vmem:[#allocation3 + $0x378] sm:$0x3] %v7989
        %8066 = vst [vmem:[#allocation3 + $0x3b0] sm:$0xff] %v7996
        %8067 = vst [vmem:[#allocation3 + $0x3b8] sm:$0xff] %v8003
        %8068 = vst [vmem:[#allocation3 + $0x3f0] sm:$0x3] %v8004
        %8069 = vst [vmem:[#allocation3 + $0x3f8] sm:$0x3] %v8005
        %v8070 = vld [vmem:[#allocation3] sm:$0xff]
        %v8071 = vld [vmem:[#allocation3 + $0x8] sm:$0xff]
        %v8072 = vld [vmem:[#allocation3 + $0x10] sm:$0xff]
        %v8073 = vld [vmem:[#allocation3 + $0x18] sm:$0xff]
        %v8074 = vld [vmem:[#allocation3 + $0x20] sm:$0xff]
        %v8075 = vld [vmem:[#allocation3 + $0x28] sm:$0xff]
        %v8076 = vld [vmem:[#allocation3 + $0x30] sm:$0xff]
        %v8077 = vld [vmem:[#allocation3 + $0x38] sm:$0xff]
        %v8078 = vld [vmem:[#allocation3 + $0x40] sm:$0xff]
        %v8079 = vld [vmem:[#allocation3 + $0x48] sm:$0xff]
        %v8080 = vld [vmem:[#allocation3 + $0x50] sm:$0xff]
        %v8081 = vld [vmem:[#allocation3 + $0x58] sm:$0xff]
        %v8082 = vld [vmem:[#allocation3 + $0x60] sm:$0xff]
        %v8083 = vld [vmem:[#allocation3 + $0x68] sm:$0xff]
        %v8084 = vld [vmem:[#allocation3 + $0x70] sm:$0xff]
        %v8085 = vld [vmem:[#allocation3 + $0x78] sm:$0xff]
        %v8086 = vld [vmem:[#allocation3 + $0x80] sm:$0xff]
        %v8087 = vld [vmem:[#allocation3 + $0x88] sm:$0xff]
        %v8088 = vld [vmem:[#allocation3 + $0x90] sm:$0xff]
        %v8089 = vld [vmem:[#allocation3 + $0x98] sm:$0xff]
        %v8090 = vld [vmem:[#allocation3 + $0xa0] sm:$0xff]
        %v8091 = vld [vmem:[#allocation3 + $0xa8] sm:$0xff]
        %v8092 = vld [vmem:[#allocation3 + $0xb0] sm:$0xff]
        %v8093 = vld [vmem:[#allocation3 + $0xb8] sm:$0xff]
        %v8094 = vld [vmem:[#allocation3 + $0xc0] sm:$0xff]
        %v8095 = vld [vmem:[#allocation3 + $0xc8] sm:$0xff]
        %v8096 = vld [vmem:[#allocation3 + $0xd0] sm:$0xff]
        %v8097 = vld [vmem:[#allocation3 + $0xd8] sm:$0xff]
        %v8098 = vld [vmem:[#allocation3 + $0xe0] sm:$0xff]
        %v8099 = vld [vmem:[#allocation3 + $0xe8] sm:$0xff]
        %v8100 = vld [vmem:[#allocation3 + $0xf0] sm:$0xff]
        %v8101 = vld [vmem:[#allocation3 + $0xf8] sm:$0xff]
        %v8102 = vld [vmem:[#allocation3 + $0x100] sm:$0xff]
        %v8103 = vld [vmem:[#allocation3 + $0x108] sm:$0xff]
        %v8104 = vld [vmem:[#allocation3 + $0x110] sm:$0xff]
        %v8105 = vld [vmem:[#allocation3 + $0x118] sm:$0xff]
        %v8106 = vld [vmem:[#allocation3 + $0x120] sm:$0xff]
        %v8107 = vld [vmem:[#allocation3 + $0x128] sm:$0xff]
        %v8108 = vld [vmem:[#allocation3 + $0x130] sm:$0xff]
        %v8109 = vld [vmem:[#allocation3 + $0x138] sm:$0xff]
        %v8110 = vld [vmem:[#allocation3 + $0x140] sm:$0xff]
        %v8111 = vld [vmem:[#allocation3 + $0x148] sm:$0xff]
        %v8112 = vld [vmem:[#allocation3 + $0x150] sm:$0xff]
        %v8113 = vld [vmem:[#allocation3 + $0x158] sm:$0xff]
        %v8114 = vld [vmem:[#allocation3 + $0x160] sm:$0xff]
        %v8115 = vld [vmem:[#allocation3 + $0x168] sm:$0xff]
        %v8116 = vld [vmem:[#allocation3 + $0x170] sm:$0xff]
        %v8117 = vld [vmem:[#allocation3 + $0x178] sm:$0xff]
        %v8118 = vld [vmem:[#allocation3 + $0x180] sm:$0xff]
        %v8119 = vld [vmem:[#allocation3 + $0x188] sm:$0xff]
        %v8120 = vld [vmem:[#allocation3 + $0x190] sm:$0xff]
        %v8121 = vld [vmem:[#allocation3 + $0x198] sm:$0xff]
        %v8122 = vld [vmem:[#allocation3 + $0x1a0] sm:$0xff]
        %v8123 = vld [vmem:[#allocation3 + $0x1a8] sm:$0xff]
        %v8124 = vld [vmem:[#allocation3 + $0x1b0] sm:$0xff]
        %v8125 = vld [vmem:[#allocation3 + $0x1b8] sm:$0xff]
        %v8126 = vld [vmem:[#allocation3 + $0x1c0] sm:$0xff]
        %v8127 = vld [vmem:[#allocation3 + $0x1c8] sm:$0xff]
        %v8128 = vld [vmem:[#allocation3 + $0x1d0] sm:$0xff]
        %v8129 = vld [vmem:[#allocation3 + $0x1d8] sm:$0xff]
        %v8130 = vld [vmem:[#allocation3 + $0x1e0] sm:$0xff]
        %v8131 = vld [vmem:[#allocation3 + $0x1e8] sm:$0xff]
        %v8132 = vld [vmem:[#allocation3 + $0x1f0] sm:$0xff]
        %v8133 = vld [vmem:[#allocation3 + $0x1f8] sm:$0xff]
        %v8134 = vld [vmem:[#allocation3 + $0x200] sm:$0xff]
        %v8135 = vld [vmem:[#allocation3 + $0x208] sm:$0xff]
        %v8136 = vld [vmem:[#allocation3 + $0x210] sm:$0xff]
        %v8137 = vld [vmem:[#allocation3 + $0x218] sm:$0xff]
        %v8138 = vld [vmem:[#allocation3 + $0x220] sm:$0xff]
        %v8139 = vld [vmem:[#allocation3 + $0x228] sm:$0xff]
        %v8140 = vld [vmem:[#allocation3 + $0x230] sm:$0xff]
        %v8141 = vld [vmem:[#allocation3 + $0x238] sm:$0xff]
        %v8142 = vld [vmem:[#allocation3 + $0x240] sm:$0xff]
        %v8143 = vld [vmem:[#allocation3 + $0x248] sm:$0xff]
        %v8144 = vld [vmem:[#allocation3 + $0x250] sm:$0xff]
        %v8145 = vld [vmem:[#allocation3 + $0x258] sm:$0xff]
        %v8146 = vld [vmem:[#allocation3 + $0x260] sm:$0xff]
        %v8147 = vld [vmem:[#allocation3 + $0x268] sm:$0xff]
        %v8148 = vld [vmem:[#allocation3 + $0x270] sm:$0xff]
        %v8149 = vld [vmem:[#allocation3 + $0x278] sm:$0xff]
        %v8150 = vld [vmem:[#allocation3 + $0x280] sm:$0xff]
        %v8151 = vld [vmem:[#allocation3 + $0x288] sm:$0xff]
        %v8152 = vld [vmem:[#allocation3 + $0x290] sm:$0xff]
        %v8153 = vld [vmem:[#allocation3 + $0x298] sm:$0xff]
        %v8154 = vld [vmem:[#allocation3 + $0x2a0] sm:$0xff]
        %v8155 = vld [vmem:[#allocation3 + $0x2a8] sm:$0xff]
        %v8156 = vld [vmem:[#allocation3 + $0x2b0] sm:$0xff]
        %v8157 = vld [vmem:[#allocation3 + $0x2b8] sm:$0xff]
        %v8158 = vld [vmem:[#allocation3 + $0x2c0] sm:$0xff]
        %v8159 = vld [vmem:[#allocation3 + $0x2c8] sm:$0xff]
        %v8160 = vld [vmem:[#allocation3 + $0x2d0] sm:$0xff]
        %v8161 = vld [vmem:[#allocation3 + $0x2d8] sm:$0xff]
        %v8162 = vld [vmem:[#allocation3 + $0x2e0] sm:$0xff]
        %v8163 = vld [vmem:[#allocation3 + $0x2e8] sm:$0xff]
        %v8164 = vld [vmem:[#allocation3 + $0x2f0] sm:$0xff]
        %v8165 = vld [vmem:[#allocation3 + $0x2f8] sm:$0xff]
        %v8166 = vld [vmem:[#allocation3 + $0x300] sm:$0xff]
        %v8167 = vld [vmem:[#allocation3 + $0x308] sm:$0xff]
        %v8168 = vld [vmem:[#allocation3 + $0x310] sm:$0xff]
        %v8169 = vld [vmem:[#allocation3 + $0x318] sm:$0xff]
        %v8170 = vld [vmem:[#allocation3 + $0x320] sm:$0xff]
        %v8171 = vld [vmem:[#allocation3 + $0x328] sm:$0xff]
        %v8172 = vld [vmem:[#allocation3 + $0x330] sm:$0xff]
        %v8173 = vld [vmem:[#allocation3 + $0x338] sm:$0xff]
        %v8174 = vld [vmem:[#allocation3 + $0x340] sm:$0xff]
        %v8175 = vld [vmem:[#allocation3 + $0x348] sm:$0xff]
        %v8176 = vld [vmem:[#allocation3 + $0x350] sm:$0xff]
        %v8177 = vld [vmem:[#allocation3 + $0x358] sm:$0xff]
        %v8178 = vld [vmem:[#allocation3 + $0x360] sm:$0xff]
        %v8179 = vld [vmem:[#allocation3 + $0x368] sm:$0xff]
        %v8180 = vld [vmem:[#allocation3 + $0x370] sm:$0xff]
        %v8181 = vld [vmem:[#allocation3 + $0x378] sm:$0xff]
        %v8182 = vld [vmem:[#allocation3 + $0x380] sm:$0xff]
        %v8183 = vld [vmem:[#allocation3 + $0x388] sm:$0xff]
        %v8184 = vld [vmem:[#allocation3 + $0x390] sm:$0xff]
        %v8185 = vld [vmem:[#allocation3 + $0x398] sm:$0xff]
        %v8186 = vld [vmem:[#allocation3 + $0x3a0] sm:$0xff]
        %v8187 = vld [vmem:[#allocation3 + $0x3a8] sm:$0xff]
        %v8188 = vld [vmem:[#allocation3 + $0x3b0] sm:$0xff]
        %v8189 = vld [vmem:[#allocation3 + $0x3b8] sm:$0xff]
        %v8190 = vld [vmem:[#allocation3 + $0x3c0] sm:$0xff]
        %v8191 = vld [vmem:[#allocation3 + $0x3c8] sm:$0xff]
        %v8192 = vld [vmem:[#allocation3 + $0x3d0] sm:$0xff]
        %v8193 = vld [vmem:[#allocation3 + $0x3d8] sm:$0xff]
        %v8194 = vld [vmem:[#allocation3 + $0x3e0] sm:$0xff]
        %v8195 = vld [vmem:[#allocation3 + $0x3e8] sm:$0xff]
        %v8196 = vld [vmem:[#allocation3 + $0x3f0] sm:$0xff]
        %v8197 = vld [vmem:[#allocation3 + $0x3f8] sm:$0xff]
        %v8198 = vld [vmem:[#allocation5] sm:$0xff]
        %v8199 = vld [vmem:[#allocation5 + $0x8] sm:$0xff]
        %v8200 = vld [vmem:[#allocation5 + $0x10] sm:$0xff]
        %v8201 = vld [vmem:[#allocation5 + $0x18] sm:$0xff]
        %v8202 = vld [vmem:[#allocation5 + $0x20] sm:$0xff]
        %v8203 = vld [vmem:[#allocation5 + $0x28] sm:$0xff]
        %v8204 = vld [vmem:[#allocation5 + $0x30] sm:$0xff]
        %v8205 = vld [vmem:[#allocation5 + $0x38] sm:$0xff]
        %v8206 = vld [vmem:[#allocation5 + $0x40] sm:$0xff]
        %v8207 = vld [vmem:[#allocation5 + $0x48] sm:$0xff]
        %v8208 = vld [vmem:[#allocation5 + $0x50] sm:$0xff]
        %v8209 = vld [vmem:[#allocation5 + $0x58] sm:$0xff]
        %v8210 = vld [vmem:[#allocation5 + $0x60] sm:$0xff]
        %v8211 = vld [vmem:[#allocation5 + $0x68] sm:$0xff]
        %v8212 = vld [vmem:[#allocation5 + $0x70] sm:$0xff]
        %v8213 = vld [vmem:[#allocation5 + $0x78] sm:$0xff]
        %v8214 = vld [vmem:[#allocation5 + $0x80] sm:$0xff]
        %v8215 = vld [vmem:[#allocation5 + $0x88] sm:$0xff]
        %v8216 = vld [vmem:[#allocation5 + $0x90] sm:$0xff]
        %v8217 = vld [vmem:[#allocation5 + $0x98] sm:$0xff]
        %v8218 = vld [vmem:[#allocation5 + $0xa0] sm:$0xff]
        %v8219 = vld [vmem:[#allocation5 + $0xa8] sm:$0xff]
        %v8220 = vld [vmem:[#allocation5 + $0xb0] sm:$0xff]
        %v8221 = vld [vmem:[#allocation5 + $0xb8] sm:$0xff]
        %v8222 = vld [vmem:[#allocation5 + $0xc0] sm:$0xff]
        %v8223 = vld [vmem:[#allocation5 + $0xc8] sm:$0xff]
        %v8224 = vld [vmem:[#allocation5 + $0xd0] sm:$0xff]
        %v8225 = vld [vmem:[#allocation5 + $0xd8] sm:$0xff]
        %v8226 = vld [vmem:[#allocation5 + $0xe0] sm:$0xff]
        %v8227 = vld [vmem:[#allocation5 + $0xe8] sm:$0xff]
        %v8228 = vld [vmem:[#allocation5 + $0xf0] sm:$0xff]
        %v8229 = vld [vmem:[#allocation5 + $0xf8] sm:$0xff]
        %v8230 = vld [vmem:[#allocation5 + $0x100] sm:$0xff]
        %v8231 = vld [vmem:[#allocation5 + $0x108] sm:$0xff]
        %v8232 = vld [vmem:[#allocation5 + $0x110] sm:$0xff]
        %v8233 = vld [vmem:[#allocation5 + $0x118] sm:$0xff]
        %v8234 = vld [vmem:[#allocation5 + $0x120] sm:$0xff]
        %v8235 = vld [vmem:[#allocation5 + $0x128] sm:$0xff]
        %v8236 = vld [vmem:[#allocation5 + $0x130] sm:$0xff]
        %v8237 = vld [vmem:[#allocation5 + $0x138] sm:$0xff]
        %v8238 = vld [vmem:[#allocation5 + $0x140] sm:$0xff]
        %v8239 = vld [vmem:[#allocation5 + $0x148] sm:$0xff]
        %v8240 = vld [vmem:[#allocation5 + $0x150] sm:$0xff]
        %v8241 = vld [vmem:[#allocation5 + $0x158] sm:$0xff]
        %v8242 = vld [vmem:[#allocation5 + $0x160] sm:$0xff]
        %v8243 = vld [vmem:[#allocation5 + $0x168] sm:$0xff]
        %v8244 = vld [vmem:[#allocation5 + $0x170] sm:$0xff]
        %v8245 = vld [vmem:[#allocation5 + $0x178] sm:$0xff]
        %v8246 = vld [vmem:[#allocation5 + $0x180] sm:$0xff]
        %v8247 = vld [vmem:[#allocation5 + $0x188] sm:$0xff]
        %v8248 = vld [vmem:[#allocation5 + $0x190] sm:$0xff]
        %v8249 = vld [vmem:[#allocation5 + $0x198] sm:$0xff]
        %v8250 = vld [vmem:[#allocation5 + $0x1a0] sm:$0xff]
        %v8251 = vld [vmem:[#allocation5 + $0x1a8] sm:$0xff]
        %v8252 = vld [vmem:[#allocation5 + $0x1b0] sm:$0xff]
        %v8253 = vld [vmem:[#allocation5 + $0x1b8] sm:$0xff]
        %v8254 = vld [vmem:[#allocation5 + $0x1c0] sm:$0xff]
        %v8255 = vld [vmem:[#allocation5 + $0x1c8] sm:$0xff]
        %v8256 = vld [vmem:[#allocation5 + $0x1d0] sm:$0xff]
        %v8257 = vld [vmem:[#allocation5 + $0x1d8] sm:$0xff]
        %v8258 = vld [vmem:[#allocation5 + $0x1e0] sm:$0xff]
        %v8259 = vld [vmem:[#allocation5 + $0x1e8] sm:$0xff]
        %v8260 = vld [vmem:[#allocation5 + $0x1f0] sm:$0xff]
        %v8261 = vld [vmem:[#allocation5 + $0x1f8] sm:$0xff]
        %v8262 = vld [vmem:[#allocation5 + $0x200] sm:$0xff]
        %v8263 = vld [vmem:[#allocation5 + $0x208] sm:$0xff]
        %v8264 = vld [vmem:[#allocation5 + $0x210] sm:$0xff]
        %v8265 = vld [vmem:[#allocation5 + $0x218] sm:$0xff]
        %v8266 = vld [vmem:[#allocation5 + $0x220] sm:$0xff]
        %v8267 = vld [vmem:[#allocation5 + $0x228] sm:$0xff]
        %v8268 = vld [vmem:[#allocation5 + $0x230] sm:$0xff]
        %v8269 = vld [vmem:[#allocation5 + $0x238] sm:$0xff]
        %v8270 = vld [vmem:[#allocation5 + $0x240] sm:$0xff]
        %v8271 = vld [vmem:[#allocation5 + $0x248] sm:$0xff]
        %v8272 = vld [vmem:[#allocation5 + $0x250] sm:$0xff]
        %v8273 = vld [vmem:[#allocation5 + $0x258] sm:$0xff]
        %v8274 = vld [vmem:[#allocation5 + $0x260] sm:$0xff]
        %v8275 = vld [vmem:[#allocation5 + $0x268] sm:$0xff]
        %v8276 = vld [vmem:[#allocation5 + $0x270] sm:$0xff]
        %v8277 = vld [vmem:[#allocation5 + $0x278] sm:$0xff]
        %v8278 = vld [vmem:[#allocation5 + $0x280] sm:$0xff]
        %v8279 = vld [vmem:[#allocation5 + $0x288] sm:$0xff]
        %v8280 = vld [vmem:[#allocation5 + $0x290] sm:$0xff]
        %v8281 = vld [vmem:[#allocation5 + $0x298] sm:$0xff]
        %v8282 = vld [vmem:[#allocation5 + $0x2a0] sm:$0xff]
        %v8283 = vld [vmem:[#allocation5 + $0x2a8] sm:$0xff]
        %v8284 = vld [vmem:[#allocation5 + $0x2b0] sm:$0xff]
        %v8285 = vld [vmem:[#allocation5 + $0x2b8] sm:$0xff]
        %v8286 = vld [vmem:[#allocation5 + $0x2c0] sm:$0xff]
        %v8287 = vld [vmem:[#allocation5 + $0x2c8] sm:$0xff]
        %v8288 = vld [vmem:[#allocation5 + $0x2d0] sm:$0xff]
        %v8289 = vld [vmem:[#allocation5 + $0x2d8] sm:$0xff]
        %v8290 = vld [vmem:[#allocation5 + $0x2e0] sm:$0xff]
        %v8291 = vld [vmem:[#allocation5 + $0x2e8] sm:$0xff]
        %v8292 = vld [vmem:[#allocation5 + $0x2f0] sm:$0xff]
        %v8293 = vld [vmem:[#allocation5 + $0x2f8] sm:$0xff]
        %v8294 = vld [vmem:[#allocation5 + $0x300] sm:$0xff]
        %v8295 = vld [vmem:[#allocation5 + $0x308] sm:$0xff]
        %v8296 = vld [vmem:[#allocation5 + $0x310] sm:$0xff]
        %v8297 = vld [vmem:[#allocation5 + $0x318] sm:$0xff]
        %v8298 = vld [vmem:[#allocation5 + $0x320] sm:$0xff]
        %v8299 = vld [vmem:[#allocation5 + $0x328] sm:$0xff]
        %v8300 = vld [vmem:[#allocation5 + $0x330] sm:$0xff]
        %v8301 = vld [vmem:[#allocation5 + $0x338] sm:$0xff]
        %v8302 = vld [vmem:[#allocation5 + $0x340] sm:$0xff]
        %v8303 = vld [vmem:[#allocation5 + $0x348] sm:$0xff]
        %v8304 = vld [vmem:[#allocation5 + $0x350] sm:$0xff]
        %v8305 = vld [vmem:[#allocation5 + $0x358] sm:$0xff]
        %v8306 = vld [vmem:[#allocation5 + $0x360] sm:$0xff]
        %v8307 = vld [vmem:[#allocation5 + $0x368] sm:$0xff]
        %v8308 = vld [vmem:[#allocation5 + $0x370] sm:$0xff]
        %v8309 = vld [vmem:[#allocation5 + $0x378] sm:$0xff]
        %v8310 = vld [vmem:[#allocation5 + $0x380] sm:$0xff]
        %v8311 = vld [vmem:[#allocation5 + $0x388] sm:$0xff]
        %v8312 = vld [vmem:[#allocation5 + $0x390] sm:$0xff]
        %v8313 = vld [vmem:[#allocation5 + $0x398] sm:$0xff]
        %v8314 = vld [vmem:[#allocation5 + $0x3a0] sm:$0xff]
        %v8315 = vld [vmem:[#allocation5 + $0x3a8] sm:$0xff]
        %v8316 = vld [vmem:[#allocation5 + $0x3b0] sm:$0xff]
        %v8317 = vld [vmem:[#allocation5 + $0x3b8] sm:$0xff]
        %v8318 = vld [vmem:[#allocation5 + $0x3c0] sm:$0xff]
        %v8319 = vld [vmem:[#allocation5 + $0x3c8] sm:$0xff]
        %v8320 = vld [vmem:[#allocation5 + $0x3d0] sm:$0xff]
        %v8321 = vld [vmem:[#allocation5 + $0x3d8] sm:$0xff]
        %v8322 = vld [vmem:[#allocation5 + $0x3e0] sm:$0xff]
        %v8323 = vld [vmem:[#allocation5 + $0x3e8] sm:$0xff]
        %v8324 = vld [vmem:[#allocation5 + $0x3f0] sm:$0xff]
        %v8325 = vld [vmem:[#allocation5 + $0x3f8] sm:$0xff]
        %8326 = vmatprep.subr.mxu0 0.0
        %8327 = vmatpush1.msra.mxu0 %v8198
        %8328 = vmatprep.subr.mxu0 0.0
        %8329 = vmatpush1.msra.mxu0 %v8199
        %8330 = vmatprep.subr.mxu0 0.0
        %8331 = vmatpush1.msra.mxu0 %v8200
        %8332 = vmatprep.subr.mxu0 0.0
        %8333 = vmatpush1.msra.mxu0 %v8201
        %8334 = vmatprep.subr.mxu0 0.0
        %8335 = vmatpush1.msra.mxu0 %v8202
        %8336 = vmatprep.subr.mxu0 0.0
        %8337 = vmatpush1.msra.mxu0 %v8203
        %8338 = vmatprep.subr.mxu0 0.0
        %8339 = vmatpush1.msra.mxu0 %v8204
        %8340 = vmatprep.subr.mxu0 0.0
        %8341 = vmatpush1.msra.mxu0 %v8205
        %8342 = vmatprep.subr.mxu0 0.0
        %8343 = vmatpush1.msra.mxu0 %v8206
        %8344 = vmatprep.subr.mxu0 0.0
        %8345 = vmatpush1.msra.mxu0 %v8207
        %8346 = vmatprep.subr.mxu0 0.0
        %8347 = vmatpush1.msra.mxu0 %v8208
        %8348 = vmatprep.subr.mxu0 0.0
        %8349 = vmatpush1.msra.mxu0 %v8209
        %8350 = vmatprep.subr.mxu0 0.0
        %8351 = vmatpush1.msra.mxu0 %v8210
        %8352 = vmatprep.subr.mxu0 0.0
        %8353 = vmatpush1.msra.mxu0 %v8211
        %8354 = vmatprep.subr.mxu0 0.0
        %8355 = vmatpush1.msra.mxu0 %v8212
        %8356 = vmatprep.subr.mxu0 0.0
        %8357 = vmatpush1.msra.mxu0 %v8213
        %8358 = vmatprep.subr.mxu0 0.0
        %8359 = vmatpush1.msra.mxu0 %v8214
        %8360 = vmatprep.subr.mxu0 0.0
        %8361 = vmatpush1.msra.mxu0 %v8215
        %8362 = vmatprep.subr.mxu0 0.0
        %8363 = vmatpush1.msra.mxu0 %v8216
        %8364 = vmatprep.subr.mxu0 0.0
        %8365 = vmatpush1.msra.mxu0 %v8217
        %8366 = vmatprep.subr.mxu0 0.0
        %8367 = vmatpush1.msra.mxu0 %v8218
        %8368 = vmatprep.subr.mxu0 0.0
        %8369 = vmatpush1.msra.mxu0 %v8219
        %8370 = vmatprep.subr.mxu0 0.0
        %8371 = vmatpush1.msra.mxu0 %v8220
        %8372 = vmatprep.subr.mxu0 0.0
        %8373 = vmatpush1.msra.mxu0 %v8221
        %8374 = vmatprep.subr.mxu0 0.0
        %8375 = vmatpush1.msra.mxu0 %v8222
        %8376 = vmatprep.subr.mxu0 0.0
        %8377 = vmatpush1.msra.mxu0 %v8223
        %8378 = vmatprep.subr.mxu0 0.0
        %8379 = vmatpush1.msra.mxu0 %v8224
        %8380 = vmatprep.subr.mxu0 0.0
        %8381 = vmatpush1.msra.mxu0 %v8225
        %8382 = vmatprep.subr.mxu0 0.0
        %8383 = vmatpush1.msra.mxu0 %v8226
        %8384 = vmatprep.subr.mxu0 0.0
        %8385 = vmatpush1.msra.mxu0 %v8227
        %8386 = vmatprep.subr.mxu0 0.0
        %8387 = vmatpush1.msra.mxu0 %v8228
        %8388 = vmatprep.subr.mxu0 0.0
        %8389 = vmatpush1.msra.mxu0 %v8229
        %8390 = vmatprep.mubr.f32.mxu0 %v8071
        %8391 = vmatmul.mubr.f32.gmra.mrb[0].mxu0 %v8070
        %v8392 = vpop.f32.mrb[0].mxu0
        %v8393 = vadd.f32 0.0, %v8392
        %v8394 = vpop.f32.mrb[0].mxu0
        %8395 = vmatprep.mubr.f32.mxu0 %v8079
        %8396 = vmatmul.mubr.f32.gmra.mrb[0].mxu0 %v8078
        %v8397 = vpop.f32.mrb[0].mxu0
        %v8398 = vadd.f32 0.0, %v8397
        %v8399 = vpop.f32.mrb[0].mxu0
        %8400 = vmatprep.mubr.f32.mxu0 %v8087
        %8401 = vmatmul.mubr.f32.gmra.mrb[0].mxu0 %v8086
        %v8402 = vpop.f32.mrb[0].mxu0
        %v8403 = vadd.f32 0.0, %v8402
        %v8404 = vpop.f32.mrb[0].mxu0
        %8405 = vmatprep.mubr.f32.mxu0 %v8095
        %8406 = vmatmul.mubr.f32.gmra.mrb[0].mxu0 %v8094
        %v8407 = vpop.f32.mrb[0].mxu0
        %v8408 = vadd.f32 0.0, %v8407
        %v8409 = vpop.f32.mrb[0].mxu0
        %8410 = vmatprep.mubr.f32.mxu0 %v8103
        %8411 = vmatmul.mubr.f32.gmra.mrb[0].mxu0 %v8102
        %v8412 = vpop.f32.mrb[0].mxu0
        %v8413 = vadd.f32 0.0, %v8412
        %v8414 = vpop.f32.mrb[0].mxu0
        %8415 = vmatprep.mubr.f32.mxu0 %v8111
        %8416 = vmatmul.mubr.f32.gmra.mrb[0].mxu0 %v8110
        %v8417 = vpop.f32.mrb[0].mxu0
        %v8418 = vadd.f32 0.0, %v8417
        %v8419 = vpop.f32.mrb[0].mxu0
        %8420 = vmatprep.mubr.f32.mxu0 %v8119
        %8421 = vmatmul.mubr.f32.gmra.mrb[0].mxu0 %v8118
        %v8422 = vpop.f32.mrb[0].mxu0
        %v8423 = vadd.f32 0.0, %v8422
        %v8424 = vpop.f32.mrb[0].mxu0
        %8425 = vmatprep.mubr.f32.mxu0 %v8127
        %8426 = vmatmul.mubr.f32.gmra.mrb[0].mxu0 %v8126
        %v8427 = vpop.f32.mrb[0].mxu0
        %v8428 = vadd.f32 0.0, %v8427
        %v8429 = vpop.f32.mrb[0].mxu0
        %8430 = vmatprep.mubr.f32.mxu0 %v8135
        %8431 = vmatmul.mubr.f32.gmra.mrb[0].mxu0 %v8134
        %v8432 = vpop.f32.mrb[0].mxu0
        %v8433 = vadd.f32 0.0, %v8432
        %v8434 = vpop.f32.mrb[0].mxu0
        %8435 = vmatprep.mubr.f32.mxu0 %v8143
        %8436 = vmatmul.mubr.f32.gmra.mrb[0].mxu0 %v8142
        %v8437 = vpop.f32.mrb[0].mxu0
        %v8438 = vadd.f32 0.0, %v8437
        %v8439 = vpop.f32.mrb[0].mxu0
        %8440 = vmatprep.mubr.f32.mxu0 %v8151
        %8441 = vmatmul.mubr.f32.gmra.mrb[0].mxu0 %v8150
        %v8442 = vpop.f32.mrb[0].mxu0
        %v8443 = vadd.f32 0.0, %v8442
        %v8444 = vpop.f32.mrb[0].mxu0
        %8445 = vmatprep.mubr.f32.mxu0 %v8159
        %8446 = vmatmul.mubr.f32.gmra.mrb[0].mxu0 %v8158
        %v8447 = vpop.f32.mrb[0].mxu0
        %v8448 = vadd.f32 0.0, %v8447
        %v8449 = vpop.f32.mrb[0].mxu0
        %8450 = vmatprep.mubr.f32.mxu0 %v8167
        %8451 = vmatmul.mubr.f32.gmra.mrb[0].mxu0 %v8166
        %v8452 = vpop.f32.mrb[0].mxu0
        %v8453 = vadd.f32 0.0, %v8452
        %v8454 = vpop.f32.mrb[0].mxu0
        %8455 = vmatprep.mubr.f32.mxu0 %v8175
        %8456 = vmatmul.mubr.f32.gmra.mrb[0].mxu0 %v8174
        %v8457 = vpop.f32.mrb[0].mxu0
        %v8458 = vadd.f32 0.0, %v8457
        %v8459 = vpop.f32.mrb[0].mxu0
        %8460 = vmatprep.mubr.f32.mxu0 %v8183
        %8461 = vmatmul.mubr.f32.gmra.mrb[0].mxu0 %v8182
        %v8462 = vpop.f32.mrb[0].mxu0
        %v8463 = vadd.f32 0.0, %v8462
        %v8464 = vpop.f32.mrb[0].mxu0
        %8465 = vmatprep.mubr.f32.mxu0 %v8191
        %8466 = vmatmul.mubr.f32.gmra.mrb[0].mxu0 %v8190
        %v8467 = vpop.f32.mrb[0].mxu0
        %v8468 = vadd.f32 0.0, %v8467
        %v8469 = vpop.f32.mrb[0].mxu0
        %8470 = vdwg.mxu0
        %8471 = vmatprep.subr.mxu0 0.0
        %8472 = vmatpush1.msra.mxu0 %v8230
        %8473 = vmatprep.subr.mxu0 0.0
        %8474 = vmatpush1.msra.mxu0 %v8231
        %8475 = vmatprep.subr.mxu0 0.0
        %8476 = vmatpush1.msra.mxu0 %v8232
        %8477 = vmatprep.subr.mxu0 0.0
        %8478 = vmatpush1.msra.mxu0 %v8233
        %8479 = vmatprep.subr.mxu0 0.0
        %8480 = vmatpush1.msra.mxu0 %v8234
        %8481 = vmatprep.subr.mxu0 0.0
        %8482 = vmatpush1.msra.mxu0 %v8235
        %8483 = vmatprep.subr.mxu0 0.0
        %8484 = vmatpush1.msra.mxu0 %v8236
        %8485 = vmatprep.subr.mxu0 0.0
        %8486 = vmatpush1.msra.mxu0 %v8237
        %8487 = vmatprep.subr.mxu0 0.0
        %8488 = vmatpush1.msra.mxu0 %v8238
        %8489 = vmatprep.subr.mxu0 0.0
        %8490 = vmatpush1.msra.mxu0 %v8239
        %8491 = vmatprep.subr.mxu0 0.0
        %8492 = vmatpush1.msra.mxu0 %v8240
        %8493 = vmatprep.subr.mxu0 0.0
        %8494 = vmatpush1.msra.mxu0 %v8241
        %8495 = vmatprep.subr.mxu0 0.0
        %8496 = vmatpush1.msra.mxu0 %v8242
        %8497 = vmatprep.subr.mxu0 0.0
        %8498 = vmatpush1.msra.mxu0 %v8243
        %8499 = vmatprep.subr.mxu0 0.0
        %8500 = vmatpush1.msra.mxu0 %v8244
        %8501 = vmatprep.subr.mxu0 0.0
        %8502 = vmatpush1.msra.mxu0 %v8245
        %8503 = vmatprep.subr.mxu0 0.0
        %8504 = vmatpush1.msra.mxu0 %v8246
        %8505 = vmatprep.subr.mxu0 0.0
        %8506 = vmatpush1.msra.mxu0 %v8247
        %8507 = vmatprep.subr.mxu0 0.0
        %8508 = vmatpush1.msra.mxu0 %v8248
        %8509 = vmatprep.subr.mxu0 0.0
        %8510 = vmatpush1.msra.mxu0 %v8249
        %8511 = vmatprep.subr.mxu0 0.0
        %8512 = vmatpush1.msra.mxu0 %v8250
        %8513 = vmatprep.subr.mxu0 0.0
        %8514 = vmatpush1.msra.mxu0 %v8251
        %8515 = vmatprep.subr.mxu0 0.0
        %8516 = vmatpush1.msra.mxu0 %v8252
        %8517 = vmatprep.subr.mxu0 0.0
        %8518 = vmatpush1.msra.mxu0 %v8253
        %8519 = vmatprep.subr.mxu0 0.0
        %8520 = vmatpush1.msra.mxu0 %v8254
        %8521 = vmatprep.subr.mxu0 0.0
        %8522 = vmatpush1.msra.mxu0 %v8255
        %8523 = vmatprep.subr.mxu0 0.0
        %8524 = vmatpush1.msra.mxu0 %v8256
        %8525 = vmatprep.subr.mxu0 0.0
        %8526 = vmatpush1.msra.mxu0 %v8257
        %8527 = vmatprep.subr.mxu0 0.0
        %8528 = vmatpush1.msra.mxu0 %v8258
        %8529 = vmatprep.subr.mxu0 0.0
        %8530 = vmatpush1.msra.mxu0 %v8259
        %8531 = vmatprep.subr.mxu0 0.0
        %8532 = vmatpush1.msra.mxu0 %v8260
        %8533 = vmatprep.subr.mxu0 0.0
        %8534 = vmatpush1.msra.mxu0 %v8261
        %8535 = vmatprep.mubr.f32.mxu0 %v8073
        %8536 = vmatmul.mubr.f32.gmra.mrb[0].mxu0 %v8072
        %v8537 = vpop.f32.mrb[0].mxu0
        %v8538 = vadd.f32 %v8393, %v8537
        %v8539 = vpop.f32.mrb[0].mxu0
        %8540 = vmatprep.mubr.f32.mxu0 %v8081
        %8541 = vmatmul.mubr.f32.gmra.mrb[0].mxu0 %v8080
        %v8542 = vpop.f32.mrb[0].mxu0
        %v8543 = vadd.f32 %v8398, %v8542
        %v8544 = vpop.f32.mrb[0].mxu0
        %8545 = vmatprep.mubr.f32.mxu0 %v8089
        %8546 = vmatmul.mubr.f32.gmra.mrb[0].mxu0 %v8088
        %v8547 = vpop.f32.mrb[0].mxu0
        %v8548 = vadd.f32 %v8403, %v8547
        %v8549 = vpop.f32.mrb[0].mxu0
        %8550 = vmatprep.mubr.f32.mxu0 %v8097
        %8551 = vmatmul.mubr.f32.gmra.mrb[0].mxu0 %v8096
        %v8552 = vpop.f32.mrb[0].mxu0
        %v8553 = vadd.f32 %v8408, %v8552
        %v8554 = vpop.f32.mrb[0].mxu0
        %8555 = vmatprep.mubr.f32.mxu0 %v8105
        %8556 = vmatmul.mubr.f32.gmra.mrb[0].mxu0 %v8104
        %v8557 = vpop.f32.mrb[0].mxu0
        %v8558 = vadd.f32 %v8413, %v8557
        %v8559 = vpop.f32.mrb[0].mxu0
        %8560 = vmatprep.mubr.f32.mxu0 %v8113
        %8561 = vmatmul.mubr.f32.gmra.mrb[0].mxu0 %v8112
        %v8562 = vpop.f32.mrb[0].mxu0
        %v8563 = vadd.f32 %v8418, %v8562
        %v8564 = vpop.f32.mrb[0].mxu0
        %8565 = vmatprep.mubr.f32.mxu0 %v8121
        %8566 = vmatmul.mubr.f32.gmra.mrb[0].mxu0 %v8120
        %v8567 = vpop.f32.mrb[0].mxu0
        %v8568 = vadd.f32 %v8423, %v8567
        %v8569 = vpop.f32.mrb[0].mxu0
        %8570 = vmatprep.mubr.f32.mxu0 %v8129
        %8571 = vmatmul.mubr.f32.gmra.mrb[0].mxu0 %v8128
        %v8572 = vpop.f32.mrb[0].mxu0
        %v8573 = vadd.f32 %v8428, %v8572
        %v8574 = vpop.f32.mrb[0].mxu0
        %8575 = vmatprep.mubr.f32.mxu0 %v8137
        %8576 = vmatmul.mubr.f32.gmra.mrb[0].mxu0 %v8136
        %v8577 = vpop.f32.mrb[0].mxu0
        %v8578 = vadd.f32 %v8433, %v8577
        %v8579 = vpop.f32.mrb[0].mxu0
        %8580 = vmatprep.mubr.f32.mxu0 %v8145
        %8581 = vmatmul.mubr.f32.gmra.mrb[0].mxu0 %v8144
        %v8582 = vpop.f32.mrb[0].mxu0
        %v8583 = vadd.f32 %v8438, %v8582
        %v8584 = vpop.f32.mrb[0].mxu0
        %8585 = vmatprep.mubr.f32.mxu0 %v8153
        %8586 = vmatmul.mubr.f32.gmra.mrb[0].mxu0 %v8152
        %v8587 = vpop.f32.mrb[0].mxu0
        %v8588 = vadd.f32 %v8443, %v8587
        %v8589 = vpop.f32.mrb[0].mxu0
        %8590 = vmatprep.mubr.f32.mxu0 %v8161
        %8591 = vmatmul.mubr.f32.gmra.mrb[0].mxu0 %v8160
        %v8592 = vpop.f32.mrb[0].mxu0
        %v8593 = vadd.f32 %v8448, %v8592
        %v8594 = vpop.f32.mrb[0].mxu0
        %8595 = vmatprep.mubr.f32.mxu0 %v8169
        %8596 = vmatmul.mubr.f32.gmra.mrb[0].mxu0 %v8168
        %v8597 = vpop.f32.mrb[0].mxu0
        %v8598 = vadd.f32 %v8453, %v8597
        %v8599 = vpop.f32.mrb[0].mxu0
        %8600 = vmatprep.mubr.f32.mxu0 %v8177
        %8601 = vmatmul.mubr.f32.gmra.mrb[0].mxu0 %v8176
        %v8602 = vpop.f32.mrb[0].mxu0
        %v8603 = vadd.f32 %v8458, %v8602
        %v8604 = vpop.f32.mrb[0].mxu0
        %8605 = vmatprep.mubr.f32.mxu0 %v8185
        %8606 = vmatmul.mubr.f32.gmra.mrb[0].mxu0 %v8184
        %v8607 = vpop.f32.mrb[0].mxu0
        %v8608 = vadd.f32 %v8463, %v8607
        %v8609 = vpop.f32.mrb[0].mxu0
        %8610 = vmatprep.mubr.f32.mxu0 %v8193
        %8611 = vmatmul.mubr.f32.gmra.mrb[0].mxu0 %v8192
        %v8612 = vpop.f32.mrb[0].mxu0
        %v8613 = vadd.f32 %v8468, %v8612
        %v8614 = vpop.f32.mrb[0].mxu0
        %8615 = vdwg.mxu0
        %8616 = vmatprep.subr.mxu0 0.0
        %8617 = vmatpush1.msra.mxu0 %v8262
        %8618 = vmatprep.subr.mxu0 0.0
        %8619 = vmatpush1.msra.mxu0 %v8263
        %8620 = vmatprep.subr.mxu0 0.0
        %8621 = vmatpush1.msra.mxu0 %v8264
        %8622 = vmatprep.subr.mxu0 0.0
        %8623 = vmatpush1.msra.mxu0 %v8265
        %8624 = vmatprep.subr.mxu0 0.0
        %8625 = vmatpush1.msra.mxu0 %v8266
        %8626 = vmatprep.subr.mxu0 0.0
        %8627 = vmatpush1.msra.mxu0 %v8267
        %8628 = vmatprep.subr.mxu0 0.0
        %8629 = vmatpush1.msra.mxu0 %v8268
        %8630 = vmatprep.subr.mxu0 0.0
        %8631 = vmatpush1.msra.mxu0 %v8269
        %8632 = vmatprep.subr.mxu0 0.0
        %8633 = vmatpush1.msra.mxu0 %v8270
        %8634 = vmatprep.subr.mxu0 0.0
        %8635 = vmatpush1.msra.mxu0 %v8271
        %8636 = vmatprep.subr.mxu0 0.0
        %8637 = vmatpush1.msra.mxu0 %v8272
        %8638 = vmatprep.subr.mxu0 0.0
        %8639 = vmatpush1.msra.mxu0 %v8273
        %8640 = vmatprep.subr.mxu0 0.0
        %8641 = vmatpush1.msra.mxu0 %v8274
        %8642 = vmatprep.subr.mxu0 0.0
        %8643 = vmatpush1.msra.mxu0 %v8275
        %8644 = vmatprep.subr.mxu0 0.0
        %8645 = vmatpush1.msra.mxu0 %v8276
        %8646 = vmatprep.subr.mxu0 0.0
        %8647 = vmatpush1.msra.mxu0 %v8277
        %8648 = vmatprep.subr.mxu0 0.0
        %8649 = vmatpush1.msra.mxu0 %v8278
        %8650 = vmatprep.subr.mxu0 0.0
        %8651 = vmatpush1.msra.mxu0 %v8279
        %8652 = vmatprep.subr.mxu0 0.0
        %8653 = vmatpush1.msra.mxu0 %v8280
        %8654 = vmatprep.subr.mxu0 0.0
        %8655 = vmatpush1.msra.mxu0 %v8281
        %8656 = vmatprep.subr.mxu0 0.0
        %8657 = vmatpush1.msra.mxu0 %v8282
        %8658 = vmatprep.subr.mxu0 0.0
        %8659 = vmatpush1.msra.mxu0 %v8283
        %8660 = vmatprep.subr.mxu0 0.0
        %8661 = vmatpush1.msra.mxu0 %v8284
        %8662 = vmatprep.subr.mxu0 0.0
        %8663 = vmatpush1.msra.mxu0 %v8285
        %8664 = vmatprep.subr.mxu0 0.0
        %8665 = vmatpush1.msra.mxu0 %v8286
        %8666 = vmatprep.subr.mxu0 0.0
        %8667 = vmatpush1.msra.mxu0 %v8287
        %8668 = vmatprep.subr.mxu0 0.0
        %8669 = vmatpush1.msra.mxu0 %v8288
        %8670 = vmatprep.subr.mxu0 0.0
        %8671 = vmatpush1.msra.mxu0 %v8289
        %8672 = vmatprep.subr.mxu0 0.0
        %8673 = vmatpush1.msra.mxu0 %v8290
        %8674 = vmatprep.subr.mxu0 0.0
        %8675 = vmatpush1.msra.mxu0 %v8291
        %8676 = vmatprep.subr.mxu0 0.0
        %8677 = vmatpush1.msra.mxu0 %v8292
        %8678 = vmatprep.subr.mxu0 0.0
        %8679 = vmatpush1.msra.mxu0 %v8293
        %8680 = vmatprep.mubr.f32.mxu0 %v8075
        %8681 = vmatmul.mubr.f32.gmra.mrb[0].mxu0 %v8074
        %v8682 = vpop.f32.mrb[0].mxu0
        %v8683 = vadd.f32 %v8538, %v8682
        %v8684 = vpop.f32.mrb[0].mxu0
        %8685 = vmatprep.mubr.f32.mxu0 %v8083
        %8686 = vmatmul.mubr.f32.gmra.mrb[0].mxu0 %v8082
        %v8687 = vpop.f32.mrb[0].mxu0
        %v8688 = vadd.f32 %v8543, %v8687
        %v8689 = vpop.f32.mrb[0].mxu0
        %8690 = vmatprep.mubr.f32.mxu0 %v8091
        %8691 = vmatmul.mubr.f32.gmra.mrb[0].mxu0 %v8090
        %v8692 = vpop.f32.mrb[0].mxu0
        %v8693 = vadd.f32 %v8548, %v8692
        %v8694 = vpop.f32.mrb[0].mxu0
        %8695 = vmatprep.mubr.f32.mxu0 %v8099
        %8696 = vmatmul.mubr.f32.gmra.mrb[0].mxu0 %v8098
        %v8697 = vpop.f32.mrb[0].mxu0
        %v8698 = vadd.f32 %v8553, %v8697
        %v8699 = vpop.f32.mrb[0].mxu0
        %8700 = vmatprep.mubr.f32.mxu0 %v8107
        %8701 = vmatmul.mubr.f32.gmra.mrb[0].mxu0 %v8106
        %v8702 = vpop.f32.mrb[0].mxu0
        %v8703 = vadd.f32 %v8558, %v8702
        %v8704 = vpop.f32.mrb[0].mxu0
        %8705 = vmatprep.mubr.f32.mxu0 %v8115
        %8706 = vmatmul.mubr.f32.gmra.mrb[0].mxu0 %v8114
        %v8707 = vpop.f32.mrb[0].mxu0
        %v8708 = vadd.f32 %v8563, %v8707
        %v8709 = vpop.f32.mrb[0].mxu0
        %8710 = vmatprep.mubr.f32.mxu0 %v8123
        %8711 = vmatmul.mubr.f32.gmra.mrb[0].mxu0 %v8122
        %v8712 = vpop.f32.mrb[0].mxu0
        %v8713 = vadd.f32 %v8568, %v8712
        %v8714 = vpop.f32.mrb[0].mxu0
        %8715 = vmatprep.mubr.f32.mxu0 %v8131
        %8716 = vmatmul.mubr.f32.gmra.mrb[0].mxu0 %v8130
        %v8717 = vpop.f32.mrb[0].mxu0
        %v8718 = vadd.f32 %v8573, %v8717
        %v8719 = vpop.f32.mrb[0].mxu0
        %8720 = vmatprep.mubr.f32.mxu0 %v8139
        %8721 = vmatmul.mubr.f32.gmra.mrb[0].mxu0 %v8138
        %v8722 = vpop.f32.mrb[0].mxu0
        %v8723 = vadd.f32 %v8578, %v8722
        %v8724 = vpop.f32.mrb[0].mxu0
        %8725 = vmatprep.mubr.f32.mxu0 %v8147
        %8726 = vmatmul.mubr.f32.gmra.mrb[0].mxu0 %v8146
        %v8727 = vpop.f32.mrb[0].mxu0
        %v8728 = vadd.f32 %v8583, %v8727
        %v8729 = vpop.f32.mrb[0].mxu0
        %8730 = vmatprep.mubr.f32.mxu0 %v8155
        %8731 = vmatmul.mubr.f32.gmra.mrb[0].mxu0 %v8154
        %v8732 = vpop.f32.mrb[0].mxu0
        %v8733 = vadd.f32 %v8588, %v8732
        %v8734 = vpop.f32.mrb[0].mxu0
        %8735 = vmatprep.mubr.f32.mxu0 %v8163
        %8736 = vmatmul.mubr.f32.gmra.mrb[0].mxu0 %v8162
        %v8737 = vpop.f32.mrb[0].mxu0
        %v8738 = vadd.f32 %v8593, %v8737
        %v8739 = vpop.f32.mrb[0].mxu0
        %8740 = vmatprep.mubr.f32.mxu0 %v8171
        %8741 = vmatmul.mubr.f32.gmra.mrb[0].mxu0 %v8170
        %v8742 = vpop.f32.mrb[0].mxu0
        %v8743 = vadd.f32 %v8598, %v8742
        %v8744 = vpop.f32.mrb[0].mxu0
        %8745 = vmatprep.mubr.f32.mxu0 %v8179
        %8746 = vmatmul.mubr.f32.gmra.mrb[0].mxu0 %v8178
        %v8747 = vpop.f32.mrb[0].mxu0
        %v8748 = vadd.f32 %v8603, %v8747
        %v8749 = vpop.f32.mrb[0].mxu0
        %8750 = vmatprep.mubr.f32.mxu0 %v8187
        %8751 = vmatmul.mubr.f32.gmra.mrb[0].mxu0 %v8186
        %v8752 = vpop.f32.mrb[0].mxu0
        %v8753 = vadd.f32 %v8608, %v8752
        %v8754 = vpop.f32.mrb[0].mxu0
        %8755 = vmatprep.mubr.f32.mxu0 %v8195
        %8756 = vmatmul.mubr.f32.gmra.mrb[0].mxu0 %v8194
        %v8757 = vpop.f32.mrb[0].mxu0
        %v8758 = vadd.f32 %v8613, %v8757
        %v8759 = vpop.f32.mrb[0].mxu0
        %8760 = vdwg.mxu0
        %8761 = vmatprep.subr.mxu0 0.0
        %8762 = vmatpush1.msra.mxu0 %v8294
        %8763 = vmatprep.subr.mxu0 0.0
        %8764 = vmatpush1.msra.mxu0 %v8295
        %8765 = vmatprep.subr.mxu0 0.0
        %8766 = vmatpush1.msra.mxu0 %v8296
        %8767 = vmatprep.subr.mxu0 0.0
        %8768 = vmatpush1.msra.mxu0 %v8297
        %8769 = vmatprep.subr.mxu0 0.0
        %8770 = vmatpush1.msra.mxu0 %v8298
        %8771 = vmatprep.subr.mxu0 0.0
        %8772 = vmatpush1.msra.mxu0 %v8299
        %8773 = vmatprep.subr.mxu0 0.0
        %8774 = vmatpush1.msra.mxu0 %v8300
        %8775 = vmatprep.subr.mxu0 0.0
        %8776 = vmatpush1.msra.mxu0 %v8301
        %8777 = vmatprep.subr.mxu0 0.0
        %8778 = vmatpush1.msra.mxu0 %v8302
        %8779 = vmatprep.subr.mxu0 0.0
        %8780 = vmatpush1.msra.mxu0 %v8303
        %8781 = vmatprep.subr.mxu0 0.0
        %8782 = vmatpush1.msra.mxu0 %v8304
        %8783 = vmatprep.subr.mxu0 0.0
        %8784 = vmatpush1.msra.mxu0 %v8305
        %8785 = vmatprep.subr.mxu0 0.0
        %8786 = vmatpush1.msra.mxu0 %v8306
        %8787 = vmatprep.subr.mxu0 0.0
        %8788 = vmatpush1.msra.mxu0 %v8307
        %8789 = vmatprep.subr.mxu0 0.0
        %8790 = vmatpush1.msra.mxu0 %v8308
        %8791 = vmatprep.subr.mxu0 0.0
        %8792 = vmatpush1.msra.mxu0 %v8309
        %8793 = vmatprep.subr.mxu0 0.0
        %8794 = vmatpush1.msra.mxu0 %v8310
        %8795 = vmatprep.subr.mxu0 0.0
        %8796 = vmatpush1.msra.mxu0 %v8311
        %8797 = vmatprep.subr.mxu0 0.0
        %8798 = vmatpush1.msra.mxu0 %v8312
        %8799 = vmatprep.subr.mxu0 0.0
        %8800 = vmatpush1.msra.mxu0 %v8313
        %8801 = vmatprep.subr.mxu0 0.0
        %8802 = vmatpush1.msra.mxu0 %v8314
        %8803 = vmatprep.subr.mxu0 0.0
        %8804 = vmatpush1.msra.mxu0 %v8315
        %8805 = vmatprep.subr.mxu0 0.0
        %8806 = vmatpush1.msra.mxu0 %v8316
        %8807 = vmatprep.subr.mxu0 0.0
        %8808 = vmatpush1.msra.mxu0 %v8317
        %8809 = vmatprep.subr.mxu0 0.0
        %8810 = vmatpush1.msra.mxu0 %v8318
        %8811 = vmatprep.subr.mxu0 0.0
        %8812 = vmatpush1.msra.mxu0 %v8319
        %8813 = vmatprep.subr.mxu0 0.0
        %8814 = vmatpush1.msra.mxu0 %v8320
        %8815 = vmatprep.subr.mxu0 0.0
        %8816 = vmatpush1.msra.mxu0 %v8321
        %8817 = vmatprep.subr.mxu0 0.0
        %8818 = vmatpush1.msra.mxu0 %v8322
        %8819 = vmatprep.subr.mxu0 0.0
        %8820 = vmatpush1.msra.mxu0 %v8323
        %8821 = vmatprep.subr.mxu0 0.0
        %8822 = vmatpush1.msra.mxu0 %v8324
        %8823 = vmatprep.subr.mxu0 0.0
        %8824 = vmatpush1.msra.mxu0 %v8325
        %8825 = vmatprep.mubr.f32.mxu0 %v8077
        %8826 = vmatmul.mubr.f32.gmra.mrb[0].mxu0 %v8076
        %v8827 = vpop.f32.mrb[0].mxu0
        %v8828 = vadd.f32 %v8683, %v8827
        %v8829 = vpop.f32.mrb[0].mxu0
        %8830 = vmatprep.mubr.f32.mxu0 %v8085
        %8831 = vmatmul.mubr.f32.gmra.mrb[0].mxu0 %v8084
        %v8832 = vpop.f32.mrb[0].mxu0
        %v8833 = vadd.f32 %v8688, %v8832
        %v8834 = vpop.f32.mrb[0].mxu0
        %8835 = vmatprep.mubr.f32.mxu0 %v8093
        %8836 = vmatmul.mubr.f32.gmra.mrb[0].mxu0 %v8092
        %v8837 = vpop.f32.mrb[0].mxu0
        %v8838 = vadd.f32 %v8693, %v8837
        %v8839 = vpop.f32.mrb[0].mxu0
        %8840 = vmatprep.mubr.f32.mxu0 %v8101
        %8841 = vmatmul.mubr.f32.gmra.mrb[0].mxu0 %v8100
        %v8842 = vpop.f32.mrb[0].mxu0
        %v8843 = vadd.f32 %v8698, %v8842
        %v8844 = vpop.f32.mrb[0].mxu0
        %8845 = vmatprep.mubr.f32.mxu0 %v8109
        %8846 = vmatmul.mubr.f32.gmra.mrb[0].mxu0 %v8108
        %v8847 = vpop.f32.mrb[0].mxu0
        %v8848 = vadd.f32 %v8703, %v8847
        %v8849 = vpop.f32.mrb[0].mxu0
        %8850 = vmatprep.mubr.f32.mxu0 %v8117
        %8851 = vmatmul.mubr.f32.gmra.mrb[0].mxu0 %v8116
        %v8852 = vpop.f32.mrb[0].mxu0
        %v8853 = vadd.f32 %v8708, %v8852
        %v8854 = vpop.f32.mrb[0].mxu0
        %8855 = vmatprep.mubr.f32.mxu0 %v8125
        %8856 = vmatmul.mubr.f32.gmra.mrb[0].mxu0 %v8124
        %v8857 = vpop.f32.mrb[0].mxu0
        %v8858 = vadd.f32 %v8713, %v8857
        %v8859 = vpop.f32.mrb[0].mxu0
        %8860 = vmatprep.mubr.f32.mxu0 %v8133
        %8861 = vmatmul.mubr.f32.gmra.mrb[0].mxu0 %v8132
        %v8862 = vpop.f32.mrb[0].mxu0
        %v8863 = vadd.f32 %v8718, %v8862
        %v8864 = vpop.f32.mrb[0].mxu0
        %8865 = vmatprep.mubr.f32.mxu0 %v8141
        %8866 = vmatmul.mubr.f32.gmra.mrb[0].mxu0 %v8140
        %v8867 = vpop.f32.mrb[0].mxu0
        %v8868 = vadd.f32 %v8723, %v8867
        %v8869 = vpop.f32.mrb[0].mxu0
        %8870 = vmatprep.mubr.f32.mxu0 %v8149
        %8871 = vmatmul.mubr.f32.gmra.mrb[0].mxu0 %v8148
        %v8872 = vpop.f32.mrb[0].mxu0
        %v8873 = vadd.f32 %v8728, %v8872
        %v8874 = vpop.f32.mrb[0].mxu0
        %8875 = vmatprep.mubr.f32.mxu0 %v8157
        %8876 = vmatmul.mubr.f32.gmra.mrb[0].mxu0 %v8156
        %v8877 = vpop.f32.mrb[0].mxu0
        %v8878 = vadd.f32 %v8733, %v8877
        %v8879 = vpop.f32.mrb[0].mxu0
        %8880 = vmatprep.mubr.f32.mxu0 %v8165
        %8881 = vmatmul.mubr.f32.gmra.mrb[0].mxu0 %v8164
        %v8882 = vpop.f32.mrb[0].mxu0
        %v8883 = vadd.f32 %v8738, %v8882
        %v8884 = vpop.f32.mrb[0].mxu0
        %8885 = vmatprep.mubr.f32.mxu0 %v8173
        %8886 = vmatmul.mubr.f32.gmra.mrb[0].mxu0 %v8172
        %v8887 = vpop.f32.mrb[0].mxu0
        %v8888 = vadd.f32 %v8743, %v8887
        %v8889 = vpop.f32.mrb[0].mxu0
        %8890 = vmatprep.mubr.f32.mxu0 %v8181
        %8891 = vmatmul.mubr.f32.gmra.mrb[0].mxu0 %v8180
        %v8892 = vpop.f32.mrb[0].mxu0
        %v8893 = vadd.f32 %v8748, %v8892
        %v8894 = vpop.f32.mrb[0].mxu0
        %8895 = vmatprep.mubr.f32.mxu0 %v8189
        %8896 = vmatmul.mubr.f32.gmra.mrb[0].mxu0 %v8188
        %v8897 = vpop.f32.mrb[0].mxu0
        %v8898 = vadd.f32 %v8753, %v8897
        %v8899 = vpop.f32.mrb[0].mxu0
        %8900 = vmatprep.mubr.f32.mxu0 %v8197
        %8901 = vmatmul.mubr.f32.gmra.mrb[0].mxu0 %v8196
        %v8902 = vpop.f32.mrb[0].mxu0
        %v8903 = vadd.f32 %v8758, %v8902
        %v8904 = vpop.f32.mrb[0].mxu0
        %8905 = vdwg.mxu0
        %v8906 = vld [vmem:[%s4] sm:$0x1]
        %v8908 = vlaneseq
        %v8909 = vshrl.u32 %v8908, 7
        %v8910 = vsub.s32 0, %v8909
        %v8911 = vrot.slane %v8906, %v8910
        %v8913 = vadd.f32 %v8828, %v8911
        %v8914 = vadd.f32 %v8833, %v8911
        %v8915 = vadd.f32 %v8838, %v8911
        %v8916 = vadd.f32 %v8843, %v8911
        %v8917 = vadd.f32 %v8848, %v8911
        %v8918 = vadd.f32 %v8853, %v8911
        %v8919 = vadd.f32 %v8858, %v8911
        %v8920 = vadd.f32 %v8863, %v8911
        %v8921 = vadd.f32 %v8868, %v8911
        %v8922 = vadd.f32 %v8873, %v8911
        %v8923 = vadd.f32 %v8878, %v8911
        %v8924 = vadd.f32 %v8883, %v8911
        %v8925 = vadd.f32 %v8888, %v8911
        %v8926 = vadd.f32 %v8893, %v8911
        %v8927 = vadd.f32 %v8898, %v8911
        %v8928 = vadd.f32 %v8903, %v8911
        %v8929 = vmax.f32 %v8913, 0.0
        %v8930 = vmax.f32 %v8914, 0.0
        %v8931 = vmax.f32 %v8915, 0.0
        %v8932 = vmax.f32 %v8916, 0.0
        %v8933 = vmax.f32 %v8917, 0.0
        %v8934 = vmax.f32 %v8918, 0.0
        %v8935 = vmax.f32 %v8919, 0.0
        %v8936 = vmax.f32 %v8920, 0.0
        %v8937 = vmax.f32 %v8921, 0.0
        %v8938 = vmax.f32 %v8922, 0.0
        %v8939 = vmax.f32 %v8923, 0.0
        %v8940 = vmax.f32 %v8924, 0.0
        %v8941 = vmax.f32 %v8925, 0.0
        %v8942 = vmax.f32 %v8926, 0.0
        %v8943 = vmax.f32 %v8927, 0.0
        %v8944 = vmax.f32 %v8928, 0.0
        %8945 = vst [vmem:[#allocation4] sm:$0xf] 0.0
        %8946 = vst [vmem:[#allocation4 + $0x8] sm:$0xf] 0.0
        %8947 = vst [vmem:[#allocation4 + $0x10] sm:$0xf] 0.0
        %8948 = vst [vmem:[#allocation4 + $0x18] sm:$0xf] 0.0
        %8949 = vst [vmem:[#allocation4 + $0x20] sm:$0xf] 0.0
        %8950 = vst [vmem:[#allocation4 + $0x78] sm:$0xf] 0.0
        %8951 = vst [vmem:[#allocation4 + $0x80] sm:$0xf] 0.0
        %8952 = vst [vmem:[#allocation4 + $0x88] sm:$0xf] 0.0
        %8953 = vst [vmem:[#allocation4 + $0x90] sm:$0xf] 0.0
        %8954 = vst [vmem:[#allocation4 + $0x98] sm:$0xf] 0.0
        %8955 = vst [vmem:[#allocation4 + $0xf0] sm:$0xf] 0.0
        %8956 = vst [vmem:[#allocation4 + $0xf8] sm:$0xf] 0.0
        %8957 = vst [vmem:[#allocation4 + $0x100] sm:$0xf] 0.0
        %8958 = vst [vmem:[#allocation4 + $0x108] sm:$0xf] 0.0
        %8959 = vst [vmem:[#allocation4 + $0x110] sm:$0xf] 0.0
        %8960 = vst [vmem:[#allocation4 + $0x168] sm:$0xf] 0.0
        %8961 = vst [vmem:[#allocation4 + $0x170] sm:$0xf] 0.0
        %8962 = vst [vmem:[#allocation4 + $0x178] sm:$0xf] 0.0
        %8963 = vst [vmem:[#allocation4 + $0x180] sm:$0xf] 0.0
        %8964 = vst [vmem:[#allocation4 + $0x188] sm:$0xf] 0.0
        %8965 = vst [vmem:[#allocation4 + $0x1e0] sm:$0xf] 0.0
        %8966 = vst [vmem:[#allocation4 + $0x1e8] sm:$0xf] 0.0
        %8967 = vst [vmem:[#allocation4 + $0x1f0] sm:$0xf] 0.0
        %8968 = vst [vmem:[#allocation4 + $0x1f8] sm:$0xf] 0.0
        %8969 = vst [vmem:[#allocation4 + $0x200] sm:$0xf] 0.0
        %8970 = vst [vmem:[#allocation4 + $0x258] sm:$0xf] 0.0
        %8971 = vst [vmem:[#allocation4 + $0x260] sm:$0xf] 0.0
        %8972 = vst [vmem:[#allocation4 + $0x268] sm:$0xf] 0.0
        %8973 = vst [vmem:[#allocation4 + $0x270] sm:$0xf] 0.0
        %8974 = vst [vmem:[#allocation4 + $0x278] sm:$0xf] 0.0
        %8975 = vst [vmem:[#allocation4 + $0x2d0] sm:$0xf] 0.0
        %8976 = vst [vmem:[#allocation4 + $0x2d8] sm:$0xf] 0.0
        %8977 = vst [vmem:[#allocation4 + $0x2e0] sm:$0xf] 0.0
        %8978 = vst [vmem:[#allocation4 + $0x2e8] sm:$0xf] 0.0
        %8979 = vst [vmem:[#allocation4 + $0x2f0] sm:$0xf] 0.0
        %8980 = vst [vmem:[#allocation4 + $0x348] sm:$0xf] 0.0
        %8981 = vst [vmem:[#allocation4 + $0x350] sm:$0xf] 0.0
        %8982 = vst [vmem:[#allocation4 + $0x358] sm:$0xf] 0.0
        %8983 = vst [vmem:[#allocation4 + $0x360] sm:$0xf] 0.0
        %8984 = vst [vmem:[#allocation4 + $0x368] sm:$0xf] 0.0
        %8985 = vst [vmem:[#allocation4 + $0x28] sm:$0xe0] 0.0
        %8986 = vst [vmem:[#allocation4 + $0x30] sm:$0xe0] 0.0
        %8987 = vst [vmem:[#allocation4 + $0x38] sm:$0xe0] 0.0
        %8988 = vst [vmem:[#allocation4 + $0x40] sm:$0xe0] 0.0
        %8989 = vst [vmem:[#allocation4 + $0x48] sm:$0xe0] 0.0
        %8990 = vst [vmem:[#allocation4 + $0x50] sm:$0xff] 0.0
        %8991 = vst [vmem:[#allocation4 + $0x58] sm:$0xff] 0.0
        %8992 = vst [vmem:[#allocation4 + $0x60] sm:$0xff] 0.0
        %8993 = vst [vmem:[#allocation4 + $0x68] sm:$0xff] 0.0
        %8994 = vst [vmem:[#allocation4 + $0x70] sm:$0xff] 0.0
        %8995 = vst [vmem:[#allocation4 + $0xa0] sm:$0xe0] 0.0
        %8996 = vst [vmem:[#allocation4 + $0xa8] sm:$0xe0] 0.0
        %8997 = vst [vmem:[#allocation4 + $0xb0] sm:$0xe0] 0.0
        %8998 = vst [vmem:[#allocation4 + $0xb8] sm:$0xe0] 0.0
        %8999 = vst [vmem:[#allocation4 + $0xc0] sm:$0xe0] 0.0
        %9000 = vst [vmem:[#allocation4 + $0xc8] sm:$0xff] 0.0
        %9001 = vst [vmem:[#allocation4 + $0xd0] sm:$0xff] 0.0
        %9002 = vst [vmem:[#allocation4 + $0xd8] sm:$0xff] 0.0
        %9003 = vst [vmem:[#allocation4 + $0xe0] sm:$0xff] 0.0
        %9004 = vst [vmem:[#allocation4 + $0xe8] sm:$0xff] 0.0
        %9005 = vst [vmem:[#allocation4 + $0x118] sm:$0xe0] 0.0
        %9006 = vst [vmem:[#allocation4 + $0x120] sm:$0xe0] 0.0
        %9007 = vst [vmem:[#allocation4 + $0x128] sm:$0xe0] 0.0
        %9008 = vst [vmem:[#allocation4 + $0x130] sm:$0xe0] 0.0
        %9009 = vst [vmem:[#allocation4 + $0x138] sm:$0xe0] 0.0
        %9010 = vst [vmem:[#allocation4 + $0x140] sm:$0xff] 0.0
        %9011 = vst [vmem:[#allocation4 + $0x148] sm:$0xff] 0.0
        %9012 = vst [vmem:[#allocation4 + $0x150] sm:$0xff] 0.0
        %9013 = vst [vmem:[#allocation4 + $0x158] sm:$0xff] 0.0
        %9014 = vst [vmem:[#allocation4 + $0x160] sm:$0xff] 0.0
        %9015 = vst [vmem:[#allocation4 + $0x190] sm:$0xe0] 0.0
        %9016 = vst [vmem:[#allocation4 + $0x198] sm:$0xe0] 0.0
        %9017 = vst [vmem:[#allocation4 + $0x1a0] sm:$0xe0] 0.0
        %9018 = vst [vmem:[#allocation4 + $0x1a8] sm:$0xe0] 0.0
        %9019 = vst [vmem:[#allocation4 + $0x1b0] sm:$0xe0] 0.0
        %9020 = vst [vmem:[#allocation4 + $0x1b8] sm:$0xff] 0.0
        %9021 = vst [vmem:[#allocation4 + $0x1c0] sm:$0xff] 0.0
        %9022 = vst [vmem:[#allocation4 + $0x1c8] sm:$0xff] 0.0
        %9023 = vst [vmem:[#allocation4 + $0x1d0] sm:$0xff] 0.0
        %9024 = vst [vmem:[#allocation4 + $0x1d8] sm:$0xff] 0.0
        %9025 = vst [vmem:[#allocation4 + $0x208] sm:$0xe0] 0.0
        %9026 = vst [vmem:[#allocation4 + $0x210] sm:$0xe0] 0.0
        %9027 = vst [vmem:[#allocation4 + $0x218] sm:$0xe0] 0.0
        %9028 = vst [vmem:[#allocation4 + $0x220] sm:$0xe0] 0.0
        %9029 = vst [vmem:[#allocation4 + $0x228] sm:$0xe0] 0.0
        %9030 = vst [vmem:[#allocation4 + $0x230] sm:$0xff] 0.0
        %9031 = vst [vmem:[#allocation4 + $0x238] sm:$0xff] 0.0
        %9032 = vst [vmem:[#allocation4 + $0x240] sm:$0xff] 0.0
        %9033 = vst [vmem:[#allocation4 + $0x248] sm:$0xff] 0.0
        %9034 = vst [vmem:[#allocation4 + $0x250] sm:$0xff] 0.0
        %9035 = vst [vmem:[#allocation4 + $0x280] sm:$0xe0] 0.0
        %9036 = vst [vmem:[#allocation4 + $0x288] sm:$0xe0] 0.0
        %9037 = vst [vmem:[#allocation4 + $0x290] sm:$0xe0] 0.0
        %9038 = vst [vmem:[#allocation4 + $0x298] sm:$0xe0] 0.0
        %9039 = vst [vmem:[#allocation4 + $0x2a0] sm:$0xe0] 0.0
        %9040 = vst [vmem:[#allocation4 + $0x2a8] sm:$0xff] 0.0
        %9041 = vst [vmem:[#allocation4 + $0x2b0] sm:$0xff] 0.0
        %9042 = vst [vmem:[#allocation4 + $0x2b8] sm:$0xff] 0.0
        %9043 = vst [vmem:[#allocation4 + $0x2c0] sm:$0xff] 0.0
        %9044 = vst [vmem:[#allocation4 + $0x2c8] sm:$0xff] 0.0
        %9045 = vst [vmem:[#allocation4 + $0x2f8] sm:$0xe0] 0.0
        %9046 = vst [vmem:[#allocation4 + $0x300] sm:$0xe0] 0.0
        %9047 = vst [vmem:[#allocation4 + $0x308] sm:$0xe0] 0.0
        %9048 = vst [vmem:[#allocation4 + $0x310] sm:$0xe0] 0.0
        %9049 = vst [vmem:[#allocation4 + $0x318] sm:$0xe0] 0.0
        %9050 = vst [vmem:[#allocation4 + $0x320] sm:$0xff] 0.0
        %9051 = vst [vmem:[#allocation4 + $0x328] sm:$0xff] 0.0
        %9052 = vst [vmem:[#allocation4 + $0x330] sm:$0xff] 0.0
        %9053 = vst [vmem:[#allocation4 + $0x338] sm:$0xff] 0.0
        %9054 = vst [vmem:[#allocation4 + $0x340] sm:$0xff] 0.0
        %9055 = vst [vmem:[#allocation4 + $0x370] sm:$0xe0] 0.0
        %9056 = vst [vmem:[#allocation4 + $0x378] sm:$0xe0] 0.0
        %9057 = vst [vmem:[#allocation4 + $0x380] sm:$0xe0] 0.0
        %9058 = vst [vmem:[#allocation4 + $0x388] sm:$0xe0] 0.0
        %9059 = vst [vmem:[#allocation4 + $0x390] sm:$0xe0] 0.0
        %9060 = vst [vmem:[#allocation4 + $0x398] sm:$0xff] 0.0
        %9061 = vst [vmem:[#allocation4 + $0x3a0] sm:$0xff] 0.0
        %9062 = vst [vmem:[#allocation4 + $0x3a8] sm:$0xff] 0.0
        %9063 = vst [vmem:[#allocation4 + $0x3b0] sm:$0xff] 0.0
        %9064 = vst [vmem:[#allocation4 + $0x3b8] sm:$0xff] 0.0
        %vm9081 = vcmask 1043456
        %v9082 = vrot.slane %v8929, 4
        %v9083 = vrot.slane %v8930, 4
        %v9084 = vsel %vm9081, %v9082, %v9083
        %v9085 = vrot.slane %v8931, 4
        %v9086 = vrot.slane %v8932, 4
        %v9087 = vsel %vm9081, %v9085, %v9086
        %v9088 = vrot.slane %v8933, 4
        %v9089 = vrot.slane %v8934, 4
        %v9090 = vsel %vm9081, %v9088, %v9089
        %v9091 = vrot.slane %v8935, 4
        %v9092 = vrot.slane %v8936, 4
        %v9093 = vsel %vm9081, %v9091, %v9092
        %v9094 = vrot.slane %v8937, 4
        %v9095 = vrot.slane %v8938, 4
        %v9096 = vsel %vm9081, %v9094, %v9095
        %v9097 = vrot.slane %v8939, 4
        %v9098 = vrot.slane %v8940, 4
        %v9099 = vsel %vm9081, %v9097, %v9098
        %v9100 = vrot.slane %v8941, 4
        %v9101 = vrot.slane %v8942, 4
        %v9102 = vsel %vm9081, %v9100, %v9101
        %v9103 = vrot.slane %v8943, 4
        %v9104 = vrot.slane %v8944, 4
        %v9105 = vsel %vm9081, %v9103, %v9104
        %9130 = vst [vmem:[#allocation4] sm:$0xf0] %v9082
        %9131 = vst [vmem:[#allocation4 + $0x28] sm:$0xff] %v9084
        %9132 = vst [vmem:[#allocation4 + $0x50] sm:$0x1] %v9083
        %9133 = vst [vmem:[#allocation4 + $0x78] sm:$0xf0] %v9085
        %9134 = vst [vmem:[#allocation4 + $0xa0] sm:$0xff] %v9087
        %9135 = vst [vmem:[#allocation4 + $0xc8] sm:$0x1] %v9086
        %9136 = vst [vmem:[#allocation4 + $0xf0] sm:$0xf0] %v9088
        %9137 = vst [vmem:[#allocation4 + $0x118] sm:$0xff] %v9090
        %9138 = vst [vmem:[#allocation4 + $0x140] sm:$0x1] %v9089
        %9139 = vst [vmem:[#allocation4 + $0x168] sm:$0xf0] %v9091
        %9140 = vst [vmem:[#allocation4 + $0x190] sm:$0xff] %v9093
        %9141 = vst [vmem:[#allocation4 + $0x1b8] sm:$0x1] %v9092
        %9142 = vst [vmem:[#allocation4 + $0x1e0] sm:$0xf0] %v9094
        %9143 = vst [vmem:[#allocation4 + $0x208] sm:$0xff] %v9096
        %9144 = vst [vmem:[#allocation4 + $0x230] sm:$0x1] %v9095
        %9145 = vst [vmem:[#allocation4 + $0x258] sm:$0xf0] %v9097
        %9146 = vst [vmem:[#allocation4 + $0x280] sm:$0xff] %v9099
        %9147 = vst [vmem:[#allocation4 + $0x2a8] sm:$0x1] %v9098
        %9148 = vst [vmem:[#allocation4 + $0x2d0] sm:$0xf0] %v9100
        %9149 = vst [vmem:[#allocation4 + $0x2f8] sm:$0xff] %v9102
        %9150 = vst [vmem:[#allocation4 + $0x320] sm:$0x1] %v9101
        %9151 = vst [vmem:[#allocation4 + $0x348] sm:$0xf0] %v9103
        %9152 = vst [vmem:[#allocation4 + $0x370] sm:$0xff] %v9105
        %9153 = vst [vmem:[#allocation4 + $0x398] sm:$0x1] %v9104
        %v9154 = vrot.slane %v8929, 5
        %v9155 = vrot.slane %v8930, 5
        %v9156 = vsel %vm5886, %v9154, %v9155
        %v9157 = vrot.slane %v8931, 5
        %v9158 = vrot.slane %v8932, 5
        %v9159 = vsel %vm5886, %v9157, %v9158
        %v9160 = vrot.slane %v8933, 5
        %v9161 = vrot.slane %v8934, 5
        %v9162 = vsel %vm5886, %v9160, %v9161
        %v9163 = vrot.slane %v8935, 5
        %v9164 = vrot.slane %v8936, 5
        %v9165 = vsel %vm5886, %v9163, %v9164
        %v9166 = vrot.slane %v8937, 5
        %v9167 = vrot.slane %v8938, 5
        %v9168 = vsel %vm5886, %v9166, %v9167
        %v9169 = vrot.slane %v8939, 5
        %v9170 = vrot.slane %v8940, 5
        %v9171 = vsel %vm5886, %v9169, %v9170
        %v9172 = vrot.slane %v8941, 5
        %v9173 = vrot.slane %v8942, 5
        %v9174 = vsel %vm5886, %v9172, %v9173
        %v9175 = vrot.slane %v8943, 5
        %v9176 = vrot.slane %v8944, 5
        %v9177 = vsel %vm5886, %v9175, %v9176
        %9194 = vst [vmem:[#allocation4 + $0x8] sm:$0xf8] %v9154
        %9195 = vst [vmem:[#allocation4 + $0x30] sm:$0xff] %v9156
        %9196 = vst [vmem:[#allocation4 + $0x80] sm:$0xf8] %v9157
        %9197 = vst [vmem:[#allocation4 + $0xa8] sm:$0xff] %v9159
        %9198 = vst [vmem:[#allocation4 + $0xf8] sm:$0xf8] %v9160
        %9199 = vst [vmem:[#allocation4 + $0x120] sm:$0xff] %v9162
        %9200 = vst [vmem:[#allocation4 + $0x170] sm:$0xf8] %v9163
        %9201 = vst [vmem:[#allocation4 + $0x198] sm:$0xff] %v9165
        %9202 = vst [vmem:[#allocation4 + $0x1e8] sm:$0xf8] %v9166
        %9203 = vst [vmem:[#allocation4 + $0x210] sm:$0xff] %v9168
        %9204 = vst [vmem:[#allocation4 + $0x260] sm:$0xf8] %v9169
        %9205 = vst [vmem:[#allocation4 + $0x288] sm:$0xff] %v9171
        %9206 = vst [vmem:[#allocation4 + $0x2d8] sm:$0xf8] %v9172
        %9207 = vst [vmem:[#allocation4 + $0x300] sm:$0xff] %v9174
        %9208 = vst [vmem:[#allocation4 + $0x350] sm:$0xf8] %v9175
        %9209 = vst [vmem:[#allocation4 + $0x378] sm:$0xff] %v9177
        %v9210 = vrot.slane %v8929, 6
        %v9211 = vrot.slane %v8930, 6
        %v9212 = vsel %vm478, %v9210, %v9211
        %v9213 = vrot.slane %v8931, 6
        %v9214 = vrot.slane %v8932, 6
        %v9215 = vsel %vm478, %v9213, %v9214
        %v9216 = vrot.slane %v8933, 6
        %v9217 = vrot.slane %v8934, 6
        %v9218 = vsel %vm478, %v9216, %v9217
        %v9219 = vrot.slane %v8935, 6
        %v9220 = vrot.slane %v8936, 6
        %v9221 = vsel %vm478, %v9219, %v9220
        %v9222 = vrot.slane %v8937, 6
        %v9223 = vrot.slane %v8938, 6
        %v9224 = vsel %vm478, %v9222, %v9223
        %v9225 = vrot.slane %v8939, 6
        %v9226 = vrot.slane %v8940, 6
        %v9227 = vsel %vm478, %v9225, %v9226
        %v9228 = vrot.slane %v8941, 6
        %v9229 = vrot.slane %v8942, 6
        %v9230 = vsel %vm478, %v9228, %v9229
        %v9231 = vrot.slane %v8943, 6
        %v9232 = vrot.slane %v8944, 6
        %v9233 = vsel %vm478, %v9231, %v9232
        %9250 = vst [vmem:[#allocation4 + $0x10] sm:$0xfc] %v9210
        %9251 = vst [vmem:[#allocation4 + $0x38] sm:$0x7f] %v9212
        %9252 = vst [vmem:[#allocation4 + $0x88] sm:$0xfc] %v9213
        %9253 = vst [vmem:[#allocation4 + $0xb0] sm:$0x7f] %v9215
        %9254 = vst [vmem:[#allocation4 + $0x100] sm:$0xfc] %v9216
        %9255 = vst [vmem:[#allocation4 + $0x128] sm:$0x7f] %v9218
        %9256 = vst [vmem:[#allocation4 + $0x178] sm:$0xfc] %v9219
        %9257 = vst [vmem:[#allocation4 + $0x1a0] sm:$0x7f] %v9221
        %9258 = vst [vmem:[#allocation4 + $0x1f0] sm:$0xfc] %v9222
        %9259 = vst [vmem:[#allocation4 + $0x218] sm:$0x7f] %v9224
        %9260 = vst [vmem:[#allocation4 + $0x268] sm:$0xfc] %v9225
        %9261 = vst [vmem:[#allocation4 + $0x290] sm:$0x7f] %v9227
        %9262 = vst [vmem:[#allocation4 + $0x2e0] sm:$0xfc] %v9228
        %9263 = vst [vmem:[#allocation4 + $0x308] sm:$0x7f] %v9230
        %9264 = vst [vmem:[#allocation4 + $0x358] sm:$0xfc] %v9231
        %9265 = vst [vmem:[#allocation4 + $0x380] sm:$0x7f] %v9233
        %v9266 = vrot.slane %v8929, 7
        %v9267 = vrot.slane %v8930, 7
        %v9268 = vsel %vm599, %v9266, %v9267
        %v9269 = vrot.slane %v8931, 7
        %v9270 = vrot.slane %v8932, 7
        %v9271 = vsel %vm599, %v9269, %v9270
        %v9272 = vrot.slane %v8933, 7
        %v9273 = vrot.slane %v8934, 7
        %v9274 = vsel %vm599, %v9272, %v9273
        %v9275 = vrot.slane %v8935, 7
        %v9276 = vrot.slane %v8936, 7
        %v9277 = vsel %vm599, %v9275, %v9276
        %v9278 = vrot.slane %v8937, 7
        %v9279 = vrot.slane %v8938, 7
        %v9280 = vsel %vm599, %v9278, %v9279
        %v9281 = vrot.slane %v8939, 7
        %v9282 = vrot.slane %v8940, 7
        %v9283 = vsel %vm599, %v9281, %v9282
        %v9284 = vrot.slane %v8941, 7
        %v9285 = vrot.slane %v8942, 7
        %v9286 = vsel %vm599, %v9284, %v9285
        %v9287 = vrot.slane %v8943, 7
        %v9288 = vrot.slane %v8944, 7
        %v9289 = vsel %vm599, %v9287, %v9288
        %9306 = vst [vmem:[#allocation4 + $0x18] sm:$0xfe] %v9266
        %9307 = vst [vmem:[#allocation4 + $0x40] sm:$0x3f] %v9268
        %9308 = vst [vmem:[#allocation4 + $0x90] sm:$0xfe] %v9269
        %9309 = vst [vmem:[#allocation4 + $0xb8] sm:$0x3f] %v9271
        %9310 = vst [vmem:[#allocation4 + $0x108] sm:$0xfe] %v9272
        %9311 = vst [vmem:[#allocation4 + $0x130] sm:$0x3f] %v9274
        %9312 = vst [vmem:[#allocation4 + $0x180] sm:$0xfe] %v9275
        %9313 = vst [vmem:[#allocation4 + $0x1a8] sm:$0x3f] %v9277
        %9314 = vst [vmem:[#allocation4 + $0x1f8] sm:$0xfe] %v9278
        %9315 = vst [vmem:[#allocation4 + $0x220] sm:$0x3f] %v9280
        %9316 = vst [vmem:[#allocation4 + $0x270] sm:$0xfe] %v9281
        %9317 = vst [vmem:[#allocation4 + $0x298] sm:$0x3f] %v9283
        %9318 = vst [vmem:[#allocation4 + $0x2e8] sm:$0xfe] %v9284
        %9319 = vst [vmem:[#allocation4 + $0x310] sm:$0x3f] %v9286
        %9320 = vst [vmem:[#allocation4 + $0x360] sm:$0xfe] %v9287
        %9321 = vst [vmem:[#allocation4 + $0x388] sm:$0x3f] %v9289
        %9322 = vst [vmem:[#allocation4 + $0x20] sm:$0xff] %v8929
        %9323 = vst [vmem:[#allocation4 + $0x48] sm:$0x1f] %v8930
        %9324 = vst [vmem:[#allocation4 + $0x98] sm:$0xff] %v8931
        %9325 = vst [vmem:[#allocation4 + $0xc0] sm:$0x1f] %v8932
        %9326 = vst [vmem:[#allocation4 + $0x110] sm:$0xff] %v8933
        %9327 = vst [vmem:[#allocation4 + $0x138] sm:$0x1f] %v8934
        %9328 = vst [vmem:[#allocation4 + $0x188] sm:$0xff] %v8935
        %9329 = vst [vmem:[#allocation4 + $0x1b0] sm:$0x1f] %v8936
        %9330 = vst [vmem:[#allocation4 + $0x200] sm:$0xff] %v8937
        %9331 = vst [vmem:[#allocation4 + $0x228] sm:$0x1f] %v8938
        %9332 = vst [vmem:[#allocation4 + $0x278] sm:$0xff] %v8939
        %9333 = vst [vmem:[#allocation4 + $0x2a0] sm:$0x1f] %v8940
        %9334 = vst [vmem:[#allocation4 + $0x2f0] sm:$0xff] %v8941
        %9335 = vst [vmem:[#allocation4 + $0x318] sm:$0x1f] %v8942
        %9336 = vst [vmem:[#allocation4 + $0x368] sm:$0xff] %v8943
        %9337 = vst [vmem:[#allocation4 + $0x390] sm:$0x1f] %v8944
        %v9338 = vld [vmem:[#allocation4] sm:$0xff]
        %v9339 = vld [vmem:[#allocation4 + $0x8] sm:$0xff]
        %v9340 = vld [vmem:[#allocation4 + $0x10] sm:$0xff]
        %v9341 = vld [vmem:[#allocation4 + $0x18] sm:$0xff]
        %v9342 = vld [vmem:[#allocation4 + $0x20] sm:$0xff]
        %v9343 = vld [vmem:[#allocation4 + $0x28] sm:$0xff]
        %v9344 = vld [vmem:[#allocation4 + $0x30] sm:$0xff]
        %v9345 = vld [vmem:[#allocation4 + $0x38] sm:$0xff]
        %v9346 = vld [vmem:[#allocation4 + $0x40] sm:$0xff]
        %v9347 = vld [vmem:[#allocation4 + $0x48] sm:$0xff]
        %v9348 = vld [vmem:[#allocation4 + $0x50] sm:$0xff]
        %v9349 = vld [vmem:[#allocation4 + $0x58] sm:$0xff]
        %v9350 = vld [vmem:[#allocation4 + $0x60] sm:$0xff]
        %v9351 = vld [vmem:[#allocation4 + $0x68] sm:$0xff]
        %v9352 = vld [vmem:[#allocation4 + $0x70] sm:$0xff]
        %v9353 = vld [vmem:[#allocation4 + $0x78] sm:$0xff]
        %v9354 = vld [vmem:[#allocation4 + $0x80] sm:$0xff]
        %v9355 = vld [vmem:[#allocation4 + $0x88] sm:$0xff]
        %v9356 = vld [vmem:[#allocation4 + $0x90] sm:$0xff]
        %v9357 = vld [vmem:[#allocation4 + $0x98] sm:$0xff]
        %v9358 = vld [vmem:[#allocation4 + $0xa0] sm:$0xff]
        %v9359 = vld [vmem:[#allocation4 + $0xa8] sm:$0xff]
        %v9360 = vld [vmem:[#allocation4 + $0xb0] sm:$0xff]
        %v9361 = vld [vmem:[#allocation4 + $0xb8] sm:$0xff]
        %v9362 = vld [vmem:[#allocation4 + $0xc0] sm:$0xff]
        %v9363 = vld [vmem:[#allocation4 + $0xc8] sm:$0xff]
        %v9364 = vld [vmem:[#allocation4 + $0xd0] sm:$0xff]
        %v9365 = vld [vmem:[#allocation4 + $0xd8] sm:$0xff]
        %v9366 = vld [vmem:[#allocation4 + $0xe0] sm:$0xff]
        %v9367 = vld [vmem:[#allocation4 + $0xe8] sm:$0xff]
        %v9368 = vld [vmem:[#allocation4 + $0xf0] sm:$0xff]
        %v9369 = vld [vmem:[#allocation4 + $0xf8] sm:$0xff]
        %v9370 = vld [vmem:[#allocation4 + $0x100] sm:$0xff]
        %v9371 = vld [vmem:[#allocation4 + $0x108] sm:$0xff]
        %v9372 = vld [vmem:[#allocation4 + $0x110] sm:$0xff]
        %v9373 = vld [vmem:[#allocation4 + $0x118] sm:$0xff]
        %v9374 = vld [vmem:[#allocation4 + $0x120] sm:$0xff]
        %v9375 = vld [vmem:[#allocation4 + $0x128] sm:$0xff]
        %v9376 = vld [vmem:[#allocation4 + $0x130] sm:$0xff]
        %v9377 = vld [vmem:[#allocation4 + $0x138] sm:$0xff]
        %v9378 = vld [vmem:[#allocation4 + $0x140] sm:$0xff]
        %v9379 = vld [vmem:[#allocation4 + $0x148] sm:$0xff]
        %v9380 = vld [vmem:[#allocation4 + $0x150] sm:$0xff]
        %v9381 = vld [vmem:[#allocation4 + $0x158] sm:$0xff]
        %v9382 = vld [vmem:[#allocation4 + $0x160] sm:$0xff]
        %v9383 = vld [vmem:[#allocation4 + $0x168] sm:$0xff]
        %v9384 = vld [vmem:[#allocation4 + $0x170] sm:$0xff]
        %v9385 = vld [vmem:[#allocation4 + $0x178] sm:$0xff]
        %v9386 = vld [vmem:[#allocation4 + $0x180] sm:$0xff]
        %v9387 = vld [vmem:[#allocation4 + $0x188] sm:$0xff]
        %v9388 = vld [vmem:[#allocation4 + $0x190] sm:$0xff]
        %v9389 = vld [vmem:[#allocation4 + $0x198] sm:$0xff]
        %v9390 = vld [vmem:[#allocation4 + $0x1a0] sm:$0xff]
        %v9391 = vld [vmem:[#allocation4 + $0x1a8] sm:$0xff]
        %v9392 = vld [vmem:[#allocation4 + $0x1b0] sm:$0xff]
        %v9393 = vld [vmem:[#allocation4 + $0x1b8] sm:$0xff]
        %v9394 = vld [vmem:[#allocation4 + $0x1c0] sm:$0xff]
        %v9395 = vld [vmem:[#allocation4 + $0x1c8] sm:$0xff]
        %v9396 = vld [vmem:[#allocation4 + $0x1d0] sm:$0xff]
        %v9397 = vld [vmem:[#allocation4 + $0x1d8] sm:$0xff]
        %v9398 = vld [vmem:[#allocation4 + $0x1e0] sm:$0xff]
        %v9399 = vld [vmem:[#allocation4 + $0x1e8] sm:$0xff]
        %v9400 = vld [vmem:[#allocation4 + $0x1f0] sm:$0xff]
        %v9401 = vld [vmem:[#allocation4 + $0x1f8] sm:$0xff]
        %v9402 = vld [vmem:[#allocation4 + $0x200] sm:$0xff]
        %v9403 = vld [vmem:[#allocation4 + $0x208] sm:$0xff]
        %v9404 = vld [vmem:[#allocation4 + $0x210] sm:$0xff]
        %v9405 = vld [vmem:[#allocation4 + $0x218] sm:$0xff]
        %v9406 = vld [vmem:[#allocation4 + $0x220] sm:$0xff]
        %v9407 = vld [vmem:[#allocation4 + $0x228] sm:$0xff]
        %v9408 = vld [vmem:[#allocation4 + $0x230] sm:$0xff]
        %v9409 = vld [vmem:[#allocation4 + $0x238] sm:$0xff]
        %v9410 = vld [vmem:[#allocation4 + $0x240] sm:$0xff]
        %v9411 = vld [vmem:[#allocation4 + $0x248] sm:$0xff]
        %v9412 = vld [vmem:[#allocation4 + $0x250] sm:$0xff]
        %v9413 = vld [vmem:[#allocation4 + $0x258] sm:$0xff]
        %v9414 = vld [vmem:[#allocation4 + $0x260] sm:$0xff]
        %v9415 = vld [vmem:[#allocation4 + $0x268] sm:$0xff]
        %v9416 = vld [vmem:[#allocation4 + $0x270] sm:$0xff]
        %v9417 = vld [vmem:[#allocation4 + $0x278] sm:$0xff]
        %v9418 = vld [vmem:[#allocation4 + $0x280] sm:$0xff]
        %v9419 = vld [vmem:[#allocation4 + $0x288] sm:$0xff]
        %v9420 = vld [vmem:[#allocation4 + $0x290] sm:$0xff]
        %v9421 = vld [vmem:[#allocation4 + $0x298] sm:$0xff]
        %v9422 = vld [vmem:[#allocation4 + $0x2a0] sm:$0xff]
        %v9423 = vld [vmem:[#allocation4 + $0x2a8] sm:$0xff]
        %v9424 = vld [vmem:[#allocation4 + $0x2b0] sm:$0xff]
        %v9425 = vld [vmem:[#allocation4 + $0x2b8] sm:$0xff]
        %v9426 = vld [vmem:[#allocation4 + $0x2c0] sm:$0xff]
        %v9427 = vld [vmem:[#allocation4 + $0x2c8] sm:$0xff]
        %v9428 = vld [vmem:[#allocation4 + $0x2d0] sm:$0xff]
        %v9429 = vld [vmem:[#allocation4 + $0x2d8] sm:$0xff]
        %v9430 = vld [vmem:[#allocation4 + $0x2e0] sm:$0xff]
        %v9431 = vld [vmem:[#allocation4 + $0x2e8] sm:$0xff]
        %v9432 = vld [vmem:[#allocation4 + $0x2f0] sm:$0xff]
        %v9433 = vld [vmem:[#allocation4 + $0x2f8] sm:$0xff]
        %v9434 = vld [vmem:[#allocation4 + $0x300] sm:$0xff]
        %v9435 = vld [vmem:[#allocation4 + $0x308] sm:$0xff]
        %v9436 = vld [vmem:[#allocation4 + $0x310] sm:$0xff]
        %v9437 = vld [vmem:[#allocation4 + $0x318] sm:$0xff]
        %v9438 = vld [vmem:[#allocation4 + $0x320] sm:$0xff]
        %v9439 = vld [vmem:[#allocation4 + $0x328] sm:$0xff]
        %v9440 = vld [vmem:[#allocation4 + $0x330] sm:$0xff]
        %v9441 = vld [vmem:[#allocation4 + $0x338] sm:$0xff]
        %v9442 = vld [vmem:[#allocation4 + $0x340] sm:$0xff]
        %v9443 = vld [vmem:[#allocation4 + $0x348] sm:$0xff]
        %v9444 = vld [vmem:[#allocation4 + $0x350] sm:$0xff]
        %v9445 = vld [vmem:[#allocation4 + $0x358] sm:$0xff]
        %v9446 = vld [vmem:[#allocation4 + $0x360] sm:$0xff]
        %v9447 = vld [vmem:[#allocation4 + $0x368] sm:$0xff]
        %v9448 = vld [vmem:[#allocation4 + $0x370] sm:$0xff]
        %v9449 = vld [vmem:[#allocation4 + $0x378] sm:$0xff]
        %v9450 = vld [vmem:[#allocation4 + $0x380] sm:$0xff]
        %v9451 = vld [vmem:[#allocation4 + $0x388] sm:$0xff]
        %v9452 = vld [vmem:[#allocation4 + $0x390] sm:$0xff]
        %v9453 = vld [vmem:[#allocation4 + $0x398] sm:$0xff]
        %v9454 = vld [vmem:[#allocation4 + $0x3a0] sm:$0xff]
        %v9455 = vld [vmem:[#allocation4 + $0x3a8] sm:$0xff]
        %v9456 = vld [vmem:[#allocation4 + $0x3b0] sm:$0xff]
        %v9457 = vld [vmem:[#allocation4 + $0x3b8] sm:$0xff]
        %v9458 = vld [vmem:[#allocation8] sm:$0xff]
        %v9459 = vld [vmem:[#allocation8 + $0x8] sm:$0xff]
        %v9460 = vld [vmem:[#allocation8 + $0x10] sm:$0xff]
        %v9461 = vld [vmem:[#allocation8 + $0x18] sm:$0xff]
        %v9462 = vld [vmem:[#allocation8 + $0x20] sm:$0xff]
        %v9463 = vld [vmem:[#allocation8 + $0x28] sm:$0xff]
        %v9464 = vld [vmem:[#allocation8 + $0x30] sm:$0xff]
        %v9465 = vld [vmem:[#allocation8 + $0x38] sm:$0xff]
        %v9466 = vld [vmem:[#allocation8 + $0x40] sm:$0xff]
        %v9467 = vld [vmem:[#allocation8 + $0x48] sm:$0xff]
        %v9468 = vld [vmem:[#allocation8 + $0x50] sm:$0xff]
        %v9469 = vld [vmem:[#allocation8 + $0x58] sm:$0xff]
        %v9470 = vld [vmem:[#allocation8 + $0x60] sm:$0xff]
        %v9471 = vld [vmem:[#allocation8 + $0x68] sm:$0xff]
        %v9472 = vld [vmem:[#allocation8 + $0x70] sm:$0xff]
        %v9473 = vld [vmem:[#allocation8 + $0x78] sm:$0xff]
        %v9474 = vld [vmem:[#allocation8 + $0x80] sm:$0xff]
        %v9475 = vld [vmem:[#allocation8 + $0x88] sm:$0xff]
        %v9476 = vld [vmem:[#allocation8 + $0x90] sm:$0xff]
        %v9477 = vld [vmem:[#allocation8 + $0x98] sm:$0xff]
        %v9478 = vld [vmem:[#allocation8 + $0xa0] sm:$0xff]
        %v9479 = vld [vmem:[#allocation8 + $0xa8] sm:$0xff]
        %v9480 = vld [vmem:[#allocation8 + $0xb0] sm:$0xff]
        %v9481 = vld [vmem:[#allocation8 + $0xb8] sm:$0xff]
        %v9482 = vld [vmem:[#allocation8 + $0xc0] sm:$0xff]
        %v9483 = vld [vmem:[#allocation8 + $0xc8] sm:$0xff]
        %v9484 = vld [vmem:[#allocation8 + $0xd0] sm:$0xff]
        %v9485 = vld [vmem:[#allocation8 + $0xd8] sm:$0xff]
        %v9486 = vld [vmem:[#allocation8 + $0xe0] sm:$0xff]
        %v9487 = vld [vmem:[#allocation8 + $0xe8] sm:$0xff]
        %v9488 = vld [vmem:[#allocation8 + $0xf0] sm:$0xff]
        %v9489 = vld [vmem:[#allocation8 + $0xf8] sm:$0xff]
        %v9490 = vld [vmem:[#allocation8 + $0x100] sm:$0xff]
        %v9491 = vld [vmem:[#allocation8 + $0x108] sm:$0xff]
        %v9492 = vld [vmem:[#allocation8 + $0x110] sm:$0xff]
        %v9493 = vld [vmem:[#allocation8 + $0x118] sm:$0xff]
        %v9494 = vld [vmem:[#allocation8 + $0x120] sm:$0xff]
        %v9495 = vld [vmem:[#allocation8 + $0x128] sm:$0xff]
        %v9496 = vld [vmem:[#allocation8 + $0x130] sm:$0xff]
        %v9497 = vld [vmem:[#allocation8 + $0x138] sm:$0xff]
        %v9498 = vld [vmem:[#allocation8 + $0x140] sm:$0xff]
        %v9499 = vld [vmem:[#allocation8 + $0x148] sm:$0xff]
        %v9500 = vld [vmem:[#allocation8 + $0x150] sm:$0xff]
        %v9501 = vld [vmem:[#allocation8 + $0x158] sm:$0xff]
        %v9502 = vld [vmem:[#allocation8 + $0x160] sm:$0xff]
        %v9503 = vld [vmem:[#allocation8 + $0x168] sm:$0xff]
        %v9504 = vld [vmem:[#allocation8 + $0x170] sm:$0xff]
        %v9505 = vld [vmem:[#allocation8 + $0x178] sm:$0xff]
        %v9506 = vld [vmem:[#allocation8 + $0x180] sm:$0xff]
        %v9507 = vld [vmem:[#allocation8 + $0x188] sm:$0xff]
        %v9508 = vld [vmem:[#allocation8 + $0x190] sm:$0xff]
        %v9509 = vld [vmem:[#allocation8 + $0x198] sm:$0xff]
        %v9510 = vld [vmem:[#allocation8 + $0x1a0] sm:$0xff]
        %v9511 = vld [vmem:[#allocation8 + $0x1a8] sm:$0xff]
        %v9512 = vld [vmem:[#allocation8 + $0x1b0] sm:$0xff]
        %v9513 = vld [vmem:[#allocation8 + $0x1b8] sm:$0xff]
        %v9514 = vld [vmem:[#allocation8 + $0x1c0] sm:$0xff]
        %v9515 = vld [vmem:[#allocation8 + $0x1c8] sm:$0xff]
        %v9516 = vld [vmem:[#allocation8 + $0x1d0] sm:$0xff]
        %v9517 = vld [vmem:[#allocation8 + $0x1d8] sm:$0xff]
        %v9518 = vld [vmem:[#allocation8 + $0x1e0] sm:$0xff]
        %v9519 = vld [vmem:[#allocation8 + $0x1e8] sm:$0xff]
        %v9520 = vld [vmem:[#allocation8 + $0x1f0] sm:$0xff]
        %v9521 = vld [vmem:[#allocation8 + $0x1f8] sm:$0xff]
        %v9522 = vld [vmem:[#allocation8 + $0x200] sm:$0xff]
        %v9523 = vld [vmem:[#allocation8 + $0x208] sm:$0xff]
        %v9524 = vld [vmem:[#allocation8 + $0x210] sm:$0xff]
        %v9525 = vld [vmem:[#allocation8 + $0x218] sm:$0xff]
        %v9526 = vld [vmem:[#allocation8 + $0x220] sm:$0xff]
        %v9527 = vld [vmem:[#allocation8 + $0x228] sm:$0xff]
        %v9528 = vld [vmem:[#allocation8 + $0x230] sm:$0xff]
        %v9529 = vld [vmem:[#allocation8 + $0x238] sm:$0xff]
        %v9530 = vld [vmem:[#allocation8 + $0x240] sm:$0xff]
        %v9531 = vld [vmem:[#allocation8 + $0x248] sm:$0xff]
        %v9532 = vld [vmem:[#allocation8 + $0x250] sm:$0xff]
        %v9533 = vld [vmem:[#allocation8 + $0x258] sm:$0xff]
        %v9534 = vld [vmem:[#allocation8 + $0x260] sm:$0xff]
        %v9535 = vld [vmem:[#allocation8 + $0x268] sm:$0xff]
        %v9536 = vld [vmem:[#allocation8 + $0x270] sm:$0xff]
        %v9537 = vld [vmem:[#allocation8 + $0x278] sm:$0xff]
        %9538 = vmatprep.subr.mxu0 0.0
        %9539 = vmatpush1.msra.mxu0 %v9458
        %9540 = vmatprep.subr.mxu0 0.0
        %9541 = vmatpush1.msra.mxu0 %v9459
        %9542 = vmatprep.subr.mxu0 0.0
        %9543 = vmatpush1.msra.mxu0 %v9460
        %9544 = vmatprep.subr.mxu0 0.0
        %9545 = vmatpush1.msra.mxu0 %v9461
        %9546 = vmatprep.subr.mxu0 0.0
        %9547 = vmatpush1.msra.mxu0 %v9462
        %9548 = vmatprep.subr.mxu0 0.0
        %9549 = vmatpush1.msra.mxu0 %v9463
        %9550 = vmatprep.subr.mxu0 0.0
        %9551 = vmatpush1.msra.mxu0 %v9464
        %9552 = vmatprep.subr.mxu0 0.0
        %9553 = vmatpush1.msra.mxu0 %v9465
        %9554 = vmatprep.subr.mxu0 0.0
        %9555 = vmatpush1.msra.mxu0 %v9466
        %9556 = vmatprep.subr.mxu0 0.0
        %9557 = vmatpush1.msra.mxu0 %v9467
        %9558 = vmatprep.subr.mxu0 0.0
        %9559 = vmatpush1.msra.mxu0 %v9468
        %9560 = vmatprep.subr.mxu0 0.0
        %9561 = vmatpush1.msra.mxu0 %v9469
        %9562 = vmatprep.subr.mxu0 0.0
        %9563 = vmatpush1.msra.mxu0 %v9470
        %9564 = vmatprep.subr.mxu0 0.0
        %9565 = vmatpush1.msra.mxu0 %v9471
        %9566 = vmatprep.subr.mxu0 0.0
        %9567 = vmatpush1.msra.mxu0 %v9472
        %9568 = vmatprep.subr.mxu0 0.0
        %9569 = vmatpush1.msra.mxu0 %v9473
        %9570 = vmatprep.subr.mxu0 0.0
        %9571 = vmatpush1.msra.mxu0 %v9474
        %9572 = vmatprep.subr.mxu0 0.0
        %9573 = vmatpush1.msra.mxu0 %v9475
        %9574 = vmatprep.subr.mxu0 0.0
        %9575 = vmatpush1.msra.mxu0 %v9476
        %9576 = vmatprep.subr.mxu0 0.0
        %9577 = vmatpush1.msra.mxu0 %v9477
        %9578 = vmatprep.subr.mxu0 0.0
        %9579 = vmatpush1.msra.mxu0 %v9478
        %9580 = vmatprep.subr.mxu0 0.0
        %9581 = vmatpush1.msra.mxu0 %v9479
        %9582 = vmatprep.subr.mxu0 0.0
        %9583 = vmatpush1.msra.mxu0 %v9480
        %9584 = vmatprep.subr.mxu0 0.0
        %9585 = vmatpush1.msra.mxu0 %v9481
        %9586 = vmatprep.subr.mxu0 0.0
        %9587 = vmatpush1.msra.mxu0 %v9482
        %9588 = vmatprep.subr.mxu0 0.0
        %9589 = vmatpush1.msra.mxu0 %v9483
        %9590 = vmatprep.subr.mxu0 0.0
        %9591 = vmatpush1.msra.mxu0 %v9484
        %9592 = vmatprep.subr.mxu0 0.0
        %9593 = vmatpush1.msra.mxu0 %v9485
        %9594 = vmatprep.subr.mxu0 0.0
        %9595 = vmatpush1.msra.mxu0 %v9486
        %9596 = vmatprep.subr.mxu0 0.0
        %9597 = vmatpush1.msra.mxu0 %v9487
        %9598 = vmatprep.subr.mxu0 0.0
        %9599 = vmatpush1.msra.mxu0 %v9488
        %9600 = vmatprep.subr.mxu0 0.0
        %9601 = vmatpush1.msra.mxu0 %v9489
        %9602 = vmatprep.mubr.f32.mxu0 %v9339
        %9603 = vmatmul.mubr.f32.gmra.mrb[0].mxu0 %v9338
        %v9604 = vpop.f32.mrb[0].mxu0
        %v9605 = vadd.f32 0.0, %v9604
        %v9606 = vpop.f32.mrb[0].mxu0
        %9607 = vmatprep.mubr.f32.mxu0 %v9344
        %9608 = vmatmul.mubr.f32.gmra.mrb[0].mxu0 %v9343
        %v9609 = vpop.f32.mrb[0].mxu0
        %v9610 = vadd.f32 0.0, %v9609
        %v9611 = vpop.f32.mrb[0].mxu0
        %9612 = vmatprep.mubr.f32.mxu0 %v9349
        %9613 = vmatmul.mubr.f32.gmra.mrb[0].mxu0 %v9348
        %v9614 = vpop.f32.mrb[0].mxu0
        %v9615 = vadd.f32 0.0, %v9614
        %v9616 = vpop.f32.mrb[0].mxu0
        %9617 = vmatprep.mubr.f32.mxu0 %v9354
        %9618 = vmatmul.mubr.f32.gmra.mrb[0].mxu0 %v9353
        %v9619 = vpop.f32.mrb[0].mxu0
        %v9620 = vadd.f32 0.0, %v9619
        %v9621 = vpop.f32.mrb[0].mxu0
        %9622 = vmatprep.mubr.f32.mxu0 %v9359
        %9623 = vmatmul.mubr.f32.gmra.mrb[0].mxu0 %v9358
        %v9624 = vpop.f32.mrb[0].mxu0
        %v9625 = vadd.f32 0.0, %v9624
        %v9626 = vpop.f32.mrb[0].mxu0
        %9627 = vmatprep.mubr.f32.mxu0 %v9364
        %9628 = vmatmul.mubr.f32.gmra.mrb[0].mxu0 %v9363
        %v9629 = vpop.f32.mrb[0].mxu0
        %v9630 = vadd.f32 0.0, %v9629
        %v9631 = vpop.f32.mrb[0].mxu0
        %9632 = vmatprep.mubr.f32.mxu0 %v9369
        %9633 = vmatmul.mubr.f32.gmra.mrb[0].mxu0 %v9368
        %v9634 = vpop.f32.mrb[0].mxu0
        %v9635 = vadd.f32 0.0, %v9634
        %v9636 = vpop.f32.mrb[0].mxu0
        %9637 = vmatprep.mubr.f32.mxu0 %v9374
        %9638 = vmatmul.mubr.f32.gmra.mrb[0].mxu0 %v9373
        %v9639 = vpop.f32.mrb[0].mxu0
        %v9640 = vadd.f32 0.0, %v9639
        %v9641 = vpop.f32.mrb[0].mxu0
        %9642 = vmatprep.mubr.f32.mxu0 %v9379
        %9643 = vmatmul.mubr.f32.gmra.mrb[0].mxu0 %v9378
        %v9644 = vpop.f32.mrb[0].mxu0
        %v9645 = vadd.f32 0.0, %v9644
        %v9646 = vpop.f32.mrb[0].mxu0
        %9647 = vmatprep.mubr.f32.mxu0 %v9384
        %9648 = vmatmul.mubr.f32.gmra.mrb[0].mxu0 %v9383
        %v9649 = vpop.f32.mrb[0].mxu0
        %v9650 = vadd.f32 0.0, %v9649
        %v9651 = vpop.f32.mrb[0].mxu0
        %9652 = vmatprep.mubr.f32.mxu0 %v9389
        %9653 = vmatmul.mubr.f32.gmra.mrb[0].mxu0 %v9388
        %v9654 = vpop.f32.mrb[0].mxu0
        %v9655 = vadd.f32 0.0, %v9654
        %v9656 = vpop.f32.mrb[0].mxu0
        %9657 = vmatprep.mubr.f32.mxu0 %v9394
        %9658 = vmatmul.mubr.f32.gmra.mrb[0].mxu0 %v9393
        %v9659 = vpop.f32.mrb[0].mxu0
        %v9660 = vadd.f32 0.0, %v9659
        %v9661 = vpop.f32.mrb[0].mxu0
        %9662 = vmatprep.mubr.f32.mxu0 %v9399
        %9663 = vmatmul.mubr.f32.gmra.mrb[0].mxu0 %v9398
        %v9664 = vpop.f32.mrb[0].mxu0
        %v9665 = vadd.f32 0.0, %v9664
        %v9666 = vpop.f32.mrb[0].mxu0
        %9667 = vmatprep.mubr.f32.mxu0 %v9404
        %9668 = vmatmul.mubr.f32.gmra.mrb[0].mxu0 %v9403
        %v9669 = vpop.f32.mrb[0].mxu0
        %v9670 = vadd.f32 0.0, %v9669
        %v9671 = vpop.f32.mrb[0].mxu0
        %9672 = vmatprep.mubr.f32.mxu0 %v9409
        %9673 = vmatmul.mubr.f32.gmra.mrb[0].mxu0 %v9408
        %v9674 = vpop.f32.mrb[0].mxu0
        %v9675 = vadd.f32 0.0, %v9674
        %v9676 = vpop.f32.mrb[0].mxu0
        %9677 = vmatprep.mubr.f32.mxu0 %v9414
        %9678 = vmatmul.mubr.f32.gmra.mrb[0].mxu0 %v9413
        %v9679 = vpop.f32.mrb[0].mxu0
        %v9680 = vadd.f32 0.0, %v9679
        %v9681 = vpop.f32.mrb[0].mxu0
        %9682 = vmatprep.mubr.f32.mxu0 %v9419
        %9683 = vmatmul.mubr.f32.gmra.mrb[0].mxu0 %v9418
        %v9684 = vpop.f32.mrb[0].mxu0
        %v9685 = vadd.f32 0.0, %v9684
        %v9686 = vpop.f32.mrb[0].mxu0
        %9687 = vmatprep.mubr.f32.mxu0 %v9424
        %9688 = vmatmul.mubr.f32.gmra.mrb[0].mxu0 %v9423
        %v9689 = vpop.f32.mrb[0].mxu0
        %v9690 = vadd.f32 0.0, %v9689
        %v9691 = vpop.f32.mrb[0].mxu0
        %9692 = vmatprep.mubr.f32.mxu0 %v9429
        %9693 = vmatmul.mubr.f32.gmra.mrb[0].mxu0 %v9428
        %v9694 = vpop.f32.mrb[0].mxu0
        %v9695 = vadd.f32 0.0, %v9694
        %v9696 = vpop.f32.mrb[0].mxu0
        %9697 = vmatprep.mubr.f32.mxu0 %v9434
        %9698 = vmatmul.mubr.f32.gmra.mrb[0].mxu0 %v9433
        %v9699 = vpop.f32.mrb[0].mxu0
        %v9700 = vadd.f32 0.0, %v9699
        %v9701 = vpop.f32.mrb[0].mxu0
        %9702 = vmatprep.mubr.f32.mxu0 %v9439
        %9703 = vmatmul.mubr.f32.gmra.mrb[0].mxu0 %v9438
        %v9704 = vpop.f32.mrb[0].mxu0
        %v9705 = vadd.f32 0.0, %v9704
        %v9706 = vpop.f32.mrb[0].mxu0
        %9707 = vmatprep.mubr.f32.mxu0 %v9444
        %9708 = vmatmul.mubr.f32.gmra.mrb[0].mxu0 %v9443
        %v9709 = vpop.f32.mrb[0].mxu0
        %v9710 = vadd.f32 0.0, %v9709
        %v9711 = vpop.f32.mrb[0].mxu0
        %9712 = vmatprep.mubr.f32.mxu0 %v9449
        %9713 = vmatmul.mubr.f32.gmra.mrb[0].mxu0 %v9448
        %v9714 = vpop.f32.mrb[0].mxu0
        %v9715 = vadd.f32 0.0, %v9714
        %v9716 = vpop.f32.mrb[0].mxu0
        %9717 = vmatprep.mubr.f32.mxu0 %v9454
        %9718 = vmatmul.mubr.f32.gmra.mrb[0].mxu0 %v9453
        %v9719 = vpop.f32.mrb[0].mxu0
        %v9720 = vadd.f32 0.0, %v9719
        %v9721 = vpop.f32.mrb[0].mxu0
        %9722 = vdwg.mxu0
        %9723 = vmatprep.subr.mxu0 0.0
        %9724 = vmatpush1.msra.mxu0 %v9490
        %9725 = vmatprep.subr.mxu0 0.0
        %9726 = vmatpush1.msra.mxu0 %v9491
        %9727 = vmatprep.subr.mxu0 0.0
        %9728 = vmatpush1.msra.mxu0 %v9492
        %9729 = vmatprep.subr.mxu0 0.0
        %9730 = vmatpush1.msra.mxu0 %v9493
        %9731 = vmatprep.subr.mxu0 0.0
        %9732 = vmatpush1.msra.mxu0 %v9494
        %9733 = vmatprep.subr.mxu0 0.0
        %9734 = vmatpush1.msra.mxu0 %v9495
        %9735 = vmatprep.subr.mxu0 0.0
        %9736 = vmatpush1.msra.mxu0 %v9496
        %9737 = vmatprep.subr.mxu0 0.0
        %9738 = vmatpush1.msra.mxu0 %v9497
        %9739 = vmatprep.subr.mxu0 0.0
        %9740 = vmatpush1.msra.mxu0 %v9498
        %9741 = vmatprep.subr.mxu0 0.0
        %9742 = vmatpush1.msra.mxu0 %v9499
        %9743 = vmatprep.subr.mxu0 0.0
        %9744 = vmatpush1.msra.mxu0 %v9500
        %9745 = vmatprep.subr.mxu0 0.0
        %9746 = vmatpush1.msra.mxu0 %v9501
        %9747 = vmatprep.subr.mxu0 0.0
        %9748 = vmatpush1.msra.mxu0 %v9502
        %9749 = vmatprep.subr.mxu0 0.0
        %9750 = vmatpush1.msra.mxu0 %v9503
        %9751 = vmatprep.subr.mxu0 0.0
        %9752 = vmatpush1.msra.mxu0 %v9504
        %9753 = vmatprep.subr.mxu0 0.0
        %9754 = vmatpush1.msra.mxu0 %v9505
        %9755 = vmatprep.subr.mxu0 0.0
        %9756 = vmatpush1.msra.mxu0 %v9506
        %9757 = vmatprep.subr.mxu0 0.0
        %9758 = vmatpush1.msra.mxu0 %v9507
        %9759 = vmatprep.subr.mxu0 0.0
        %9760 = vmatpush1.msra.mxu0 %v9508
        %9761 = vmatprep.subr.mxu0 0.0
        %9762 = vmatpush1.msra.mxu0 %v9509
        %9763 = vmatprep.subr.mxu0 0.0
        %9764 = vmatpush1.msra.mxu0 %v9510
        %9765 = vmatprep.subr.mxu0 0.0
        %9766 = vmatpush1.msra.mxu0 %v9511
        %9767 = vmatprep.subr.mxu0 0.0
        %9768 = vmatpush1.msra.mxu0 %v9512
        %9769 = vmatprep.subr.mxu0 0.0
        %9770 = vmatpush1.msra.mxu0 %v9513
        %9771 = vmatprep.subr.mxu0 0.0
        %9772 = vmatpush1.msra.mxu0 %v9514
        %9773 = vmatprep.subr.mxu0 0.0
        %9774 = vmatpush1.msra.mxu0 %v9515
        %9775 = vmatprep.subr.mxu0 0.0
        %9776 = vmatpush1.msra.mxu0 %v9516
        %9777 = vmatprep.subr.mxu0 0.0
        %9778 = vmatpush1.msra.mxu0 %v9517
        %9779 = vmatprep.subr.mxu0 0.0
        %9780 = vmatpush1.msra.mxu0 %v9518
        %9781 = vmatprep.subr.mxu0 0.0
        %9782 = vmatpush1.msra.mxu0 %v9519
        %9783 = vmatprep.subr.mxu0 0.0
        %9784 = vmatpush1.msra.mxu0 %v9520
        %9785 = vmatprep.subr.mxu0 0.0
        %9786 = vmatpush1.msra.mxu0 %v9521
        %9787 = vmatprep.mubr.f32.mxu0 %v9341
        %9788 = vmatmul.mubr.f32.gmra.mrb[0].mxu0 %v9340
        %v9789 = vpop.f32.mrb[0].mxu0
        %v9790 = vadd.f32 %v9605, %v9789
        %v9791 = vpop.f32.mrb[0].mxu0
        %9792 = vmatprep.mubr.f32.mxu0 %v9346
        %9793 = vmatmul.mubr.f32.gmra.mrb[0].mxu0 %v9345
        %v9794 = vpop.f32.mrb[0].mxu0
        %v9795 = vadd.f32 %v9610, %v9794
        %v9796 = vpop.f32.mrb[0].mxu0
        %9797 = vmatprep.mubr.f32.mxu0 %v9351
        %9798 = vmatmul.mubr.f32.gmra.mrb[0].mxu0 %v9350
        %v9799 = vpop.f32.mrb[0].mxu0
        %v9800 = vadd.f32 %v9615, %v9799
        %v9801 = vpop.f32.mrb[0].mxu0
        %9802 = vmatprep.mubr.f32.mxu0 %v9356
        %9803 = vmatmul.mubr.f32.gmra.mrb[0].mxu0 %v9355
        %v9804 = vpop.f32.mrb[0].mxu0
        %v9805 = vadd.f32 %v9620, %v9804
        %v9806 = vpop.f32.mrb[0].mxu0
        %9807 = vmatprep.mubr.f32.mxu0 %v9361
        %9808 = vmatmul.mubr.f32.gmra.mrb[0].mxu0 %v9360
        %v9809 = vpop.f32.mrb[0].mxu0
        %v9810 = vadd.f32 %v9625, %v9809
        %v9811 = vpop.f32.mrb[0].mxu0
        %9812 = vmatprep.mubr.f32.mxu0 %v9366
        %9813 = vmatmul.mubr.f32.gmra.mrb[0].mxu0 %v9365
        %v9814 = vpop.f32.mrb[0].mxu0
        %v9815 = vadd.f32 %v9630, %v9814
        %v9816 = vpop.f32.mrb[0].mxu0
        %9817 = vmatprep.mubr.f32.mxu0 %v9371
        %9818 = vmatmul.mubr.f32.gmra.mrb[0].mxu0 %v9370
        %v9819 = vpop.f32.mrb[0].mxu0
        %v9820 = vadd.f32 %v9635, %v9819
        %v9821 = vpop.f32.mrb[0].mxu0
        %9822 = vmatprep.mubr.f32.mxu0 %v9376
        %9823 = vmatmul.mubr.f32.gmra.mrb[0].mxu0 %v9375
        %v9824 = vpop.f32.mrb[0].mxu0
        %v9825 = vadd.f32 %v9640, %v9824
        %v9826 = vpop.f32.mrb[0].mxu0
        %9827 = vmatprep.mubr.f32.mxu0 %v9381
        %9828 = vmatmul.mubr.f32.gmra.mrb[0].mxu0 %v9380
        %v9829 = vpop.f32.mrb[0].mxu0
        %v9830 = vadd.f32 %v9645, %v9829
        %v9831 = vpop.f32.mrb[0].mxu0
        %9832 = vmatprep.mubr.f32.mxu0 %v9386
        %9833 = vmatmul.mubr.f32.gmra.mrb[0].mxu0 %v9385
        %v9834 = vpop.f32.mrb[0].mxu0
        %v9835 = vadd.f32 %v9650, %v9834
        %v9836 = vpop.f32.mrb[0].mxu0
        %9837 = vmatprep.mubr.f32.mxu0 %v9391
        %9838 = vmatmul.mubr.f32.gmra.mrb[0].mxu0 %v9390
        %v9839 = vpop.f32.mrb[0].mxu0
        %v9840 = vadd.f32 %v9655, %v9839
        %v9841 = vpop.f32.mrb[0].mxu0
        %9842 = vmatprep.mubr.f32.mxu0 %v9396
        %9843 = vmatmul.mubr.f32.gmra.mrb[0].mxu0 %v9395
        %v9844 = vpop.f32.mrb[0].mxu0
        %v9845 = vadd.f32 %v9660, %v9844
        %v9846 = vpop.f32.mrb[0].mxu0
        %9847 = vmatprep.mubr.f32.mxu0 %v9401
        %9848 = vmatmul.mubr.f32.gmra.mrb[0].mxu0 %v9400
        %v9849 = vpop.f32.mrb[0].mxu0
        %v9850 = vadd.f32 %v9665, %v9849
        %v9851 = vpop.f32.mrb[0].mxu0
        %9852 = vmatprep.mubr.f32.mxu0 %v9406
        %9853 = vmatmul.mubr.f32.gmra.mrb[0].mxu0 %v9405
        %v9854 = vpop.f32.mrb[0].mxu0
        %v9855 = vadd.f32 %v9670, %v9854
        %v9856 = vpop.f32.mrb[0].mxu0
        %9857 = vmatprep.mubr.f32.mxu0 %v9411
        %9858 = vmatmul.mubr.f32.gmra.mrb[0].mxu0 %v9410
        %v9859 = vpop.f32.mrb[0].mxu0
        %v9860 = vadd.f32 %v9675, %v9859
        %v9861 = vpop.f32.mrb[0].mxu0
        %9862 = vmatprep.mubr.f32.mxu0 %v9416
        %9863 = vmatmul.mubr.f32.gmra.mrb[0].mxu0 %v9415
        %v9864 = vpop.f32.mrb[0].mxu0
        %v9865 = vadd.f32 %v9680, %v9864
        %v9866 = vpop.f32.mrb[0].mxu0
        %9867 = vmatprep.mubr.f32.mxu0 %v9421
        %9868 = vmatmul.mubr.f32.gmra.mrb[0].mxu0 %v9420
        %v9869 = vpop.f32.mrb[0].mxu0
        %v9870 = vadd.f32 %v9685, %v9869
        %v9871 = vpop.f32.mrb[0].mxu0
        %9872 = vmatprep.mubr.f32.mxu0 %v9426
        %9873 = vmatmul.mubr.f32.gmra.mrb[0].mxu0 %v9425
        %v9874 = vpop.f32.mrb[0].mxu0
        %v9875 = vadd.f32 %v9690, %v9874
        %v9876 = vpop.f32.mrb[0].mxu0
        %9877 = vmatprep.mubr.f32.mxu0 %v9431
        %9878 = vmatmul.mubr.f32.gmra.mrb[0].mxu0 %v9430
        %v9879 = vpop.f32.mrb[0].mxu0
        %v9880 = vadd.f32 %v9695, %v9879
        %v9881 = vpop.f32.mrb[0].mxu0
        %9882 = vmatprep.mubr.f32.mxu0 %v9436
        %9883 = vmatmul.mubr.f32.gmra.mrb[0].mxu0 %v9435
        %v9884 = vpop.f32.mrb[0].mxu0
        %v9885 = vadd.f32 %v9700, %v9884
        %v9886 = vpop.f32.mrb[0].mxu0
        %9887 = vmatprep.mubr.f32.mxu0 %v9441
        %9888 = vmatmul.mubr.f32.gmra.mrb[0].mxu0 %v9440
        %v9889 = vpop.f32.mrb[0].mxu0
        %v9890 = vadd.f32 %v9705, %v9889
        %v9891 = vpop.f32.mrb[0].mxu0
        %9892 = vmatprep.mubr.f32.mxu0 %v9446
        %9893 = vmatmul.mubr.f32.gmra.mrb[0].mxu0 %v9445
        %v9894 = vpop.f32.mrb[0].mxu0
        %v9895 = vadd.f32 %v9710, %v9894
        %v9896 = vpop.f32.mrb[0].mxu0
        %9897 = vmatprep.mubr.f32.mxu0 %v9451
        %9898 = vmatmul.mubr.f32.gmra.mrb[0].mxu0 %v9450
        %v9899 = vpop.f32.mrb[0].mxu0
        %v9900 = vadd.f32 %v9715, %v9899
        %v9901 = vpop.f32.mrb[0].mxu0
        %9902 = vmatprep.mubr.f32.mxu0 %v9456
        %9903 = vmatmul.mubr.f32.gmra.mrb[0].mxu0 %v9455
        %v9904 = vpop.f32.mrb[0].mxu0
        %v9905 = vadd.f32 %v9720, %v9904
        %v9906 = vpop.f32.mrb[0].mxu0
        %9907 = vdwg.mxu0
        %9908 = vmatprep.subr.mxu0 0.0
        %9909 = vmatpush1.msra.mxu0 %v9522
        %9910 = vmatprep.subr.mxu0 0.0
        %9911 = vmatpush1.msra.mxu0 %v9523
        %9912 = vmatprep.subr.mxu0 0.0
        %9913 = vmatpush1.msra.mxu0 %v9524
        %9914 = vmatprep.subr.mxu0 0.0
        %9915 = vmatpush1.msra.mxu0 %v9525
        %9916 = vmatprep.subr.mxu0 0.0
        %9917 = vmatpush1.msra.mxu0 %v9526
        %9918 = vmatprep.subr.mxu0 0.0
        %9919 = vmatpush1.msra.mxu0 %v9527
        %9920 = vmatprep.subr.mxu0 0.0
        %9921 = vmatpush1.msra.mxu0 %v9528
        %9922 = vmatprep.subr.mxu0 0.0
        %9923 = vmatpush1.msra.mxu0 %v9529
        %9924 = vmatprep.subr.mxu0 0.0
        %9925 = vmatpush1.msra.mxu0 %v9530
        %9926 = vmatprep.subr.mxu0 0.0
        %9927 = vmatpush1.msra.mxu0 %v9531
        %9928 = vmatprep.subr.mxu0 0.0
        %9929 = vmatpush1.msra.mxu0 %v9532
        %9930 = vmatprep.subr.mxu0 0.0
        %9931 = vmatpush1.msra.mxu0 %v9533
        %9932 = vmatprep.subr.mxu0 0.0
        %9933 = vmatpush1.msra.mxu0 %v9534
        %9934 = vmatprep.subr.mxu0 0.0
        %9935 = vmatpush1.msra.mxu0 %v9535
        %9936 = vmatprep.subr.mxu0 0.0
        %9937 = vmatpush1.msra.mxu0 %v9536
        %9938 = vmatprep.subr.mxu0 0.0
        %9939 = vmatpush1.msra.mxu0 %v9537
        %9940 = vmatprep.subr.mxu0 0.0
        %9941 = vmatpush1.msra.mxu0 0.0
        %9942 = vmatprep.subr.mxu0 0.0
        %9943 = vmatpush1.msra.mxu0 0.0
        %9944 = vmatprep.subr.mxu0 0.0
        %9945 = vmatpush1.msra.mxu0 0.0
        %9946 = vmatprep.subr.mxu0 0.0
        %9947 = vmatpush1.msra.mxu0 0.0
        %9948 = vmatprep.subr.mxu0 0.0
        %9949 = vmatpush1.msra.mxu0 0.0
        %9950 = vmatprep.subr.mxu0 0.0
        %9951 = vmatpush1.msra.mxu0 0.0
        %9952 = vmatprep.subr.mxu0 0.0
        %9953 = vmatpush1.msra.mxu0 0.0
        %9954 = vmatprep.subr.mxu0 0.0
        %9955 = vmatpush1.msra.mxu0 0.0
        %9956 = vmatprep.subr.mxu0 0.0
        %9957 = vmatpush1.msra.mxu0 0.0
        %9958 = vmatprep.subr.mxu0 0.0
        %9959 = vmatpush1.msra.mxu0 0.0
        %9960 = vmatprep.subr.mxu0 0.0
        %9961 = vmatpush1.msra.mxu0 0.0
        %9962 = vmatprep.subr.mxu0 0.0
        %9963 = vmatpush1.msra.mxu0 0.0
        %9964 = vmatprep.subr.mxu0 0.0
        %9965 = vmatpush1.msra.mxu0 0.0
        %9966 = vmatprep.subr.mxu0 0.0
        %9967 = vmatpush1.msra.mxu0 0.0
        %9968 = vmatprep.subr.mxu0 0.0
        %9969 = vmatpush1.msra.mxu0 0.0
        %9970 = vmatprep.subr.mxu0 0.0
        %9971 = vmatpush1.msra.mxu0 0.0
        %9972 = vmatprep.mubr.f32.mxu0 0.0
        %9973 = vmatmul.mubr.f32.gmra.mrb[0].mxu0 %v9342
        %v9974 = vpop.f32.mrb[0].mxu0
        %v9975 = vadd.f32 %v9790, %v9974
        %v9976 = vpop.f32.mrb[0].mxu0
        %9977 = vmatprep.mubr.f32.mxu0 0.0
        %9978 = vmatmul.mubr.f32.gmra.mrb[0].mxu0 %v9347
        %v9979 = vpop.f32.mrb[0].mxu0
        %v9980 = vadd.f32 %v9795, %v9979
        %v9981 = vpop.f32.mrb[0].mxu0
        %9982 = vmatprep.mubr.f32.mxu0 0.0
        %9983 = vmatmul.mubr.f32.gmra.mrb[0].mxu0 %v9352
        %v9984 = vpop.f32.mrb[0].mxu0
        %v9985 = vadd.f32 %v9800, %v9984
        %v9986 = vpop.f32.mrb[0].mxu0
        %9987 = vmatprep.mubr.f32.mxu0 0.0
        %9988 = vmatmul.mubr.f32.gmra.mrb[0].mxu0 %v9357
        %v9989 = vpop.f32.mrb[0].mxu0
        %v9990 = vadd.f32 %v9805, %v9989
        %v9991 = vpop.f32.mrb[0].mxu0
        %9992 = vmatprep.mubr.f32.mxu0 0.0
        %9993 = vmatmul.mubr.f32.gmra.mrb[0].mxu0 %v9362
        %v9994 = vpop.f32.mrb[0].mxu0
        %v9995 = vadd.f32 %v9810, %v9994
        %v9996 = vpop.f32.mrb[0].mxu0
        %9997 = vmatprep.mubr.f32.mxu0 0.0
        %9998 = vmatmul.mubr.f32.gmra.mrb[0].mxu0 %v9367
        %v9999 = vpop.f32.mrb[0].mxu0
        %v10000 = vadd.f32 %v9815, %v9999
        %v10001 = vpop.f32.mrb[0].mxu0
        %10002 = vmatprep.mubr.f32.mxu0 0.0
        %10003 = vmatmul.mubr.f32.gmra.mrb[0].mxu0 %v9372
        %v10004 = vpop.f32.mrb[0].mxu0
        %v10005 = vadd.f32 %v9820, %v10004
        %v10006 = vpop.f32.mrb[0].mxu0
        %10007 = vmatprep.mubr.f32.mxu0 0.0
        %10008 = vmatmul.mubr.f32.gmra.mrb[0].mxu0 %v9377
        %v10009 = vpop.f32.mrb[0].mxu0
        %v10010 = vadd.f32 %v9825, %v10009
        %v10011 = vpop.f32.mrb[0].mxu0
        %10012 = vmatprep.mubr.f32.mxu0 0.0
        %10013 = vmatmul.mubr.f32.gmra.mrb[0].mxu0 %v9382
        %v10014 = vpop.f32.mrb[0].mxu0
        %v10015 = vadd.f32 %v9830, %v10014
        %v10016 = vpop.f32.mrb[0].mxu0
        %10017 = vmatprep.mubr.f32.mxu0 0.0
        %10018 = vmatmul.mubr.f32.gmra.mrb[0].mxu0 %v9387
        %v10019 = vpop.f32.mrb[0].mxu0
        %v10020 = vadd.f32 %v9835, %v10019
        %v10021 = vpop.f32.mrb[0].mxu0
        %10022 = vmatprep.mubr.f32.mxu0 0.0
        %10023 = vmatmul.mubr.f32.gmra.mrb[0].mxu0 %v9392
        %v10024 = vpop.f32.mrb[0].mxu0
        %v10025 = vadd.f32 %v9840, %v10024
        %v10026 = vpop.f32.mrb[0].mxu0
        %10027 = vmatprep.mubr.f32.mxu0 0.0
        %10028 = vmatmul.mubr.f32.gmra.mrb[0].mxu0 %v9397
        %v10029 = vpop.f32.mrb[0].mxu0
        %v10030 = vadd.f32 %v9845, %v10029
        %v10031 = vpop.f32.mrb[0].mxu0
        %10032 = vmatprep.mubr.f32.mxu0 0.0
        %10033 = vmatmul.mubr.f32.gmra.mrb[0].mxu0 %v9402
        %v10034 = vpop.f32.mrb[0].mxu0
        %v10035 = vadd.f32 %v9850, %v10034
        %v10036 = vpop.f32.mrb[0].mxu0
        %10037 = vmatprep.mubr.f32.mxu0 0.0
        %10038 = vmatmul.mubr.f32.gmra.mrb[0].mxu0 %v9407
        %v10039 = vpop.f32.mrb[0].mxu0
        %v10040 = vadd.f32 %v9855, %v10039
        %v10041 = vpop.f32.mrb[0].mxu0
        %10042 = vmatprep.mubr.f32.mxu0 0.0
        %10043 = vmatmul.mubr.f32.gmra.mrb[0].mxu0 %v9412
        %v10044 = vpop.f32.mrb[0].mxu0
        %v10045 = vadd.f32 %v9860, %v10044
        %v10046 = vpop.f32.mrb[0].mxu0
        %10047 = vmatprep.mubr.f32.mxu0 0.0
        %10048 = vmatmul.mubr.f32.gmra.mrb[0].mxu0 %v9417
        %v10049 = vpop.f32.mrb[0].mxu0
        %v10050 = vadd.f32 %v9865, %v10049
        %v10051 = vpop.f32.mrb[0].mxu0
        %10052 = vmatprep.mubr.f32.mxu0 0.0
        %10053 = vmatmul.mubr.f32.gmra.mrb[0].mxu0 %v9422
        %v10054 = vpop.f32.mrb[0].mxu0
        %v10055 = vadd.f32 %v9870, %v10054
        %v10056 = vpop.f32.mrb[0].mxu0
        %10057 = vmatprep.mubr.f32.mxu0 0.0
        %10058 = vmatmul.mubr.f32.gmra.mrb[0].mxu0 %v9427
        %v10059 = vpop.f32.mrb[0].mxu0
        %v10060 = vadd.f32 %v9875, %v10059
        %v10061 = vpop.f32.mrb[0].mxu0
        %10062 = vmatprep.mubr.f32.mxu0 0.0
        %10063 = vmatmul.mubr.f32.gmra.mrb[0].mxu0 %v9432
        %v10064 = vpop.f32.mrb[0].mxu0
        %v10065 = vadd.f32 %v9880, %v10064
        %v10066 = vpop.f32.mrb[0].mxu0
        %10067 = vmatprep.mubr.f32.mxu0 0.0
        %10068 = vmatmul.mubr.f32.gmra.mrb[0].mxu0 %v9437
        %v10069 = vpop.f32.mrb[0].mxu0
        %v10070 = vadd.f32 %v9885, %v10069
        %v10071 = vpop.f32.mrb[0].mxu0
        %10072 = vmatprep.mubr.f32.mxu0 0.0
        %10073 = vmatmul.mubr.f32.gmra.mrb[0].mxu0 %v9442
        %v10074 = vpop.f32.mrb[0].mxu0
        %v10075 = vadd.f32 %v9890, %v10074
        %v10076 = vpop.f32.mrb[0].mxu0
        %10077 = vmatprep.mubr.f32.mxu0 0.0
        %10078 = vmatmul.mubr.f32.gmra.mrb[0].mxu0 %v9447
        %v10079 = vpop.f32.mrb[0].mxu0
        %v10080 = vadd.f32 %v9895, %v10079
        %v10081 = vpop.f32.mrb[0].mxu0
        %10082 = vmatprep.mubr.f32.mxu0 0.0
        %10083 = vmatmul.mubr.f32.gmra.mrb[0].mxu0 %v9452
        %v10084 = vpop.f32.mrb[0].mxu0
        %v10085 = vadd.f32 %v9900, %v10084
        %v10086 = vpop.f32.mrb[0].mxu0
        %10087 = vmatprep.mubr.f32.mxu0 0.0
        %10088 = vmatmul.mubr.f32.gmra.mrb[0].mxu0 %v9457
        %v10089 = vpop.f32.mrb[0].mxu0
        %v10090 = vadd.f32 %v9905, %v10089
        %v10091 = vpop.f32.mrb[0].mxu0
        %10092 = vdwg.mxu0
        %v10093 = vld [vmem:[%s6] sm:$0x1]
        %v10095 = vlaneseq
        %v10096 = vshrl.u32 %v10095, 7
        %v10097 = vsub.s32 0, %v10096
        %v10098 = vrot.slane %v10093, %v10097
        %v10100 = vadd.f32 %v9975, %v10098
        %v10101 = vadd.f32 %v9980, %v10098
        %v10102 = vadd.f32 %v9985, %v10098
        %v10103 = vadd.f32 %v9990, %v10098
        %v10104 = vadd.f32 %v9995, %v10098
        %v10105 = vadd.f32 %v10000, %v10098
        %v10106 = vadd.f32 %v10005, %v10098
        %v10107 = vadd.f32 %v10010, %v10098
        %v10108 = vadd.f32 %v10015, %v10098
        %v10109 = vadd.f32 %v10020, %v10098
        %v10110 = vadd.f32 %v10025, %v10098
        %v10111 = vadd.f32 %v10030, %v10098
        %v10112 = vadd.f32 %v10035, %v10098
        %v10113 = vadd.f32 %v10040, %v10098
        %v10114 = vadd.f32 %v10045, %v10098
        %v10115 = vadd.f32 %v10050, %v10098
        %v10116 = vadd.f32 %v10055, %v10098
        %v10117 = vadd.f32 %v10060, %v10098
        %v10118 = vadd.f32 %v10065, %v10098
        %v10119 = vadd.f32 %v10070, %v10098
        %v10120 = vadd.f32 %v10075, %v10098
        %v10121 = vadd.f32 %v10080, %v10098
        %v10122 = vadd.f32 %v10085, %v10098
        %v10123 = vadd.f32 %v10090, %v10098
        %v10124 = vmax.f32 %v10100, 0.0
        %v10125 = vmax.f32 %v10101, 0.0
        %v10126 = vmax.f32 %v10102, 0.0
        %v10127 = vmax.f32 %v10103, 0.0
        %v10128 = vmax.f32 %v10104, 0.0
        %v10129 = vmax.f32 %v10105, 0.0
        %v10130 = vmax.f32 %v10106, 0.0
        %v10131 = vmax.f32 %v10107, 0.0
        %v10132 = vmax.f32 %v10108, 0.0
        %v10133 = vmax.f32 %v10109, 0.0
        %v10134 = vmax.f32 %v10110, 0.0
        %v10135 = vmax.f32 %v10111, 0.0
        %v10136 = vmax.f32 %v10112, 0.0
        %v10137 = vmax.f32 %v10113, 0.0
        %v10138 = vmax.f32 %v10114, 0.0
        %v10139 = vmax.f32 %v10115, 0.0
        %v10140 = vmax.f32 %v10116, 0.0
        %v10141 = vmax.f32 %v10117, 0.0
        %v10142 = vmax.f32 %v10118, 0.0
        %v10143 = vmax.f32 %v10119, 0.0
        %v10144 = vmax.f32 %v10120, 0.0
        %v10145 = vmax.f32 %v10121, 0.0
        %v10146 = vmax.f32 %v10122, 0.0
        %v10147 = vmax.f32 %v10123, 0.0
        %10148 = vmax.xlane.f32.xlu0 %v10124
        %v10149 = vpop.xlane.xlu0 %10148
        %10150 = vmax.xlane.f32.xlu0 %v10125
        %v10151 = vpop.xlane.xlu0 %10150
        %v10152 = vsel %vm599, %v10126, -inf
        %10153 = vmax.xlane.f32.xlu0 %v10152
        %v10154 = vpop.xlane.xlu0 %10153
        %10155 = vmax.xlane.f32.xlu0 %v10127
        %v10156 = vpop.xlane.xlu0 %10155
        %10157 = vmax.xlane.f32.xlu0 %v10128
        %v10158 = vpop.xlane.xlu0 %10157
        %v10159 = vsel %vm599, %v10129, -inf
        %10160 = vmax.xlane.f32.xlu0 %v10159
        %v10161 = vpop.xlane.xlu0 %10160
        %10162 = vmax.xlane.f32.xlu0 %v10130
        %v10163 = vpop.xlane.xlu0 %10162
        %10164 = vmax.xlane.f32.xlu0 %v10131
        %v10165 = vpop.xlane.xlu0 %10164
        %v10166 = vsel %vm599, %v10132, -inf
        %10167 = vmax.xlane.f32.xlu0 %v10166
        %v10168 = vpop.xlane.xlu0 %10167
        %10169 = vmax.xlane.f32.xlu0 %v10133
        %v10170 = vpop.xlane.xlu0 %10169
        %10171 = vmax.xlane.f32.xlu0 %v10134
        %v10172 = vpop.xlane.xlu0 %10171
        %v10173 = vsel %vm599, %v10135, -inf
        %10174 = vmax.xlane.f32.xlu0 %v10173
        %v10175 = vpop.xlane.xlu0 %10174
        %10176 = vmax.xlane.f32.xlu0 %v10136
        %v10177 = vpop.xlane.xlu0 %10176
        %10178 = vmax.xlane.f32.xlu0 %v10137
        %v10179 = vpop.xlane.xlu0 %10178
        %v10180 = vsel %vm599, %v10138, -inf
        %10181 = vmax.xlane.f32.xlu0 %v10180
        %v10182 = vpop.xlane.xlu0 %10181
        %10183 = vmax.xlane.f32.xlu0 %v10139
        %v10184 = vpop.xlane.xlu0 %10183
        %10185 = vmax.xlane.f32.xlu0 %v10140
        %v10186 = vpop.xlane.xlu0 %10185
        %v10187 = vsel %vm599, %v10141, -inf
        %10188 = vmax.xlane.f32.xlu0 %v10187
        %v10189 = vpop.xlane.xlu0 %10188
        %10190 = vmax.xlane.f32.xlu0 %v10142
        %v10191 = vpop.xlane.xlu0 %10190
        %10192 = vmax.xlane.f32.xlu0 %v10143
        %v10193 = vpop.xlane.xlu0 %10192
        %v10194 = vsel %vm599, %v10144, -inf
        %10195 = vmax.xlane.f32.xlu0 %v10194
        %v10196 = vpop.xlane.xlu0 %10195
        %10197 = vmax.xlane.f32.xlu0 %v10145
        %v10198 = vpop.xlane.xlu0 %10197
        %10199 = vmax.xlane.f32.xlu0 %v10146
        %v10200 = vpop.xlane.xlu0 %10199
        %v10201 = vsel %vm599, %v10147, -inf
        %10202 = vmax.xlane.f32.xlu0 %v10201
        %v10203 = vpop.xlane.xlu0 %10202
        %v10204 = vld [vmem:[%s7] sm:$0xff]
        %v10205 = vld [vmem:[%s7 + $0x8] sm:$0xff]
        %v10206 = vld [vmem:[%s7 + $0x10] sm:$0x1]
        %v10207 = vld [vmem:[%s8] sm:$0x1]
        %v10209 = vlaneseq
        %v10210 = vshrl.u32 %v10209, 7
        %v10211 = vsub.s32 0, %v10210
        %v10212 = vrot.slane %v10207, %v10211
        %v10238 = vlaneseq
        %v10239 = vand.u32 %v10238, 127
        %v10240 = vlaneseq
        %v10241 = vshrl.u32 %v10240, 7
        %v10242 = vsub.s32 %v10239, %v10241
        %v10243 = vrot.slane %v10149, %v10242
        %v10244 = vadd.s32 %v10239, 4294967288
        %v10245 = vlaneseq
        %v10246 = vshrl.u32 %v10245, 7
        %v10247 = vsub.s32 %v10244, %v10246
        %v10248 = vrot.slane %v10151, %v10247
        %vm10249 = vcmask 130112
        %v10250 = vsel %vm10249, %v10248, %v10243
        %v10251 = vadd.s32 %v10239, 4294967280
        %v10252 = vlaneseq
        %v10253 = vshrl.u32 %v10252, 7
        %v10254 = vsub.s32 %v10251, %v10253
        %v10255 = vrot.slane %v10154, %v10254
        %vm10256 = vcmask 195712
        %v10257 = vsel %vm10256, %v10255, %v10250
        %v10258 = vlaneseq
        %v10259 = vshrl.u32 %v10258, 7
        %v10260 = vsub.s32 %v10239, %v10259
        %v10261 = vrot.slane %v10156, %v10260
        %v10262 = vlaneseq
        %v10263 = vshrl.u32 %v10262, 7
        %v10264 = vsub.s32 %v10244, %v10263
        %v10265 = vrot.slane %v10158, %v10264
        %v10266 = vsel %vm10249, %v10265, %v10261
        %v10267 = vlaneseq
        %v10268 = vshrl.u32 %v10267, 7
        %v10269 = vsub.s32 %v10251, %v10268
        %v10270 = vrot.slane %v10161, %v10269
        %v10271 = vsel %vm10256, %v10270, %v10266
        %v10272 = vlaneseq
        %v10273 = vshrl.u32 %v10272, 7
        %v10274 = vsub.s32 %v10239, %v10273
        %v10275 = vrot.slane %v10163, %v10274
        %v10276 = vlaneseq
        %v10277 = vshrl.u32 %v10276, 7
        %v10278 = vsub.s32 %v10244, %v10277
        %v10279 = vrot.slane %v10165, %v10278
        %v10280 = vsel %vm10249, %v10279, %v10275
        %v10281 = vlaneseq
        %v10282 = vshrl.u32 %v10281, 7
        %v10283 = vsub.s32 %v10251, %v10282
        %v10284 = vrot.slane %v10168, %v10283
        %v10285 = vsel %vm10256, %v10284, %v10280
        %v10286 = vlaneseq
        %v10287 = vshrl.u32 %v10286, 7
        %v10288 = vsub.s32 %v10239, %v10287
        %v10289 = vrot.slane %v10170, %v10288
        %v10290 = vlaneseq
        %v10291 = vshrl.u32 %v10290, 7
        %v10292 = vsub.s32 %v10244, %v10291
        %v10293 = vrot.slane %v10172, %v10292
        %v10294 = vsel %vm10249, %v10293, %v10289
        %v10295 = vlaneseq
        %v10296 = vshrl.u32 %v10295, 7
        %v10297 = vsub.s32 %v10251, %v10296
        %v10298 = vrot.slane %v10175, %v10297
        %v10299 = vsel %vm10256, %v10298, %v10294
        %v10300 = vlaneseq
        %v10301 = vshrl.u32 %v10300, 7
        %v10302 = vsub.s32 %v10239, %v10301
        %v10303 = vrot.slane %v10177, %v10302
        %v10304 = vlaneseq
        %v10305 = vshrl.u32 %v10304, 7
        %v10306 = vsub.s32 %v10244, %v10305
        %v10307 = vrot.slane %v10179, %v10306
        %v10308 = vsel %vm10249, %v10307, %v10303
        %v10309 = vlaneseq
        %v10310 = vshrl.u32 %v10309, 7
        %v10311 = vsub.s32 %v10251, %v10310
        %v10312 = vrot.slane %v10182, %v10311
        %v10313 = vsel %vm10256, %v10312, %v10308
        %v10314 = vlaneseq
        %v10315 = vshrl.u32 %v10314, 7
        %v10316 = vsub.s32 %v10239, %v10315
        %v10317 = vrot.slane %v10184, %v10316
        %v10318 = vlaneseq
        %v10319 = vshrl.u32 %v10318, 7
        %v10320 = vsub.s32 %v10244, %v10319
        %v10321 = vrot.slane %v10186, %v10320
        %v10322 = vsel %vm10249, %v10321, %v10317
        %v10323 = vlaneseq
        %v10324 = vshrl.u32 %v10323, 7
        %v10325 = vsub.s32 %v10251, %v10324
        %v10326 = vrot.slane %v10189, %v10325
        %v10327 = vsel %vm10256, %v10326, %v10322
        %v10328 = vlaneseq
        %v10329 = vshrl.u32 %v10328, 7
        %v10330 = vsub.s32 %v10239, %v10329
        %v10331 = vrot.slane %v10191, %v10330
        %v10332 = vlaneseq
        %v10333 = vshrl.u32 %v10332, 7
        %v10334 = vsub.s32 %v10244, %v10333
        %v10335 = vrot.slane %v10193, %v10334
        %v10336 = vsel %vm10249, %v10335, %v10331
        %v10337 = vlaneseq
        %v10338 = vshrl.u32 %v10337, 7
        %v10339 = vsub.s32 %v10251, %v10338
        %v10340 = vrot.slane %v10196, %v10339
        %v10341 = vsel %vm10256, %v10340, %v10336
        %v10342 = vlaneseq
        %v10343 = vshrl.u32 %v10342, 7
        %v10344 = vsub.s32 %v10239, %v10343
        %v10345 = vrot.slane %v10198, %v10344
        %v10346 = vlaneseq
        %v10347 = vshrl.u32 %v10346, 7
        %v10348 = vsub.s32 %v10244, %v10347
        %v10349 = vrot.slane %v10200, %v10348
        %v10350 = vsel %vm10249, %v10349, %v10345
        %v10351 = vlaneseq
        %v10352 = vshrl.u32 %v10351, 7
        %v10353 = vsub.s32 %v10251, %v10352
        %v10354 = vrot.slane %v10203, %v10353
        %v10355 = vsel %vm10256, %v10354, %v10350
        %v10356 = vsel %vm7307, %v10271, %v10257
        %v10357 = vsel %vm7309, %v10285, %v10356
        %v10358 = vsel %vm7311, %v10299, %v10357
        %v10359 = vsel %vm7295, %v10313, %v10358
        %v10360 = vsel %vm7297, %v10327, %v10359
        %v10361 = vsel %vm7299, %v10341, %v10360
        %v10362 = vsel %vm7301, %v10355, %v10361
        %vm10363 = vcmask 138240
        %v10364 = vsel %vm10363, %v10362, 0
        %v10367 = vsel %vm599, %v10206, 0
        %10369 = vmatprep.subr.mxu0 0.0
        %10370 = vmatpush1.msra.mxu0 %v10204
        %10371 = vmatprep.subr.mxu0 0.0
        %10372 = vmatpush1.msra.mxu0 %v10205
        %10373 = vmatprep.subr.mxu0 0.0
        %10374 = vmatpush1.msra.mxu0 %v10367
        %10375 = vmatprep.subr.mxu0 0.0
        %10376 = vmatpush1.msra.mxu0 0.0
        %10377 = vmatprep.subr.mxu0 0.0
        %10378 = vmatpush1.msra.mxu0 0.0
        %10379 = vmatprep.subr.mxu0 0.0
        %10380 = vmatpush1.msra.mxu0 0.0
        %10381 = vmatprep.subr.mxu0 0.0
        %10382 = vmatpush1.msra.mxu0 0.0
        %10383 = vmatprep.subr.mxu0 0.0
        %10384 = vmatpush1.msra.mxu0 0.0
        %10385 = vmatprep.subr.mxu0 0.0
        %10386 = vmatpush1.msra.mxu0 0.0
        %10387 = vmatprep.subr.mxu0 0.0
        %10388 = vmatpush1.msra.mxu0 0.0
        %10389 = vmatprep.subr.mxu0 0.0
        %10390 = vmatpush1.msra.mxu0 0.0
        %10391 = vmatprep.subr.mxu0 0.0
        %10392 = vmatpush1.msra.mxu0 0.0
        %10393 = vmatprep.subr.mxu0 0.0
        %10394 = vmatpush1.msra.mxu0 0.0
        %10395 = vmatprep.subr.mxu0 0.0
        %10396 = vmatpush1.msra.mxu0 0.0
        %10397 = vmatprep.subr.mxu0 0.0
        %10398 = vmatpush1.msra.mxu0 0.0
        %10399 = vmatprep.subr.mxu0 0.0
        %10400 = vmatpush1.msra.mxu0 0.0
        %10401 = vmatprep.subr.mxu0 0.0
        %10402 = vmatpush1.msra.mxu0 0.0
        %10403 = vmatprep.subr.mxu0 0.0
        %10404 = vmatpush1.msra.mxu0 0.0
        %10405 = vmatprep.subr.mxu0 0.0
        %10406 = vmatpush1.msra.mxu0 0.0
        %10407 = vmatprep.subr.mxu0 0.0
        %10408 = vmatpush1.msra.mxu0 0.0
        %10409 = vmatprep.subr.mxu0 0.0
        %10410 = vmatpush1.msra.mxu0 0.0
        %10411 = vmatprep.subr.mxu0 0.0
        %10412 = vmatpush1.msra.mxu0 0.0
        %10413 = vmatprep.subr.mxu0 0.0
        %10414 = vmatpush1.msra.mxu0 0.0
        %10415 = vmatprep.subr.mxu0 0.0
        %10416 = vmatpush1.msra.mxu0 0.0
        %10417 = vmatprep.subr.mxu0 0.0
        %10418 = vmatpush1.msra.mxu0 0.0
        %10419 = vmatprep.subr.mxu0 0.0
        %10420 = vmatpush1.msra.mxu0 0.0
        %10421 = vmatprep.subr.mxu0 0.0
        %10422 = vmatpush1.msra.mxu0 0.0
        %10423 = vmatprep.subr.mxu0 0.0
        %10424 = vmatpush1.msra.mxu0 0.0
        %10425 = vmatprep.subr.mxu0 0.0
        %10426 = vmatpush1.msra.mxu0 0.0
        %10427 = vmatprep.subr.mxu0 0.0
        %10428 = vmatpush1.msra.mxu0 0.0
        %10429 = vmatprep.subr.mxu0 0.0
        %10430 = vmatpush1.msra.mxu0 0.0
        %10431 = vmatprep.subr.mxu0 0.0
        %10432 = vmatpush1.msra.mxu0 0.0
        %10433 = vmatprep.mubr.f32.mxu0 0.0
        %10434 = vmatmul.mubr.f32.gmra.mrb[0].mxu0 %v10364
        %v10435 = vpop.f32.mrb[0].mxu0
        %v10436 = vadd.f32 %v10212, %v10435
        %v10437 = vpop.f32.mrb[0].mxu0
        %10438 = vdwg.mxu0
        %10439 = vst [vmem:[%s358] sm:$0xff] %v10436
        %s10440 = sand.u32 %s227, 1
        %s10441 = scalar_lea.sflag [#allocation7], %s10440
        %s10442 = sand.u32 %s227, 1
        %s10443 = smul.addr %s10442, 8
        %s10444 = scalar_lea.vmem [#allocation10], %s10443
        // Predicated region
        $region65: #{tpu_custom_call.1} parent=55 // pred_check
          %p10445 = pneg %p237
        $region66: #{tpu_custom_call.1} parent=55 // pred_check_branch
          %10447 = sbr.rel (%p10445) target = $region68
        $region67: #{tpu_custom_call.1} parent=55 // pred_region
          %s10449 = ssub.s32 128, 128
          %10450 = vsyncadd %s10441, %s10449
          %s10451 = smul.addr %s25, 128
          %s10452 = scalar_lea.hbm %s9, %s10451
          %s10454 = sshll.u32 %s10444, 4
          %s10455 = int_to_ptr.vmem [resolvable:$true] %s10454
          %10457 = dma.vmem_to_hbm [thread:$0]  %s10455, 128, %s10452, %s10441
        $region68: #{tpu_custom_call.1} parent=55 // pred_fallthru
          _
      $region56: #{tpu_custom_call.1} parent=5 // pred_fallthru
        _
      %p10458 = scmp.le.s32.totalorder 2, %s20
      // Predicated region
      $region69: #{tpu_custom_call.1} parent=5 // pred_check
        %p10459 = pneg %p10458
      $region70: #{tpu_custom_call.1} parent=5 // pred_check_branch
        %10461 = sbr.rel (%p10459) target = $region72
      $region71: #{tpu_custom_call.1} parent=5 // pred_region
        %s10462 = ssub.s32 %s20, 2
        // Predicated region
        $region73: #{tpu_custom_call.1} parent=71 // pred_check
          %p10463 = pneg %p243
        $region74: #{tpu_custom_call.1} parent=71 // pred_check_branch
          %10465 = sbr.rel (%p10463) target = $region76
        $region75: #{tpu_custom_call.1} parent=71 // pred_region
          %s10466 = sand.u32 %s228, 1
          %s10467 = scalar_lea.sflag [#allocation7], %s10466
          %s10468 = sand.u32 %s228, 1
          %s10469 = smul.addr %s10468, 8
          %s10470 = scalar_lea.vmem [#allocation10], %s10469
          %10471 = dma.done %s10467, 128
        $region76: #{tpu_custom_call.1} parent=71 // pred_fallthru
          _
      $region72: #{tpu_custom_call.1} parent=5 // pred_fallthru
        _
    $region6: #{tpu_custom_call.1} parent=1 // loop_footer
      %s24 = sadd.s32 1, %s20
    $region7: #{tpu_custom_call.1} parent=1 // loop_footer_branch
      %19 = sbr.rel target = $region3
    $region8: #{tpu_custom_call.1} parent=1 // loop_exit
      _
    %10472 = vsyncpa [#allocation6], 1
    %s10473 = scalar_lea.sflag [#allocation6], 1
    %10474 = vsyncpa %s10473, 1
    %10475 = vsyncpa [#allocation9], 1
    %10476 = vsyncpa [#allocation7], 1
    %s10477 = scalar_lea.sflag [#allocation7], 1
    %10478 = vsyncpa %s10477, 1

</llo_original>
